<compile_context>
chip_gen: v5e
topology: v5e:2x2
jax: 0.10.0
libtpu: 0.0.40
codegen_flags: <defaults>
</compile_context>

<pallas_src>
import jax
import jax.numpy as jnp
import numpy as np
from jax.experimental import pallas as pl
from jax.experimental.pallas import tpu as pltpu


def _fused_forward_pallas(x_nhwc, params):
    """Fused 4-layer forward. x_nhwc: (N, H, W, C0) f32 -> (N, 1, H, W) f32."""
    N, H, W, C0 = x_nhwc.shape
    HW = H * W
    C1, C2, C3 = 32, 64, 128

    # 3x3 weights flattened to (9*Cin, Cout): tap-major, channel-minor —
    # matches the im2col patch layout built in-kernel.
    w1m = params["w1"].reshape(9 * C0, C1)
    w2m = params["w2"].reshape(9 * C1, C2)
    w3m = params["w3"].reshape(9 * C2, C3)
    # 1x1 conv weight as a (1, C3) row so the final matmul emits a lane-dense
    # (1, H*W) result.
    w4t = params["w4"].reshape(C3, 1).T            # (1, C3)
    b1 = params["b1"].reshape(1, C1)
    b2 = params["b2"].reshape(1, C2)
    b3 = params["b3"].reshape(1, C3)
    b4 = params["b4"].reshape(1, 1)

    def im2col_into(pad_ref, patches_ref, cin):
        # 9 shifted (H*W, cin) windows concatenated along lanes -> (H*W, 9*cin).
        for k in range(9):
            dy, dx = k // 3, k % 3
            tap = pad_ref[dy:dy + H, dx:dx + W, :].reshape(HW, cin)
            patches_ref[:, k * cin:(k + 1) * cin] = tap

    def kernel(x_ref, w1_ref, b1_ref, w2_ref, b2_ref, w3_ref, b3_ref,
               w4_ref, b4_ref, o_ref,
               pad0, pad1, pad2, p1, p2, p3, act3):
        # Zero the padded buffers (halo must be zero; interior is overwritten).
        pad0[...] = jnp.zeros_like(pad0)
        pad1[...] = jnp.zeros_like(pad1)
        pad2[...] = jnp.zeros_like(pad2)

        # ---- conv1: 3x3, C0 -> 32, ReLU ------------------------------------
        pad0[1:1 + H, 1:1 + W, :] = x_ref[0]
        im2col_into(pad0, p1, C0)
        a1 = jnp.dot(p1[...], w1_ref[...], preferred_element_type=jnp.float32)
        a1 = jnp.maximum(a1 + b1_ref[...], 0.0)
        # dropout (eval mode) == identity
        pad1[1:1 + H, 1:1 + W, :] = a1.reshape(H, W, C1)

        # ---- conv2: 3x3, 32 -> 64, ReLU ------------------------------------
        im2col_into(pad1, p2, C1)
        a2 = jnp.dot(p2[...], w2_ref[...], preferred_element_type=jnp.float32)
        a2 = jnp.maximum(a2 + b2_ref[...], 0.0)
        # dropout (eval mode) == identity
        pad2[1:1 + H, 1:1 + W, :] = a2.reshape(H, W, C2)

        # ---- conv3: 3x3, 64 -> 128, ReLU -----------------------------------
        im2col_into(pad2, p3, C2)
        a3 = jnp.dot(p3[...], w3_ref[...], preferred_element_type=jnp.float32)
        act3[...] = jnp.maximum(a3 + b3_ref[...], 0.0)

        # ---- conv4: 1x1, 128 -> 1, no ReLU ---------------------------------
        # (1, C3) . (HW, C3)^T -> (1, HW): lane-dense output row.
        y = jax.lax.dot_general(
            w4_ref[...], act3[...],
            dimension_numbers=(((1,), (1,)), ((), ())),
            preferred_element_type=jnp.float32)
        o_ref[0] = y + b4_ref[...]

    out = pl.pallas_call(
        kernel,
        out_shape=jax.ShapeDtypeStruct((N, 1, HW), jnp.float32),
        grid=(N,),
        in_specs=[
            pl.BlockSpec((1, H, W, C0), lambda n: (n, 0, 0, 0)),
            pl.BlockSpec((9 * C0, C1), lambda n: (0, 0)),
            pl.BlockSpec((1, C1), lambda n: (0, 0)),
            pl.BlockSpec((9 * C1, C2), lambda n: (0, 0)),
            pl.BlockSpec((1, C2), lambda n: (0, 0)),
            pl.BlockSpec((9 * C2, C3), lambda n: (0, 0)),
            pl.BlockSpec((1, C3), lambda n: (0, 0)),
            pl.BlockSpec((1, C3), lambda n: (0, 0)),
            pl.BlockSpec((1, 1), lambda n: (0, 0)),
        ],
        out_specs=pl.BlockSpec((1, 1, HW), lambda n: (n, 0, 0)),
        scratch_shapes=[
            pltpu.VMEM((H + 2, W + 2, C0), jnp.float32),   # padded input
            pltpu.VMEM((H + 2, W + 2, C1), jnp.float32),   # padded act1
            pltpu.VMEM((H + 2, W + 2, C2), jnp.float32),   # padded act2
            pltpu.VMEM((HW, 9 * C0), jnp.float32),         # im2col layer 1
            pltpu.VMEM((HW, 9 * C1), jnp.float32),         # im2col layer 2
            pltpu.VMEM((HW, 9 * C2), jnp.float32),         # im2col layer 3
            pltpu.VMEM((HW, C3), jnp.float32),             # act3
        ],
        compiler_params=pltpu.CompilerParams(
            dimension_semantics=("parallel",)),
    )(x_nhwc, w1m, b1, w2m, b2, w3m, b3, w4t, b4)

    # (N, 1, H*W) -> (N, 1, H, W): free metadata reshape, already NCHW.
    return out.reshape(N, 1, H, W)


def init_params(key, num_channels=4):
    """Deterministic synthetic parameters (shapes match the PyTorch module)."""
    ks = jax.random.split(key, 8)

    def conv_init(kw, kb, kh, kwid, cin, cout):
        fan_in = cin * kh * kwid
        bound = 1.0 / np.sqrt(fan_in)
        w = jax.random.uniform(kw, (kh, kwid, cin, cout), jnp.float32,
                               minval=-bound, maxval=bound)
        b = jax.random.uniform(kb, (cout,), jnp.float32,
                               minval=-bound, maxval=bound)
        return w, b

    w1, b1 = conv_init(ks[0], ks[1], 3, 3, num_channels, 32)
    w2, b2 = conv_init(ks[2], ks[3], 3, 3, 32, 64)
    w3, b3 = conv_init(ks[4], ks[5], 3, 3, 64, 128)
    w4, b4 = conv_init(ks[6], ks[7], 1, 1, 128, 1)
    return dict(w1=w1, b1=b1, w2=w2, b2=b2, w3=w3, b3=b3, w4=w4, b4=b4)


@jax.jit
def segmentation_model_forward(x_nchw, params):
    # NCHW (PyTorch) -> NHWC (kernel layout); single fused Pallas kernel.
    x = jnp.transpose(x_nchw, (0, 2, 3, 1)).astype(jnp.float32)
    return _fused_forward_pallas(x, params)


def _reference_forward(x_nchw, params):
    """Pure-JAX reference (lax conv) for a correctness check."""
    x = x_nchw.astype(jnp.float32)

    def conv(x, w, b, relu):
        y = jax.lax.conv_general_dilated(
            x, w, window_strides=(1, 1),
            padding="SAME" if w.shape[0] == 3 else "VALID",
            dimension_numbers=("NCHW", "HWIO", "NCHW"))
        y = y + b.reshape(1, -1, 1, 1)
        return jnp.maximum(y, 0.0) if relu else y

    x = conv(x, params["w1"], params["b1"], True)
    x = conv(x, params["w2"], params["b2"], True)
    x = conv(x, params["w3"], params["b3"], True)
    x = conv(x, params["w4"], params["b4"], False)
    return x


if __name__ == "__main__":
    key = jax.random.PRNGKey(0)
    k_x, k_p = jax.random.split(key)

    # Small shapes consistent with the module: batch=2, channels=4, spatial=16.
    x = jax.random.normal(k_x, (2, 4, 16, 16), jnp.float32)
    params = init_params(k_p, num_channels=4)

    out = segmentation_model_forward(x, params)
    out = jax.block_until_ready(out)
    assert out.shape == (2, 1, 16, 16), out.shape

    ref = jax.block_until_ready(_reference_forward(x, params))
    np.testing.assert_allclose(np.asarray(out), np.asarray(ref),
                               atol=1e-2, rtol=1e-2)

    print("KERNEL_OK")
</pallas_src>

<mosaic_0001>
module attributes {stable_mosaic.version = 11 : i64} {
  func.func @kernel(%arg0: i32, %arg1: memref<1x16x16x4xf32, #tpu.memory_space<vmem>>, %arg2: memref<36x32xf32, #tpu.memory_space<vmem>>, %arg3: memref<1x32xf32, #tpu.memory_space<vmem>>, %arg4: memref<288x64xf32, #tpu.memory_space<vmem>>, %arg5: memref<1x64xf32, #tpu.memory_space<vmem>>, %arg6: memref<576x128xf32, #tpu.memory_space<vmem>>, %arg7: memref<1x128xf32, #tpu.memory_space<vmem>>, %arg8: memref<1x128xf32, #tpu.memory_space<vmem>>, %arg9: memref<1x1xf32, #tpu.memory_space<vmem>>, %arg10: memref<1x1x256xf32, #tpu.memory_space<vmem>>, %arg11: memref<18x18x4xf32, #tpu.memory_space<vmem>>, %arg12: memref<18x18x32xf32, #tpu.memory_space<vmem>>, %arg13: memref<18x18x64xf32, #tpu.memory_space<vmem>>, %arg14: memref<256x36xf32, #tpu.memory_space<vmem>>, %arg15: memref<256x288xf32, #tpu.memory_space<vmem>>, %arg16: memref<256x576xf32, #tpu.memory_space<vmem>>, %arg17: memref<256x128xf32, #tpu.memory_space<vmem>>) attributes {dimension_semantics = [#tpu.dimension_semantics<parallel>], iteration_bounds = array<i64: 2>, scalar_prefetch = 0 : i64, scratch_operands = 7 : i64, tpu.core_type = #tpu.core_type<tc>, window_params = [{transform_indices = @transform_0, window_bounds = array<i64: 1, 16, 16, 4>}, {pipeline_mode = #tpu.pipeline_mode<synchronous>, transform_indices = @transform_1, window_bounds = array<i64: 36, 32>}, {pipeline_mode = #tpu.pipeline_mode<synchronous>, transform_indices = @transform_2, window_bounds = array<i64: 1, 32>}, {pipeline_mode = #tpu.pipeline_mode<synchronous>, transform_indices = @transform_3, window_bounds = array<i64: 288, 64>}, {pipeline_mode = #tpu.pipeline_mode<synchronous>, transform_indices = @transform_4, window_bounds = array<i64: 1, 64>}, {pipeline_mode = #tpu.pipeline_mode<synchronous>, transform_indices = @transform_5, window_bounds = array<i64: 576, 128>}, {pipeline_mode = #tpu.pipeline_mode<synchronous>, transform_indices = @transform_6, window_bounds = array<i64: 1, 128>}, {pipeline_mode = #tpu.pipeline_mode<synchronous>, transform_indices = @transform_7, window_bounds = array<i64: 1, 128>}, {pipeline_mode = #tpu.pipeline_mode<synchronous>, transform_indices = @transform_8, window_bounds = array<i64: 1, 1>}, {transform_indices = @transform_9, window_bounds = array<i64: 1, 1, 256>}]} {
    %cst = arith.constant 0.000000e+00 : f32
    %0 = vector.broadcast %cst : f32 to vector<18x18x4xf32>
    %c0 = arith.constant 0 : index
    %c0_0 = arith.constant 0 : index
    %c0_1 = arith.constant 0 : index
    %1 = vector.load %arg11[%c0, %c0_0, %c0_1] : memref<18x18x4xf32, #tpu.memory_space<vmem>>, vector<18x18x4xf32>
    tpu.vector_store %arg11[%c0, %c0_0, %c0_1], %0 {strides = array<i32>} : memref<18x18x4xf32, #tpu.memory_space<vmem>>, vector<18x18x4xf32>,
    %cst_2 = arith.constant 0.000000e+00 : f32
    %2 = vector.broadcast %cst_2 : f32 to vector<18x18x32xf32>
    %c0_3 = arith.constant 0 : index
    %c0_4 = arith.constant 0 : index
    %c0_5 = arith.constant 0 : index
    %3 = vector.load %arg12[%c0_3, %c0_4, %c0_5] : memref<18x18x32xf32, #tpu.memory_space<vmem>>, vector<18x18x32xf32>
    tpu.vector_store %arg12[%c0_3, %c0_4, %c0_5], %2 {strides = array<i32>} : memref<18x18x32xf32, #tpu.memory_space<vmem>>, vector<18x18x32xf32>,
    %cst_6 = arith.constant 0.000000e+00 : f32
    %4 = vector.broadcast %cst_6 : f32 to vector<18x18x64xf32>
    %c0_7 = arith.constant 0 : index
    %c0_8 = arith.constant 0 : index
    %c0_9 = arith.constant 0 : index
    %5 = vector.load %arg13[%c0_7, %c0_8, %c0_9] : memref<18x18x64xf32, #tpu.memory_space<vmem>>, vector<18x18x64xf32>
    tpu.vector_store %arg13[%c0_7, %c0_8, %c0_9], %4 {strides = array<i32>} : memref<18x18x64xf32, #tpu.memory_space<vmem>>, vector<18x18x64xf32>,
    %c0_10 = arith.constant 0 : index
    %c0_11 = arith.constant 0 : index
    %c0_12 = arith.constant 0 : index
    %c0_13 = arith.constant 0 : index
    %6 = vector.load %arg1[%c0_10, %c0_11, %c0_12, %c0_13] : memref<1x16x16x4xf32, #tpu.memory_space<vmem>>, vector<1x16x16x4xf32>
    %7 = vector.shape_cast %6 : vector<1x16x16x4xf32> to vector<16x16x4xf32>
    %c1 = arith.constant 1 : index
    %c1_14 = arith.constant 1 : index
    %c0_15 = arith.constant 0 : index
    %8 = vector.load %arg11[%c1, %c1_14, %c0_15] : memref<18x18x4xf32, #tpu.memory_space<vmem>>, vector<16x16x4xf32>
    tpu.vector_store %arg11[%c1, %c1_14, %c0_15], %7 {strides = array<i32>} : memref<18x18x4xf32, #tpu.memory_space<vmem>>, vector<16x16x4xf32>,
    %c0_16 = arith.constant 0 : index
    %c0_17 = arith.constant 0 : index
    %c0_18 = arith.constant 0 : index
    %9 = vector.load %arg11[%c0_16, %c0_17, %c0_18] : memref<18x18x4xf32, #tpu.memory_space<vmem>>, vector<16x16x4xf32>
    %10 = vector.shape_cast %9 : vector<16x16x4xf32> to vector<256x4xf32>
    %c0_19 = arith.constant 0 : index
    %c0_20 = arith.constant 0 : index
    %11 = vector.load %arg14[%c0_19, %c0_20] : memref<256x36xf32, #tpu.memory_space<vmem>>, vector<256x4xf32>
    tpu.vector_store %arg14[%c0_19, %c0_20], %10 {strides = array<i32>} : memref<256x36xf32, #tpu.memory_space<vmem>>, vector<256x4xf32>,
    %c0_21 = arith.constant 0 : index
    %c1_22 = arith.constant 1 : index
    %c0_23 = arith.constant 0 : index
    %12 = vector.load %arg11[%c0_21, %c1_22, %c0_23] : memref<18x18x4xf32, #tpu.memory_space<vmem>>, vector<16x16x4xf32>
    %13 = vector.shape_cast %12 : vector<16x16x4xf32> to vector<256x4xf32>
    %c0_24 = arith.constant 0 : index
    %c4 = arith.constant 4 : index
    %14 = vector.load %arg14[%c0_24, %c4] : memref<256x36xf32, #tpu.memory_space<vmem>>, vector<256x4xf32>
    tpu.vector_store %arg14[%c0_24, %c4], %13 {strides = array<i32>} : memref<256x36xf32, #tpu.memory_space<vmem>>, vector<256x4xf32>,
    %c0_25 = arith.constant 0 : index
    %c2 = arith.constant 2 : index
    %c0_26 = arith.constant 0 : index
    %15 = vector.load %arg11[%c0_25, %c2, %c0_26] : memref<18x18x4xf32, #tpu.memory_space<vmem>>, vector<16x16x4xf32>
    %16 = vector.shape_cast %15 : vector<16x16x4xf32> to vector<256x4xf32>
    %c0_27 = arith.constant 0 : index
    %c8 = arith.constant 8 : index
    %17 = vector.load %arg14[%c0_27, %c8] : memref<256x36xf32, #tpu.memory_space<vmem>>, vector<256x4xf32>
    tpu.vector_store %arg14[%c0_27, %c8], %16 {strides = array<i32>} : memref<256x36xf32, #tpu.memory_space<vmem>>, vector<256x4xf32>,
    %c1_28 = arith.constant 1 : index
    %c0_29 = arith.constant 0 : index
    %c0_30 = arith.constant 0 : index
    %18 = vector.load %arg11[%c1_28, %c0_29, %c0_30] : memref<18x18x4xf32, #tpu.memory_space<vmem>>, vector<16x16x4xf32>
    %19 = vector.shape_cast %18 : vector<16x16x4xf32> to vector<256x4xf32>
    %c0_31 = arith.constant 0 : index
    %c12 = arith.constant 12 : index
    %20 = vector.load %arg14[%c0_31, %c12] : memref<256x36xf32, #tpu.memory_space<vmem>>, vector<256x4xf32>
    tpu.vector_store %arg14[%c0_31, %c12], %19 {strides = array<i32>} : memref<256x36xf32, #tpu.memory_space<vmem>>, vector<256x4xf32>,
    %c1_32 = arith.constant 1 : index
    %c1_33 = arith.constant 1 : index
    %c0_34 = arith.constant 0 : index
    %21 = vector.load %arg11[%c1_32, %c1_33, %c0_34] : memref<18x18x4xf32, #tpu.memory_space<vmem>>, vector<16x16x4xf32>
    %22 = vector.shape_cast %21 : vector<16x16x4xf32> to vector<256x4xf32>
    %c0_35 = arith.constant 0 : index
    %c16 = arith.constant 16 : index
    %23 = vector.load %arg14[%c0_35, %c16] : memref<256x36xf32, #tpu.memory_space<vmem>>, vector<256x4xf32>
    tpu.vector_store %arg14[%c0_35, %c16], %22 {strides = array<i32>} : memref<256x36xf32, #tpu.memory_space<vmem>>, vector<256x4xf32>,
    %c1_36 = arith.constant 1 : index
    %c2_37 = arith.constant 2 : index
    %c0_38 = arith.constant 0 : index
    %24 = vector.load %arg11[%c1_36, %c2_37, %c0_38] : memref<18x18x4xf32, #tpu.memory_space<vmem>>, vector<16x16x4xf32>
    %25 = vector.shape_cast %24 : vector<16x16x4xf32> to vector<256x4xf32>
    %c0_39 = arith.constant 0 : index
    %c20 = arith.constant 20 : index
    %26 = vector.load %arg14[%c0_39, %c20] : memref<256x36xf32, #tpu.memory_space<vmem>>, vector<256x4xf32>
    tpu.vector_store %arg14[%c0_39, %c20], %25 {strides = array<i32>} : memref<256x36xf32, #tpu.memory_space<vmem>>, vector<256x4xf32>,
    %c2_40 = arith.constant 2 : index
    %c0_41 = arith.constant 0 : index
    %c0_42 = arith.constant 0 : index
    %27 = vector.load %arg11[%c2_40, %c0_41, %c0_42] : memref<18x18x4xf32, #tpu.memory_space<vmem>>, vector<16x16x4xf32>
    %28 = vector.shape_cast %27 : vector<16x16x4xf32> to vector<256x4xf32>
    %c0_43 = arith.constant 0 : index
    %c24 = arith.constant 24 : index
    %29 = vector.load %arg14[%c0_43, %c24] : memref<256x36xf32, #tpu.memory_space<vmem>>, vector<256x4xf32>
    tpu.vector_store %arg14[%c0_43, %c24], %28 {strides = array<i32>} : memref<256x36xf32, #tpu.memory_space<vmem>>, vector<256x4xf32>,
    %c2_44 = arith.constant 2 : index
    %c1_45 = arith.constant 1 : index
    %c0_46 = arith.constant 0 : index
    %30 = vector.load %arg11[%c2_44, %c1_45, %c0_46] : memref<18x18x4xf32, #tpu.memory_space<vmem>>, vector<16x16x4xf32>
    %31 = vector.shape_cast %30 : vector<16x16x4xf32> to vector<256x4xf32>
    %c0_47 = arith.constant 0 : index
    %c28 = arith.constant 28 : index
    %32 = vector.load %arg14[%c0_47, %c28] : memref<256x36xf32, #tpu.memory_space<vmem>>, vector<256x4xf32>
    tpu.vector_store %arg14[%c0_47, %c28], %31 {strides = array<i32>} : memref<256x36xf32, #tpu.memory_space<vmem>>, vector<256x4xf32>,
    %c2_48 = arith.constant 2 : index
    %c2_49 = arith.constant 2 : index
    %c0_50 = arith.constant 0 : index
    %33 = vector.load %arg11[%c2_48, %c2_49, %c0_50] : memref<18x18x4xf32, #tpu.memory_space<vmem>>, vector<16x16x4xf32>
    %34 = vector.shape_cast %33 : vector<16x16x4xf32> to vector<256x4xf32>
    %c0_51 = arith.constant 0 : index
    %c32 = arith.constant 32 : index
    %35 = vector.load %arg14[%c0_51, %c32] : memref<256x36xf32, #tpu.memory_space<vmem>>, vector<256x4xf32>
    tpu.vector_store %arg14[%c0_51, %c32], %34 {strides = array<i32>} : memref<256x36xf32, #tpu.memory_space<vmem>>, vector<256x4xf32>,
    %c0_52 = arith.constant 0 : index
    %c0_53 = arith.constant 0 : index
    %36 = vector.load %arg14[%c0_52, %c0_53] : memref<256x36xf32, #tpu.memory_space<vmem>>, vector<256x36xf32>
    %c0_54 = arith.constant 0 : index
    %c0_55 = arith.constant 0 : index
    %37 = vector.load %arg2[%c0_54, %c0_55] : memref<36x32xf32, #tpu.memory_space<vmem>>, vector<36x32xf32>
    %cst_56 = arith.constant dense<0.000000e+00> : vector<256x32xf32>
    %38 = tpu.matmul %36, %37, %cst_56 {dimension_numbers = #tpu.dot_dimension_numbers<[1], [0], [0], [1], [0, 0, 1, 1], [], []>} : vector<256x36xf32>, vector<36x32xf32>, vector<256x32xf32> -> vector<256x32xf32>
    %c0_57 = arith.constant 0 : index
    %c0_58 = arith.constant 0 : index
    %39 = vector.load %arg3[%c0_57, %c0_58] : memref<1x32xf32, #tpu.memory_space<vmem>>, vector<1x32xf32>
    %40 = vector.broadcast %39 : vector<1x32xf32> to vector<256x32xf32>
    %41 = arith.addf %38, %40 : vector<256x32xf32>
    %cst_59 = arith.constant 0.000000e+00 : f32
    %42 = vector.broadcast %cst_59 : f32 to vector<256x32xf32>
    %43 = arith.maximumf %41, %42 : vector<256x32xf32>
    %44 = vector.shape_cast %43 : vector<256x32xf32> to vector<16x16x32xf32>
    %c1_60 = arith.constant 1 : index
    %c1_61 = arith.constant 1 : index
    %c0_62 = arith.constant 0 : index
    %45 = vector.load %arg12[%c1_60, %c1_61, %c0_62] : memref<18x18x32xf32, #tpu.memory_space<vmem>>, vector<16x16x32xf32>
    tpu.vector_store %arg12[%c1_60, %c1_61, %c0_62], %44 {strides = array<i32>} : memref<18x18x32xf32, #tpu.memory_space<vmem>>, vector<16x16x32xf32>,
    %c0_63 = arith.constant 0 : index
    %c0_64 = arith.constant 0 : index
    %c0_65 = arith.constant 0 : index
    %46 = vector.load %arg12[%c0_63, %c0_64, %c0_65] : memref<18x18x32xf32, #tpu.memory_space<vmem>>, vector<16x16x32xf32>
    %47 = vector.shape_cast %46 : vector<16x16x32xf32> to vector<256x32xf32>
    %c0_66 = arith.constant 0 : index
    %c0_67 = arith.constant 0 : index
    %48 = vector.load %arg15[%c0_66, %c0_67] : memref<256x288xf32, #tpu.memory_space<vmem>>, vector<256x32xf32>
    tpu.vector_store %arg15[%c0_66, %c0_67], %47 {strides = array<i32>} : memref<256x288xf32, #tpu.memory_space<vmem>>, vector<256x32xf32>,
    %c0_68 = arith.constant 0 : index
    %c1_69 = arith.constant 1 : index
    %c0_70 = arith.constant 0 : index
    %49 = vector.load %arg12[%c0_68, %c1_69, %c0_70] : memref<18x18x32xf32, #tpu.memory_space<vmem>>, vector<16x16x32xf32>
    %50 = vector.shape_cast %49 : vector<16x16x32xf32> to vector<256x32xf32>
    %c0_71 = arith.constant 0 : index
    %c32_72 = arith.constant 32 : index
    %51 = vector.load %arg15[%c0_71, %c32_72] : memref<256x288xf32, #tpu.memory_space<vmem>>, vector<256x32xf32>
    tpu.vector_store %arg15[%c0_71, %c32_72], %50 {strides = array<i32>} : memref<256x288xf32, #tpu.memory_space<vmem>>, vector<256x32xf32>,
    %c0_73 = arith.constant 0 : index
    %c2_74 = arith.constant 2 : index
    %c0_75 = arith.constant 0 : index
    %52 = vector.load %arg12[%c0_73, %c2_74, %c0_75] : memref<18x18x32xf32, #tpu.memory_space<vmem>>, vector<16x16x32xf32>
    %53 = vector.shape_cast %52 : vector<16x16x32xf32> to vector<256x32xf32>
    %c0_76 = arith.constant 0 : index
    %c64 = arith.constant 64 : index
    %54 = vector.load %arg15[%c0_76, %c64] : memref<256x288xf32, #tpu.memory_space<vmem>>, vector<256x32xf32>
    tpu.vector_store %arg15[%c0_76, %c64], %53 {strides = array<i32>} : memref<256x288xf32, #tpu.memory_space<vmem>>, vector<256x32xf32>,
    %c1_77 = arith.constant 1 : index
    %c0_78 = arith.constant 0 : index
    %c0_79 = arith.constant 0 : index
    %55 = vector.load %arg12[%c1_77, %c0_78, %c0_79] : memref<18x18x32xf32, #tpu.memory_space<vmem>>, vector<16x16x32xf32>
    %56 = vector.shape_cast %55 : vector<16x16x32xf32> to vector<256x32xf32>
    %c0_80 = arith.constant 0 : index
    %c96 = arith.constant 96 : index
    %57 = vector.load %arg15[%c0_80, %c96] : memref<256x288xf32, #tpu.memory_space<vmem>>, vector<256x32xf32>
    tpu.vector_store %arg15[%c0_80, %c96], %56 {strides = array<i32>} : memref<256x288xf32, #tpu.memory_space<vmem>>, vector<256x32xf32>,
    %c1_81 = arith.constant 1 : index
    %c1_82 = arith.constant 1 : index
    %c0_83 = arith.constant 0 : index
    %58 = vector.load %arg12[%c1_81, %c1_82, %c0_83] : memref<18x18x32xf32, #tpu.memory_space<vmem>>, vector<16x16x32xf32>
    %59 = vector.shape_cast %58 : vector<16x16x32xf32> to vector<256x32xf32>
    %c0_84 = arith.constant 0 : index
    %c128 = arith.constant 128 : index
    %60 = vector.load %arg15[%c0_84, %c128] : memref<256x288xf32, #tpu.memory_space<vmem>>, vector<256x32xf32>
    tpu.vector_store %arg15[%c0_84, %c128], %59 {strides = array<i32>} : memref<256x288xf32, #tpu.memory_space<vmem>>, vector<256x32xf32>,
    %c1_85 = arith.constant 1 : index
    %c2_86 = arith.constant 2 : index
    %c0_87 = arith.constant 0 : index
    %61 = vector.load %arg12[%c1_85, %c2_86, %c0_87] : memref<18x18x32xf32, #tpu.memory_space<vmem>>, vector<16x16x32xf32>
    %62 = vector.shape_cast %61 : vector<16x16x32xf32> to vector<256x32xf32>
    %c0_88 = arith.constant 0 : index
    %c160 = arith.constant 160 : index
    %63 = vector.load %arg15[%c0_88, %c160] : memref<256x288xf32, #tpu.memory_space<vmem>>, vector<256x32xf32>
    tpu.vector_store %arg15[%c0_88, %c160], %62 {strides = array<i32>} : memref<256x288xf32, #tpu.memory_space<vmem>>, vector<256x32xf32>,
    %c2_89 = arith.constant 2 : index
    %c0_90 = arith.constant 0 : index
    %c0_91 = arith.constant 0 : index
    %64 = vector.load %arg12[%c2_89, %c0_90, %c0_91] : memref<18x18x32xf32, #tpu.memory_space<vmem>>, vector<16x16x32xf32>
    %65 = vector.shape_cast %64 : vector<16x16x32xf32> to vector<256x32xf32>
    %c0_92 = arith.constant 0 : index
    %c192 = arith.constant 192 : index
    %66 = vector.load %arg15[%c0_92, %c192] : memref<256x288xf32, #tpu.memory_space<vmem>>, vector<256x32xf32>
    tpu.vector_store %arg15[%c0_92, %c192], %65 {strides = array<i32>} : memref<256x288xf32, #tpu.memory_space<vmem>>, vector<256x32xf32>,
    %c2_93 = arith.constant 2 : index
    %c1_94 = arith.constant 1 : index
    %c0_95 = arith.constant 0 : index
    %67 = vector.load %arg12[%c2_93, %c1_94, %c0_95] : memref<18x18x32xf32, #tpu.memory_space<vmem>>, vector<16x16x32xf32>
    %68 = vector.shape_cast %67 : vector<16x16x32xf32> to vector<256x32xf32>
    %c0_96 = arith.constant 0 : index
    %c224 = arith.constant 224 : index
    %69 = vector.load %arg15[%c0_96, %c224] : memref<256x288xf32, #tpu.memory_space<vmem>>, vector<256x32xf32>
    tpu.vector_store %arg15[%c0_96, %c224], %68 {strides = array<i32>} : memref<256x288xf32, #tpu.memory_space<vmem>>, vector<256x32xf32>,
    %c2_97 = arith.constant 2 : index
    %c2_98 = arith.constant 2 : index
    %c0_99 = arith.constant 0 : index
    %70 = vector.load %arg12[%c2_97, %c2_98, %c0_99] : memref<18x18x32xf32, #tpu.memory_space<vmem>>, vector<16x16x32xf32>
    %71 = vector.shape_cast %70 : vector<16x16x32xf32> to vector<256x32xf32>
    %c0_100 = arith.constant 0 : index
    %c256 = arith.constant 256 : index
    %72 = vector.load %arg15[%c0_100, %c256] : memref<256x288xf32, #tpu.memory_space<vmem>>, vector<256x32xf32>
    tpu.vector_store %arg15[%c0_100, %c256], %71 {strides = array<i32>} : memref<256x288xf32, #tpu.memory_space<vmem>>, vector<256x32xf32>,
    %c0_101 = arith.constant 0 : index
    %c0_102 = arith.constant 0 : index
    %73 = vector.load %arg15[%c0_101, %c0_102] : memref<256x288xf32, #tpu.memory_space<vmem>>, vector<256x288xf32>
    %c0_103 = arith.constant 0 : index
    %c0_104 = arith.constant 0 : index
    %74 = vector.load %arg4[%c0_103, %c0_104] : memref<288x64xf32, #tpu.memory_space<vmem>>, vector<288x64xf32>
    %cst_105 = arith.constant dense<0.000000e+00> : vector<256x64xf32>
    %75 = tpu.matmul %73, %74, %cst_105 {dimension_numbers = #tpu.dot_dimension_numbers<[1], [0], [0], [1], [0, 0, 1, 1], [], []>} : vector<256x288xf32>, vector<288x64xf32>, vector<256x64xf32> -> vector<256x64xf32>
    %c0_106 = arith.constant 0 : index
    %c0_107 = arith.constant 0 : index
    %76 = vector.load %arg5[%c0_106, %c0_107] : memref<1x64xf32, #tpu.memory_space<vmem>>, vector<1x64xf32>
    %77 = vector.broadcast %76 : vector<1x64xf32> to vector<256x64xf32>
    %78 = arith.addf %75, %77 : vector<256x64xf32>
    %cst_108 = arith.constant 0.000000e+00 : f32
    %79 = vector.broadcast %cst_108 : f32 to vector<256x64xf32>
    %80 = arith.maximumf %78, %79 : vector<256x64xf32>
    %81 = vector.shape_cast %80 : vector<256x64xf32> to vector<16x16x64xf32>
    %c1_109 = arith.constant 1 : index
    %c1_110 = arith.constant 1 : index
    %c0_111 = arith.constant 0 : index
    %82 = vector.load %arg13[%c1_109, %c1_110, %c0_111] : memref<18x18x64xf32, #tpu.memory_space<vmem>>, vector<16x16x64xf32>
    tpu.vector_store %arg13[%c1_109, %c1_110, %c0_111], %81 {strides = array<i32>} : memref<18x18x64xf32, #tpu.memory_space<vmem>>, vector<16x16x64xf32>,
    %c0_112 = arith.constant 0 : index
    %c0_113 = arith.constant 0 : index
    %c0_114 = arith.constant 0 : index
    %83 = vector.load %arg13[%c0_112, %c0_113, %c0_114] : memref<18x18x64xf32, #tpu.memory_space<vmem>>, vector<16x16x64xf32>
    %84 = vector.shape_cast %83 : vector<16x16x64xf32> to vector<256x64xf32>
    %c0_115 = arith.constant 0 : index
    %c0_116 = arith.constant 0 : index
    %85 = vector.load %arg16[%c0_115, %c0_116] : memref<256x576xf32, #tpu.memory_space<vmem>>, vector<256x64xf32>
    tpu.vector_store %arg16[%c0_115, %c0_116], %84 {strides = array<i32>} : memref<256x576xf32, #tpu.memory_space<vmem>>, vector<256x64xf32>,
    %c0_117 = arith.constant 0 : index
    %c1_118 = arith.constant 1 : index
    %c0_119 = arith.constant 0 : index
    %86 = vector.load %arg13[%c0_117, %c1_118, %c0_119] : memref<18x18x64xf32, #tpu.memory_space<vmem>>, vector<16x16x64xf32>
    %87 = vector.shape_cast %86 : vector<16x16x64xf32> to vector<256x64xf32>
    %c0_120 = arith.constant 0 : index
    %c64_121 = arith.constant 64 : index
    %88 = vector.load %arg16[%c0_120, %c64_121] : memref<256x576xf32, #tpu.memory_space<vmem>>, vector<256x64xf32>
    tpu.vector_store %arg16[%c0_120, %c64_121], %87 {strides = array<i32>} : memref<256x576xf32, #tpu.memory_space<vmem>>, vector<256x64xf32>,
    %c0_122 = arith.constant 0 : index
    %c2_123 = arith.constant 2 : index
    %c0_124 = arith.constant 0 : index
    %89 = vector.load %arg13[%c0_122, %c2_123, %c0_124] : memref<18x18x64xf32, #tpu.memory_space<vmem>>, vector<16x16x64xf32>
    %90 = vector.shape_cast %89 : vector<16x16x64xf32> to vector<256x64xf32>
    %c0_125 = arith.constant 0 : index
    %c128_126 = arith.constant 128 : index
    %91 = vector.load %arg16[%c0_125, %c128_126] : memref<256x576xf32, #tpu.memory_space<vmem>>, vector<256x64xf32>
    tpu.vector_store %arg16[%c0_125, %c128_126], %90 {strides = array<i32>} : memref<256x576xf32, #tpu.memory_space<vmem>>, vector<256x64xf32>,
    %c1_127 = arith.constant 1 : index
    %c0_128 = arith.constant 0 : index
    %c0_129 = arith.constant 0 : index
    %92 = vector.load %arg13[%c1_127, %c0_128, %c0_129] : memref<18x18x64xf32, #tpu.memory_space<vmem>>, vector<16x16x64xf32>
    %93 = vector.shape_cast %92 : vector<16x16x64xf32> to vector<256x64xf32>
    %c0_130 = arith.constant 0 : index
    %c192_131 = arith.constant 192 : index
    %94 = vector.load %arg16[%c0_130, %c192_131] : memref<256x576xf32, #tpu.memory_space<vmem>>, vector<256x64xf32>
    tpu.vector_store %arg16[%c0_130, %c192_131], %93 {strides = array<i32>} : memref<256x576xf32, #tpu.memory_space<vmem>>, vector<256x64xf32>,
    %c1_132 = arith.constant 1 : index
    %c1_133 = arith.constant 1 : index
    %c0_134 = arith.constant 0 : index
    %95 = vector.load %arg13[%c1_132, %c1_133, %c0_134] : memref<18x18x64xf32, #tpu.memory_space<vmem>>, vector<16x16x64xf32>
    %96 = vector.shape_cast %95 : vector<16x16x64xf32> to vector<256x64xf32>
    %c0_135 = arith.constant 0 : index
    %c256_136 = arith.constant 256 : index
    %97 = vector.load %arg16[%c0_135, %c256_136] : memref<256x576xf32, #tpu.memory_space<vmem>>, vector<256x64xf32>
    tpu.vector_store %arg16[%c0_135, %c256_136], %96 {strides = array<i32>} : memref<256x576xf32, #tpu.memory_space<vmem>>, vector<256x64xf32>,
    %c1_137 = arith.constant 1 : index
    %c2_138 = arith.constant 2 : index
    %c0_139 = arith.constant 0 : index
    %98 = vector.load %arg13[%c1_137, %c2_138, %c0_139] : memref<18x18x64xf32, #tpu.memory_space<vmem>>, vector<16x16x64xf32>
    %99 = vector.shape_cast %98 : vector<16x16x64xf32> to vector<256x64xf32>
    %c0_140 = arith.constant 0 : index
    %c320 = arith.constant 320 : index
    %100 = vector.load %arg16[%c0_140, %c320] : memref<256x576xf32, #tpu.memory_space<vmem>>, vector<256x64xf32>
    tpu.vector_store %arg16[%c0_140, %c320], %99 {strides = array<i32>} : memref<256x576xf32, #tpu.memory_space<vmem>>, vector<256x64xf32>,
    %c2_141 = arith.constant 2 : index
    %c0_142 = arith.constant 0 : index
    %c0_143 = arith.constant 0 : index
    %101 = vector.load %arg13[%c2_141, %c0_142, %c0_143] : memref<18x18x64xf32, #tpu.memory_space<vmem>>, vector<16x16x64xf32>
    %102 = vector.shape_cast %101 : vector<16x16x64xf32> to vector<256x64xf32>
    %c0_144 = arith.constant 0 : index
    %c384 = arith.constant 384 : index
    %103 = vector.load %arg16[%c0_144, %c384] : memref<256x576xf32, #tpu.memory_space<vmem>>, vector<256x64xf32>
    tpu.vector_store %arg16[%c0_144, %c384], %102 {strides = array<i32>} : memref<256x576xf32, #tpu.memory_space<vmem>>, vector<256x64xf32>,
    %c2_145 = arith.constant 2 : index
    %c1_146 = arith.constant 1 : index
    %c0_147 = arith.constant 0 : index
    %104 = vector.load %arg13[%c2_145, %c1_146, %c0_147] : memref<18x18x64xf32, #tpu.memory_space<vmem>>, vector<16x16x64xf32>
    %105 = vector.shape_cast %104 : vector<16x16x64xf32> to vector<256x64xf32>
    %c0_148 = arith.constant 0 : index
    %c448 = arith.constant 448 : index
    %106 = vector.load %arg16[%c0_148, %c448] : memref<256x576xf32, #tpu.memory_space<vmem>>, vector<256x64xf32>
    tpu.vector_store %arg16[%c0_148, %c448], %105 {strides = array<i32>} : memref<256x576xf32, #tpu.memory_space<vmem>>, vector<256x64xf32>,
    %c2_149 = arith.constant 2 : index
    %c2_150 = arith.constant 2 : index
    %c0_151 = arith.constant 0 : index
    %107 = vector.load %arg13[%c2_149, %c2_150, %c0_151] : memref<18x18x64xf32, #tpu.memory_space<vmem>>, vector<16x16x64xf32>
    %108 = vector.shape_cast %107 : vector<16x16x64xf32> to vector<256x64xf32>
    %c0_152 = arith.constant 0 : index
    %c512 = arith.constant 512 : index
    %109 = vector.load %arg16[%c0_152, %c512] : memref<256x576xf32, #tpu.memory_space<vmem>>, vector<256x64xf32>
    tpu.vector_store %arg16[%c0_152, %c512], %108 {strides = array<i32>} : memref<256x576xf32, #tpu.memory_space<vmem>>, vector<256x64xf32>,
    %c0_153 = arith.constant 0 : index
    %c0_154 = arith.constant 0 : index
    %110 = vector.load %arg16[%c0_153, %c0_154] : memref<256x576xf32, #tpu.memory_space<vmem>>, vector<256x576xf32>
    %c0_155 = arith.constant 0 : index
    %c0_156 = arith.constant 0 : index
    %111 = vector.load %arg6[%c0_155, %c0_156] : memref<576x128xf32, #tpu.memory_space<vmem>>, vector<576x128xf32>
    %cst_157 = arith.constant dense<0.000000e+00> : vector<256x128xf32>
    %112 = tpu.matmul %110, %111, %cst_157 {dimension_numbers = #tpu.dot_dimension_numbers<[1], [0], [0], [1], [0, 0, 1, 1], [], []>} : vector<256x576xf32>, vector<576x128xf32>, vector<256x128xf32> -> vector<256x128xf32>
    %c0_158 = arith.constant 0 : index
    %c0_159 = arith.constant 0 : index
    %113 = vector.load %arg7[%c0_158, %c0_159] : memref<1x128xf32, #tpu.memory_space<vmem>>, vector<1x128xf32>
    %114 = vector.broadcast %113 : vector<1x128xf32> to vector<256x128xf32>
    %115 = arith.addf %112, %114 : vector<256x128xf32>
    %cst_160 = arith.constant 0.000000e+00 : f32
    %116 = vector.broadcast %cst_160 : f32 to vector<256x128xf32>
    %117 = arith.maximumf %115, %116 : vector<256x128xf32>
    %c0_161 = arith.constant 0 : index
    %c0_162 = arith.constant 0 : index
    %118 = vector.load %arg17[%c0_161, %c0_162] : memref<256x128xf32, #tpu.memory_space<vmem>>, vector<256x128xf32>
    tpu.vector_store %arg17[%c0_161, %c0_162], %117 {strides = array<i32>} : memref<256x128xf32, #tpu.memory_space<vmem>>, vector<256x128xf32>,
    %c0_163 = arith.constant 0 : index
    %c0_164 = arith.constant 0 : index
    %119 = vector.load %arg8[%c0_163, %c0_164] : memref<1x128xf32, #tpu.memory_space<vmem>>, vector<1x128xf32>
    %c0_165 = arith.constant 0 : index
    %c0_166 = arith.constant 0 : index
    %120 = vector.load %arg17[%c0_165, %c0_166] : memref<256x128xf32, #tpu.memory_space<vmem>>, vector<256x128xf32>
    %cst_167 = arith.constant dense<0.000000e+00> : vector<1x256xf32>
    %121 = tpu.matmul %119, %120, %cst_167 {dimension_numbers = #tpu.dot_dimension_numbers<[1], [1], [0], [0], [0, 0, 1, 0], [], []>} : vector<1x128xf32>, vector<256x128xf32>, vector<1x256xf32> -> vector<1x256xf32>
    %c0_168 = arith.constant 0 : index
    %c0_169 = arith.constant 0 : index
    %122 = vector.load %arg9[%c0_168, %c0_169] : memref<1x1xf32, #tpu.memory_space<vmem>>, vector<1x1xf32>
    %123 = vector.broadcast %122 : vector<1x1xf32> to vector<1x256xf32>
    %124 = arith.addf %121, %123 : vector<1x256xf32>
    %c0_170 = arith.constant 0 : index
    %c0_171 = arith.constant 0 : index
    %c0_172 = arith.constant 0 : index
    %125 = vector.load %arg10[%c0_170, %c0_171, %c0_172] : memref<1x1x256xf32, #tpu.memory_space<vmem>>, vector<1x1x256xf32>
    %126 = vector.shape_cast %125 : vector<1x1x256xf32> to vector<1x256xf32>
    %127 = vector.shape_cast %124 : vector<1x256xf32> to vector<1x1x256xf32>
    tpu.vector_store %arg10[%c0_170, %c0_171, %c0_172], %127 {strides = array<i32>} : memref<1x1x256xf32, #tpu.memory_space<vmem>>, vector<1x1x256xf32>,
    return
  }
  func.func @transform_0(%arg0: i32) -> (i32, i32, i32, i32) {
    %c0_i32 = arith.constant 0 : i32
    %c0_i32_0 = arith.constant 0 : i32
    %c0_i32_1 = arith.constant 0 : i32
    %c0_i32_2 = arith.constant 0 : i32
    return %arg0, %c0_i32, %c0_i32_0, %c0_i32_1 : i32, i32, i32, i32
  }
  func.func @transform_1(%arg0: i32) -> (i32, i32) {
    %c0_i32 = arith.constant 0 : i32
    %c0_i32_0 = arith.constant 0 : i32
    %c0_i32_1 = arith.constant 0 : i32
    return %c0_i32, %c0_i32_0 : i32, i32
  }
  func.func @transform_2(%arg0: i32) -> (i32, i32) {
    %c0_i32 = arith.constant 0 : i32
    %c0_i32_0 = arith.constant 0 : i32
    %c0_i32_1 = arith.constant 0 : i32
    return %c0_i32, %c0_i32_0 : i32, i32
  }
  func.func @transform_3(%arg0: i32) -> (i32, i32) {
    %c0_i32 = arith.constant 0 : i32
    %c0_i32_0 = arith.constant 0 : i32
    %c0_i32_1 = arith.constant 0 : i32
    return %c0_i32, %c0_i32_0 : i32, i32
  }
  func.func @transform_4(%arg0: i32) -> (i32, i32) {
    %c0_i32 = arith.constant 0 : i32
    %c0_i32_0 = arith.constant 0 : i32
    %c0_i32_1 = arith.constant 0 : i32
    return %c0_i32, %c0_i32_0 : i32, i32
  }
  func.func @transform_5(%arg0: i32) -> (i32, i32) {
    %c0_i32 = arith.constant 0 : i32
    %c0_i32_0 = arith.constant 0 : i32
    %c0_i32_1 = arith.constant 0 : i32
    return %c0_i32, %c0_i32_0 : i32, i32
  }
  func.func @transform_6(%arg0: i32) -> (i32, i32) {
    %c0_i32 = arith.constant 0 : i32
    %c0_i32_0 = arith.constant 0 : i32
    %c0_i32_1 = arith.constant 0 : i32
    return %c0_i32, %c0_i32_0 : i32, i32
  }
  func.func @transform_7(%arg0: i32) -> (i32, i32) {
    %c0_i32 = arith.constant 0 : i32
    %c0_i32_0 = arith.constant 0 : i32
    %c0_i32_1 = arith.constant 0 : i32
    return %c0_i32, %c0_i32_0 : i32, i32
  }
  func.func @transform_8(%arg0: i32) -> (i32, i32) {
    %c0_i32 = arith.constant 0 : i32
    %c0_i32_0 = arith.constant 0 : i32
    %c0_i32_1 = arith.constant 0 : i32
    return %c0_i32, %c0_i32_0 : i32, i32
  }
  func.func @transform_9(%arg0: i32) -> (i32, i32, i32) {
    %c0_i32 = arith.constant 0 : i32
    %c0_i32_0 = arith.constant 0 : i32
    %c0_i32_1 = arith.constant 0 : i32
    return %arg0, %c0_i32, %c0_i32_0 : i32, i32, i32
  }
}

</mosaic_0001>

<llo_original>
// kernel: segmentation_model_forward.1
$region0: #{segmentation_model_forward.1}
  #allocation0 [shape = 'u32[]', space=smem, size = 0x4, offset = 0x4, fixed_abs, tag = 'smem constant byte address 0x4 - core index']
  #allocation1 [shape = 'u32[72,128]{1,0:T(1,128)}', space=vmem, size = 0x9000, scoped, tag = 'internal scratch']
  #allocation2 [shape = 'f32[18,18,4]{2,1,0:T(8,128)}', space=vmem, size = 0x36000, scoped, tag = 'scratch operand']
  #allocation3 [shape = 'f32[18,18,32]{2,1,0:T(8,128)}', space=vmem, size = 0x36000, scoped, tag = 'scratch operand']
  #allocation4 [shape = 'f32[18,18,64]{2,1,0:T(8,128)}', space=vmem, size = 0x36000, scoped, tag = 'scratch operand']
  #allocation5 [shape = 'f32[256,36]{1,0:T(8,128)}', space=vmem, size = 0x20000, scoped, tag = 'scratch operand']
  #allocation6 [shape = 'f32[256,288]{1,0:T(8,128)}', space=vmem, size = 0x60000, scoped, tag = 'scratch operand']
  #allocation7 [shape = 'f32[256,576]{1,0:T(8,128)}', space=vmem, size = 0xa0000, scoped, tag = 'scratch operand']
  #allocation8 [shape = 'f32[256,128]{1,0:T(8,128)}', space=vmem, size = 0x20000, scoped, tag = 'scratch operand']
  #allocation9 [shape = 'f32[1,1]{1,0:T(1,128)S(1)}', space=vmem, size = 0x200, scoped, tag = 'scoped memory for segmentation_model_forward.1']
  %s0 = inlined_call_operand.vmem [shape: f32[2,16,16,4], index: 0, kind: input, shape index: {}]
  %s1 = inlined_call_operand.vmem [shape: f32[36,32], index: 1, kind: input, shape index: {}]
  %s2 = inlined_call_operand.vmem [shape: f32[1,32], index: 2, kind: input, shape index: {}]
  %s3 = inlined_call_operand.hbm [shape: f32[288,64], index: 3, kind: input, shape index: {}]
  %s4 = inlined_call_operand.vmem [shape: f32[1,64], index: 4, kind: input, shape index: {}]
  %s5 = inlined_call_operand.vmem [shape: f32[576,128], index: 5, kind: input, shape index: {}]
  %s6 = inlined_call_operand.vmem [shape: f32[1,128], index: 6, kind: input, shape index: {}]
  %s7 = inlined_call_operand.vmem [shape: f32[1,128], index: 7, kind: input, shape index: {}]
  %s8 = inlined_call_operand.<no memory space> [shape: f32[1,1], index: 8, kind: input, shape index: {}]
  %s9 = inlined_call_operand.vmem [shape: f32[2,1,256], index: 9, kind: output, shape index: {}]
  %s10 = sld [smem:[#allocation0]]
  $region73: #{segmentation_model_forward.1} parent=0
    _
  %s12 = ssub.s32 1, %s10
  %s13 = scalar_select 0, %s12, %s10
  %v14 = vstv %s8
  %15 = vst [vmem:[#allocation9] sm:$0x1] %v14
  $region1: #{segmentation_model_forward.1} parent=0
    #allocation10 [shape = 'u8[147456]{0}', space=vmem, size = 0x24000, scoped, tag = 'input window, operand 3, single buffered']
    #allocation11 [shape = 's32[2]{0}', space=sflag, size = 0x8, scoped, tag = 'scoped memory for segmentation_model_forward.1']
    %16 = vsyncpa [#allocation11], 0
    loop: start=0, step=1, limit=4
    $region2: #{segmentation_model_forward.1} parent=1 // loop_pre_header
      _
    $region3: #{segmentation_model_forward.1} parent=1 // loop_header
      %s18 = sphi 0, %s22
      %p19 = scmp.ge.s32.totalorder %s18, 4
      %s28 = sphi 0, %s30
      %s31 = sphi 0, %s28
      %s32 = sphi 0, %s31
      %s48 = sphi 0, %s32
      %s52 = sphi 0, %s52
      %s54 = sphi 0, %s52
      %s55 = sphi 0, %s54
      %s69 = sphi 0, %s55
      %s73 = sphi 0, %s73
      %s75 = sphi 0, %s73
      %s76 = sphi 0, %s75
      %s90 = sphi 0, %s76
      %s94 = sphi 0, %s94
      %s96 = sphi 0, %s94
      %s97 = sphi 0, %s96
      %s111 = sphi 0, %s97
      %s115 = sphi 0, %s115
      %s117 = sphi 0, %s115
      %s118 = sphi 0, %s117
      %s132 = sphi 0, %s118
      %s136 = sphi 0, %s136
      %s138 = sphi 0, %s136
      %s139 = sphi 0, %s138
      %s153 = sphi 0, %s139
      %s157 = sphi 0, %s157
      %s159 = sphi 0, %s157
      %s160 = sphi 0, %s159
      %s174 = sphi 0, %s160
      %s178 = sphi 0, %s178
      %s180 = sphi 0, %s178
      %s181 = sphi 0, %s180
      %s195 = sphi 0, %s181
      %s199 = sphi 0, %s199
      %s201 = sphi 0, %s199
      %s202 = sphi 0, %s201
      %s216 = sphi 0, %s202
      %s222 = sphi 0, %s224
      %s225 = sphi 0, %s222
      %s226 = sphi 0, %s225
      %s242 = sphi 0, %s226
    $region4: #{segmentation_model_forward.1} parent=1 // loop_header_branch
      %21 = sbr.rel (%p19) target = $region8
    $region5: #{segmentation_model_forward.1} parent=1 // loop_body
      %s23 = ssub.s32 %s18, 1
      %s24 = ssub.s32 %s18, 2
      %s25 = sadd.s32 %s18, 1
      %s26 = ssub.s32 %s18, %s25
      %p27 = scmp.eq.s32.totalorder %s26, 0
      %s29 = sadd.s32 %s28, 1
      %s30 = scalar_select %p27, %s28, %s29
      %p33 = pneg %p27
      %p34 = scmp.eq.s32.totalorder %s18, 1
      %p35 = por %p33, %p34
      %p36 = scmp.ne.s32.totalorder %s28, %s31
      %p37 = scmp.eq.s32.totalorder %s18, 0
      %p38 = por %p36, %p37
      %p39 = scmp.ne.s32.totalorder %s28, %s31
      %p40 = scmp.eq.s32.totalorder %s23, 1
      %p41 = por %p39, %p40
      %p42 = scmp.ne.s32.totalorder %s31, %s32
      %p43 = scmp.eq.s32.totalorder %s23, 0
      %p44 = por %p42, %p43
      %p45 = scmp.ne.s32.totalorder %s31, %s32
      %p46 = scmp.eq.s32.totalorder %s24, 1
      %p47 = por %p45, %p46
      %p49 = scmp.ne.s32.totalorder %s32, %s48
      %p50 = scmp.eq.s32.totalorder %s24, 0
      %p51 = por %p49, %p50
      %s53 = sadd.s32 %s52, 1
      %p56 = scmp.eq.s32.totalorder %s18, 1
      %p57 = scmp.ne.s32.totalorder %s52, %s54
      %p58 = scmp.eq.s32.totalorder %s18, 0
      %p59 = por %p57, %p58
      %p60 = scmp.ne.s32.totalorder %s52, %s54
      %p61 = scmp.eq.s32.totalorder %s23, 1
      %p62 = por %p60, %p61
      %p63 = scmp.ne.s32.totalorder %s54, %s55
      %p64 = scmp.eq.s32.totalorder %s23, 0
      %p65 = por %p63, %p64
      %p66 = scmp.ne.s32.totalorder %s54, %s55
      %p67 = scmp.eq.s32.totalorder %s24, 1
      %p68 = por %p66, %p67
      %p70 = scmp.ne.s32.totalorder %s55, %s69
      %p71 = scmp.eq.s32.totalorder %s24, 0
      %p72 = por %p70, %p71
      %s74 = sadd.s32 %s73, 1
      %p77 = scmp.eq.s32.totalorder %s18, 1
      %p78 = scmp.ne.s32.totalorder %s73, %s75
      %p79 = scmp.eq.s32.totalorder %s18, 0
      %p80 = por %p78, %p79
      %p81 = scmp.ne.s32.totalorder %s73, %s75
      %p82 = scmp.eq.s32.totalorder %s23, 1
      %p83 = por %p81, %p82
      %p84 = scmp.ne.s32.totalorder %s75, %s76
      %p85 = scmp.eq.s32.totalorder %s23, 0
      %p86 = por %p84, %p85
      %p87 = scmp.ne.s32.totalorder %s75, %s76
      %p88 = scmp.eq.s32.totalorder %s24, 1
      %p89 = por %p87, %p88
      %p91 = scmp.ne.s32.totalorder %s76, %s90
      %p92 = scmp.eq.s32.totalorder %s24, 0
      %p93 = por %p91, %p92
      %s95 = sadd.s32 %s94, 1
      %p98 = scmp.eq.s32.totalorder %s18, 1
      %p99 = scmp.ne.s32.totalorder %s94, %s96
      %p100 = scmp.eq.s32.totalorder %s18, 0
      %p101 = por %p99, %p100
      %p102 = scmp.ne.s32.totalorder %s94, %s96
      %p103 = scmp.eq.s32.totalorder %s23, 1
      %p104 = por %p102, %p103
      %p105 = scmp.ne.s32.totalorder %s96, %s97
      %p106 = scmp.eq.s32.totalorder %s23, 0
      %p107 = por %p105, %p106
      %p108 = scmp.ne.s32.totalorder %s96, %s97
      %p109 = scmp.eq.s32.totalorder %s24, 1
      %p110 = por %p108, %p109
      %p112 = scmp.ne.s32.totalorder %s97, %s111
      %p113 = scmp.eq.s32.totalorder %s24, 0
      %p114 = por %p112, %p113
      %s116 = sadd.s32 %s115, 1
      %p119 = scmp.eq.s32.totalorder %s18, 1
      %p120 = scmp.ne.s32.totalorder %s115, %s117
      %p121 = scmp.eq.s32.totalorder %s18, 0
      %p122 = por %p120, %p121
      %p123 = scmp.ne.s32.totalorder %s115, %s117
      %p124 = scmp.eq.s32.totalorder %s23, 1
      %p125 = por %p123, %p124
      %p126 = scmp.ne.s32.totalorder %s117, %s118
      %p127 = scmp.eq.s32.totalorder %s23, 0
      %p128 = por %p126, %p127
      %p129 = scmp.ne.s32.totalorder %s117, %s118
      %p130 = scmp.eq.s32.totalorder %s24, 1
      %p131 = por %p129, %p130
      %p133 = scmp.ne.s32.totalorder %s118, %s132
      %p134 = scmp.eq.s32.totalorder %s24, 0
      %p135 = por %p133, %p134
      %s137 = sadd.s32 %s136, 1
      %p140 = scmp.eq.s32.totalorder %s18, 1
      %p141 = scmp.ne.s32.totalorder %s136, %s138
      %p142 = scmp.eq.s32.totalorder %s18, 0
      %p143 = por %p141, %p142
      %p144 = scmp.ne.s32.totalorder %s136, %s138
      %p145 = scmp.eq.s32.totalorder %s23, 1
      %p146 = por %p144, %p145
      %p147 = scmp.ne.s32.totalorder %s138, %s139
      %p148 = scmp.eq.s32.totalorder %s23, 0
      %p149 = por %p147, %p148
      %p150 = scmp.ne.s32.totalorder %s138, %s139
      %p151 = scmp.eq.s32.totalorder %s24, 1
      %p152 = por %p150, %p151
      %p154 = scmp.ne.s32.totalorder %s139, %s153
      %p155 = scmp.eq.s32.totalorder %s24, 0
      %p156 = por %p154, %p155
      %s158 = sadd.s32 %s157, 1
      %p161 = scmp.eq.s32.totalorder %s18, 1
      %p162 = scmp.ne.s32.totalorder %s157, %s159
      %p163 = scmp.eq.s32.totalorder %s18, 0
      %p164 = por %p162, %p163
      %p165 = scmp.ne.s32.totalorder %s157, %s159
      %p166 = scmp.eq.s32.totalorder %s23, 1
      %p167 = por %p165, %p166
      %p168 = scmp.ne.s32.totalorder %s159, %s160
      %p169 = scmp.eq.s32.totalorder %s23, 0
      %p170 = por %p168, %p169
      %p171 = scmp.ne.s32.totalorder %s159, %s160
      %p172 = scmp.eq.s32.totalorder %s24, 1
      %p173 = por %p171, %p172
      %p175 = scmp.ne.s32.totalorder %s160, %s174
      %p176 = scmp.eq.s32.totalorder %s24, 0
      %p177 = por %p175, %p176
      %s179 = sadd.s32 %s178, 1
      %p182 = scmp.eq.s32.totalorder %s18, 1
      %p183 = scmp.ne.s32.totalorder %s178, %s180
      %p184 = scmp.eq.s32.totalorder %s18, 0
      %p185 = por %p183, %p184
      %p186 = scmp.ne.s32.totalorder %s178, %s180
      %p187 = scmp.eq.s32.totalorder %s23, 1
      %p188 = por %p186, %p187
      %p189 = scmp.ne.s32.totalorder %s180, %s181
      %p190 = scmp.eq.s32.totalorder %s23, 0
      %p191 = por %p189, %p190
      %p192 = scmp.ne.s32.totalorder %s180, %s181
      %p193 = scmp.eq.s32.totalorder %s24, 1
      %p194 = por %p192, %p193
      %p196 = scmp.ne.s32.totalorder %s181, %s195
      %p197 = scmp.eq.s32.totalorder %s24, 0
      %p198 = por %p196, %p197
      %s200 = sadd.s32 %s199, 1
      %p203 = scmp.eq.s32.totalorder %s18, 1
      %p204 = scmp.ne.s32.totalorder %s199, %s201
      %p205 = scmp.eq.s32.totalorder %s18, 0
      %p206 = por %p204, %p205
      %p207 = scmp.ne.s32.totalorder %s199, %s201
      %p208 = scmp.eq.s32.totalorder %s23, 1
      %p209 = por %p207, %p208
      %p210 = scmp.ne.s32.totalorder %s201, %s202
      %p211 = scmp.eq.s32.totalorder %s23, 0
      %p212 = por %p210, %p211
      %p213 = scmp.ne.s32.totalorder %s201, %s202
      %p214 = scmp.eq.s32.totalorder %s24, 1
      %p215 = por %p213, %p214
      %p217 = scmp.ne.s32.totalorder %s202, %s216
      %p218 = scmp.eq.s32.totalorder %s24, 0
      %p219 = por %p217, %p218
      %s220 = ssub.s32 %s18, %s25
      %p221 = scmp.eq.s32.totalorder %s220, 0
      %s223 = sadd.s32 %s222, 1
      %s224 = scalar_select %p221, %s222, %s223
      %p227 = pneg %p221
      %p228 = scmp.eq.s32.totalorder %s18, 1
      %p229 = por %p227, %p228
      %p230 = scmp.ne.s32.totalorder %s222, %s225
      %p231 = scmp.eq.s32.totalorder %s18, 0
      %p232 = por %p230, %p231
      %p233 = scmp.ne.s32.totalorder %s222, %s225
      %p234 = scmp.eq.s32.totalorder %s23, 1
      %p235 = por %p233, %p234
      %p236 = scmp.ne.s32.totalorder %s225, %s226
      %p237 = scmp.eq.s32.totalorder %s23, 0
      %p238 = por %p236, %p237
      %p239 = scmp.ne.s32.totalorder %s225, %s226
      %p240 = scmp.eq.s32.totalorder %s24, 1
      %p241 = por %p239, %p240
      %p243 = scmp.ne.s32.totalorder %s226, %s242
      %p244 = scmp.eq.s32.totalorder %s24, 0
      %p245 = por %p243, %p244
      %p246 = scmp.le.s32.totalorder 1, %s18
      %p247 = scmp.lt.s32.totalorder %s18, 3
      %p248 = pnand %p246, %p247
      %p249 = pneg %p248
      // Predicated region
      $region9: #{segmentation_model_forward.1} parent=5 // pred_check
        _
      $region10: #{segmentation_model_forward.1} parent=5 // pred_check_branch
        %251 = sbr.rel (%p248) target = $region12
      $region11: #{segmentation_model_forward.1} parent=5 // pred_region
        %s252 = ssub.s32 %s18, 1
        // Predicated region
        $region13: #{segmentation_model_forward.1} parent=11 // pred_check
          %p253 = pneg %p65
        $region14: #{segmentation_model_forward.1} parent=11 // pred_check_branch
          %255 = sbr.rel (%p253) target = $region16
        $region15: #{segmentation_model_forward.1} parent=11 // pred_region
          _
        $region16: #{segmentation_model_forward.1} parent=11 // pred_fallthru
          _
        // Predicated region
        $region17: #{segmentation_model_forward.1} parent=11 // pred_check
          %p256 = pneg %p86
        $region18: #{segmentation_model_forward.1} parent=11 // pred_check_branch
          %258 = sbr.rel (%p256) target = $region20
        $region19: #{segmentation_model_forward.1} parent=11 // pred_region
          _
        $region20: #{segmentation_model_forward.1} parent=11 // pred_fallthru
          _
        // Predicated region
        $region21: #{segmentation_model_forward.1} parent=11 // pred_check
          %p259 = pneg %p107
        $region22: #{segmentation_model_forward.1} parent=11 // pred_check_branch
          %261 = sbr.rel (%p259) target = $region24
        $region23: #{segmentation_model_forward.1} parent=11 // pred_region
          %263 = vsyncadd [#allocation11], 0
          %s264 = sshll.u32 %s3, 4
          %s265 = int_to_ptr.hbm [resolvable:$true] %s264
          %s266 = sshll.u32 [#allocation10], 4
          %s267 = int_to_ptr.vmem [resolvable:$true] %s266
          %272 = dma.hbm_to_vmem [thread:$0]  %s265, 4608, %s267, [#allocation11], 128, 128, 8
        $region24: #{segmentation_model_forward.1} parent=11 // pred_fallthru
          _
        // Predicated region
        $region25: #{segmentation_model_forward.1} parent=11 // pred_check
          %p273 = pneg %p128
        $region26: #{segmentation_model_forward.1} parent=11 // pred_check_branch
          %275 = sbr.rel (%p273) target = $region28
        $region27: #{segmentation_model_forward.1} parent=11 // pred_region
          _
        $region28: #{segmentation_model_forward.1} parent=11 // pred_fallthru
          _
        // Predicated region
        $region29: #{segmentation_model_forward.1} parent=11 // pred_check
          %p276 = pneg %p149
        $region30: #{segmentation_model_forward.1} parent=11 // pred_check_branch
          %278 = sbr.rel (%p276) target = $region32
        $region31: #{segmentation_model_forward.1} parent=11 // pred_region
          _
        $region32: #{segmentation_model_forward.1} parent=11 // pred_fallthru
          _
        // Predicated region
        $region33: #{segmentation_model_forward.1} parent=11 // pred_check
          %p279 = pneg %p170
        $region34: #{segmentation_model_forward.1} parent=11 // pred_check_branch
          %281 = sbr.rel (%p279) target = $region36
        $region35: #{segmentation_model_forward.1} parent=11 // pred_region
          _
        $region36: #{segmentation_model_forward.1} parent=11 // pred_fallthru
          _
        // Predicated region
        $region37: #{segmentation_model_forward.1} parent=11 // pred_check
          %p282 = pneg %p191
        $region38: #{segmentation_model_forward.1} parent=11 // pred_check_branch
          %284 = sbr.rel (%p282) target = $region40
        $region39: #{segmentation_model_forward.1} parent=11 // pred_region
          _
        $region40: #{segmentation_model_forward.1} parent=11 // pred_fallthru
          _
        // Predicated region
        $region41: #{segmentation_model_forward.1} parent=11 // pred_check
          %p285 = pneg %p212
        $region42: #{segmentation_model_forward.1} parent=11 // pred_check_branch
          %287 = sbr.rel (%p285) target = $region44
        $region43: #{segmentation_model_forward.1} parent=11 // pred_region
          _
        $region44: #{segmentation_model_forward.1} parent=11 // pred_fallthru
          _
      $region12: #{segmentation_model_forward.1} parent=5 // pred_fallthru
        _
      %p288 = scmp.lt.s32.totalorder %s18, 2
      // Predicated region
      $region45: #{segmentation_model_forward.1} parent=5 // pred_check
        %p289 = pneg %p288
      $region46: #{segmentation_model_forward.1} parent=5 // pred_check_branch
        %291 = sbr.rel (%p289) target = $region48
      $region47: #{segmentation_model_forward.1} parent=5 // pred_region
        // Predicated region
        $region49: #{segmentation_model_forward.1} parent=47 // pred_check
          %p292 = pneg %p38
        $region50: #{segmentation_model_forward.1} parent=47 // pred_check_branch
          %294 = sbr.rel (%p292) target = $region52
        $region51: #{segmentation_model_forward.1} parent=47 // pred_region
          %p295 = scmp.lt.s32.totalorder %s18, 1
          %s296 = scalar_select %p295, %s18, 1
          %s297 = smul.addr %s296, 32
          %s298 = smul.addr %s297, 8
          %s299 = scalar_lea.vmem %s0, %s298
        $region52: #{segmentation_model_forward.1} parent=47 // pred_fallthru
          _
      $region48: #{segmentation_model_forward.1} parent=5 // pred_fallthru
        _
      %p300 = scmp.le.s32.totalorder 1, %s18
      %p301 = scmp.lt.s32.totalorder %s18, 3
      %p302 = pnand %p300, %p301
      %p303 = pneg %p302
      // Predicated region
      $region53: #{segmentation_model_forward.1} parent=5 // pred_check
        _
      $region54: #{segmentation_model_forward.1} parent=5 // pred_check_branch
        %305 = sbr.rel (%p302) target = $region56
      $region55: #{segmentation_model_forward.1} parent=5 // pred_region
        %s306 = ssub.s32 %s18, 1
        // Predicated region
        $region57: #{segmentation_model_forward.1} parent=55 // pred_check
          %p307 = pneg %p107
        $region58: #{segmentation_model_forward.1} parent=55 // pred_check_branch
          %309 = sbr.rel (%p307) target = $region60
        $region59: #{segmentation_model_forward.1} parent=55 // pred_region
          %311 = dma.done [#allocation11], 4608
        $region60: #{segmentation_model_forward.1} parent=55 // pred_fallthru
          _
        %p312 = scmp.lt.s32.totalorder %s23, 1
        %s313 = scalar_select %p312, %s23, 1
        %s314 = smul.addr %s313, 32
        %s315 = smul.addr %s314, 8
        %s316 = scalar_lea.vmem %s0, %s315
        %p317 = pneg %p44
        %p318 = pneg %p41
        %p319 = pneg %p65
        %p320 = pneg %p62
        %p321 = pneg %p86
        %p322 = pneg %p83
        %p323 = pneg %p107
        %p324 = pneg %p104
        %p325 = pneg %p128
        %p326 = pneg %p125
        %p327 = pneg %p149
        %p328 = pneg %p146
        %p329 = pneg %p170
        %p330 = pneg %p167
        %p331 = pneg %p191
        %p332 = pneg %p188
        %p333 = pneg %p212
        %p334 = pneg %p209
        %p335 = pneg %p238
        %p336 = pneg %p235
        %p337 = scmp.lt.s32.totalorder %s23, 1
        %s338 = scalar_select %p337, %s23, 1
        %s339 = smul.addr %s338, 2
        %s340 = scalar_lea.vmem %s9, %s339
        %p341 = scmp.lt.s32.totalorder %s23, 1
        %s342 = scalar_select %p341, %s23, 1
        %s343 = smul.addr %s342, 32
        %s344 = smul.addr %s343, 8
        %s345 = scalar_lea.vmem %s0, %s344
        %p346 = scmp.lt.s32.totalorder %s23, 1
        %s347 = scalar_select %p346, %s23, 1
        %s348 = smul.addr %s347, 2
        %s349 = scalar_lea.vmem %s9, %s348
        %vm350 = vcmask 31744
        %351 = vst.msk [vmem:[#allocation2] sm:$0xff] %vm350, 0.0
        %352 = vst.msk [vmem:[#allocation2 + $0x8] sm:$0xff] %vm350, 0.0
        %vm353 = vcmask 25600
        %354 = vst.msk [vmem:[#allocation2 + $0x10] sm:$0x3] %vm353, 0.0
        %355 = vst.msk [vmem:[#allocation2 + $0x18] sm:$0xff] %vm350, 0.0
        %356 = vst.msk [vmem:[#allocation2 + $0x20] sm:$0xff] %vm350, 0.0
        %357 = vst.msk [vmem:[#allocation2 + $0x28] sm:$0x3] %vm353, 0.0
        %358 = vst.msk [vmem:[#allocation2 + $0x30] sm:$0xff] %vm350, 0.0
        %359 = vst.msk [vmem:[#allocation2 + $0x38] sm:$0xff] %vm350, 0.0
        %360 = vst.msk [vmem:[#allocation2 + $0x40] sm:$0x3] %vm353, 0.0
        %361 = vst.msk [vmem:[#allocation2 + $0x48] sm:$0xff] %vm350, 0.0
        %362 = vst.msk [vmem:[#allocation2 + $0x50] sm:$0xff] %vm350, 0.0
        %363 = vst.msk [vmem:[#allocation2 + $0x58] sm:$0x3] %vm353, 0.0
        %364 = vst.msk [vmem:[#allocation2 + $0x60] sm:$0xff] %vm350, 0.0
        %365 = vst.msk [vmem:[#allocation2 + $0x68] sm:$0xff] %vm350, 0.0
        %366 = vst.msk [vmem:[#allocation2 + $0x70] sm:$0x3] %vm353, 0.0
        %367 = vst.msk [vmem:[#allocation2 + $0x78] sm:$0xff] %vm350, 0.0
        %368 = vst.msk [vmem:[#allocation2 + $0x80] sm:$0xff] %vm350, 0.0
        %369 = vst.msk [vmem:[#allocation2 + $0x88] sm:$0x3] %vm353, 0.0
        %370 = vst.msk [vmem:[#allocation2 + $0x90] sm:$0xff] %vm350, 0.0
        %371 = vst.msk [vmem:[#allocation2 + $0x98] sm:$0xff] %vm350, 0.0
        %372 = vst.msk [vmem:[#allocation2 + $0xa0] sm:$0x3] %vm353, 0.0
        %373 = vst.msk [vmem:[#allocation2 + $0xa8] sm:$0xff] %vm350, 0.0
        %374 = vst.msk [vmem:[#allocation2 + $0xb0] sm:$0xff] %vm350, 0.0
        %375 = vst.msk [vmem:[#allocation2 + $0xb8] sm:$0x3] %vm353, 0.0
        %376 = vst.msk [vmem:[#allocation2 + $0xc0] sm:$0xff] %vm350, 0.0
        %377 = vst.msk [vmem:[#allocation2 + $0xc8] sm:$0xff] %vm350, 0.0
        %378 = vst.msk [vmem:[#allocation2 + $0xd0] sm:$0x3] %vm353, 0.0
        %379 = vst.msk [vmem:[#allocation2 + $0xd8] sm:$0xff] %vm350, 0.0
        %380 = vst.msk [vmem:[#allocation2 + $0xe0] sm:$0xff] %vm350, 0.0
        %381 = vst.msk [vmem:[#allocation2 + $0xe8] sm:$0x3] %vm353, 0.0
        %382 = vst.msk [vmem:[#allocation2 + $0xf0] sm:$0xff] %vm350, 0.0
        %383 = vst.msk [vmem:[#allocation2 + $0xf8] sm:$0xff] %vm350, 0.0
        %384 = vst.msk [vmem:[#allocation2 + $0x100] sm:$0x3] %vm353, 0.0
        %385 = vst.msk [vmem:[#allocation2 + $0x108] sm:$0xff] %vm350, 0.0
        %386 = vst.msk [vmem:[#allocation2 + $0x110] sm:$0xff] %vm350, 0.0
        %387 = vst.msk [vmem:[#allocation2 + $0x118] sm:$0x3] %vm353, 0.0
        %388 = vst.msk [vmem:[#allocation2 + $0x120] sm:$0xff] %vm350, 0.0
        %389 = vst.msk [vmem:[#allocation2 + $0x128] sm:$0xff] %vm350, 0.0
        %390 = vst.msk [vmem:[#allocation2 + $0x130] sm:$0x3] %vm353, 0.0
        %391 = vst.msk [vmem:[#allocation2 + $0x138] sm:$0xff] %vm350, 0.0
        %392 = vst.msk [vmem:[#allocation2 + $0x140] sm:$0xff] %vm350, 0.0
        %393 = vst.msk [vmem:[#allocation2 + $0x148] sm:$0x3] %vm353, 0.0
        %394 = vst.msk [vmem:[#allocation2 + $0x150] sm:$0xff] %vm350, 0.0
        %395 = vst.msk [vmem:[#allocation2 + $0x158] sm:$0xff] %vm350, 0.0
        %396 = vst.msk [vmem:[#allocation2 + $0x160] sm:$0x3] %vm353, 0.0
        %397 = vst.msk [vmem:[#allocation2 + $0x168] sm:$0xff] %vm350, 0.0
        %398 = vst.msk [vmem:[#allocation2 + $0x170] sm:$0xff] %vm350, 0.0
        %399 = vst.msk [vmem:[#allocation2 + $0x178] sm:$0x3] %vm353, 0.0
        %400 = vst.msk [vmem:[#allocation2 + $0x180] sm:$0xff] %vm350, 0.0
        %401 = vst.msk [vmem:[#allocation2 + $0x188] sm:$0xff] %vm350, 0.0
        %402 = vst.msk [vmem:[#allocation2 + $0x190] sm:$0x3] %vm353, 0.0
        %403 = vst.msk [vmem:[#allocation2 + $0x198] sm:$0xff] %vm350, 0.0
        %404 = vst.msk [vmem:[#allocation2 + $0x1a0] sm:$0xff] %vm350, 0.0
        %405 = vst.msk [vmem:[#allocation2 + $0x1a8] sm:$0x3] %vm353, 0.0
        %vm406 = vcmask 261120
        %407 = vst.msk [vmem:[#allocation3] sm:$0xff] %vm406, 0.0
        %408 = vst.msk [vmem:[#allocation3 + $0x8] sm:$0xff] %vm406, 0.0
        %vm409 = vcmask 254976
        %410 = vst.msk [vmem:[#allocation3 + $0x10] sm:$0x3] %vm409, 0.0
        %411 = vst.msk [vmem:[#allocation3 + $0x18] sm:$0xff] %vm406, 0.0
        %412 = vst.msk [vmem:[#allocation3 + $0x20] sm:$0xff] %vm406, 0.0
        %413 = vst.msk [vmem:[#allocation3 + $0x28] sm:$0x3] %vm409, 0.0
        %414 = vst.msk [vmem:[#allocation3 + $0x30] sm:$0xff] %vm406, 0.0
        %415 = vst.msk [vmem:[#allocation3 + $0x38] sm:$0xff] %vm406, 0.0
        %416 = vst.msk [vmem:[#allocation3 + $0x40] sm:$0x3] %vm409, 0.0
        %417 = vst.msk [vmem:[#allocation3 + $0x48] sm:$0xff] %vm406, 0.0
        %418 = vst.msk [vmem:[#allocation3 + $0x50] sm:$0xff] %vm406, 0.0
        %419 = vst.msk [vmem:[#allocation3 + $0x58] sm:$0x3] %vm409, 0.0
        %420 = vst.msk [vmem:[#allocation3 + $0x60] sm:$0xff] %vm406, 0.0
        %421 = vst.msk [vmem:[#allocation3 + $0x68] sm:$0xff] %vm406, 0.0
        %422 = vst.msk [vmem:[#allocation3 + $0x70] sm:$0x3] %vm409, 0.0
        %423 = vst.msk [vmem:[#allocation3 + $0x78] sm:$0xff] %vm406, 0.0
        %424 = vst.msk [vmem:[#allocation3 + $0x80] sm:$0xff] %vm406, 0.0
        %425 = vst.msk [vmem:[#allocation3 + $0x88] sm:$0x3] %vm409, 0.0
        %426 = vst.msk [vmem:[#allocation3 + $0x90] sm:$0xff] %vm406, 0.0
        %427 = vst.msk [vmem:[#allocation3 + $0x98] sm:$0xff] %vm406, 0.0
        %428 = vst.msk [vmem:[#allocation3 + $0xa0] sm:$0x3] %vm409, 0.0
        %429 = vst.msk [vmem:[#allocation3 + $0xa8] sm:$0xff] %vm406, 0.0
        %430 = vst.msk [vmem:[#allocation3 + $0xb0] sm:$0xff] %vm406, 0.0
        %431 = vst.msk [vmem:[#allocation3 + $0xb8] sm:$0x3] %vm409, 0.0
        %432 = vst.msk [vmem:[#allocation3 + $0xc0] sm:$0xff] %vm406, 0.0
        %433 = vst.msk [vmem:[#allocation3 + $0xc8] sm:$0xff] %vm406, 0.0
        %434 = vst.msk [vmem:[#allocation3 + $0xd0] sm:$0x3] %vm409, 0.0
        %435 = vst.msk [vmem:[#allocation3 + $0xd8] sm:$0xff] %vm406, 0.0
        %436 = vst.msk [vmem:[#allocation3 + $0xe0] sm:$0xff] %vm406, 0.0
        %437 = vst.msk [vmem:[#allocation3 + $0xe8] sm:$0x3] %vm409, 0.0
        %438 = vst.msk [vmem:[#allocation3 + $0xf0] sm:$0xff] %vm406, 0.0
        %439 = vst.msk [vmem:[#allocation3 + $0xf8] sm:$0xff] %vm406, 0.0
        %440 = vst.msk [vmem:[#allocation3 + $0x100] sm:$0x3] %vm409, 0.0
        %441 = vst.msk [vmem:[#allocation3 + $0x108] sm:$0xff] %vm406, 0.0
        %442 = vst.msk [vmem:[#allocation3 + $0x110] sm:$0xff] %vm406, 0.0
        %443 = vst.msk [vmem:[#allocation3 + $0x118] sm:$0x3] %vm409, 0.0
        %444 = vst.msk [vmem:[#allocation3 + $0x120] sm:$0xff] %vm406, 0.0
        %445 = vst.msk [vmem:[#allocation3 + $0x128] sm:$0xff] %vm406, 0.0
        %446 = vst.msk [vmem:[#allocation3 + $0x130] sm:$0x3] %vm409, 0.0
        %447 = vst.msk [vmem:[#allocation3 + $0x138] sm:$0xff] %vm406, 0.0
        %448 = vst.msk [vmem:[#allocation3 + $0x140] sm:$0xff] %vm406, 0.0
        %449 = vst.msk [vmem:[#allocation3 + $0x148] sm:$0x3] %vm409, 0.0
        %450 = vst.msk [vmem:[#allocation3 + $0x150] sm:$0xff] %vm406, 0.0
        %451 = vst.msk [vmem:[#allocation3 + $0x158] sm:$0xff] %vm406, 0.0
        %452 = vst.msk [vmem:[#allocation3 + $0x160] sm:$0x3] %vm409, 0.0
        %453 = vst.msk [vmem:[#allocation3 + $0x168] sm:$0xff] %vm406, 0.0
        %454 = vst.msk [vmem:[#allocation3 + $0x170] sm:$0xff] %vm406, 0.0
        %455 = vst.msk [vmem:[#allocation3 + $0x178] sm:$0x3] %vm409, 0.0
        %456 = vst.msk [vmem:[#allocation3 + $0x180] sm:$0xff] %vm406, 0.0
        %457 = vst.msk [vmem:[#allocation3 + $0x188] sm:$0xff] %vm406, 0.0
        %458 = vst.msk [vmem:[#allocation3 + $0x190] sm:$0x3] %vm409, 0.0
        %459 = vst.msk [vmem:[#allocation3 + $0x198] sm:$0xff] %vm406, 0.0
        %460 = vst.msk [vmem:[#allocation3 + $0x1a0] sm:$0xff] %vm406, 0.0
        %461 = vst.msk [vmem:[#allocation3 + $0x1a8] sm:$0x3] %vm409, 0.0
        %vm462 = vcmask 523264
        %463 = vst.msk [vmem:[#allocation4] sm:$0xff] %vm462, 0.0
        %464 = vst.msk [vmem:[#allocation4 + $0x8] sm:$0xff] %vm462, 0.0
        %vm465 = vcmask 517120
        %466 = vst.msk [vmem:[#allocation4 + $0x10] sm:$0x3] %vm465, 0.0
        %467 = vst.msk [vmem:[#allocation4 + $0x18] sm:$0xff] %vm462, 0.0
        %468 = vst.msk [vmem:[#allocation4 + $0x20] sm:$0xff] %vm462, 0.0
        %469 = vst.msk [vmem:[#allocation4 + $0x28] sm:$0x3] %vm465, 0.0
        %470 = vst.msk [vmem:[#allocation4 + $0x30] sm:$0xff] %vm462, 0.0
        %471 = vst.msk [vmem:[#allocation4 + $0x38] sm:$0xff] %vm462, 0.0
        %472 = vst.msk [vmem:[#allocation4 + $0x40] sm:$0x3] %vm465, 0.0
        %473 = vst.msk [vmem:[#allocation4 + $0x48] sm:$0xff] %vm462, 0.0
        %474 = vst.msk [vmem:[#allocation4 + $0x50] sm:$0xff] %vm462, 0.0
        %475 = vst.msk [vmem:[#allocation4 + $0x58] sm:$0x3] %vm465, 0.0
        %476 = vst.msk [vmem:[#allocation4 + $0x60] sm:$0xff] %vm462, 0.0
        %477 = vst.msk [vmem:[#allocation4 + $0x68] sm:$0xff] %vm462, 0.0
        %478 = vst.msk [vmem:[#allocation4 + $0x70] sm:$0x3] %vm465, 0.0
        %479 = vst.msk [vmem:[#allocation4 + $0x78] sm:$0xff] %vm462, 0.0
        %480 = vst.msk [vmem:[#allocation4 + $0x80] sm:$0xff] %vm462, 0.0
        %481 = vst.msk [vmem:[#allocation4 + $0x88] sm:$0x3] %vm465, 0.0
        %482 = vst.msk [vmem:[#allocation4 + $0x90] sm:$0xff] %vm462, 0.0
        %483 = vst.msk [vmem:[#allocation4 + $0x98] sm:$0xff] %vm462, 0.0
        %484 = vst.msk [vmem:[#allocation4 + $0xa0] sm:$0x3] %vm465, 0.0
        %485 = vst.msk [vmem:[#allocation4 + $0xa8] sm:$0xff] %vm462, 0.0
        %486 = vst.msk [vmem:[#allocation4 + $0xb0] sm:$0xff] %vm462, 0.0
        %487 = vst.msk [vmem:[#allocation4 + $0xb8] sm:$0x3] %vm465, 0.0
        %488 = vst.msk [vmem:[#allocation4 + $0xc0] sm:$0xff] %vm462, 0.0
        %489 = vst.msk [vmem:[#allocation4 + $0xc8] sm:$0xff] %vm462, 0.0
        %490 = vst.msk [vmem:[#allocation4 + $0xd0] sm:$0x3] %vm465, 0.0
        %491 = vst.msk [vmem:[#allocation4 + $0xd8] sm:$0xff] %vm462, 0.0
        %492 = vst.msk [vmem:[#allocation4 + $0xe0] sm:$0xff] %vm462, 0.0
        %493 = vst.msk [vmem:[#allocation4 + $0xe8] sm:$0x3] %vm465, 0.0
        %494 = vst.msk [vmem:[#allocation4 + $0xf0] sm:$0xff] %vm462, 0.0
        %495 = vst.msk [vmem:[#allocation4 + $0xf8] sm:$0xff] %vm462, 0.0
        %496 = vst.msk [vmem:[#allocation4 + $0x100] sm:$0x3] %vm465, 0.0
        %497 = vst.msk [vmem:[#allocation4 + $0x108] sm:$0xff] %vm462, 0.0
        %498 = vst.msk [vmem:[#allocation4 + $0x110] sm:$0xff] %vm462, 0.0
        %499 = vst.msk [vmem:[#allocation4 + $0x118] sm:$0x3] %vm465, 0.0
        %500 = vst.msk [vmem:[#allocation4 + $0x120] sm:$0xff] %vm462, 0.0
        %501 = vst.msk [vmem:[#allocation4 + $0x128] sm:$0xff] %vm462, 0.0
        %502 = vst.msk [vmem:[#allocation4 + $0x130] sm:$0x3] %vm465, 0.0
        %503 = vst.msk [vmem:[#allocation4 + $0x138] sm:$0xff] %vm462, 0.0
        %504 = vst.msk [vmem:[#allocation4 + $0x140] sm:$0xff] %vm462, 0.0
        %505 = vst.msk [vmem:[#allocation4 + $0x148] sm:$0x3] %vm465, 0.0
        %506 = vst.msk [vmem:[#allocation4 + $0x150] sm:$0xff] %vm462, 0.0
        %507 = vst.msk [vmem:[#allocation4 + $0x158] sm:$0xff] %vm462, 0.0
        %508 = vst.msk [vmem:[#allocation4 + $0x160] sm:$0x3] %vm465, 0.0
        %509 = vst.msk [vmem:[#allocation4 + $0x168] sm:$0xff] %vm462, 0.0
        %510 = vst.msk [vmem:[#allocation4 + $0x170] sm:$0xff] %vm462, 0.0
        %511 = vst.msk [vmem:[#allocation4 + $0x178] sm:$0x3] %vm465, 0.0
        %512 = vst.msk [vmem:[#allocation4 + $0x180] sm:$0xff] %vm462, 0.0
        %513 = vst.msk [vmem:[#allocation4 + $0x188] sm:$0xff] %vm462, 0.0
        %514 = vst.msk [vmem:[#allocation4 + $0x190] sm:$0x3] %vm465, 0.0
        %515 = vst.msk [vmem:[#allocation4 + $0x198] sm:$0xff] %vm462, 0.0
        %516 = vst.msk [vmem:[#allocation4 + $0x1a0] sm:$0xff] %vm462, 0.0
        %517 = vst.msk [vmem:[#allocation4 + $0x1a8] sm:$0x3] %vm465, 0.0
        %v518 = vld [vmem:[%s345] sm:$0xff]
        %v519 = vld [vmem:[%s345 + $0x8] sm:$0xff]
        %v520 = vld [vmem:[%s345 + $0x10] sm:$0xff]
        %v521 = vld [vmem:[%s345 + $0x18] sm:$0xff]
        %v522 = vld [vmem:[%s345 + $0x20] sm:$0xff]
        %v523 = vld [vmem:[%s345 + $0x28] sm:$0xff]
        %v524 = vld [vmem:[%s345 + $0x30] sm:$0xff]
        %v525 = vld [vmem:[%s345 + $0x38] sm:$0xff]
        %v526 = vld [vmem:[%s345 + $0x40] sm:$0xff]
        %v527 = vld [vmem:[%s345 + $0x48] sm:$0xff]
        %v528 = vld [vmem:[%s345 + $0x50] sm:$0xff]
        %v529 = vld [vmem:[%s345 + $0x58] sm:$0xff]
        %v530 = vld [vmem:[%s345 + $0x60] sm:$0xff]
        %v531 = vld [vmem:[%s345 + $0x68] sm:$0xff]
        %v532 = vld [vmem:[%s345 + $0x70] sm:$0xff]
        %v533 = vld [vmem:[%s345 + $0x78] sm:$0xff]
        %v534 = vld [vmem:[%s345 + $0x80] sm:$0xff]
        %v535 = vld [vmem:[%s345 + $0x88] sm:$0xff]
        %v536 = vld [vmem:[%s345 + $0x90] sm:$0xff]
        %v537 = vld [vmem:[%s345 + $0x98] sm:$0xff]
        %v538 = vld [vmem:[%s345 + $0xa0] sm:$0xff]
        %v539 = vld [vmem:[%s345 + $0xa8] sm:$0xff]
        %v540 = vld [vmem:[%s345 + $0xb0] sm:$0xff]
        %v541 = vld [vmem:[%s345 + $0xb8] sm:$0xff]
        %v542 = vld [vmem:[%s345 + $0xc0] sm:$0xff]
        %v543 = vld [vmem:[%s345 + $0xc8] sm:$0xff]
        %v544 = vld [vmem:[%s345 + $0xd0] sm:$0xff]
        %v545 = vld [vmem:[%s345 + $0xd8] sm:$0xff]
        %v546 = vld [vmem:[%s345 + $0xe0] sm:$0xff]
        %v547 = vld [vmem:[%s345 + $0xe8] sm:$0xff]
        %v548 = vld [vmem:[%s345 + $0xf0] sm:$0xff]
        %v549 = vld [vmem:[%s345 + $0xf8] sm:$0xff]
        %s550 = scalar_lea.vmem [#allocation2], 24
        %551 = vst.msk [vmem:[%s550 + $0x1] sm:$0xff] %vm350, %v518
        %552 = vst.msk [vmem:[%s550 + $0x9] sm:$0xff] %vm350, %v519
        %553 = vst.msk [vmem:[%s550 + $0x19] sm:$0xff] %vm350, %v520
        %554 = vst.msk [vmem:[%s550 + $0x21] sm:$0xff] %vm350, %v521
        %555 = vst.msk [vmem:[%s550 + $0x31] sm:$0xff] %vm350, %v522
        %556 = vst.msk [vmem:[%s550 + $0x39] sm:$0xff] %vm350, %v523
        %557 = vst.msk [vmem:[%s550 + $0x49] sm:$0xff] %vm350, %v524
        %558 = vst.msk [vmem:[%s550 + $0x51] sm:$0xff] %vm350, %v525
        %559 = vst.msk [vmem:[%s550 + $0x61] sm:$0xff] %vm350, %v526
        %560 = vst.msk [vmem:[%s550 + $0x69] sm:$0xff] %vm350, %v527
        %561 = vst.msk [vmem:[%s550 + $0x79] sm:$0xff] %vm350, %v528
        %562 = vst.msk [vmem:[%s550 + $0x81] sm:$0xff] %vm350, %v529
        %563 = vst.msk [vmem:[%s550 + $0x91] sm:$0xff] %vm350, %v530
        %564 = vst.msk [vmem:[%s550 + $0x99] sm:$0xff] %vm350, %v531
        %565 = vst.msk [vmem:[%s550 + $0xa9] sm:$0xff] %vm350, %v532
        %566 = vst.msk [vmem:[%s550 + $0xb1] sm:$0xff] %vm350, %v533
        %567 = vst.msk [vmem:[%s550 + $0xc1] sm:$0xff] %vm350, %v534
        %568 = vst.msk [vmem:[%s550 + $0xc9] sm:$0xff] %vm350, %v535
        %569 = vst.msk [vmem:[%s550 + $0xd9] sm:$0xff] %vm350, %v536
        %570 = vst.msk [vmem:[%s550 + $0xe1] sm:$0xff] %vm350, %v537
        %571 = vst.msk [vmem:[%s550 + $0xf1] sm:$0xff] %vm350, %v538
        %572 = vst.msk [vmem:[%s550 + $0xf9] sm:$0xff] %vm350, %v539
        %573 = vst.msk [vmem:[%s550 + $0x109] sm:$0xff] %vm350, %v540
        %574 = vst.msk [vmem:[%s550 + $0x111] sm:$0xff] %vm350, %v541
        %575 = vst.msk [vmem:[%s550 + $0x121] sm:$0xff] %vm350, %v542
        %576 = vst.msk [vmem:[%s550 + $0x129] sm:$0xff] %vm350, %v543
        %577 = vst.msk [vmem:[%s550 + $0x139] sm:$0xff] %vm350, %v544
        %578 = vst.msk [vmem:[%s550 + $0x141] sm:$0xff] %vm350, %v545
        %579 = vst.msk [vmem:[%s550 + $0x151] sm:$0xff] %vm350, %v546
        %580 = vst.msk [vmem:[%s550 + $0x159] sm:$0xff] %vm350, %v547
        %581 = vst.msk [vmem:[%s550 + $0x169] sm:$0xff] %vm350, %v548
        %582 = vst.msk [vmem:[%s550 + $0x171] sm:$0xff] %vm350, %v549
        %v583 = vld [vmem:[#allocation2] sm:$0xff]
        %v584 = vld [vmem:[#allocation2 + $0x8] sm:$0xff]
        %v585 = vld [vmem:[#allocation2 + $0x18] sm:$0xff]
        %v586 = vld [vmem:[#allocation2 + $0x20] sm:$0xff]
        %v587 = vld [vmem:[#allocation2 + $0x30] sm:$0xff]
        %v588 = vld [vmem:[#allocation2 + $0x38] sm:$0xff]
        %v589 = vld [vmem:[#allocation2 + $0x48] sm:$0xff]
        %v590 = vld [vmem:[#allocation2 + $0x50] sm:$0xff]
        %v591 = vld [vmem:[#allocation2 + $0x60] sm:$0xff]
        %v592 = vld [vmem:[#allocation2 + $0x68] sm:$0xff]
        %v593 = vld [vmem:[#allocation2 + $0x78] sm:$0xff]
        %v594 = vld [vmem:[#allocation2 + $0x80] sm:$0xff]
        %v595 = vld [vmem:[#allocation2 + $0x90] sm:$0xff]
        %v596 = vld [vmem:[#allocation2 + $0x98] sm:$0xff]
        %v597 = vld [vmem:[#allocation2 + $0xa8] sm:$0xff]
        %v598 = vld [vmem:[#allocation2 + $0xb0] sm:$0xff]
        %v599 = vld [vmem:[#allocation2 + $0xc0] sm:$0xff]
        %v600 = vld [vmem:[#allocation2 + $0xc8] sm:$0xff]
        %v601 = vld [vmem:[#allocation2 + $0xd8] sm:$0xff]
        %v602 = vld [vmem:[#allocation2 + $0xe0] sm:$0xff]
        %v603 = vld [vmem:[#allocation2 + $0xf0] sm:$0xff]
        %v604 = vld [vmem:[#allocation2 + $0xf8] sm:$0xff]
        %v605 = vld [vmem:[#allocation2 + $0x108] sm:$0xff]
        %v606 = vld [vmem:[#allocation2 + $0x110] sm:$0xff]
        %v607 = vld [vmem:[#allocation2 + $0x120] sm:$0xff]
        %v608 = vld [vmem:[#allocation2 + $0x128] sm:$0xff]
        %v609 = vld [vmem:[#allocation2 + $0x138] sm:$0xff]
        %v610 = vld [vmem:[#allocation2 + $0x140] sm:$0xff]
        %v611 = vld [vmem:[#allocation2 + $0x150] sm:$0xff]
        %v612 = vld [vmem:[#allocation2 + $0x158] sm:$0xff]
        %v613 = vld [vmem:[#allocation2 + $0x168] sm:$0xff]
        %v614 = vld [vmem:[#allocation2 + $0x170] sm:$0xff]
        %615 = vst.msk [vmem:[#allocation5] sm:$0xff] %vm350, %v583
        %616 = vst.msk [vmem:[#allocation5 + $0x8] sm:$0xff] %vm350, %v584
        %617 = vst.msk [vmem:[#allocation5 + $0x10] sm:$0xff] %vm350, %v585
        %618 = vst.msk [vmem:[#allocation5 + $0x18] sm:$0xff] %vm350, %v586
        %619 = vst.msk [vmem:[#allocation5 + $0x20] sm:$0xff] %vm350, %v587
        %620 = vst.msk [vmem:[#allocation5 + $0x28] sm:$0xff] %vm350, %v588
        %621 = vst.msk [vmem:[#allocation5 + $0x30] sm:$0xff] %vm350, %v589
        %622 = vst.msk [vmem:[#allocation5 + $0x38] sm:$0xff] %vm350, %v590
        %623 = vst.msk [vmem:[#allocation5 + $0x40] sm:$0xff] %vm350, %v591
        %624 = vst.msk [vmem:[#allocation5 + $0x48] sm:$0xff] %vm350, %v592
        %625 = vst.msk [vmem:[#allocation5 + $0x50] sm:$0xff] %vm350, %v593
        %626 = vst.msk [vmem:[#allocation5 + $0x58] sm:$0xff] %vm350, %v594
        %627 = vst.msk [vmem:[#allocation5 + $0x60] sm:$0xff] %vm350, %v595
        %628 = vst.msk [vmem:[#allocation5 + $0x68] sm:$0xff] %vm350, %v596
        %629 = vst.msk [vmem:[#allocation5 + $0x70] sm:$0xff] %vm350, %v597
        %630 = vst.msk [vmem:[#allocation5 + $0x78] sm:$0xff] %vm350, %v598
        %631 = vst.msk [vmem:[#allocation5 + $0x80] sm:$0xff] %vm350, %v599
        %632 = vst.msk [vmem:[#allocation5 + $0x88] sm:$0xff] %vm350, %v600
        %633 = vst.msk [vmem:[#allocation5 + $0x90] sm:$0xff] %vm350, %v601
        %634 = vst.msk [vmem:[#allocation5 + $0x98] sm:$0xff] %vm350, %v602
        %635 = vst.msk [vmem:[#allocation5 + $0xa0] sm:$0xff] %vm350, %v603
        %636 = vst.msk [vmem:[#allocation5 + $0xa8] sm:$0xff] %vm350, %v604
        %637 = vst.msk [vmem:[#allocation5 + $0xb0] sm:$0xff] %vm350, %v605
        %638 = vst.msk [vmem:[#allocation5 + $0xb8] sm:$0xff] %vm350, %v606
        %639 = vst.msk [vmem:[#allocation5 + $0xc0] sm:$0xff] %vm350, %v607
        %640 = vst.msk [vmem:[#allocation5 + $0xc8] sm:$0xff] %vm350, %v608
        %641 = vst.msk [vmem:[#allocation5 + $0xd0] sm:$0xff] %vm350, %v609
        %642 = vst.msk [vmem:[#allocation5 + $0xd8] sm:$0xff] %vm350, %v610
        %643 = vst.msk [vmem:[#allocation5 + $0xe0] sm:$0xff] %vm350, %v611
        %644 = vst.msk [vmem:[#allocation5 + $0xe8] sm:$0xff] %vm350, %v612
        %645 = vst.msk [vmem:[#allocation5 + $0xf0] sm:$0xff] %vm350, %v613
        %646 = vst.msk [vmem:[#allocation5 + $0xf8] sm:$0xff] %vm350, %v614
        %v647 = vld [vmem:[#allocation2 + $0x1] sm:$0xff]
        %v648 = vld [vmem:[#allocation2 + $0x9] sm:$0xff]
        %v649 = vld [vmem:[#allocation2 + $0x19] sm:$0xff]
        %v650 = vld [vmem:[#allocation2 + $0x21] sm:$0xff]
        %v651 = vld [vmem:[#allocation2 + $0x31] sm:$0xff]
        %v652 = vld [vmem:[#allocation2 + $0x39] sm:$0xff]
        %v653 = vld [vmem:[#allocation2 + $0x49] sm:$0xff]
        %v654 = vld [vmem:[#allocation2 + $0x51] sm:$0xff]
        %v655 = vld [vmem:[#allocation2 + $0x61] sm:$0xff]
        %v656 = vld [vmem:[#allocation2 + $0x69] sm:$0xff]
        %v657 = vld [vmem:[#allocation2 + $0x79] sm:$0xff]
        %v658 = vld [vmem:[#allocation2 + $0x81] sm:$0xff]
        %v659 = vld [vmem:[#allocation2 + $0x91] sm:$0xff]
        %v660 = vld [vmem:[#allocation2 + $0x99] sm:$0xff]
        %v661 = vld [vmem:[#allocation2 + $0xa9] sm:$0xff]
        %v662 = vld [vmem:[#allocation2 + $0xb1] sm:$0xff]
        %v663 = vld [vmem:[#allocation2 + $0xc1] sm:$0xff]
        %v664 = vld [vmem:[#allocation2 + $0xc9] sm:$0xff]
        %v665 = vld [vmem:[#allocation2 + $0xd9] sm:$0xff]
        %v666 = vld [vmem:[#allocation2 + $0xe1] sm:$0xff]
        %v667 = vld [vmem:[#allocation2 + $0xf1] sm:$0xff]
        %v668 = vld [vmem:[#allocation2 + $0xf9] sm:$0xff]
        %v669 = vld [vmem:[#allocation2 + $0x109] sm:$0xff]
        %v670 = vld [vmem:[#allocation2 + $0x111] sm:$0xff]
        %v671 = vld [vmem:[#allocation2 + $0x121] sm:$0xff]
        %v672 = vld [vmem:[#allocation2 + $0x129] sm:$0xff]
        %v673 = vld [vmem:[#allocation2 + $0x139] sm:$0xff]
        %v674 = vld [vmem:[#allocation2 + $0x141] sm:$0xff]
        %v675 = vld [vmem:[#allocation2 + $0x151] sm:$0xff]
        %v676 = vld [vmem:[#allocation2 + $0x159] sm:$0xff]
        %v677 = vld [vmem:[#allocation2 + $0x169] sm:$0xff]
        %v678 = vld [vmem:[#allocation2 + $0x171] sm:$0xff]
        %711 = vrot.lane.b32.xlu0 %v647, 4
        %v712 = vpop.permute.xlu0 %711
        %713 = vrot.lane.b32.xlu0 %v648, 4
        %v714 = vpop.permute.xlu0 %713
        %715 = vrot.lane.b32.xlu0 %v649, 4
        %v716 = vpop.permute.xlu0 %715
        %717 = vrot.lane.b32.xlu0 %v650, 4
        %v718 = vpop.permute.xlu0 %717
        %719 = vrot.lane.b32.xlu0 %v651, 4
        %v720 = vpop.permute.xlu0 %719
        %721 = vrot.lane.b32.xlu0 %v652, 4
        %v722 = vpop.permute.xlu0 %721
        %723 = vrot.lane.b32.xlu0 %v653, 4
        %v724 = vpop.permute.xlu0 %723
        %725 = vrot.lane.b32.xlu0 %v654, 4
        %v726 = vpop.permute.xlu0 %725
        %727 = vrot.lane.b32.xlu0 %v655, 4
        %v728 = vpop.permute.xlu0 %727
        %729 = vrot.lane.b32.xlu0 %v656, 4
        %v730 = vpop.permute.xlu0 %729
        %731 = vrot.lane.b32.xlu0 %v657, 4
        %v732 = vpop.permute.xlu0 %731
        %733 = vrot.lane.b32.xlu0 %v658, 4
        %v734 = vpop.permute.xlu0 %733
        %735 = vrot.lane.b32.xlu0 %v659, 4
        %v736 = vpop.permute.xlu0 %735
        %737 = vrot.lane.b32.xlu0 %v660, 4
        %v738 = vpop.permute.xlu0 %737
        %739 = vrot.lane.b32.xlu0 %v661, 4
        %v740 = vpop.permute.xlu0 %739
        %741 = vrot.lane.b32.xlu0 %v662, 4
        %v742 = vpop.permute.xlu0 %741
        %743 = vrot.lane.b32.xlu0 %v663, 4
        %v744 = vpop.permute.xlu0 %743
        %745 = vrot.lane.b32.xlu0 %v664, 4
        %v746 = vpop.permute.xlu0 %745
        %747 = vrot.lane.b32.xlu0 %v665, 4
        %v748 = vpop.permute.xlu0 %747
        %749 = vrot.lane.b32.xlu0 %v666, 4
        %v750 = vpop.permute.xlu0 %749
        %751 = vrot.lane.b32.xlu0 %v667, 4
        %v752 = vpop.permute.xlu0 %751
        %753 = vrot.lane.b32.xlu0 %v668, 4
        %v754 = vpop.permute.xlu0 %753
        %755 = vrot.lane.b32.xlu0 %v669, 4
        %v756 = vpop.permute.xlu0 %755
        %757 = vrot.lane.b32.xlu0 %v670, 4
        %v758 = vpop.permute.xlu0 %757
        %759 = vrot.lane.b32.xlu0 %v671, 4
        %v760 = vpop.permute.xlu0 %759
        %761 = vrot.lane.b32.xlu0 %v672, 4
        %v762 = vpop.permute.xlu0 %761
        %763 = vrot.lane.b32.xlu0 %v673, 4
        %v764 = vpop.permute.xlu0 %763
        %765 = vrot.lane.b32.xlu0 %v674, 4
        %v766 = vpop.permute.xlu0 %765
        %767 = vrot.lane.b32.xlu0 %v675, 4
        %v768 = vpop.permute.xlu0 %767
        %769 = vrot.lane.b32.xlu0 %v676, 4
        %v770 = vpop.permute.xlu0 %769
        %771 = vrot.lane.b32.xlu0 %v677, 4
        %v772 = vpop.permute.xlu0 %771
        %773 = vrot.lane.b32.xlu0 %v678, 4
        %v774 = vpop.permute.xlu0 %773
        %vm807 = vcmask 64544
        %808 = vst.msk [vmem:[#allocation5] sm:$0xff] %vm807, %v712
        %809 = vst.msk [vmem:[#allocation5 + $0x8] sm:$0xff] %vm807, %v714
        %810 = vst.msk [vmem:[#allocation5 + $0x10] sm:$0xff] %vm807, %v716
        %811 = vst.msk [vmem:[#allocation5 + $0x18] sm:$0xff] %vm807, %v718
        %812 = vst.msk [vmem:[#allocation5 + $0x20] sm:$0xff] %vm807, %v720
        %813 = vst.msk [vmem:[#allocation5 + $0x28] sm:$0xff] %vm807, %v722
        %814 = vst.msk [vmem:[#allocation5 + $0x30] sm:$0xff] %vm807, %v724
        %815 = vst.msk [vmem:[#allocation5 + $0x38] sm:$0xff] %vm807, %v726
        %816 = vst.msk [vmem:[#allocation5 + $0x40] sm:$0xff] %vm807, %v728
        %817 = vst.msk [vmem:[#allocation5 + $0x48] sm:$0xff] %vm807, %v730
        %818 = vst.msk [vmem:[#allocation5 + $0x50] sm:$0xff] %vm807, %v732
        %819 = vst.msk [vmem:[#allocation5 + $0x58] sm:$0xff] %vm807, %v734
        %820 = vst.msk [vmem:[#allocation5 + $0x60] sm:$0xff] %vm807, %v736
        %821 = vst.msk [vmem:[#allocation5 + $0x68] sm:$0xff] %vm807, %v738
        %822 = vst.msk [vmem:[#allocation5 + $0x70] sm:$0xff] %vm807, %v740
        %823 = vst.msk [vmem:[#allocation5 + $0x78] sm:$0xff] %vm807, %v742
        %824 = vst.msk [vmem:[#allocation5 + $0x80] sm:$0xff] %vm807, %v744
        %825 = vst.msk [vmem:[#allocation5 + $0x88] sm:$0xff] %vm807, %v746
        %826 = vst.msk [vmem:[#allocation5 + $0x90] sm:$0xff] %vm807, %v748
        %827 = vst.msk [vmem:[#allocation5 + $0x98] sm:$0xff] %vm807, %v750
        %828 = vst.msk [vmem:[#allocation5 + $0xa0] sm:$0xff] %vm807, %v752
        %829 = vst.msk [vmem:[#allocation5 + $0xa8] sm:$0xff] %vm807, %v754
        %830 = vst.msk [vmem:[#allocation5 + $0xb0] sm:$0xff] %vm807, %v756
        %831 = vst.msk [vmem:[#allocation5 + $0xb8] sm:$0xff] %vm807, %v758
        %832 = vst.msk [vmem:[#allocation5 + $0xc0] sm:$0xff] %vm807, %v760
        %833 = vst.msk [vmem:[#allocation5 + $0xc8] sm:$0xff] %vm807, %v762
        %834 = vst.msk [vmem:[#allocation5 + $0xd0] sm:$0xff] %vm807, %v764
        %835 = vst.msk [vmem:[#allocation5 + $0xd8] sm:$0xff] %vm807, %v766
        %836 = vst.msk [vmem:[#allocation5 + $0xe0] sm:$0xff] %vm807, %v768
        %837 = vst.msk [vmem:[#allocation5 + $0xe8] sm:$0xff] %vm807, %v770
        %838 = vst.msk [vmem:[#allocation5 + $0xf0] sm:$0xff] %vm807, %v772
        %839 = vst.msk [vmem:[#allocation5 + $0xf8] sm:$0xff] %vm807, %v774
        %v840 = vld [vmem:[#allocation2 + $0x2] sm:$0xff]
        %v841 = vld [vmem:[#allocation2 + $0xa] sm:$0xff]
        %v842 = vld [vmem:[#allocation2 + $0x1a] sm:$0xff]
        %v843 = vld [vmem:[#allocation2 + $0x22] sm:$0xff]
        %v844 = vld [vmem:[#allocation2 + $0x32] sm:$0xff]
        %v845 = vld [vmem:[#allocation2 + $0x3a] sm:$0xff]
        %v846 = vld [vmem:[#allocation2 + $0x4a] sm:$0xff]
        %v847 = vld [vmem:[#allocation2 + $0x52] sm:$0xff]
        %v848 = vld [vmem:[#allocation2 + $0x62] sm:$0xff]
        %v849 = vld [vmem:[#allocation2 + $0x6a] sm:$0xff]
        %v850 = vld [vmem:[#allocation2 + $0x7a] sm:$0xff]
        %v851 = vld [vmem:[#allocation2 + $0x82] sm:$0xff]
        %v852 = vld [vmem:[#allocation2 + $0x92] sm:$0xff]
        %v853 = vld [vmem:[#allocation2 + $0x9a] sm:$0xff]
        %v854 = vld [vmem:[#allocation2 + $0xaa] sm:$0xff]
        %v855 = vld [vmem:[#allocation2 + $0xb2] sm:$0xff]
        %v856 = vld [vmem:[#allocation2 + $0xc2] sm:$0xff]
        %v857 = vld [vmem:[#allocation2 + $0xca] sm:$0xff]
        %v858 = vld [vmem:[#allocation2 + $0xda] sm:$0xff]
        %v859 = vld [vmem:[#allocation2 + $0xe2] sm:$0xff]
        %v860 = vld [vmem:[#allocation2 + $0xf2] sm:$0xff]
        %v861 = vld [vmem:[#allocation2 + $0xfa] sm:$0xff]
        %v862 = vld [vmem:[#allocation2 + $0x10a] sm:$0xff]
        %v863 = vld [vmem:[#allocation2 + $0x112] sm:$0xff]
        %v864 = vld [vmem:[#allocation2 + $0x122] sm:$0xff]
        %v865 = vld [vmem:[#allocation2 + $0x12a] sm:$0xff]
        %v866 = vld [vmem:[#allocation2 + $0x13a] sm:$0xff]
        %v867 = vld [vmem:[#allocation2 + $0x142] sm:$0xff]
        %v868 = vld [vmem:[#allocation2 + $0x152] sm:$0xff]
        %v869 = vld [vmem:[#allocation2 + $0x15a] sm:$0xff]
        %v870 = vld [vmem:[#allocation2 + $0x16a] sm:$0xff]
        %v871 = vld [vmem:[#allocation2 + $0x172] sm:$0xff]
        %904 = vrot.lane.b32.xlu0 %v840, 8
        %v905 = vpop.permute.xlu0 %904
        %906 = vrot.lane.b32.xlu0 %v841, 8
        %v907 = vpop.permute.xlu0 %906
        %908 = vrot.lane.b32.xlu0 %v842, 8
        %v909 = vpop.permute.xlu0 %908
        %910 = vrot.lane.b32.xlu0 %v843, 8
        %v911 = vpop.permute.xlu0 %910
        %912 = vrot.lane.b32.xlu0 %v844, 8
        %v913 = vpop.permute.xlu0 %912
        %914 = vrot.lane.b32.xlu0 %v845, 8
        %v915 = vpop.permute.xlu0 %914
        %916 = vrot.lane.b32.xlu0 %v846, 8
        %v917 = vpop.permute.xlu0 %916
        %918 = vrot.lane.b32.xlu0 %v847, 8
        %v919 = vpop.permute.xlu0 %918
        %920 = vrot.lane.b32.xlu0 %v848, 8
        %v921 = vpop.permute.xlu0 %920
        %922 = vrot.lane.b32.xlu0 %v849, 8
        %v923 = vpop.permute.xlu0 %922
        %924 = vrot.lane.b32.xlu0 %v850, 8
        %v925 = vpop.permute.xlu0 %924
        %926 = vrot.lane.b32.xlu0 %v851, 8
        %v927 = vpop.permute.xlu0 %926
        %928 = vrot.lane.b32.xlu0 %v852, 8
        %v929 = vpop.permute.xlu0 %928
        %930 = vrot.lane.b32.xlu0 %v853, 8
        %v931 = vpop.permute.xlu0 %930
        %932 = vrot.lane.b32.xlu0 %v854, 8
        %v933 = vpop.permute.xlu0 %932
        %934 = vrot.lane.b32.xlu0 %v855, 8
        %v935 = vpop.permute.xlu0 %934
        %936 = vrot.lane.b32.xlu0 %v856, 8
        %v937 = vpop.permute.xlu0 %936
        %938 = vrot.lane.b32.xlu0 %v857, 8
        %v939 = vpop.permute.xlu0 %938
        %940 = vrot.lane.b32.xlu0 %v858, 8
        %v941 = vpop.permute.xlu0 %940
        %942 = vrot.lane.b32.xlu0 %v859, 8
        %v943 = vpop.permute.xlu0 %942
        %944 = vrot.lane.b32.xlu0 %v860, 8
        %v945 = vpop.permute.xlu0 %944
        %946 = vrot.lane.b32.xlu0 %v861, 8
        %v947 = vpop.permute.xlu0 %946
        %948 = vrot.lane.b32.xlu0 %v862, 8
        %v949 = vpop.permute.xlu0 %948
        %950 = vrot.lane.b32.xlu0 %v863, 8
        %v951 = vpop.permute.xlu0 %950
        %952 = vrot.lane.b32.xlu0 %v864, 8
        %v953 = vpop.permute.xlu0 %952
        %954 = vrot.lane.b32.xlu0 %v865, 8
        %v955 = vpop.permute.xlu0 %954
        %956 = vrot.lane.b32.xlu0 %v866, 8
        %v957 = vpop.permute.xlu0 %956
        %958 = vrot.lane.b32.xlu0 %v867, 8
        %v959 = vpop.permute.xlu0 %958
        %960 = vrot.lane.b32.xlu0 %v868, 8
        %v961 = vpop.permute.xlu0 %960
        %962 = vrot.lane.b32.xlu0 %v869, 8
        %v963 = vpop.permute.xlu0 %962
        %964 = vrot.lane.b32.xlu0 %v870, 8
        %v965 = vpop.permute.xlu0 %964
        %966 = vrot.lane.b32.xlu0 %v871, 8
        %v967 = vpop.permute.xlu0 %966
        %vm1000 = vcmask 97344
        %1001 = vst.msk [vmem:[#allocation5] sm:$0xff] %vm1000, %v905
        %1002 = vst.msk [vmem:[#allocation5 + $0x8] sm:$0xff] %vm1000, %v907
        %1003 = vst.msk [vmem:[#allocation5 + $0x10] sm:$0xff] %vm1000, %v909
        %1004 = vst.msk [vmem:[#allocation5 + $0x18] sm:$0xff] %vm1000, %v911
        %1005 = vst.msk [vmem:[#allocation5 + $0x20] sm:$0xff] %vm1000, %v913
        %1006 = vst.msk [vmem:[#allocation5 + $0x28] sm:$0xff] %vm1000, %v915
        %1007 = vst.msk [vmem:[#allocation5 + $0x30] sm:$0xff] %vm1000, %v917
        %1008 = vst.msk [vmem:[#allocation5 + $0x38] sm:$0xff] %vm1000, %v919
        %1009 = vst.msk [vmem:[#allocation5 + $0x40] sm:$0xff] %vm1000, %v921
        %1010 = vst.msk [vmem:[#allocation5 + $0x48] sm:$0xff] %vm1000, %v923
        %1011 = vst.msk [vmem:[#allocation5 + $0x50] sm:$0xff] %vm1000, %v925
        %1012 = vst.msk [vmem:[#allocation5 + $0x58] sm:$0xff] %vm1000, %v927
        %1013 = vst.msk [vmem:[#allocation5 + $0x60] sm:$0xff] %vm1000, %v929
        %1014 = vst.msk [vmem:[#allocation5 + $0x68] sm:$0xff] %vm1000, %v931
        %1015 = vst.msk [vmem:[#allocation5 + $0x70] sm:$0xff] %vm1000, %v933
        %1016 = vst.msk [vmem:[#allocation5 + $0x78] sm:$0xff] %vm1000, %v935
        %1017 = vst.msk [vmem:[#allocation5 + $0x80] sm:$0xff] %vm1000, %v937
        %1018 = vst.msk [vmem:[#allocation5 + $0x88] sm:$0xff] %vm1000, %v939
        %1019 = vst.msk [vmem:[#allocation5 + $0x90] sm:$0xff] %vm1000, %v941
        %1020 = vst.msk [vmem:[#allocation5 + $0x98] sm:$0xff] %vm1000, %v943
        %1021 = vst.msk [vmem:[#allocation5 + $0xa0] sm:$0xff] %vm1000, %v945
        %1022 = vst.msk [vmem:[#allocation5 + $0xa8] sm:$0xff] %vm1000, %v947
        %1023 = vst.msk [vmem:[#allocation5 + $0xb0] sm:$0xff] %vm1000, %v949
        %1024 = vst.msk [vmem:[#allocation5 + $0xb8] sm:$0xff] %vm1000, %v951
        %1025 = vst.msk [vmem:[#allocation5 + $0xc0] sm:$0xff] %vm1000, %v953
        %1026 = vst.msk [vmem:[#allocation5 + $0xc8] sm:$0xff] %vm1000, %v955
        %1027 = vst.msk [vmem:[#allocation5 + $0xd0] sm:$0xff] %vm1000, %v957
        %1028 = vst.msk [vmem:[#allocation5 + $0xd8] sm:$0xff] %vm1000, %v959
        %1029 = vst.msk [vmem:[#allocation5 + $0xe0] sm:$0xff] %vm1000, %v961
        %1030 = vst.msk [vmem:[#allocation5 + $0xe8] sm:$0xff] %vm1000, %v963
        %1031 = vst.msk [vmem:[#allocation5 + $0xf0] sm:$0xff] %vm1000, %v965
        %1032 = vst.msk [vmem:[#allocation5 + $0xf8] sm:$0xff] %vm1000, %v967
        %v1033 = vld [vmem:[%s550] sm:$0xff]
        %v1034 = vld [vmem:[%s550 + $0x8] sm:$0xff]
        %v1035 = vld [vmem:[%s550 + $0x18] sm:$0xff]
        %v1036 = vld [vmem:[%s550 + $0x20] sm:$0xff]
        %v1037 = vld [vmem:[%s550 + $0x30] sm:$0xff]
        %v1038 = vld [vmem:[%s550 + $0x38] sm:$0xff]
        %v1039 = vld [vmem:[%s550 + $0x48] sm:$0xff]
        %v1040 = vld [vmem:[%s550 + $0x50] sm:$0xff]
        %v1041 = vld [vmem:[%s550 + $0x60] sm:$0xff]
        %v1042 = vld [vmem:[%s550 + $0x68] sm:$0xff]
        %v1043 = vld [vmem:[%s550 + $0x78] sm:$0xff]
        %v1044 = vld [vmem:[%s550 + $0x80] sm:$0xff]
        %v1045 = vld [vmem:[%s550 + $0x90] sm:$0xff]
        %v1046 = vld [vmem:[%s550 + $0x98] sm:$0xff]
        %v1047 = vld [vmem:[%s550 + $0xa8] sm:$0xff]
        %v1048 = vld [vmem:[%s550 + $0xb0] sm:$0xff]
        %v1049 = vld [vmem:[%s550 + $0xc0] sm:$0xff]
        %v1050 = vld [vmem:[%s550 + $0xc8] sm:$0xff]
        %v1051 = vld [vmem:[%s550 + $0xd8] sm:$0xff]
        %v1052 = vld [vmem:[%s550 + $0xe0] sm:$0xff]
        %v1053 = vld [vmem:[%s550 + $0xf0] sm:$0xff]
        %v1054 = vld [vmem:[%s550 + $0xf8] sm:$0xff]
        %v1055 = vld [vmem:[%s550 + $0x108] sm:$0xff]
        %v1056 = vld [vmem:[%s550 + $0x110] sm:$0xff]
        %v1057 = vld [vmem:[%s550 + $0x120] sm:$0xff]
        %v1058 = vld [vmem:[%s550 + $0x128] sm:$0xff]
        %v1059 = vld [vmem:[%s550 + $0x138] sm:$0xff]
        %v1060 = vld [vmem:[%s550 + $0x140] sm:$0xff]
        %v1061 = vld [vmem:[%s550 + $0x150] sm:$0xff]
        %v1062 = vld [vmem:[%s550 + $0x158] sm:$0xff]
        %v1063 = vld [vmem:[%s550 + $0x168] sm:$0xff]
        %v1064 = vld [vmem:[%s550 + $0x170] sm:$0xff]
        %1097 = vrot.lane.b32.xlu0 %v1033, 12
        %v1098 = vpop.permute.xlu0 %1097
        %1099 = vrot.lane.b32.xlu0 %v1034, 12
        %v1100 = vpop.permute.xlu0 %1099
        %1101 = vrot.lane.b32.xlu0 %v1035, 12
        %v1102 = vpop.permute.xlu0 %1101
        %1103 = vrot.lane.b32.xlu0 %v1036, 12
        %v1104 = vpop.permute.xlu0 %1103
        %1105 = vrot.lane.b32.xlu0 %v1037, 12
        %v1106 = vpop.permute.xlu0 %1105
        %1107 = vrot.lane.b32.xlu0 %v1038, 12
        %v1108 = vpop.permute.xlu0 %1107
        %1109 = vrot.lane.b32.xlu0 %v1039, 12
        %v1110 = vpop.permute.xlu0 %1109
        %1111 = vrot.lane.b32.xlu0 %v1040, 12
        %v1112 = vpop.permute.xlu0 %1111
        %1113 = vrot.lane.b32.xlu0 %v1041, 12
        %v1114 = vpop.permute.xlu0 %1113
        %1115 = vrot.lane.b32.xlu0 %v1042, 12
        %v1116 = vpop.permute.xlu0 %1115
        %1117 = vrot.lane.b32.xlu0 %v1043, 12
        %v1118 = vpop.permute.xlu0 %1117
        %1119 = vrot.lane.b32.xlu0 %v1044, 12
        %v1120 = vpop.permute.xlu0 %1119
        %1121 = vrot.lane.b32.xlu0 %v1045, 12
        %v1122 = vpop.permute.xlu0 %1121
        %1123 = vrot.lane.b32.xlu0 %v1046, 12
        %v1124 = vpop.permute.xlu0 %1123
        %1125 = vrot.lane.b32.xlu0 %v1047, 12
        %v1126 = vpop.permute.xlu0 %1125
        %1127 = vrot.lane.b32.xlu0 %v1048, 12
        %v1128 = vpop.permute.xlu0 %1127
        %1129 = vrot.lane.b32.xlu0 %v1049, 12
        %v1130 = vpop.permute.xlu0 %1129
        %1131 = vrot.lane.b32.xlu0 %v1050, 12
        %v1132 = vpop.permute.xlu0 %1131
        %1133 = vrot.lane.b32.xlu0 %v1051, 12
        %v1134 = vpop.permute.xlu0 %1133
        %1135 = vrot.lane.b32.xlu0 %v1052, 12
        %v1136 = vpop.permute.xlu0 %1135
        %1137 = vrot.lane.b32.xlu0 %v1053, 12
        %v1138 = vpop.permute.xlu0 %1137
        %1139 = vrot.lane.b32.xlu0 %v1054, 12
        %v1140 = vpop.permute.xlu0 %1139
        %1141 = vrot.lane.b32.xlu0 %v1055, 12
        %v1142 = vpop.permute.xlu0 %1141
        %1143 = vrot.lane.b32.xlu0 %v1056, 12
        %v1144 = vpop.permute.xlu0 %1143
        %1145 = vrot.lane.b32.xlu0 %v1057, 12
        %v1146 = vpop.permute.xlu0 %1145
        %1147 = vrot.lane.b32.xlu0 %v1058, 12
        %v1148 = vpop.permute.xlu0 %1147
        %1149 = vrot.lane.b32.xlu0 %v1059, 12
        %v1150 = vpop.permute.xlu0 %1149
        %1151 = vrot.lane.b32.xlu0 %v1060, 12
        %v1152 = vpop.permute.xlu0 %1151
        %1153 = vrot.lane.b32.xlu0 %v1061, 12
        %v1154 = vpop.permute.xlu0 %1153
        %1155 = vrot.lane.b32.xlu0 %v1062, 12
        %v1156 = vpop.permute.xlu0 %1155
        %1157 = vrot.lane.b32.xlu0 %v1063, 12
        %v1158 = vpop.permute.xlu0 %1157
        %1159 = vrot.lane.b32.xlu0 %v1064, 12
        %v1160 = vpop.permute.xlu0 %1159
        %vm1193 = vcmask 130144
        %1194 = vst.msk [vmem:[#allocation5] sm:$0xff] %vm1193, %v1098
        %1195 = vst.msk [vmem:[#allocation5 + $0x8] sm:$0xff] %vm1193, %v1100
        %1196 = vst.msk [vmem:[#allocation5 + $0x10] sm:$0xff] %vm1193, %v1102
        %1197 = vst.msk [vmem:[#allocation5 + $0x18] sm:$0xff] %vm1193, %v1104
        %1198 = vst.msk [vmem:[#allocation5 + $0x20] sm:$0xff] %vm1193, %v1106
        %1199 = vst.msk [vmem:[#allocation5 + $0x28] sm:$0xff] %vm1193, %v1108
        %1200 = vst.msk [vmem:[#allocation5 + $0x30] sm:$0xff] %vm1193, %v1110
        %1201 = vst.msk [vmem:[#allocation5 + $0x38] sm:$0xff] %vm1193, %v1112
        %1202 = vst.msk [vmem:[#allocation5 + $0x40] sm:$0xff] %vm1193, %v1114
        %1203 = vst.msk [vmem:[#allocation5 + $0x48] sm:$0xff] %vm1193, %v1116
        %1204 = vst.msk [vmem:[#allocation5 + $0x50] sm:$0xff] %vm1193, %v1118
        %1205 = vst.msk [vmem:[#allocation5 + $0x58] sm:$0xff] %vm1193, %v1120
        %1206 = vst.msk [vmem:[#allocation5 + $0x60] sm:$0xff] %vm1193, %v1122
        %1207 = vst.msk [vmem:[#allocation5 + $0x68] sm:$0xff] %vm1193, %v1124
        %1208 = vst.msk [vmem:[#allocation5 + $0x70] sm:$0xff] %vm1193, %v1126
        %1209 = vst.msk [vmem:[#allocation5 + $0x78] sm:$0xff] %vm1193, %v1128
        %1210 = vst.msk [vmem:[#allocation5 + $0x80] sm:$0xff] %vm1193, %v1130
        %1211 = vst.msk [vmem:[#allocation5 + $0x88] sm:$0xff] %vm1193, %v1132
        %1212 = vst.msk [vmem:[#allocation5 + $0x90] sm:$0xff] %vm1193, %v1134
        %1213 = vst.msk [vmem:[#allocation5 + $0x98] sm:$0xff] %vm1193, %v1136
        %1214 = vst.msk [vmem:[#allocation5 + $0xa0] sm:$0xff] %vm1193, %v1138
        %1215 = vst.msk [vmem:[#allocation5 + $0xa8] sm:$0xff] %vm1193, %v1140
        %1216 = vst.msk [vmem:[#allocation5 + $0xb0] sm:$0xff] %vm1193, %v1142
        %1217 = vst.msk [vmem:[#allocation5 + $0xb8] sm:$0xff] %vm1193, %v1144
        %1218 = vst.msk [vmem:[#allocation5 + $0xc0] sm:$0xff] %vm1193, %v1146
        %1219 = vst.msk [vmem:[#allocation5 + $0xc8] sm:$0xff] %vm1193, %v1148
        %1220 = vst.msk [vmem:[#allocation5 + $0xd0] sm:$0xff] %vm1193, %v1150
        %1221 = vst.msk [vmem:[#allocation5 + $0xd8] sm:$0xff] %vm1193, %v1152
        %1222 = vst.msk [vmem:[#allocation5 + $0xe0] sm:$0xff] %vm1193, %v1154
        %1223 = vst.msk [vmem:[#allocation5 + $0xe8] sm:$0xff] %vm1193, %v1156
        %1224 = vst.msk [vmem:[#allocation5 + $0xf0] sm:$0xff] %vm1193, %v1158
        %1225 = vst.msk [vmem:[#allocation5 + $0xf8] sm:$0xff] %vm1193, %v1160
        %v1226 = vld [vmem:[%s550 + $0x1] sm:$0xff]
        %v1227 = vld [vmem:[%s550 + $0x9] sm:$0xff]
        %v1228 = vld [vmem:[%s550 + $0x19] sm:$0xff]
        %v1229 = vld [vmem:[%s550 + $0x21] sm:$0xff]
        %v1230 = vld [vmem:[%s550 + $0x31] sm:$0xff]
        %v1231 = vld [vmem:[%s550 + $0x39] sm:$0xff]
        %v1232 = vld [vmem:[%s550 + $0x49] sm:$0xff]
        %v1233 = vld [vmem:[%s550 + $0x51] sm:$0xff]
        %v1234 = vld [vmem:[%s550 + $0x61] sm:$0xff]
        %v1235 = vld [vmem:[%s550 + $0x69] sm:$0xff]
        %v1236 = vld [vmem:[%s550 + $0x79] sm:$0xff]
        %v1237 = vld [vmem:[%s550 + $0x81] sm:$0xff]
        %v1238 = vld [vmem:[%s550 + $0x91] sm:$0xff]
        %v1239 = vld [vmem:[%s550 + $0x99] sm:$0xff]
        %v1240 = vld [vmem:[%s550 + $0xa9] sm:$0xff]
        %v1241 = vld [vmem:[%s550 + $0xb1] sm:$0xff]
        %v1242 = vld [vmem:[%s550 + $0xc1] sm:$0xff]
        %v1243 = vld [vmem:[%s550 + $0xc9] sm:$0xff]
        %v1244 = vld [vmem:[%s550 + $0xd9] sm:$0xff]
        %v1245 = vld [vmem:[%s550 + $0xe1] sm:$0xff]
        %v1246 = vld [vmem:[%s550 + $0xf1] sm:$0xff]
        %v1247 = vld [vmem:[%s550 + $0xf9] sm:$0xff]
        %v1248 = vld [vmem:[%s550 + $0x109] sm:$0xff]
        %v1249 = vld [vmem:[%s550 + $0x111] sm:$0xff]
        %v1250 = vld [vmem:[%s550 + $0x121] sm:$0xff]
        %v1251 = vld [vmem:[%s550 + $0x129] sm:$0xff]
        %v1252 = vld [vmem:[%s550 + $0x139] sm:$0xff]
        %v1253 = vld [vmem:[%s550 + $0x141] sm:$0xff]
        %v1254 = vld [vmem:[%s550 + $0x151] sm:$0xff]
        %v1255 = vld [vmem:[%s550 + $0x159] sm:$0xff]
        %v1256 = vld [vmem:[%s550 + $0x169] sm:$0xff]
        %v1257 = vld [vmem:[%s550 + $0x171] sm:$0xff]
        %1290 = vrot.lane.b32.xlu0 %v1226, 16
        %v1291 = vpop.permute.xlu0 %1290
        %1292 = vrot.lane.b32.xlu0 %v1227, 16
        %v1293 = vpop.permute.xlu0 %1292
        %1294 = vrot.lane.b32.xlu0 %v1228, 16
        %v1295 = vpop.permute.xlu0 %1294
        %1296 = vrot.lane.b32.xlu0 %v1229, 16
        %v1297 = vpop.permute.xlu0 %1296
        %1298 = vrot.lane.b32.xlu0 %v1230, 16
        %v1299 = vpop.permute.xlu0 %1298
        %1300 = vrot.lane.b32.xlu0 %v1231, 16
        %v1301 = vpop.permute.xlu0 %1300
        %1302 = vrot.lane.b32.xlu0 %v1232, 16
        %v1303 = vpop.permute.xlu0 %1302
        %1304 = vrot.lane.b32.xlu0 %v1233, 16
        %v1305 = vpop.permute.xlu0 %1304
        %1306 = vrot.lane.b32.xlu0 %v1234, 16
        %v1307 = vpop.permute.xlu0 %1306
        %1308 = vrot.lane.b32.xlu0 %v1235, 16
        %v1309 = vpop.permute.xlu0 %1308
        %1310 = vrot.lane.b32.xlu0 %v1236, 16
        %v1311 = vpop.permute.xlu0 %1310
        %1312 = vrot.lane.b32.xlu0 %v1237, 16
        %v1313 = vpop.permute.xlu0 %1312
        %1314 = vrot.lane.b32.xlu0 %v1238, 16
        %v1315 = vpop.permute.xlu0 %1314
        %1316 = vrot.lane.b32.xlu0 %v1239, 16
        %v1317 = vpop.permute.xlu0 %1316
        %1318 = vrot.lane.b32.xlu0 %v1240, 16
        %v1319 = vpop.permute.xlu0 %1318
        %1320 = vrot.lane.b32.xlu0 %v1241, 16
        %v1321 = vpop.permute.xlu0 %1320
        %1322 = vrot.lane.b32.xlu0 %v1242, 16
        %v1323 = vpop.permute.xlu0 %1322
        %1324 = vrot.lane.b32.xlu0 %v1243, 16
        %v1325 = vpop.permute.xlu0 %1324
        %1326 = vrot.lane.b32.xlu0 %v1244, 16
        %v1327 = vpop.permute.xlu0 %1326
        %1328 = vrot.lane.b32.xlu0 %v1245, 16
        %v1329 = vpop.permute.xlu0 %1328
        %1330 = vrot.lane.b32.xlu0 %v1246, 16
        %v1331 = vpop.permute.xlu0 %1330
        %1332 = vrot.lane.b32.xlu0 %v1247, 16
        %v1333 = vpop.permute.xlu0 %1332
        %1334 = vrot.lane.b32.xlu0 %v1248, 16
        %v1335 = vpop.permute.xlu0 %1334
        %1336 = vrot.lane.b32.xlu0 %v1249, 16
        %v1337 = vpop.permute.xlu0 %1336
        %1338 = vrot.lane.b32.xlu0 %v1250, 16
        %v1339 = vpop.permute.xlu0 %1338
        %1340 = vrot.lane.b32.xlu0 %v1251, 16
        %v1341 = vpop.permute.xlu0 %1340
        %1342 = vrot.lane.b32.xlu0 %v1252, 16
        %v1343 = vpop.permute.xlu0 %1342
        %1344 = vrot.lane.b32.xlu0 %v1253, 16
        %v1345 = vpop.permute.xlu0 %1344
        %1346 = vrot.lane.b32.xlu0 %v1254, 16
        %v1347 = vpop.permute.xlu0 %1346
        %1348 = vrot.lane.b32.xlu0 %v1255, 16
        %v1349 = vpop.permute.xlu0 %1348
        %1350 = vrot.lane.b32.xlu0 %v1256, 16
        %v1351 = vpop.permute.xlu0 %1350
        %1352 = vrot.lane.b32.xlu0 %v1257, 16
        %v1353 = vpop.permute.xlu0 %1352
        %vm1386 = vcmask 162944
        %1387 = vst.msk [vmem:[#allocation5] sm:$0xff] %vm1386, %v1291
        %1388 = vst.msk [vmem:[#allocation5 + $0x8] sm:$0xff] %vm1386, %v1293
        %1389 = vst.msk [vmem:[#allocation5 + $0x10] sm:$0xff] %vm1386, %v1295
        %1390 = vst.msk [vmem:[#allocation5 + $0x18] sm:$0xff] %vm1386, %v1297
        %1391 = vst.msk [vmem:[#allocation5 + $0x20] sm:$0xff] %vm1386, %v1299
        %1392 = vst.msk [vmem:[#allocation5 + $0x28] sm:$0xff] %vm1386, %v1301
        %1393 = vst.msk [vmem:[#allocation5 + $0x30] sm:$0xff] %vm1386, %v1303
        %1394 = vst.msk [vmem:[#allocation5 + $0x38] sm:$0xff] %vm1386, %v1305
        %1395 = vst.msk [vmem:[#allocation5 + $0x40] sm:$0xff] %vm1386, %v1307
        %1396 = vst.msk [vmem:[#allocation5 + $0x48] sm:$0xff] %vm1386, %v1309
        %1397 = vst.msk [vmem:[#allocation5 + $0x50] sm:$0xff] %vm1386, %v1311
        %1398 = vst.msk [vmem:[#allocation5 + $0x58] sm:$0xff] %vm1386, %v1313
        %1399 = vst.msk [vmem:[#allocation5 + $0x60] sm:$0xff] %vm1386, %v1315
        %1400 = vst.msk [vmem:[#allocation5 + $0x68] sm:$0xff] %vm1386, %v1317
        %1401 = vst.msk [vmem:[#allocation5 + $0x70] sm:$0xff] %vm1386, %v1319
        %1402 = vst.msk [vmem:[#allocation5 + $0x78] sm:$0xff] %vm1386, %v1321
        %1403 = vst.msk [vmem:[#allocation5 + $0x80] sm:$0xff] %vm1386, %v1323
        %1404 = vst.msk [vmem:[#allocation5 + $0x88] sm:$0xff] %vm1386, %v1325
        %1405 = vst.msk [vmem:[#allocation5 + $0x90] sm:$0xff] %vm1386, %v1327
        %1406 = vst.msk [vmem:[#allocation5 + $0x98] sm:$0xff] %vm1386, %v1329
        %1407 = vst.msk [vmem:[#allocation5 + $0xa0] sm:$0xff] %vm1386, %v1331
        %1408 = vst.msk [vmem:[#allocation5 + $0xa8] sm:$0xff] %vm1386, %v1333
        %1409 = vst.msk [vmem:[#allocation5 + $0xb0] sm:$0xff] %vm1386, %v1335
        %1410 = vst.msk [vmem:[#allocation5 + $0xb8] sm:$0xff] %vm1386, %v1337
        %1411 = vst.msk [vmem:[#allocation5 + $0xc0] sm:$0xff] %vm1386, %v1339
        %1412 = vst.msk [vmem:[#allocation5 + $0xc8] sm:$0xff] %vm1386, %v1341
        %1413 = vst.msk [vmem:[#allocation5 + $0xd0] sm:$0xff] %vm1386, %v1343
        %1414 = vst.msk [vmem:[#allocation5 + $0xd8] sm:$0xff] %vm1386, %v1345
        %1415 = vst.msk [vmem:[#allocation5 + $0xe0] sm:$0xff] %vm1386, %v1347
        %1416 = vst.msk [vmem:[#allocation5 + $0xe8] sm:$0xff] %vm1386, %v1349
        %1417 = vst.msk [vmem:[#allocation5 + $0xf0] sm:$0xff] %vm1386, %v1351
        %1418 = vst.msk [vmem:[#allocation5 + $0xf8] sm:$0xff] %vm1386, %v1353
        %v1419 = vld [vmem:[%s550 + $0x2] sm:$0xff]
        %v1420 = vld [vmem:[%s550 + $0xa] sm:$0xff]
        %v1421 = vld [vmem:[%s550 + $0x1a] sm:$0xff]
        %v1422 = vld [vmem:[%s550 + $0x22] sm:$0xff]
        %v1423 = vld [vmem:[%s550 + $0x32] sm:$0xff]
        %v1424 = vld [vmem:[%s550 + $0x3a] sm:$0xff]
        %v1425 = vld [vmem:[%s550 + $0x4a] sm:$0xff]
        %v1426 = vld [vmem:[%s550 + $0x52] sm:$0xff]
        %v1427 = vld [vmem:[%s550 + $0x62] sm:$0xff]
        %v1428 = vld [vmem:[%s550 + $0x6a] sm:$0xff]
        %v1429 = vld [vmem:[%s550 + $0x7a] sm:$0xff]
        %v1430 = vld [vmem:[%s550 + $0x82] sm:$0xff]
        %v1431 = vld [vmem:[%s550 + $0x92] sm:$0xff]
        %v1432 = vld [vmem:[%s550 + $0x9a] sm:$0xff]
        %v1433 = vld [vmem:[%s550 + $0xaa] sm:$0xff]
        %v1434 = vld [vmem:[%s550 + $0xb2] sm:$0xff]
        %v1435 = vld [vmem:[%s550 + $0xc2] sm:$0xff]
        %v1436 = vld [vmem:[%s550 + $0xca] sm:$0xff]
        %v1437 = vld [vmem:[%s550 + $0xda] sm:$0xff]
        %v1438 = vld [vmem:[%s550 + $0xe2] sm:$0xff]
        %v1439 = vld [vmem:[%s550 + $0xf2] sm:$0xff]
        %v1440 = vld [vmem:[%s550 + $0xfa] sm:$0xff]
        %v1441 = vld [vmem:[%s550 + $0x10a] sm:$0xff]
        %v1442 = vld [vmem:[%s550 + $0x112] sm:$0xff]
        %v1443 = vld [vmem:[%s550 + $0x122] sm:$0xff]
        %v1444 = vld [vmem:[%s550 + $0x12a] sm:$0xff]
        %v1445 = vld [vmem:[%s550 + $0x13a] sm:$0xff]
        %v1446 = vld [vmem:[%s550 + $0x142] sm:$0xff]
        %v1447 = vld [vmem:[%s550 + $0x152] sm:$0xff]
        %v1448 = vld [vmem:[%s550 + $0x15a] sm:$0xff]
        %v1449 = vld [vmem:[%s550 + $0x16a] sm:$0xff]
        %v1450 = vld [vmem:[%s550 + $0x172] sm:$0xff]
        %1483 = vrot.lane.b32.xlu0 %v1419, 20
        %v1484 = vpop.permute.xlu0 %1483
        %1485 = vrot.lane.b32.xlu0 %v1420, 20
        %v1486 = vpop.permute.xlu0 %1485
        %1487 = vrot.lane.b32.xlu0 %v1421, 20
        %v1488 = vpop.permute.xlu0 %1487
        %1489 = vrot.lane.b32.xlu0 %v1422, 20
        %v1490 = vpop.permute.xlu0 %1489
        %1491 = vrot.lane.b32.xlu0 %v1423, 20
        %v1492 = vpop.permute.xlu0 %1491
        %1493 = vrot.lane.b32.xlu0 %v1424, 20
        %v1494 = vpop.permute.xlu0 %1493
        %1495 = vrot.lane.b32.xlu0 %v1425, 20
        %v1496 = vpop.permute.xlu0 %1495
        %1497 = vrot.lane.b32.xlu0 %v1426, 20
        %v1498 = vpop.permute.xlu0 %1497
        %1499 = vrot.lane.b32.xlu0 %v1427, 20
        %v1500 = vpop.permute.xlu0 %1499
        %1501 = vrot.lane.b32.xlu0 %v1428, 20
        %v1502 = vpop.permute.xlu0 %1501
        %1503 = vrot.lane.b32.xlu0 %v1429, 20
        %v1504 = vpop.permute.xlu0 %1503
        %1505 = vrot.lane.b32.xlu0 %v1430, 20
        %v1506 = vpop.permute.xlu0 %1505
        %1507 = vrot.lane.b32.xlu0 %v1431, 20
        %v1508 = vpop.permute.xlu0 %1507
        %1509 = vrot.lane.b32.xlu0 %v1432, 20
        %v1510 = vpop.permute.xlu0 %1509
        %1511 = vrot.lane.b32.xlu0 %v1433, 20
        %v1512 = vpop.permute.xlu0 %1511
        %1513 = vrot.lane.b32.xlu0 %v1434, 20
        %v1514 = vpop.permute.xlu0 %1513
        %1515 = vrot.lane.b32.xlu0 %v1435, 20
        %v1516 = vpop.permute.xlu0 %1515
        %1517 = vrot.lane.b32.xlu0 %v1436, 20
        %v1518 = vpop.permute.xlu0 %1517
        %1519 = vrot.lane.b32.xlu0 %v1437, 20
        %v1520 = vpop.permute.xlu0 %1519
        %1521 = vrot.lane.b32.xlu0 %v1438, 20
        %v1522 = vpop.permute.xlu0 %1521
        %1523 = vrot.lane.b32.xlu0 %v1439, 20
        %v1524 = vpop.permute.xlu0 %1523
        %1525 = vrot.lane.b32.xlu0 %v1440, 20
        %v1526 = vpop.permute.xlu0 %1525
        %1527 = vrot.lane.b32.xlu0 %v1441, 20
        %v1528 = vpop.permute.xlu0 %1527
        %1529 = vrot.lane.b32.xlu0 %v1442, 20
        %v1530 = vpop.permute.xlu0 %1529
        %1531 = vrot.lane.b32.xlu0 %v1443, 20
        %v1532 = vpop.permute.xlu0 %1531
        %1533 = vrot.lane.b32.xlu0 %v1444, 20
        %v1534 = vpop.permute.xlu0 %1533
        %1535 = vrot.lane.b32.xlu0 %v1445, 20
        %v1536 = vpop.permute.xlu0 %1535
        %1537 = vrot.lane.b32.xlu0 %v1446, 20
        %v1538 = vpop.permute.xlu0 %1537
        %1539 = vrot.lane.b32.xlu0 %v1447, 20
        %v1540 = vpop.permute.xlu0 %1539
        %1541 = vrot.lane.b32.xlu0 %v1448, 20
        %v1542 = vpop.permute.xlu0 %1541
        %1543 = vrot.lane.b32.xlu0 %v1449, 20
        %v1544 = vpop.permute.xlu0 %1543
        %1545 = vrot.lane.b32.xlu0 %v1450, 20
        %v1546 = vpop.permute.xlu0 %1545
        %vm1579 = vcmask 195744
        %1580 = vst.msk [vmem:[#allocation5] sm:$0xff] %vm1579, %v1484
        %1581 = vst.msk [vmem:[#allocation5 + $0x8] sm:$0xff] %vm1579, %v1486
        %1582 = vst.msk [vmem:[#allocation5 + $0x10] sm:$0xff] %vm1579, %v1488
        %1583 = vst.msk [vmem:[#allocation5 + $0x18] sm:$0xff] %vm1579, %v1490
        %1584 = vst.msk [vmem:[#allocation5 + $0x20] sm:$0xff] %vm1579, %v1492
        %1585 = vst.msk [vmem:[#allocation5 + $0x28] sm:$0xff] %vm1579, %v1494
        %1586 = vst.msk [vmem:[#allocation5 + $0x30] sm:$0xff] %vm1579, %v1496
        %1587 = vst.msk [vmem:[#allocation5 + $0x38] sm:$0xff] %vm1579, %v1498
        %1588 = vst.msk [vmem:[#allocation5 + $0x40] sm:$0xff] %vm1579, %v1500
        %1589 = vst.msk [vmem:[#allocation5 + $0x48] sm:$0xff] %vm1579, %v1502
        %1590 = vst.msk [vmem:[#allocation5 + $0x50] sm:$0xff] %vm1579, %v1504
        %1591 = vst.msk [vmem:[#allocation5 + $0x58] sm:$0xff] %vm1579, %v1506
        %1592 = vst.msk [vmem:[#allocation5 + $0x60] sm:$0xff] %vm1579, %v1508
        %1593 = vst.msk [vmem:[#allocation5 + $0x68] sm:$0xff] %vm1579, %v1510
        %1594 = vst.msk [vmem:[#allocation5 + $0x70] sm:$0xff] %vm1579, %v1512
        %1595 = vst.msk [vmem:[#allocation5 + $0x78] sm:$0xff] %vm1579, %v1514
        %1596 = vst.msk [vmem:[#allocation5 + $0x80] sm:$0xff] %vm1579, %v1516
        %1597 = vst.msk [vmem:[#allocation5 + $0x88] sm:$0xff] %vm1579, %v1518
        %1598 = vst.msk [vmem:[#allocation5 + $0x90] sm:$0xff] %vm1579, %v1520
        %1599 = vst.msk [vmem:[#allocation5 + $0x98] sm:$0xff] %vm1579, %v1522
        %1600 = vst.msk [vmem:[#allocation5 + $0xa0] sm:$0xff] %vm1579, %v1524
        %1601 = vst.msk [vmem:[#allocation5 + $0xa8] sm:$0xff] %vm1579, %v1526
        %1602 = vst.msk [vmem:[#allocation5 + $0xb0] sm:$0xff] %vm1579, %v1528
        %1603 = vst.msk [vmem:[#allocation5 + $0xb8] sm:$0xff] %vm1579, %v1530
        %1604 = vst.msk [vmem:[#allocation5 + $0xc0] sm:$0xff] %vm1579, %v1532
        %1605 = vst.msk [vmem:[#allocation5 + $0xc8] sm:$0xff] %vm1579, %v1534
        %1606 = vst.msk [vmem:[#allocation5 + $0xd0] sm:$0xff] %vm1579, %v1536
        %1607 = vst.msk [vmem:[#allocation5 + $0xd8] sm:$0xff] %vm1579, %v1538
        %1608 = vst.msk [vmem:[#allocation5 + $0xe0] sm:$0xff] %vm1579, %v1540
        %1609 = vst.msk [vmem:[#allocation5 + $0xe8] sm:$0xff] %vm1579, %v1542
        %1610 = vst.msk [vmem:[#allocation5 + $0xf0] sm:$0xff] %vm1579, %v1544
        %1611 = vst.msk [vmem:[#allocation5 + $0xf8] sm:$0xff] %vm1579, %v1546
        %s1612 = scalar_lea.vmem [#allocation2], 48
        %v1613 = vld [vmem:[%s1612] sm:$0xff]
        %v1614 = vld [vmem:[%s1612 + $0x8] sm:$0xff]
        %v1615 = vld [vmem:[%s1612 + $0x18] sm:$0xff]
        %v1616 = vld [vmem:[%s1612 + $0x20] sm:$0xff]
        %v1617 = vld [vmem:[%s1612 + $0x30] sm:$0xff]
        %v1618 = vld [vmem:[%s1612 + $0x38] sm:$0xff]
        %v1619 = vld [vmem:[%s1612 + $0x48] sm:$0xff]
        %v1620 = vld [vmem:[%s1612 + $0x50] sm:$0xff]
        %v1621 = vld [vmem:[%s1612 + $0x60] sm:$0xff]
        %v1622 = vld [vmem:[%s1612 + $0x68] sm:$0xff]
        %v1623 = vld [vmem:[%s1612 + $0x78] sm:$0xff]
        %v1624 = vld [vmem:[%s1612 + $0x80] sm:$0xff]
        %v1625 = vld [vmem:[%s1612 + $0x90] sm:$0xff]
        %v1626 = vld [vmem:[%s1612 + $0x98] sm:$0xff]
        %v1627 = vld [vmem:[%s1612 + $0xa8] sm:$0xff]
        %v1628 = vld [vmem:[%s1612 + $0xb0] sm:$0xff]
        %v1629 = vld [vmem:[%s1612 + $0xc0] sm:$0xff]
        %v1630 = vld [vmem:[%s1612 + $0xc8] sm:$0xff]
        %v1631 = vld [vmem:[%s1612 + $0xd8] sm:$0xff]
        %v1632 = vld [vmem:[%s1612 + $0xe0] sm:$0xff]
        %v1633 = vld [vmem:[%s1612 + $0xf0] sm:$0xff]
        %v1634 = vld [vmem:[%s1612 + $0xf8] sm:$0xff]
        %v1635 = vld [vmem:[%s1612 + $0x108] sm:$0xff]
        %v1636 = vld [vmem:[%s1612 + $0x110] sm:$0xff]
        %v1637 = vld [vmem:[%s1612 + $0x120] sm:$0xff]
        %v1638 = vld [vmem:[%s1612 + $0x128] sm:$0xff]
        %v1639 = vld [vmem:[%s1612 + $0x138] sm:$0xff]
        %v1640 = vld [vmem:[%s1612 + $0x140] sm:$0xff]
        %v1641 = vld [vmem:[%s1612 + $0x150] sm:$0xff]
        %v1642 = vld [vmem:[%s1612 + $0x158] sm:$0xff]
        %v1643 = vld [vmem:[%s1612 + $0x168] sm:$0xff]
        %v1644 = vld [vmem:[%s1612 + $0x170] sm:$0xff]
        %1677 = vrot.lane.b32.xlu0 %v1613, 24
        %v1678 = vpop.permute.xlu0 %1677
        %1679 = vrot.lane.b32.xlu0 %v1614, 24
        %v1680 = vpop.permute.xlu0 %1679
        %1681 = vrot.lane.b32.xlu0 %v1615, 24
        %v1682 = vpop.permute.xlu0 %1681
        %1683 = vrot.lane.b32.xlu0 %v1616, 24
        %v1684 = vpop.permute.xlu0 %1683
        %1685 = vrot.lane.b32.xlu0 %v1617, 24
        %v1686 = vpop.permute.xlu0 %1685
        %1687 = vrot.lane.b32.xlu0 %v1618, 24
        %v1688 = vpop.permute.xlu0 %1687
        %1689 = vrot.lane.b32.xlu0 %v1619, 24
        %v1690 = vpop.permute.xlu0 %1689
        %1691 = vrot.lane.b32.xlu0 %v1620, 24
        %v1692 = vpop.permute.xlu0 %1691
        %1693 = vrot.lane.b32.xlu0 %v1621, 24
        %v1694 = vpop.permute.xlu0 %1693
        %1695 = vrot.lane.b32.xlu0 %v1622, 24
        %v1696 = vpop.permute.xlu0 %1695
        %1697 = vrot.lane.b32.xlu0 %v1623, 24
        %v1698 = vpop.permute.xlu0 %1697
        %1699 = vrot.lane.b32.xlu0 %v1624, 24
        %v1700 = vpop.permute.xlu0 %1699
        %1701 = vrot.lane.b32.xlu0 %v1625, 24
        %v1702 = vpop.permute.xlu0 %1701
        %1703 = vrot.lane.b32.xlu0 %v1626, 24
        %v1704 = vpop.permute.xlu0 %1703
        %1705 = vrot.lane.b32.xlu0 %v1627, 24
        %v1706 = vpop.permute.xlu0 %1705
        %1707 = vrot.lane.b32.xlu0 %v1628, 24
        %v1708 = vpop.permute.xlu0 %1707
        %1709 = vrot.lane.b32.xlu0 %v1629, 24
        %v1710 = vpop.permute.xlu0 %1709
        %1711 = vrot.lane.b32.xlu0 %v1630, 24
        %v1712 = vpop.permute.xlu0 %1711
        %1713 = vrot.lane.b32.xlu0 %v1631, 24
        %v1714 = vpop.permute.xlu0 %1713
        %1715 = vrot.lane.b32.xlu0 %v1632, 24
        %v1716 = vpop.permute.xlu0 %1715
        %1717 = vrot.lane.b32.xlu0 %v1633, 24
        %v1718 = vpop.permute.xlu0 %1717
        %1719 = vrot.lane.b32.xlu0 %v1634, 24
        %v1720 = vpop.permute.xlu0 %1719
        %1721 = vrot.lane.b32.xlu0 %v1635, 24
        %v1722 = vpop.permute.xlu0 %1721
        %1723 = vrot.lane.b32.xlu0 %v1636, 24
        %v1724 = vpop.permute.xlu0 %1723
        %1725 = vrot.lane.b32.xlu0 %v1637, 24
        %v1726 = vpop.permute.xlu0 %1725
        %1727 = vrot.lane.b32.xlu0 %v1638, 24
        %v1728 = vpop.permute.xlu0 %1727
        %1729 = vrot.lane.b32.xlu0 %v1639, 24
        %v1730 = vpop.permute.xlu0 %1729
        %1731 = vrot.lane.b32.xlu0 %v1640, 24
        %v1732 = vpop.permute.xlu0 %1731
        %1733 = vrot.lane.b32.xlu0 %v1641, 24
        %v1734 = vpop.permute.xlu0 %1733
        %1735 = vrot.lane.b32.xlu0 %v1642, 24
        %v1736 = vpop.permute.xlu0 %1735
        %1737 = vrot.lane.b32.xlu0 %v1643, 24
        %v1738 = vpop.permute.xlu0 %1737
        %1739 = vrot.lane.b32.xlu0 %v1644, 24
        %v1740 = vpop.permute.xlu0 %1739
        %vm1773 = vcmask 228544
        %1774 = vst.msk [vmem:[#allocation5] sm:$0xff] %vm1773, %v1678
        %1775 = vst.msk [vmem:[#allocation5 + $0x8] sm:$0xff] %vm1773, %v1680
        %1776 = vst.msk [vmem:[#allocation5 + $0x10] sm:$0xff] %vm1773, %v1682
        %1777 = vst.msk [vmem:[#allocation5 + $0x18] sm:$0xff] %vm1773, %v1684
        %1778 = vst.msk [vmem:[#allocation5 + $0x20] sm:$0xff] %vm1773, %v1686
        %1779 = vst.msk [vmem:[#allocation5 + $0x28] sm:$0xff] %vm1773, %v1688
        %1780 = vst.msk [vmem:[#allocation5 + $0x30] sm:$0xff] %vm1773, %v1690
        %1781 = vst.msk [vmem:[#allocation5 + $0x38] sm:$0xff] %vm1773, %v1692
        %1782 = vst.msk [vmem:[#allocation5 + $0x40] sm:$0xff] %vm1773, %v1694
        %1783 = vst.msk [vmem:[#allocation5 + $0x48] sm:$0xff] %vm1773, %v1696
        %1784 = vst.msk [vmem:[#allocation5 + $0x50] sm:$0xff] %vm1773, %v1698
        %1785 = vst.msk [vmem:[#allocation5 + $0x58] sm:$0xff] %vm1773, %v1700
        %1786 = vst.msk [vmem:[#allocation5 + $0x60] sm:$0xff] %vm1773, %v1702
        %1787 = vst.msk [vmem:[#allocation5 + $0x68] sm:$0xff] %vm1773, %v1704
        %1788 = vst.msk [vmem:[#allocation5 + $0x70] sm:$0xff] %vm1773, %v1706
        %1789 = vst.msk [vmem:[#allocation5 + $0x78] sm:$0xff] %vm1773, %v1708
        %1790 = vst.msk [vmem:[#allocation5 + $0x80] sm:$0xff] %vm1773, %v1710
        %1791 = vst.msk [vmem:[#allocation5 + $0x88] sm:$0xff] %vm1773, %v1712
        %1792 = vst.msk [vmem:[#allocation5 + $0x90] sm:$0xff] %vm1773, %v1714
        %1793 = vst.msk [vmem:[#allocation5 + $0x98] sm:$0xff] %vm1773, %v1716
        %1794 = vst.msk [vmem:[#allocation5 + $0xa0] sm:$0xff] %vm1773, %v1718
        %1795 = vst.msk [vmem:[#allocation5 + $0xa8] sm:$0xff] %vm1773, %v1720
        %1796 = vst.msk [vmem:[#allocation5 + $0xb0] sm:$0xff] %vm1773, %v1722
        %1797 = vst.msk [vmem:[#allocation5 + $0xb8] sm:$0xff] %vm1773, %v1724
        %1798 = vst.msk [vmem:[#allocation5 + $0xc0] sm:$0xff] %vm1773, %v1726
        %1799 = vst.msk [vmem:[#allocation5 + $0xc8] sm:$0xff] %vm1773, %v1728
        %1800 = vst.msk [vmem:[#allocation5 + $0xd0] sm:$0xff] %vm1773, %v1730
        %1801 = vst.msk [vmem:[#allocation5 + $0xd8] sm:$0xff] %vm1773, %v1732
        %1802 = vst.msk [vmem:[#allocation5 + $0xe0] sm:$0xff] %vm1773, %v1734
        %1803 = vst.msk [vmem:[#allocation5 + $0xe8] sm:$0xff] %vm1773, %v1736
        %1804 = vst.msk [vmem:[#allocation5 + $0xf0] sm:$0xff] %vm1773, %v1738
        %1805 = vst.msk [vmem:[#allocation5 + $0xf8] sm:$0xff] %vm1773, %v1740
        %v1806 = vld [vmem:[%s1612 + $0x1] sm:$0xff]
        %v1807 = vld [vmem:[%s1612 + $0x9] sm:$0xff]
        %v1808 = vld [vmem:[%s1612 + $0x19] sm:$0xff]
        %v1809 = vld [vmem:[%s1612 + $0x21] sm:$0xff]
        %v1810 = vld [vmem:[%s1612 + $0x31] sm:$0xff]
        %v1811 = vld [vmem:[%s1612 + $0x39] sm:$0xff]
        %v1812 = vld [vmem:[%s1612 + $0x49] sm:$0xff]
        %v1813 = vld [vmem:[%s1612 + $0x51] sm:$0xff]
        %v1814 = vld [vmem:[%s1612 + $0x61] sm:$0xff]
        %v1815 = vld [vmem:[%s1612 + $0x69] sm:$0xff]
        %v1816 = vld [vmem:[%s1612 + $0x79] sm:$0xff]
        %v1817 = vld [vmem:[%s1612 + $0x81] sm:$0xff]
        %v1818 = vld [vmem:[%s1612 + $0x91] sm:$0xff]
        %v1819 = vld [vmem:[%s1612 + $0x99] sm:$0xff]
        %v1820 = vld [vmem:[%s1612 + $0xa9] sm:$0xff]
        %v1821 = vld [vmem:[%s1612 + $0xb1] sm:$0xff]
        %v1822 = vld [vmem:[%s1612 + $0xc1] sm:$0xff]
        %v1823 = vld [vmem:[%s1612 + $0xc9] sm:$0xff]
        %v1824 = vld [vmem:[%s1612 + $0xd9] sm:$0xff]
        %v1825 = vld [vmem:[%s1612 + $0xe1] sm:$0xff]
        %v1826 = vld [vmem:[%s1612 + $0xf1] sm:$0xff]
        %v1827 = vld [vmem:[%s1612 + $0xf9] sm:$0xff]
        %v1828 = vld [vmem:[%s1612 + $0x109] sm:$0xff]
        %v1829 = vld [vmem:[%s1612 + $0x111] sm:$0xff]
        %v1830 = vld [vmem:[%s1612 + $0x121] sm:$0xff]
        %v1831 = vld [vmem:[%s1612 + $0x129] sm:$0xff]
        %v1832 = vld [vmem:[%s1612 + $0x139] sm:$0xff]
        %v1833 = vld [vmem:[%s1612 + $0x141] sm:$0xff]
        %v1834 = vld [vmem:[%s1612 + $0x151] sm:$0xff]
        %v1835 = vld [vmem:[%s1612 + $0x159] sm:$0xff]
        %v1836 = vld [vmem:[%s1612 + $0x169] sm:$0xff]
        %v1837 = vld [vmem:[%s1612 + $0x171] sm:$0xff]
        %1870 = vrot.lane.b32.xlu0 %v1806, 28
        %v1871 = vpop.permute.xlu0 %1870
        %1872 = vrot.lane.b32.xlu0 %v1807, 28
        %v1873 = vpop.permute.xlu0 %1872
        %1874 = vrot.lane.b32.xlu0 %v1808, 28
        %v1875 = vpop.permute.xlu0 %1874
        %1876 = vrot.lane.b32.xlu0 %v1809, 28
        %v1877 = vpop.permute.xlu0 %1876
        %1878 = vrot.lane.b32.xlu0 %v1810, 28
        %v1879 = vpop.permute.xlu0 %1878
        %1880 = vrot.lane.b32.xlu0 %v1811, 28
        %v1881 = vpop.permute.xlu0 %1880
        %1882 = vrot.lane.b32.xlu0 %v1812, 28
        %v1883 = vpop.permute.xlu0 %1882
        %1884 = vrot.lane.b32.xlu0 %v1813, 28
        %v1885 = vpop.permute.xlu0 %1884
        %1886 = vrot.lane.b32.xlu0 %v1814, 28
        %v1887 = vpop.permute.xlu0 %1886
        %1888 = vrot.lane.b32.xlu0 %v1815, 28
        %v1889 = vpop.permute.xlu0 %1888
        %1890 = vrot.lane.b32.xlu0 %v1816, 28
        %v1891 = vpop.permute.xlu0 %1890
        %1892 = vrot.lane.b32.xlu0 %v1817, 28
        %v1893 = vpop.permute.xlu0 %1892
        %1894 = vrot.lane.b32.xlu0 %v1818, 28
        %v1895 = vpop.permute.xlu0 %1894
        %1896 = vrot.lane.b32.xlu0 %v1819, 28
        %v1897 = vpop.permute.xlu0 %1896
        %1898 = vrot.lane.b32.xlu0 %v1820, 28
        %v1899 = vpop.permute.xlu0 %1898
        %1900 = vrot.lane.b32.xlu0 %v1821, 28
        %v1901 = vpop.permute.xlu0 %1900
        %1902 = vrot.lane.b32.xlu0 %v1822, 28
        %v1903 = vpop.permute.xlu0 %1902
        %1904 = vrot.lane.b32.xlu0 %v1823, 28
        %v1905 = vpop.permute.xlu0 %1904
        %1906 = vrot.lane.b32.xlu0 %v1824, 28
        %v1907 = vpop.permute.xlu0 %1906
        %1908 = vrot.lane.b32.xlu0 %v1825, 28
        %v1909 = vpop.permute.xlu0 %1908
        %1910 = vrot.lane.b32.xlu0 %v1826, 28
        %v1911 = vpop.permute.xlu0 %1910
        %1912 = vrot.lane.b32.xlu0 %v1827, 28
        %v1913 = vpop.permute.xlu0 %1912
        %1914 = vrot.lane.b32.xlu0 %v1828, 28
        %v1915 = vpop.permute.xlu0 %1914
        %1916 = vrot.lane.b32.xlu0 %v1829, 28
        %v1917 = vpop.permute.xlu0 %1916
        %1918 = vrot.lane.b32.xlu0 %v1830, 28
        %v1919 = vpop.permute.xlu0 %1918
        %1920 = vrot.lane.b32.xlu0 %v1831, 28
        %v1921 = vpop.permute.xlu0 %1920
        %1922 = vrot.lane.b32.xlu0 %v1832, 28
        %v1923 = vpop.permute.xlu0 %1922
        %1924 = vrot.lane.b32.xlu0 %v1833, 28
        %v1925 = vpop.permute.xlu0 %1924
        %1926 = vrot.lane.b32.xlu0 %v1834, 28
        %v1927 = vpop.permute.xlu0 %1926
        %1928 = vrot.lane.b32.xlu0 %v1835, 28
        %v1929 = vpop.permute.xlu0 %1928
        %1930 = vrot.lane.b32.xlu0 %v1836, 28
        %v1931 = vpop.permute.xlu0 %1930
        %1932 = vrot.lane.b32.xlu0 %v1837, 28
        %v1933 = vpop.permute.xlu0 %1932
        %vm1966 = vcmask 261344
        %1967 = vst.msk [vmem:[#allocation5] sm:$0xff] %vm1966, %v1871
        %1968 = vst.msk [vmem:[#allocation5 + $0x8] sm:$0xff] %vm1966, %v1873
        %1969 = vst.msk [vmem:[#allocation5 + $0x10] sm:$0xff] %vm1966, %v1875
        %1970 = vst.msk [vmem:[#allocation5 + $0x18] sm:$0xff] %vm1966, %v1877
        %1971 = vst.msk [vmem:[#allocation5 + $0x20] sm:$0xff] %vm1966, %v1879
        %1972 = vst.msk [vmem:[#allocation5 + $0x28] sm:$0xff] %vm1966, %v1881
        %1973 = vst.msk [vmem:[#allocation5 + $0x30] sm:$0xff] %vm1966, %v1883
        %1974 = vst.msk [vmem:[#allocation5 + $0x38] sm:$0xff] %vm1966, %v1885
        %1975 = vst.msk [vmem:[#allocation5 + $0x40] sm:$0xff] %vm1966, %v1887
        %1976 = vst.msk [vmem:[#allocation5 + $0x48] sm:$0xff] %vm1966, %v1889
        %1977 = vst.msk [vmem:[#allocation5 + $0x50] sm:$0xff] %vm1966, %v1891
        %1978 = vst.msk [vmem:[#allocation5 + $0x58] sm:$0xff] %vm1966, %v1893
        %1979 = vst.msk [vmem:[#allocation5 + $0x60] sm:$0xff] %vm1966, %v1895
        %1980 = vst.msk [vmem:[#allocation5 + $0x68] sm:$0xff] %vm1966, %v1897
        %1981 = vst.msk [vmem:[#allocation5 + $0x70] sm:$0xff] %vm1966, %v1899
        %1982 = vst.msk [vmem:[#allocation5 + $0x78] sm:$0xff] %vm1966, %v1901
        %1983 = vst.msk [vmem:[#allocation5 + $0x80] sm:$0xff] %vm1966, %v1903
        %1984 = vst.msk [vmem:[#allocation5 + $0x88] sm:$0xff] %vm1966, %v1905
        %1985 = vst.msk [vmem:[#allocation5 + $0x90] sm:$0xff] %vm1966, %v1907
        %1986 = vst.msk [vmem:[#allocation5 + $0x98] sm:$0xff] %vm1966, %v1909
        %1987 = vst.msk [vmem:[#allocation5 + $0xa0] sm:$0xff] %vm1966, %v1911
        %1988 = vst.msk [vmem:[#allocation5 + $0xa8] sm:$0xff] %vm1966, %v1913
        %1989 = vst.msk [vmem:[#allocation5 + $0xb0] sm:$0xff] %vm1966, %v1915
        %1990 = vst.msk [vmem:[#allocation5 + $0xb8] sm:$0xff] %vm1966, %v1917
        %1991 = vst.msk [vmem:[#allocation5 + $0xc0] sm:$0xff] %vm1966, %v1919
        %1992 = vst.msk [vmem:[#allocation5 + $0xc8] sm:$0xff] %vm1966, %v1921
        %1993 = vst.msk [vmem:[#allocation5 + $0xd0] sm:$0xff] %vm1966, %v1923
        %1994 = vst.msk [vmem:[#allocation5 + $0xd8] sm:$0xff] %vm1966, %v1925
        %1995 = vst.msk [vmem:[#allocation5 + $0xe0] sm:$0xff] %vm1966, %v1927
        %1996 = vst.msk [vmem:[#allocation5 + $0xe8] sm:$0xff] %vm1966, %v1929
        %1997 = vst.msk [vmem:[#allocation5 + $0xf0] sm:$0xff] %vm1966, %v1931
        %1998 = vst.msk [vmem:[#allocation5 + $0xf8] sm:$0xff] %vm1966, %v1933
        %v1999 = vld [vmem:[%s1612 + $0x2] sm:$0xff]
        %v2000 = vld [vmem:[%s1612 + $0xa] sm:$0xff]
        %v2001 = vld [vmem:[%s1612 + $0x1a] sm:$0xff]
        %v2002 = vld [vmem:[%s1612 + $0x22] sm:$0xff]
        %v2003 = vld [vmem:[%s1612 + $0x32] sm:$0xff]
        %v2004 = vld [vmem:[%s1612 + $0x3a] sm:$0xff]
        %v2005 = vld [vmem:[%s1612 + $0x4a] sm:$0xff]
        %v2006 = vld [vmem:[%s1612 + $0x52] sm:$0xff]
        %v2007 = vld [vmem:[%s1612 + $0x62] sm:$0xff]
        %v2008 = vld [vmem:[%s1612 + $0x6a] sm:$0xff]
        %v2009 = vld [vmem:[%s1612 + $0x7a] sm:$0xff]
        %v2010 = vld [vmem:[%s1612 + $0x82] sm:$0xff]
        %v2011 = vld [vmem:[%s1612 + $0x92] sm:$0xff]
        %v2012 = vld [vmem:[%s1612 + $0x9a] sm:$0xff]
        %v2013 = vld [vmem:[%s1612 + $0xaa] sm:$0xff]
        %v2014 = vld [vmem:[%s1612 + $0xb2] sm:$0xff]
        %v2015 = vld [vmem:[%s1612 + $0xc2] sm:$0xff]
        %v2016 = vld [vmem:[%s1612 + $0xca] sm:$0xff]
        %v2017 = vld [vmem:[%s1612 + $0xda] sm:$0xff]
        %v2018 = vld [vmem:[%s1612 + $0xe2] sm:$0xff]
        %v2019 = vld [vmem:[%s1612 + $0xf2] sm:$0xff]
        %v2020 = vld [vmem:[%s1612 + $0xfa] sm:$0xff]
        %v2021 = vld [vmem:[%s1612 + $0x10a] sm:$0xff]
        %v2022 = vld [vmem:[%s1612 + $0x112] sm:$0xff]
        %v2023 = vld [vmem:[%s1612 + $0x122] sm:$0xff]
        %v2024 = vld [vmem:[%s1612 + $0x12a] sm:$0xff]
        %v2025 = vld [vmem:[%s1612 + $0x13a] sm:$0xff]
        %v2026 = vld [vmem:[%s1612 + $0x142] sm:$0xff]
        %v2027 = vld [vmem:[%s1612 + $0x152] sm:$0xff]
        %v2028 = vld [vmem:[%s1612 + $0x15a] sm:$0xff]
        %v2029 = vld [vmem:[%s1612 + $0x16a] sm:$0xff]
        %v2030 = vld [vmem:[%s1612 + $0x172] sm:$0xff]
        %2063 = vrot.lane.b32.xlu0 %v1999, 32
        %v2064 = vpop.permute.xlu0 %2063
        %2065 = vrot.lane.b32.xlu0 %v2000, 32
        %v2066 = vpop.permute.xlu0 %2065
        %2067 = vrot.lane.b32.xlu0 %v2001, 32
        %v2068 = vpop.permute.xlu0 %2067
        %2069 = vrot.lane.b32.xlu0 %v2002, 32
        %v2070 = vpop.permute.xlu0 %2069
        %2071 = vrot.lane.b32.xlu0 %v2003, 32
        %v2072 = vpop.permute.xlu0 %2071
        %2073 = vrot.lane.b32.xlu0 %v2004, 32
        %v2074 = vpop.permute.xlu0 %2073
        %2075 = vrot.lane.b32.xlu0 %v2005, 32
        %v2076 = vpop.permute.xlu0 %2075
        %2077 = vrot.lane.b32.xlu0 %v2006, 32
        %v2078 = vpop.permute.xlu0 %2077
        %2079 = vrot.lane.b32.xlu0 %v2007, 32
        %v2080 = vpop.permute.xlu0 %2079
        %2081 = vrot.lane.b32.xlu0 %v2008, 32
        %v2082 = vpop.permute.xlu0 %2081
        %2083 = vrot.lane.b32.xlu0 %v2009, 32
        %v2084 = vpop.permute.xlu0 %2083
        %2085 = vrot.lane.b32.xlu0 %v2010, 32
        %v2086 = vpop.permute.xlu0 %2085
        %2087 = vrot.lane.b32.xlu0 %v2011, 32
        %v2088 = vpop.permute.xlu0 %2087
        %2089 = vrot.lane.b32.xlu0 %v2012, 32
        %v2090 = vpop.permute.xlu0 %2089
        %2091 = vrot.lane.b32.xlu0 %v2013, 32
        %v2092 = vpop.permute.xlu0 %2091
        %2093 = vrot.lane.b32.xlu0 %v2014, 32
        %v2094 = vpop.permute.xlu0 %2093
        %2095 = vrot.lane.b32.xlu0 %v2015, 32
        %v2096 = vpop.permute.xlu0 %2095
        %2097 = vrot.lane.b32.xlu0 %v2016, 32
        %v2098 = vpop.permute.xlu0 %2097
        %2099 = vrot.lane.b32.xlu0 %v2017, 32
        %v2100 = vpop.permute.xlu0 %2099
        %2101 = vrot.lane.b32.xlu0 %v2018, 32
        %v2102 = vpop.permute.xlu0 %2101
        %2103 = vrot.lane.b32.xlu0 %v2019, 32
        %v2104 = vpop.permute.xlu0 %2103
        %2105 = vrot.lane.b32.xlu0 %v2020, 32
        %v2106 = vpop.permute.xlu0 %2105
        %2107 = vrot.lane.b32.xlu0 %v2021, 32
        %v2108 = vpop.permute.xlu0 %2107
        %2109 = vrot.lane.b32.xlu0 %v2022, 32
        %v2110 = vpop.permute.xlu0 %2109
        %2111 = vrot.lane.b32.xlu0 %v2023, 32
        %v2112 = vpop.permute.xlu0 %2111
        %2113 = vrot.lane.b32.xlu0 %v2024, 32
        %v2114 = vpop.permute.xlu0 %2113
        %2115 = vrot.lane.b32.xlu0 %v2025, 32
        %v2116 = vpop.permute.xlu0 %2115
        %2117 = vrot.lane.b32.xlu0 %v2026, 32
        %v2118 = vpop.permute.xlu0 %2117
        %2119 = vrot.lane.b32.xlu0 %v2027, 32
        %v2120 = vpop.permute.xlu0 %2119
        %2121 = vrot.lane.b32.xlu0 %v2028, 32
        %v2122 = vpop.permute.xlu0 %2121
        %2123 = vrot.lane.b32.xlu0 %v2029, 32
        %v2124 = vpop.permute.xlu0 %2123
        %2125 = vrot.lane.b32.xlu0 %v2030, 32
        %v2126 = vpop.permute.xlu0 %2125
        %vm2159 = vcmask 294144
        %2160 = vst.msk [vmem:[#allocation5] sm:$0xff] %vm2159, %v2064
        %2161 = vst.msk [vmem:[#allocation5 + $0x8] sm:$0xff] %vm2159, %v2066
        %2162 = vst.msk [vmem:[#allocation5 + $0x10] sm:$0xff] %vm2159, %v2068
        %2163 = vst.msk [vmem:[#allocation5 + $0x18] sm:$0xff] %vm2159, %v2070
        %2164 = vst.msk [vmem:[#allocation5 + $0x20] sm:$0xff] %vm2159, %v2072
        %2165 = vst.msk [vmem:[#allocation5 + $0x28] sm:$0xff] %vm2159, %v2074
        %2166 = vst.msk [vmem:[#allocation5 + $0x30] sm:$0xff] %vm2159, %v2076
        %2167 = vst.msk [vmem:[#allocation5 + $0x38] sm:$0xff] %vm2159, %v2078
        %2168 = vst.msk [vmem:[#allocation5 + $0x40] sm:$0xff] %vm2159, %v2080
        %2169 = vst.msk [vmem:[#allocation5 + $0x48] sm:$0xff] %vm2159, %v2082
        %2170 = vst.msk [vmem:[#allocation5 + $0x50] sm:$0xff] %vm2159, %v2084
        %2171 = vst.msk [vmem:[#allocation5 + $0x58] sm:$0xff] %vm2159, %v2086
        %2172 = vst.msk [vmem:[#allocation5 + $0x60] sm:$0xff] %vm2159, %v2088
        %2173 = vst.msk [vmem:[#allocation5 + $0x68] sm:$0xff] %vm2159, %v2090
        %2174 = vst.msk [vmem:[#allocation5 + $0x70] sm:$0xff] %vm2159, %v2092
        %2175 = vst.msk [vmem:[#allocation5 + $0x78] sm:$0xff] %vm2159, %v2094
        %2176 = vst.msk [vmem:[#allocation5 + $0x80] sm:$0xff] %vm2159, %v2096
        %2177 = vst.msk [vmem:[#allocation5 + $0x88] sm:$0xff] %vm2159, %v2098
        %2178 = vst.msk [vmem:[#allocation5 + $0x90] sm:$0xff] %vm2159, %v2100
        %2179 = vst.msk [vmem:[#allocation5 + $0x98] sm:$0xff] %vm2159, %v2102
        %2180 = vst.msk [vmem:[#allocation5 + $0xa0] sm:$0xff] %vm2159, %v2104
        %2181 = vst.msk [vmem:[#allocation5 + $0xa8] sm:$0xff] %vm2159, %v2106
        %2182 = vst.msk [vmem:[#allocation5 + $0xb0] sm:$0xff] %vm2159, %v2108
        %2183 = vst.msk [vmem:[#allocation5 + $0xb8] sm:$0xff] %vm2159, %v2110
        %2184 = vst.msk [vmem:[#allocation5 + $0xc0] sm:$0xff] %vm2159, %v2112
        %2185 = vst.msk [vmem:[#allocation5 + $0xc8] sm:$0xff] %vm2159, %v2114
        %2186 = vst.msk [vmem:[#allocation5 + $0xd0] sm:$0xff] %vm2159, %v2116
        %2187 = vst.msk [vmem:[#allocation5 + $0xd8] sm:$0xff] %vm2159, %v2118
        %2188 = vst.msk [vmem:[#allocation5 + $0xe0] sm:$0xff] %vm2159, %v2120
        %2189 = vst.msk [vmem:[#allocation5 + $0xe8] sm:$0xff] %vm2159, %v2122
        %2190 = vst.msk [vmem:[#allocation5 + $0xf0] sm:$0xff] %vm2159, %v2124
        %2191 = vst.msk [vmem:[#allocation5 + $0xf8] sm:$0xff] %vm2159, %v2126
        %v2192 = vld [vmem:[#allocation5] sm:$0xff]
        %v2193 = vld [vmem:[#allocation5 + $0x8] sm:$0xff]
        %v2194 = vld [vmem:[#allocation5 + $0x10] sm:$0xff]
        %v2195 = vld [vmem:[#allocation5 + $0x18] sm:$0xff]
        %v2196 = vld [vmem:[#allocation5 + $0x20] sm:$0xff]
        %v2197 = vld [vmem:[#allocation5 + $0x28] sm:$0xff]
        %v2198 = vld [vmem:[#allocation5 + $0x30] sm:$0xff]
        %v2199 = vld [vmem:[#allocation5 + $0x38] sm:$0xff]
        %v2200 = vld [vmem:[#allocation5 + $0x40] sm:$0xff]
        %v2201 = vld [vmem:[#allocation5 + $0x48] sm:$0xff]
        %v2202 = vld [vmem:[#allocation5 + $0x50] sm:$0xff]
        %v2203 = vld [vmem:[#allocation5 + $0x58] sm:$0xff]
        %v2204 = vld [vmem:[#allocation5 + $0x60] sm:$0xff]
        %v2205 = vld [vmem:[#allocation5 + $0x68] sm:$0xff]
        %v2206 = vld [vmem:[#allocation5 + $0x70] sm:$0xff]
        %v2207 = vld [vmem:[#allocation5 + $0x78] sm:$0xff]
        %v2208 = vld [vmem:[#allocation5 + $0x80] sm:$0xff]
        %v2209 = vld [vmem:[#allocation5 + $0x88] sm:$0xff]
        %v2210 = vld [vmem:[#allocation5 + $0x90] sm:$0xff]
        %v2211 = vld [vmem:[#allocation5 + $0x98] sm:$0xff]
        %v2212 = vld [vmem:[#allocation5 + $0xa0] sm:$0xff]
        %v2213 = vld [vmem:[#allocation5 + $0xa8] sm:$0xff]
        %v2214 = vld [vmem:[#allocation5 + $0xb0] sm:$0xff]
        %v2215 = vld [vmem:[#allocation5 + $0xb8] sm:$0xff]
        %v2216 = vld [vmem:[#allocation5 + $0xc0] sm:$0xff]
        %v2217 = vld [vmem:[#allocation5 + $0xc8] sm:$0xff]
        %v2218 = vld [vmem:[#allocation5 + $0xd0] sm:$0xff]
        %v2219 = vld [vmem:[#allocation5 + $0xd8] sm:$0xff]
        %v2220 = vld [vmem:[#allocation5 + $0xe0] sm:$0xff]
        %v2221 = vld [vmem:[#allocation5 + $0xe8] sm:$0xff]
        %v2222 = vld [vmem:[#allocation5 + $0xf0] sm:$0xff]
        %v2223 = vld [vmem:[#allocation5 + $0xf8] sm:$0xff]
        %v2224 = vld [vmem:[%s1] sm:$0xff]
        %v2225 = vld [vmem:[%s1 + $0x8] sm:$0xff]
        %v2226 = vld [vmem:[%s1 + $0x10] sm:$0xff]
        %v2227 = vld [vmem:[%s1 + $0x18] sm:$0xff]
        %v2228 = vld [vmem:[%s1 + $0x20] sm:$0xf]
        %v2229 = vld [vmem:[%s2] sm:$0x1]
        %v2231 = vperm.slane %v2229, 0
        %vm2233 = vcmask 293888
        %v2235 = vsel %vm2233, %v2192, 0
        %v2238 = vsel %vm2233, %v2193, 0
        %v2241 = vsel %vm2233, %v2194, 0
        %v2244 = vsel %vm2233, %v2195, 0
        %v2247 = vsel %vm2233, %v2196, 0
        %v2250 = vsel %vm2233, %v2197, 0
        %v2253 = vsel %vm2233, %v2198, 0
        %v2256 = vsel %vm2233, %v2199, 0
        %v2259 = vsel %vm2233, %v2200, 0
        %v2262 = vsel %vm2233, %v2201, 0
        %v2265 = vsel %vm2233, %v2202, 0
        %v2268 = vsel %vm2233, %v2203, 0
        %v2271 = vsel %vm2233, %v2204, 0
        %v2274 = vsel %vm2233, %v2205, 0
        %v2277 = vsel %vm2233, %v2206, 0
        %v2280 = vsel %vm2233, %v2207, 0
        %v2283 = vsel %vm2233, %v2208, 0
        %v2286 = vsel %vm2233, %v2209, 0
        %v2289 = vsel %vm2233, %v2210, 0
        %v2292 = vsel %vm2233, %v2211, 0
        %v2295 = vsel %vm2233, %v2212, 0
        %v2298 = vsel %vm2233, %v2213, 0
        %v2301 = vsel %vm2233, %v2214, 0
        %v2304 = vsel %vm2233, %v2215, 0
        %v2307 = vsel %vm2233, %v2216, 0
        %v2310 = vsel %vm2233, %v2217, 0
        %v2313 = vsel %vm2233, %v2218, 0
        %v2316 = vsel %vm2233, %v2219, 0
        %v2319 = vsel %vm2233, %v2220, 0
        %v2322 = vsel %vm2233, %v2221, 0
        %v2325 = vsel %vm2233, %v2222, 0
        %v2328 = vsel %vm2233, %v2223, 0
        %vm2330 = vcmask 1043456
        %v2332 = vsel %vm2330, %v2228, 0
        %2334 = vmatpush.msra.mxu0 0.0
        %2335 = vmatpush.msra.mxu0 0.0
        %2336 = vmatpush.msra.mxu0 0.0
        %2337 = vmatpush.msra.mxu0 0.0
        %2338 = vmatpush.msra.mxu0 0.0
        %2339 = vmatpush.msra.mxu0 0.0
        %2340 = vmatpush.msra.mxu0 0.0
        %2341 = vmatpush.msra.mxu0 0.0
        %2342 = vmatpush.msra.mxu0 0.0
        %2343 = vmatpush.msra.mxu0 0.0
        %2344 = vmatpush.msra.mxu0 0.0
        %2345 = vmatpush.msra.mxu0 %v2332
        %2346 = vmatpush.msra.mxu0 %v2227
        %2347 = vmatpush.msra.mxu0 %v2226
        %2348 = vmatpush.msra.mxu0 %v2225
        %2349 = vmatpush.msra.mxu0 %v2224
        %2350 = vmatmul.f32.gmra.mxu0 %v2235
        %v2351 = vpop.f32.mrf.mxu0
        %v2352 = vadd.f32 %v2231, %v2351
        %2353 = vmatmul.f32.gmra.mxu0 %v2238
        %v2354 = vpop.f32.mrf.mxu0
        %v2355 = vadd.f32 %v2231, %v2354
        %2356 = vmatmul.f32.gmra.mxu0 %v2241
        %v2357 = vpop.f32.mrf.mxu0
        %v2358 = vadd.f32 %v2231, %v2357
        %2359 = vmatmul.f32.gmra.mxu0 %v2244
        %v2360 = vpop.f32.mrf.mxu0
        %v2361 = vadd.f32 %v2231, %v2360
        %2362 = vmatmul.f32.gmra.mxu0 %v2247
        %v2363 = vpop.f32.mrf.mxu0
        %v2364 = vadd.f32 %v2231, %v2363
        %2365 = vmatmul.f32.gmra.mxu0 %v2250
        %v2366 = vpop.f32.mrf.mxu0
        %v2367 = vadd.f32 %v2231, %v2366
        %2368 = vmatmul.f32.gmra.mxu0 %v2253
        %v2369 = vpop.f32.mrf.mxu0
        %v2370 = vadd.f32 %v2231, %v2369
        %2371 = vmatmul.f32.gmra.mxu0 %v2256
        %v2372 = vpop.f32.mrf.mxu0
        %v2373 = vadd.f32 %v2231, %v2372
        %2374 = vmatmul.f32.gmra.mxu0 %v2259
        %v2375 = vpop.f32.mrf.mxu0
        %v2376 = vadd.f32 %v2231, %v2375
        %2377 = vmatmul.f32.gmra.mxu0 %v2262
        %v2378 = vpop.f32.mrf.mxu0
        %v2379 = vadd.f32 %v2231, %v2378
        %2380 = vmatmul.f32.gmra.mxu0 %v2265
        %v2381 = vpop.f32.mrf.mxu0
        %v2382 = vadd.f32 %v2231, %v2381
        %2383 = vmatmul.f32.gmra.mxu0 %v2268
        %v2384 = vpop.f32.mrf.mxu0
        %v2385 = vadd.f32 %v2231, %v2384
        %2386 = vmatmul.f32.gmra.mxu0 %v2271
        %v2387 = vpop.f32.mrf.mxu0
        %v2388 = vadd.f32 %v2231, %v2387
        %2389 = vmatmul.f32.gmra.mxu0 %v2274
        %v2390 = vpop.f32.mrf.mxu0
        %v2391 = vadd.f32 %v2231, %v2390
        %2392 = vmatmul.f32.gmra.mxu0 %v2277
        %v2393 = vpop.f32.mrf.mxu0
        %v2394 = vadd.f32 %v2231, %v2393
        %2395 = vmatmul.f32.gmra.mxu0 %v2280
        %v2396 = vpop.f32.mrf.mxu0
        %v2397 = vadd.f32 %v2231, %v2396
        %2398 = vmatmul.f32.gmra.mxu0 %v2283
        %v2399 = vpop.f32.mrf.mxu0
        %v2400 = vadd.f32 %v2231, %v2399
        %2401 = vmatmul.f32.gmra.mxu0 %v2286
        %v2402 = vpop.f32.mrf.mxu0
        %v2403 = vadd.f32 %v2231, %v2402
        %2404 = vmatmul.f32.gmra.mxu0 %v2289
        %v2405 = vpop.f32.mrf.mxu0
        %v2406 = vadd.f32 %v2231, %v2405
        %2407 = vmatmul.f32.gmra.mxu0 %v2292
        %v2408 = vpop.f32.mrf.mxu0
        %v2409 = vadd.f32 %v2231, %v2408
        %2410 = vmatmul.f32.gmra.mxu0 %v2295
        %v2411 = vpop.f32.mrf.mxu0
        %v2412 = vadd.f32 %v2231, %v2411
        %2413 = vmatmul.f32.gmra.mxu0 %v2298
        %v2414 = vpop.f32.mrf.mxu0
        %v2415 = vadd.f32 %v2231, %v2414
        %2416 = vmatmul.f32.gmra.mxu0 %v2301
        %v2417 = vpop.f32.mrf.mxu0
        %v2418 = vadd.f32 %v2231, %v2417
        %2419 = vmatmul.f32.gmra.mxu0 %v2304
        %v2420 = vpop.f32.mrf.mxu0
        %v2421 = vadd.f32 %v2231, %v2420
        %2422 = vmatmul.f32.gmra.mxu0 %v2307
        %v2423 = vpop.f32.mrf.mxu0
        %v2424 = vadd.f32 %v2231, %v2423
        %2425 = vmatmul.f32.gmra.mxu0 %v2310
        %v2426 = vpop.f32.mrf.mxu0
        %v2427 = vadd.f32 %v2231, %v2426
        %2428 = vmatmul.f32.gmra.mxu0 %v2313
        %v2429 = vpop.f32.mrf.mxu0
        %v2430 = vadd.f32 %v2231, %v2429
        %2431 = vmatmul.f32.gmra.mxu0 %v2316
        %v2432 = vpop.f32.mrf.mxu0
        %v2433 = vadd.f32 %v2231, %v2432
        %2434 = vmatmul.f32.gmra.mxu0 %v2319
        %v2435 = vpop.f32.mrf.mxu0
        %v2436 = vadd.f32 %v2231, %v2435
        %2437 = vmatmul.f32.gmra.mxu0 %v2322
        %v2438 = vpop.f32.mrf.mxu0
        %v2439 = vadd.f32 %v2231, %v2438
        %2440 = vmatmul.f32.gmra.mxu0 %v2325
        %v2441 = vpop.f32.mrf.mxu0
        %v2442 = vadd.f32 %v2231, %v2441
        %2443 = vmatmul.f32.gmra.mxu0 %v2328
        %v2444 = vpop.f32.mrf.mxu0
        %v2445 = vadd.f32 %v2231, %v2444
        %2446 = vdwg.mxu0
        %v2447 = vmax.f32 %v2352, 0.0
        %v2448 = vmax.f32 %v2355, 0.0
        %v2449 = vmax.f32 %v2358, 0.0
        %v2450 = vmax.f32 %v2361, 0.0
        %v2451 = vmax.f32 %v2364, 0.0
        %v2452 = vmax.f32 %v2367, 0.0
        %v2453 = vmax.f32 %v2370, 0.0
        %v2454 = vmax.f32 %v2373, 0.0
        %v2455 = vmax.f32 %v2376, 0.0
        %v2456 = vmax.f32 %v2379, 0.0
        %v2457 = vmax.f32 %v2382, 0.0
        %v2458 = vmax.f32 %v2385, 0.0
        %v2459 = vmax.f32 %v2388, 0.0
        %v2460 = vmax.f32 %v2391, 0.0
        %v2461 = vmax.f32 %v2394, 0.0
        %v2462 = vmax.f32 %v2397, 0.0
        %v2463 = vmax.f32 %v2400, 0.0
        %v2464 = vmax.f32 %v2403, 0.0
        %v2465 = vmax.f32 %v2406, 0.0
        %v2466 = vmax.f32 %v2409, 0.0
        %v2467 = vmax.f32 %v2412, 0.0
        %v2468 = vmax.f32 %v2415, 0.0
        %v2469 = vmax.f32 %v2418, 0.0
        %v2470 = vmax.f32 %v2421, 0.0
        %v2471 = vmax.f32 %v2424, 0.0
        %v2472 = vmax.f32 %v2427, 0.0
        %v2473 = vmax.f32 %v2430, 0.0
        %v2474 = vmax.f32 %v2433, 0.0
        %v2475 = vmax.f32 %v2436, 0.0
        %v2476 = vmax.f32 %v2439, 0.0
        %v2477 = vmax.f32 %v2442, 0.0
        %v2478 = vmax.f32 %v2445, 0.0
        %s2479 = scalar_lea.vmem [#allocation3], 24
        %2480 = vst.msk [vmem:[%s2479 + $0x1] sm:$0xff] %vm406, %v2447
        %2481 = vst.msk [vmem:[%s2479 + $0x9] sm:$0xff] %vm406, %v2448
        %2482 = vst.msk [vmem:[%s2479 + $0x19] sm:$0xff] %vm406, %v2449
        %2483 = vst.msk [vmem:[%s2479 + $0x21] sm:$0xff] %vm406, %v2450
        %2484 = vst.msk [vmem:[%s2479 + $0x31] sm:$0xff] %vm406, %v2451
        %2485 = vst.msk [vmem:[%s2479 + $0x39] sm:$0xff] %vm406, %v2452
        %2486 = vst.msk [vmem:[%s2479 + $0x49] sm:$0xff] %vm406, %v2453
        %2487 = vst.msk [vmem:[%s2479 + $0x51] sm:$0xff] %vm406, %v2454
        %2488 = vst.msk [vmem:[%s2479 + $0x61] sm:$0xff] %vm406, %v2455
        %2489 = vst.msk [vmem:[%s2479 + $0x69] sm:$0xff] %vm406, %v2456
        %2490 = vst.msk [vmem:[%s2479 + $0x79] sm:$0xff] %vm406, %v2457
        %2491 = vst.msk [vmem:[%s2479 + $0x81] sm:$0xff] %vm406, %v2458
        %2492 = vst.msk [vmem:[%s2479 + $0x91] sm:$0xff] %vm406, %v2459
        %2493 = vst.msk [vmem:[%s2479 + $0x99] sm:$0xff] %vm406, %v2460
        %2494 = vst.msk [vmem:[%s2479 + $0xa9] sm:$0xff] %vm406, %v2461
        %2495 = vst.msk [vmem:[%s2479 + $0xb1] sm:$0xff] %vm406, %v2462
        %2496 = vst.msk [vmem:[%s2479 + $0xc1] sm:$0xff] %vm406, %v2463
        %2497 = vst.msk [vmem:[%s2479 + $0xc9] sm:$0xff] %vm406, %v2464
        %2498 = vst.msk [vmem:[%s2479 + $0xd9] sm:$0xff] %vm406, %v2465
        %2499 = vst.msk [vmem:[%s2479 + $0xe1] sm:$0xff] %vm406, %v2466
        %2500 = vst.msk [vmem:[%s2479 + $0xf1] sm:$0xff] %vm406, %v2467
        %2501 = vst.msk [vmem:[%s2479 + $0xf9] sm:$0xff] %vm406, %v2468
        %2502 = vst.msk [vmem:[%s2479 + $0x109] sm:$0xff] %vm406, %v2469
        %2503 = vst.msk [vmem:[%s2479 + $0x111] sm:$0xff] %vm406, %v2470
        %2504 = vst.msk [vmem:[%s2479 + $0x121] sm:$0xff] %vm406, %v2471
        %2505 = vst.msk [vmem:[%s2479 + $0x129] sm:$0xff] %vm406, %v2472
        %2506 = vst.msk [vmem:[%s2479 + $0x139] sm:$0xff] %vm406, %v2473
        %2507 = vst.msk [vmem:[%s2479 + $0x141] sm:$0xff] %vm406, %v2474
        %2508 = vst.msk [vmem:[%s2479 + $0x151] sm:$0xff] %vm406, %v2475
        %2509 = vst.msk [vmem:[%s2479 + $0x159] sm:$0xff] %vm406, %v2476
        %2510 = vst.msk [vmem:[%s2479 + $0x169] sm:$0xff] %vm406, %v2477
        %2511 = vst.msk [vmem:[%s2479 + $0x171] sm:$0xff] %vm406, %v2478
        %v2512 = vld [vmem:[#allocation3] sm:$0xff]
        %v2513 = vld [vmem:[#allocation3 + $0x8] sm:$0xff]
        %v2514 = vld [vmem:[#allocation3 + $0x18] sm:$0xff]
        %v2515 = vld [vmem:[#allocation3 + $0x20] sm:$0xff]
        %v2516 = vld [vmem:[#allocation3 + $0x30] sm:$0xff]
        %v2517 = vld [vmem:[#allocation3 + $0x38] sm:$0xff]
        %v2518 = vld [vmem:[#allocation3 + $0x48] sm:$0xff]
        %v2519 = vld [vmem:[#allocation3 + $0x50] sm:$0xff]
        %v2520 = vld [vmem:[#allocation3 + $0x60] sm:$0xff]
        %v2521 = vld [vmem:[#allocation3 + $0x68] sm:$0xff]
        %v2522 = vld [vmem:[#allocation3 + $0x78] sm:$0xff]
        %v2523 = vld [vmem:[#allocation3 + $0x80] sm:$0xff]
        %v2524 = vld [vmem:[#allocation3 + $0x90] sm:$0xff]
        %v2525 = vld [vmem:[#allocation3 + $0x98] sm:$0xff]
        %v2526 = vld [vmem:[#allocation3 + $0xa8] sm:$0xff]
        %v2527 = vld [vmem:[#allocation3 + $0xb0] sm:$0xff]
        %v2528 = vld [vmem:[#allocation3 + $0xc0] sm:$0xff]
        %v2529 = vld [vmem:[#allocation3 + $0xc8] sm:$0xff]
        %v2530 = vld [vmem:[#allocation3 + $0xd8] sm:$0xff]
        %v2531 = vld [vmem:[#allocation3 + $0xe0] sm:$0xff]
        %v2532 = vld [vmem:[#allocation3 + $0xf0] sm:$0xff]
        %v2533 = vld [vmem:[#allocation3 + $0xf8] sm:$0xff]
        %v2534 = vld [vmem:[#allocation3 + $0x108] sm:$0xff]
        %v2535 = vld [vmem:[#allocation3 + $0x110] sm:$0xff]
        %v2536 = vld [vmem:[#allocation3 + $0x120] sm:$0xff]
        %v2537 = vld [vmem:[#allocation3 + $0x128] sm:$0xff]
        %v2538 = vld [vmem:[#allocation3 + $0x138] sm:$0xff]
        %v2539 = vld [vmem:[#allocation3 + $0x140] sm:$0xff]
        %v2540 = vld [vmem:[#allocation3 + $0x150] sm:$0xff]
        %v2541 = vld [vmem:[#allocation3 + $0x158] sm:$0xff]
        %v2542 = vld [vmem:[#allocation3 + $0x168] sm:$0xff]
        %v2543 = vld [vmem:[#allocation3 + $0x170] sm:$0xff]
        %2544 = vst.msk [vmem:[#allocation6] sm:$0xff] %vm406, %v2512
        %2545 = vst.msk [vmem:[#allocation6 + $0x18] sm:$0xff] %vm406, %v2513
        %2546 = vst.msk [vmem:[#allocation6 + $0x30] sm:$0xff] %vm406, %v2514
        %2547 = vst.msk [vmem:[#allocation6 + $0x48] sm:$0xff] %vm406, %v2515
        %2548 = vst.msk [vmem:[#allocation6 + $0x60] sm:$0xff] %vm406, %v2516
        %2549 = vst.msk [vmem:[#allocation6 + $0x78] sm:$0xff] %vm406, %v2517
        %2550 = vst.msk [vmem:[#allocation6 + $0x90] sm:$0xff] %vm406, %v2518
        %2551 = vst.msk [vmem:[#allocation6 + $0xa8] sm:$0xff] %vm406, %v2519
        %2552 = vst.msk [vmem:[#allocation6 + $0xc0] sm:$0xff] %vm406, %v2520
        %2553 = vst.msk [vmem:[#allocation6 + $0xd8] sm:$0xff] %vm406, %v2521
        %2554 = vst.msk [vmem:[#allocation6 + $0xf0] sm:$0xff] %vm406, %v2522
        %2555 = vst.msk [vmem:[#allocation6 + $0x108] sm:$0xff] %vm406, %v2523
        %2556 = vst.msk [vmem:[#allocation6 + $0x120] sm:$0xff] %vm406, %v2524
        %2557 = vst.msk [vmem:[#allocation6 + $0x138] sm:$0xff] %vm406, %v2525
        %2558 = vst.msk [vmem:[#allocation6 + $0x150] sm:$0xff] %vm406, %v2526
        %2559 = vst.msk [vmem:[#allocation6 + $0x168] sm:$0xff] %vm406, %v2527
        %2560 = vst.msk [vmem:[#allocation6 + $0x180] sm:$0xff] %vm406, %v2528
        %2561 = vst.msk [vmem:[#allocation6 + $0x198] sm:$0xff] %vm406, %v2529
        %2562 = vst.msk [vmem:[#allocation6 + $0x1b0] sm:$0xff] %vm406, %v2530
        %2563 = vst.msk [vmem:[#allocation6 + $0x1c8] sm:$0xff] %vm406, %v2531
        %2564 = vst.msk [vmem:[#allocation6 + $0x1e0] sm:$0xff] %vm406, %v2532
        %2565 = vst.msk [vmem:[#allocation6 + $0x1f8] sm:$0xff] %vm406, %v2533
        %2566 = vst.msk [vmem:[#allocation6 + $0x210] sm:$0xff] %vm406, %v2534
        %2567 = vst.msk [vmem:[#allocation6 + $0x228] sm:$0xff] %vm406, %v2535
        %2568 = vst.msk [vmem:[#allocation6 + $0x240] sm:$0xff] %vm406, %v2536
        %2569 = vst.msk [vmem:[#allocation6 + $0x258] sm:$0xff] %vm406, %v2537
        %2570 = vst.msk [vmem:[#allocation6 + $0x270] sm:$0xff] %vm406, %v2538
        %2571 = vst.msk [vmem:[#allocation6 + $0x288] sm:$0xff] %vm406, %v2539
        %2572 = vst.msk [vmem:[#allocation6 + $0x2a0] sm:$0xff] %vm406, %v2540
        %2573 = vst.msk [vmem:[#allocation6 + $0x2b8] sm:$0xff] %vm406, %v2541
        %2574 = vst.msk [vmem:[#allocation6 + $0x2d0] sm:$0xff] %vm406, %v2542
        %2575 = vst.msk [vmem:[#allocation6 + $0x2e8] sm:$0xff] %vm406, %v2543
        %v2576 = vld [vmem:[#allocation3 + $0x1] sm:$0xff]
        %v2577 = vld [vmem:[#allocation3 + $0x9] sm:$0xff]
        %v2578 = vld [vmem:[#allocation3 + $0x19] sm:$0xff]
        %v2579 = vld [vmem:[#allocation3 + $0x21] sm:$0xff]
        %v2580 = vld [vmem:[#allocation3 + $0x31] sm:$0xff]
        %v2581 = vld [vmem:[#allocation3 + $0x39] sm:$0xff]
        %v2582 = vld [vmem:[#allocation3 + $0x49] sm:$0xff]
        %v2583 = vld [vmem:[#allocation3 + $0x51] sm:$0xff]
        %v2584 = vld [vmem:[#allocation3 + $0x61] sm:$0xff]
        %v2585 = vld [vmem:[#allocation3 + $0x69] sm:$0xff]
        %v2586 = vld [vmem:[#allocation3 + $0x79] sm:$0xff]
        %v2587 = vld [vmem:[#allocation3 + $0x81] sm:$0xff]
        %v2588 = vld [vmem:[#allocation3 + $0x91] sm:$0xff]
        %v2589 = vld [vmem:[#allocation3 + $0x99] sm:$0xff]
        %v2590 = vld [vmem:[#allocation3 + $0xa9] sm:$0xff]
        %v2591 = vld [vmem:[#allocation3 + $0xb1] sm:$0xff]
        %v2592 = vld [vmem:[#allocation3 + $0xc1] sm:$0xff]
        %v2593 = vld [vmem:[#allocation3 + $0xc9] sm:$0xff]
        %v2594 = vld [vmem:[#allocation3 + $0xd9] sm:$0xff]
        %v2595 = vld [vmem:[#allocation3 + $0xe1] sm:$0xff]
        %v2596 = vld [vmem:[#allocation3 + $0xf1] sm:$0xff]
        %v2597 = vld [vmem:[#allocation3 + $0xf9] sm:$0xff]
        %v2598 = vld [vmem:[#allocation3 + $0x109] sm:$0xff]
        %v2599 = vld [vmem:[#allocation3 + $0x111] sm:$0xff]
        %v2600 = vld [vmem:[#allocation3 + $0x121] sm:$0xff]
        %v2601 = vld [vmem:[#allocation3 + $0x129] sm:$0xff]
        %v2602 = vld [vmem:[#allocation3 + $0x139] sm:$0xff]
        %v2603 = vld [vmem:[#allocation3 + $0x141] sm:$0xff]
        %v2604 = vld [vmem:[#allocation3 + $0x151] sm:$0xff]
        %v2605 = vld [vmem:[#allocation3 + $0x159] sm:$0xff]
        %v2606 = vld [vmem:[#allocation3 + $0x169] sm:$0xff]
        %v2607 = vld [vmem:[#allocation3 + $0x171] sm:$0xff]
        %2640 = vrot.lane.b32.xlu0 %v2576, 32
        %v2641 = vpop.permute.xlu0 %2640
        %2642 = vrot.lane.b32.xlu0 %v2577, 32
        %v2643 = vpop.permute.xlu0 %2642
        %2644 = vrot.lane.b32.xlu0 %v2578, 32
        %v2645 = vpop.permute.xlu0 %2644
        %2646 = vrot.lane.b32.xlu0 %v2579, 32
        %v2647 = vpop.permute.xlu0 %2646
        %2648 = vrot.lane.b32.xlu0 %v2580, 32
        %v2649 = vpop.permute.xlu0 %2648
        %2650 = vrot.lane.b32.xlu0 %v2581, 32
        %v2651 = vpop.permute.xlu0 %2650
        %2652 = vrot.lane.b32.xlu0 %v2582, 32
        %v2653 = vpop.permute.xlu0 %2652
        %2654 = vrot.lane.b32.xlu0 %v2583, 32
        %v2655 = vpop.permute.xlu0 %2654
        %2656 = vrot.lane.b32.xlu0 %v2584, 32
        %v2657 = vpop.permute.xlu0 %2656
        %2658 = vrot.lane.b32.xlu0 %v2585, 32
        %v2659 = vpop.permute.xlu0 %2658
        %2660 = vrot.lane.b32.xlu0 %v2586, 32
        %v2661 = vpop.permute.xlu0 %2660
        %2662 = vrot.lane.b32.xlu0 %v2587, 32
        %v2663 = vpop.permute.xlu0 %2662
        %2664 = vrot.lane.b32.xlu0 %v2588, 32
        %v2665 = vpop.permute.xlu0 %2664
        %2666 = vrot.lane.b32.xlu0 %v2589, 32
        %v2667 = vpop.permute.xlu0 %2666
        %2668 = vrot.lane.b32.xlu0 %v2590, 32
        %v2669 = vpop.permute.xlu0 %2668
        %2670 = vrot.lane.b32.xlu0 %v2591, 32
        %v2671 = vpop.permute.xlu0 %2670
        %2672 = vrot.lane.b32.xlu0 %v2592, 32
        %v2673 = vpop.permute.xlu0 %2672
        %2674 = vrot.lane.b32.xlu0 %v2593, 32
        %v2675 = vpop.permute.xlu0 %2674
        %2676 = vrot.lane.b32.xlu0 %v2594, 32
        %v2677 = vpop.permute.xlu0 %2676
        %2678 = vrot.lane.b32.xlu0 %v2595, 32
        %v2679 = vpop.permute.xlu0 %2678
        %2680 = vrot.lane.b32.xlu0 %v2596, 32
        %v2681 = vpop.permute.xlu0 %2680
        %2682 = vrot.lane.b32.xlu0 %v2597, 32
        %v2683 = vpop.permute.xlu0 %2682
        %2684 = vrot.lane.b32.xlu0 %v2598, 32
        %v2685 = vpop.permute.xlu0 %2684
        %2686 = vrot.lane.b32.xlu0 %v2599, 32
        %v2687 = vpop.permute.xlu0 %2686
        %2688 = vrot.lane.b32.xlu0 %v2600, 32
        %v2689 = vpop.permute.xlu0 %2688
        %2690 = vrot.lane.b32.xlu0 %v2601, 32
        %v2691 = vpop.permute.xlu0 %2690
        %2692 = vrot.lane.b32.xlu0 %v2602, 32
        %v2693 = vpop.permute.xlu0 %2692
        %2694 = vrot.lane.b32.xlu0 %v2603, 32
        %v2695 = vpop.permute.xlu0 %2694
        %2696 = vrot.lane.b32.xlu0 %v2604, 32
        %v2697 = vpop.permute.xlu0 %2696
        %2698 = vrot.lane.b32.xlu0 %v2605, 32
        %v2699 = vpop.permute.xlu0 %2698
        %2700 = vrot.lane.b32.xlu0 %v2606, 32
        %v2701 = vpop.permute.xlu0 %2700
        %2702 = vrot.lane.b32.xlu0 %v2607, 32
        %v2703 = vpop.permute.xlu0 %2702
        %vm2736 = vcmask 523520
        %2737 = vst.msk [vmem:[#allocation6] sm:$0xff] %vm2736, %v2641
        %2738 = vst.msk [vmem:[#allocation6 + $0x18] sm:$0xff] %vm2736, %v2643
        %2739 = vst.msk [vmem:[#allocation6 + $0x30] sm:$0xff] %vm2736, %v2645
        %2740 = vst.msk [vmem:[#allocation6 + $0x48] sm:$0xff] %vm2736, %v2647
        %2741 = vst.msk [vmem:[#allocation6 + $0x60] sm:$0xff] %vm2736, %v2649
        %2742 = vst.msk [vmem:[#allocation6 + $0x78] sm:$0xff] %vm2736, %v2651
        %2743 = vst.msk [vmem:[#allocation6 + $0x90] sm:$0xff] %vm2736, %v2653
        %2744 = vst.msk [vmem:[#allocation6 + $0xa8] sm:$0xff] %vm2736, %v2655
        %2745 = vst.msk [vmem:[#allocation6 + $0xc0] sm:$0xff] %vm2736, %v2657
        %2746 = vst.msk [vmem:[#allocation6 + $0xd8] sm:$0xff] %vm2736, %v2659
        %2747 = vst.msk [vmem:[#allocation6 + $0xf0] sm:$0xff] %vm2736, %v2661
        %2748 = vst.msk [vmem:[#allocation6 + $0x108] sm:$0xff] %vm2736, %v2663
        %2749 = vst.msk [vmem:[#allocation6 + $0x120] sm:$0xff] %vm2736, %v2665
        %2750 = vst.msk [vmem:[#allocation6 + $0x138] sm:$0xff] %vm2736, %v2667
        %2751 = vst.msk [vmem:[#allocation6 + $0x150] sm:$0xff] %vm2736, %v2669
        %2752 = vst.msk [vmem:[#allocation6 + $0x168] sm:$0xff] %vm2736, %v2671
        %2753 = vst.msk [vmem:[#allocation6 + $0x180] sm:$0xff] %vm2736, %v2673
        %2754 = vst.msk [vmem:[#allocation6 + $0x198] sm:$0xff] %vm2736, %v2675
        %2755 = vst.msk [vmem:[#allocation6 + $0x1b0] sm:$0xff] %vm2736, %v2677
        %2756 = vst.msk [vmem:[#allocation6 + $0x1c8] sm:$0xff] %vm2736, %v2679
        %2757 = vst.msk [vmem:[#allocation6 + $0x1e0] sm:$0xff] %vm2736, %v2681
        %2758 = vst.msk [vmem:[#allocation6 + $0x1f8] sm:$0xff] %vm2736, %v2683
        %2759 = vst.msk [vmem:[#allocation6 + $0x210] sm:$0xff] %vm2736, %v2685
        %2760 = vst.msk [vmem:[#allocation6 + $0x228] sm:$0xff] %vm2736, %v2687
        %2761 = vst.msk [vmem:[#allocation6 + $0x240] sm:$0xff] %vm2736, %v2689
        %2762 = vst.msk [vmem:[#allocation6 + $0x258] sm:$0xff] %vm2736, %v2691
        %2763 = vst.msk [vmem:[#allocation6 + $0x270] sm:$0xff] %vm2736, %v2693
        %2764 = vst.msk [vmem:[#allocation6 + $0x288] sm:$0xff] %vm2736, %v2695
        %2765 = vst.msk [vmem:[#allocation6 + $0x2a0] sm:$0xff] %vm2736, %v2697
        %2766 = vst.msk [vmem:[#allocation6 + $0x2b8] sm:$0xff] %vm2736, %v2699
        %2767 = vst.msk [vmem:[#allocation6 + $0x2d0] sm:$0xff] %vm2736, %v2701
        %2768 = vst.msk [vmem:[#allocation6 + $0x2e8] sm:$0xff] %vm2736, %v2703
        %v2769 = vld [vmem:[#allocation3 + $0x2] sm:$0xff]
        %v2770 = vld [vmem:[#allocation3 + $0xa] sm:$0xff]
        %v2771 = vld [vmem:[#allocation3 + $0x1a] sm:$0xff]
        %v2772 = vld [vmem:[#allocation3 + $0x22] sm:$0xff]
        %v2773 = vld [vmem:[#allocation3 + $0x32] sm:$0xff]
        %v2774 = vld [vmem:[#allocation3 + $0x3a] sm:$0xff]
        %v2775 = vld [vmem:[#allocation3 + $0x4a] sm:$0xff]
        %v2776 = vld [vmem:[#allocation3 + $0x52] sm:$0xff]
        %v2777 = vld [vmem:[#allocation3 + $0x62] sm:$0xff]
        %v2778 = vld [vmem:[#allocation3 + $0x6a] sm:$0xff]
        %v2779 = vld [vmem:[#allocation3 + $0x7a] sm:$0xff]
        %v2780 = vld [vmem:[#allocation3 + $0x82] sm:$0xff]
        %v2781 = vld [vmem:[#allocation3 + $0x92] sm:$0xff]
        %v2782 = vld [vmem:[#allocation3 + $0x9a] sm:$0xff]
        %v2783 = vld [vmem:[#allocation3 + $0xaa] sm:$0xff]
        %v2784 = vld [vmem:[#allocation3 + $0xb2] sm:$0xff]
        %v2785 = vld [vmem:[#allocation3 + $0xc2] sm:$0xff]
        %v2786 = vld [vmem:[#allocation3 + $0xca] sm:$0xff]
        %v2787 = vld [vmem:[#allocation3 + $0xda] sm:$0xff]
        %v2788 = vld [vmem:[#allocation3 + $0xe2] sm:$0xff]
        %v2789 = vld [vmem:[#allocation3 + $0xf2] sm:$0xff]
        %v2790 = vld [vmem:[#allocation3 + $0xfa] sm:$0xff]
        %v2791 = vld [vmem:[#allocation3 + $0x10a] sm:$0xff]
        %v2792 = vld [vmem:[#allocation3 + $0x112] sm:$0xff]
        %v2793 = vld [vmem:[#allocation3 + $0x122] sm:$0xff]
        %v2794 = vld [vmem:[#allocation3 + $0x12a] sm:$0xff]
        %v2795 = vld [vmem:[#allocation3 + $0x13a] sm:$0xff]
        %v2796 = vld [vmem:[#allocation3 + $0x142] sm:$0xff]
        %v2797 = vld [vmem:[#allocation3 + $0x152] sm:$0xff]
        %v2798 = vld [vmem:[#allocation3 + $0x15a] sm:$0xff]
        %v2799 = vld [vmem:[#allocation3 + $0x16a] sm:$0xff]
        %v2800 = vld [vmem:[#allocation3 + $0x172] sm:$0xff]
        %2833 = vrot.lane.b32.xlu0 %v2769, 64
        %v2834 = vpop.permute.xlu0 %2833
        %2835 = vrot.lane.b32.xlu0 %v2770, 64
        %v2836 = vpop.permute.xlu0 %2835
        %2837 = vrot.lane.b32.xlu0 %v2771, 64
        %v2838 = vpop.permute.xlu0 %2837
        %2839 = vrot.lane.b32.xlu0 %v2772, 64
        %v2840 = vpop.permute.xlu0 %2839
        %2841 = vrot.lane.b32.xlu0 %v2773, 64
        %v2842 = vpop.permute.xlu0 %2841
        %2843 = vrot.lane.b32.xlu0 %v2774, 64
        %v2844 = vpop.permute.xlu0 %2843
        %2845 = vrot.lane.b32.xlu0 %v2775, 64
        %v2846 = vpop.permute.xlu0 %2845
        %2847 = vrot.lane.b32.xlu0 %v2776, 64
        %v2848 = vpop.permute.xlu0 %2847
        %2849 = vrot.lane.b32.xlu0 %v2777, 64
        %v2850 = vpop.permute.xlu0 %2849
        %2851 = vrot.lane.b32.xlu0 %v2778, 64
        %v2852 = vpop.permute.xlu0 %2851
        %2853 = vrot.lane.b32.xlu0 %v2779, 64
        %v2854 = vpop.permute.xlu0 %2853
        %2855 = vrot.lane.b32.xlu0 %v2780, 64
        %v2856 = vpop.permute.xlu0 %2855
        %2857 = vrot.lane.b32.xlu0 %v2781, 64
        %v2858 = vpop.permute.xlu0 %2857
        %2859 = vrot.lane.b32.xlu0 %v2782, 64
        %v2860 = vpop.permute.xlu0 %2859
        %2861 = vrot.lane.b32.xlu0 %v2783, 64
        %v2862 = vpop.permute.xlu0 %2861
        %2863 = vrot.lane.b32.xlu0 %v2784, 64
        %v2864 = vpop.permute.xlu0 %2863
        %2865 = vrot.lane.b32.xlu0 %v2785, 64
        %v2866 = vpop.permute.xlu0 %2865
        %2867 = vrot.lane.b32.xlu0 %v2786, 64
        %v2868 = vpop.permute.xlu0 %2867
        %2869 = vrot.lane.b32.xlu0 %v2787, 64
        %v2870 = vpop.permute.xlu0 %2869
        %2871 = vrot.lane.b32.xlu0 %v2788, 64
        %v2872 = vpop.permute.xlu0 %2871
        %2873 = vrot.lane.b32.xlu0 %v2789, 64
        %v2874 = vpop.permute.xlu0 %2873
        %2875 = vrot.lane.b32.xlu0 %v2790, 64
        %v2876 = vpop.permute.xlu0 %2875
        %2877 = vrot.lane.b32.xlu0 %v2791, 64
        %v2878 = vpop.permute.xlu0 %2877
        %2879 = vrot.lane.b32.xlu0 %v2792, 64
        %v2880 = vpop.permute.xlu0 %2879
        %2881 = vrot.lane.b32.xlu0 %v2793, 64
        %v2882 = vpop.permute.xlu0 %2881
        %2883 = vrot.lane.b32.xlu0 %v2794, 64
        %v2884 = vpop.permute.xlu0 %2883
        %2885 = vrot.lane.b32.xlu0 %v2795, 64
        %v2886 = vpop.permute.xlu0 %2885
        %2887 = vrot.lane.b32.xlu0 %v2796, 64
        %v2888 = vpop.permute.xlu0 %2887
        %2889 = vrot.lane.b32.xlu0 %v2797, 64
        %v2890 = vpop.permute.xlu0 %2889
        %2891 = vrot.lane.b32.xlu0 %v2798, 64
        %v2892 = vpop.permute.xlu0 %2891
        %2893 = vrot.lane.b32.xlu0 %v2799, 64
        %v2894 = vpop.permute.xlu0 %2893
        %2895 = vrot.lane.b32.xlu0 %v2800, 64
        %v2896 = vpop.permute.xlu0 %2895
        %vm2929 = vcmask 785920
        %2930 = vst.msk [vmem:[#allocation6] sm:$0xff] %vm2929, %v2834
        %2931 = vst.msk [vmem:[#allocation6 + $0x18] sm:$0xff] %vm2929, %v2836
        %2932 = vst.msk [vmem:[#allocation6 + $0x30] sm:$0xff] %vm2929, %v2838
        %2933 = vst.msk [vmem:[#allocation6 + $0x48] sm:$0xff] %vm2929, %v2840
        %2934 = vst.msk [vmem:[#allocation6 + $0x60] sm:$0xff] %vm2929, %v2842
        %2935 = vst.msk [vmem:[#allocation6 + $0x78] sm:$0xff] %vm2929, %v2844
        %2936 = vst.msk [vmem:[#allocation6 + $0x90] sm:$0xff] %vm2929, %v2846
        %2937 = vst.msk [vmem:[#allocation6 + $0xa8] sm:$0xff] %vm2929, %v2848
        %2938 = vst.msk [vmem:[#allocation6 + $0xc0] sm:$0xff] %vm2929, %v2850
        %2939 = vst.msk [vmem:[#allocation6 + $0xd8] sm:$0xff] %vm2929, %v2852
        %2940 = vst.msk [vmem:[#allocation6 + $0xf0] sm:$0xff] %vm2929, %v2854
        %2941 = vst.msk [vmem:[#allocation6 + $0x108] sm:$0xff] %vm2929, %v2856
        %2942 = vst.msk [vmem:[#allocation6 + $0x120] sm:$0xff] %vm2929, %v2858
        %2943 = vst.msk [vmem:[#allocation6 + $0x138] sm:$0xff] %vm2929, %v2860
        %2944 = vst.msk [vmem:[#allocation6 + $0x150] sm:$0xff] %vm2929, %v2862
        %2945 = vst.msk [vmem:[#allocation6 + $0x168] sm:$0xff] %vm2929, %v2864
        %2946 = vst.msk [vmem:[#allocation6 + $0x180] sm:$0xff] %vm2929, %v2866
        %2947 = vst.msk [vmem:[#allocation6 + $0x198] sm:$0xff] %vm2929, %v2868
        %2948 = vst.msk [vmem:[#allocation6 + $0x1b0] sm:$0xff] %vm2929, %v2870
        %2949 = vst.msk [vmem:[#allocation6 + $0x1c8] sm:$0xff] %vm2929, %v2872
        %2950 = vst.msk [vmem:[#allocation6 + $0x1e0] sm:$0xff] %vm2929, %v2874
        %2951 = vst.msk [vmem:[#allocation6 + $0x1f8] sm:$0xff] %vm2929, %v2876
        %2952 = vst.msk [vmem:[#allocation6 + $0x210] sm:$0xff] %vm2929, %v2878
        %2953 = vst.msk [vmem:[#allocation6 + $0x228] sm:$0xff] %vm2929, %v2880
        %2954 = vst.msk [vmem:[#allocation6 + $0x240] sm:$0xff] %vm2929, %v2882
        %2955 = vst.msk [vmem:[#allocation6 + $0x258] sm:$0xff] %vm2929, %v2884
        %2956 = vst.msk [vmem:[#allocation6 + $0x270] sm:$0xff] %vm2929, %v2886
        %2957 = vst.msk [vmem:[#allocation6 + $0x288] sm:$0xff] %vm2929, %v2888
        %2958 = vst.msk [vmem:[#allocation6 + $0x2a0] sm:$0xff] %vm2929, %v2890
        %2959 = vst.msk [vmem:[#allocation6 + $0x2b8] sm:$0xff] %vm2929, %v2892
        %2960 = vst.msk [vmem:[#allocation6 + $0x2d0] sm:$0xff] %vm2929, %v2894
        %2961 = vst.msk [vmem:[#allocation6 + $0x2e8] sm:$0xff] %vm2929, %v2896
        %v2962 = vld [vmem:[%s2479] sm:$0xff]
        %v2963 = vld [vmem:[%s2479 + $0x8] sm:$0xff]
        %v2964 = vld [vmem:[%s2479 + $0x18] sm:$0xff]
        %v2965 = vld [vmem:[%s2479 + $0x20] sm:$0xff]
        %v2966 = vld [vmem:[%s2479 + $0x30] sm:$0xff]
        %v2967 = vld [vmem:[%s2479 + $0x38] sm:$0xff]
        %v2968 = vld [vmem:[%s2479 + $0x48] sm:$0xff]
        %v2969 = vld [vmem:[%s2479 + $0x50] sm:$0xff]
        %v2970 = vld [vmem:[%s2479 + $0x60] sm:$0xff]
        %v2971 = vld [vmem:[%s2479 + $0x68] sm:$0xff]
        %v2972 = vld [vmem:[%s2479 + $0x78] sm:$0xff]
        %v2973 = vld [vmem:[%s2479 + $0x80] sm:$0xff]
        %v2974 = vld [vmem:[%s2479 + $0x90] sm:$0xff]
        %v2975 = vld [vmem:[%s2479 + $0x98] sm:$0xff]
        %v2976 = vld [vmem:[%s2479 + $0xa8] sm:$0xff]
        %v2977 = vld [vmem:[%s2479 + $0xb0] sm:$0xff]
        %v2978 = vld [vmem:[%s2479 + $0xc0] sm:$0xff]
        %v2979 = vld [vmem:[%s2479 + $0xc8] sm:$0xff]
        %v2980 = vld [vmem:[%s2479 + $0xd8] sm:$0xff]
        %v2981 = vld [vmem:[%s2479 + $0xe0] sm:$0xff]
        %v2982 = vld [vmem:[%s2479 + $0xf0] sm:$0xff]
        %v2983 = vld [vmem:[%s2479 + $0xf8] sm:$0xff]
        %v2984 = vld [vmem:[%s2479 + $0x108] sm:$0xff]
        %v2985 = vld [vmem:[%s2479 + $0x110] sm:$0xff]
        %v2986 = vld [vmem:[%s2479 + $0x120] sm:$0xff]
        %v2987 = vld [vmem:[%s2479 + $0x128] sm:$0xff]
        %v2988 = vld [vmem:[%s2479 + $0x138] sm:$0xff]
        %v2989 = vld [vmem:[%s2479 + $0x140] sm:$0xff]
        %v2990 = vld [vmem:[%s2479 + $0x150] sm:$0xff]
        %v2991 = vld [vmem:[%s2479 + $0x158] sm:$0xff]
        %v2992 = vld [vmem:[%s2479 + $0x168] sm:$0xff]
        %v2993 = vld [vmem:[%s2479 + $0x170] sm:$0xff]
        %3026 = vrot.lane.b32.xlu0 %v2962, 96
        %v3027 = vpop.permute.xlu0 %3026
        %3028 = vrot.lane.b32.xlu0 %v2963, 96
        %v3029 = vpop.permute.xlu0 %3028
        %3030 = vrot.lane.b32.xlu0 %v2964, 96
        %v3031 = vpop.permute.xlu0 %3030
        %3032 = vrot.lane.b32.xlu0 %v2965, 96
        %v3033 = vpop.permute.xlu0 %3032
        %3034 = vrot.lane.b32.xlu0 %v2966, 96
        %v3035 = vpop.permute.xlu0 %3034
        %3036 = vrot.lane.b32.xlu0 %v2967, 96
        %v3037 = vpop.permute.xlu0 %3036
        %3038 = vrot.lane.b32.xlu0 %v2968, 96
        %v3039 = vpop.permute.xlu0 %3038
        %3040 = vrot.lane.b32.xlu0 %v2969, 96
        %v3041 = vpop.permute.xlu0 %3040
        %3042 = vrot.lane.b32.xlu0 %v2970, 96
        %v3043 = vpop.permute.xlu0 %3042
        %3044 = vrot.lane.b32.xlu0 %v2971, 96
        %v3045 = vpop.permute.xlu0 %3044
        %3046 = vrot.lane.b32.xlu0 %v2972, 96
        %v3047 = vpop.permute.xlu0 %3046
        %3048 = vrot.lane.b32.xlu0 %v2973, 96
        %v3049 = vpop.permute.xlu0 %3048
        %3050 = vrot.lane.b32.xlu0 %v2974, 96
        %v3051 = vpop.permute.xlu0 %3050
        %3052 = vrot.lane.b32.xlu0 %v2975, 96
        %v3053 = vpop.permute.xlu0 %3052
        %3054 = vrot.lane.b32.xlu0 %v2976, 96
        %v3055 = vpop.permute.xlu0 %3054
        %3056 = vrot.lane.b32.xlu0 %v2977, 96
        %v3057 = vpop.permute.xlu0 %3056
        %3058 = vrot.lane.b32.xlu0 %v2978, 96
        %v3059 = vpop.permute.xlu0 %3058
        %3060 = vrot.lane.b32.xlu0 %v2979, 96
        %v3061 = vpop.permute.xlu0 %3060
        %3062 = vrot.lane.b32.xlu0 %v2980, 96
        %v3063 = vpop.permute.xlu0 %3062
        %3064 = vrot.lane.b32.xlu0 %v2981, 96
        %v3065 = vpop.permute.xlu0 %3064
        %3066 = vrot.lane.b32.xlu0 %v2982, 96
        %v3067 = vpop.permute.xlu0 %3066
        %3068 = vrot.lane.b32.xlu0 %v2983, 96
        %v3069 = vpop.permute.xlu0 %3068
        %3070 = vrot.lane.b32.xlu0 %v2984, 96
        %v3071 = vpop.permute.xlu0 %3070
        %3072 = vrot.lane.b32.xlu0 %v2985, 96
        %v3073 = vpop.permute.xlu0 %3072
        %3074 = vrot.lane.b32.xlu0 %v2986, 96
        %v3075 = vpop.permute.xlu0 %3074
        %3076 = vrot.lane.b32.xlu0 %v2987, 96
        %v3077 = vpop.permute.xlu0 %3076
        %3078 = vrot.lane.b32.xlu0 %v2988, 96
        %v3079 = vpop.permute.xlu0 %3078
        %3080 = vrot.lane.b32.xlu0 %v2989, 96
        %v3081 = vpop.permute.xlu0 %3080
        %3082 = vrot.lane.b32.xlu0 %v2990, 96
        %v3083 = vpop.permute.xlu0 %3082
        %3084 = vrot.lane.b32.xlu0 %v2991, 96
        %v3085 = vpop.permute.xlu0 %3084
        %3086 = vrot.lane.b32.xlu0 %v2992, 96
        %v3087 = vpop.permute.xlu0 %3086
        %3088 = vrot.lane.b32.xlu0 %v2993, 96
        %v3089 = vpop.permute.xlu0 %3088
        %vm3122 = vcmask 1048320
        %3123 = vst.msk [vmem:[#allocation6] sm:$0xff] %vm3122, %v3027
        %3124 = vst.msk [vmem:[#allocation6 + $0x18] sm:$0xff] %vm3122, %v3029
        %3125 = vst.msk [vmem:[#allocation6 + $0x30] sm:$0xff] %vm3122, %v3031
        %3126 = vst.msk [vmem:[#allocation6 + $0x48] sm:$0xff] %vm3122, %v3033
        %3127 = vst.msk [vmem:[#allocation6 + $0x60] sm:$0xff] %vm3122, %v3035
        %3128 = vst.msk [vmem:[#allocation6 + $0x78] sm:$0xff] %vm3122, %v3037
        %3129 = vst.msk [vmem:[#allocation6 + $0x90] sm:$0xff] %vm3122, %v3039
        %3130 = vst.msk [vmem:[#allocation6 + $0xa8] sm:$0xff] %vm3122, %v3041
        %3131 = vst.msk [vmem:[#allocation6 + $0xc0] sm:$0xff] %vm3122, %v3043
        %3132 = vst.msk [vmem:[#allocation6 + $0xd8] sm:$0xff] %vm3122, %v3045
        %3133 = vst.msk [vmem:[#allocation6 + $0xf0] sm:$0xff] %vm3122, %v3047
        %3134 = vst.msk [vmem:[#allocation6 + $0x108] sm:$0xff] %vm3122, %v3049
        %3135 = vst.msk [vmem:[#allocation6 + $0x120] sm:$0xff] %vm3122, %v3051
        %3136 = vst.msk [vmem:[#allocation6 + $0x138] sm:$0xff] %vm3122, %v3053
        %3137 = vst.msk [vmem:[#allocation6 + $0x150] sm:$0xff] %vm3122, %v3055
        %3138 = vst.msk [vmem:[#allocation6 + $0x168] sm:$0xff] %vm3122, %v3057
        %3139 = vst.msk [vmem:[#allocation6 + $0x180] sm:$0xff] %vm3122, %v3059
        %3140 = vst.msk [vmem:[#allocation6 + $0x198] sm:$0xff] %vm3122, %v3061
        %3141 = vst.msk [vmem:[#allocation6 + $0x1b0] sm:$0xff] %vm3122, %v3063
        %3142 = vst.msk [vmem:[#allocation6 + $0x1c8] sm:$0xff] %vm3122, %v3065
        %3143 = vst.msk [vmem:[#allocation6 + $0x1e0] sm:$0xff] %vm3122, %v3067
        %3144 = vst.msk [vmem:[#allocation6 + $0x1f8] sm:$0xff] %vm3122, %v3069
        %3145 = vst.msk [vmem:[#allocation6 + $0x210] sm:$0xff] %vm3122, %v3071
        %3146 = vst.msk [vmem:[#allocation6 + $0x228] sm:$0xff] %vm3122, %v3073
        %3147 = vst.msk [vmem:[#allocation6 + $0x240] sm:$0xff] %vm3122, %v3075
        %3148 = vst.msk [vmem:[#allocation6 + $0x258] sm:$0xff] %vm3122, %v3077
        %3149 = vst.msk [vmem:[#allocation6 + $0x270] sm:$0xff] %vm3122, %v3079
        %3150 = vst.msk [vmem:[#allocation6 + $0x288] sm:$0xff] %vm3122, %v3081
        %3151 = vst.msk [vmem:[#allocation6 + $0x2a0] sm:$0xff] %vm3122, %v3083
        %3152 = vst.msk [vmem:[#allocation6 + $0x2b8] sm:$0xff] %vm3122, %v3085
        %3153 = vst.msk [vmem:[#allocation6 + $0x2d0] sm:$0xff] %vm3122, %v3087
        %3154 = vst.msk [vmem:[#allocation6 + $0x2e8] sm:$0xff] %vm3122, %v3089
        %v3155 = vld [vmem:[%s2479 + $0x1] sm:$0xff]
        %v3156 = vld [vmem:[%s2479 + $0x9] sm:$0xff]
        %v3157 = vld [vmem:[%s2479 + $0x19] sm:$0xff]
        %v3158 = vld [vmem:[%s2479 + $0x21] sm:$0xff]
        %v3159 = vld [vmem:[%s2479 + $0x31] sm:$0xff]
        %v3160 = vld [vmem:[%s2479 + $0x39] sm:$0xff]
        %v3161 = vld [vmem:[%s2479 + $0x49] sm:$0xff]
        %v3162 = vld [vmem:[%s2479 + $0x51] sm:$0xff]
        %v3163 = vld [vmem:[%s2479 + $0x61] sm:$0xff]
        %v3164 = vld [vmem:[%s2479 + $0x69] sm:$0xff]
        %v3165 = vld [vmem:[%s2479 + $0x79] sm:$0xff]
        %v3166 = vld [vmem:[%s2479 + $0x81] sm:$0xff]
        %v3167 = vld [vmem:[%s2479 + $0x91] sm:$0xff]
        %v3168 = vld [vmem:[%s2479 + $0x99] sm:$0xff]
        %v3169 = vld [vmem:[%s2479 + $0xa9] sm:$0xff]
        %v3170 = vld [vmem:[%s2479 + $0xb1] sm:$0xff]
        %v3171 = vld [vmem:[%s2479 + $0xc1] sm:$0xff]
        %v3172 = vld [vmem:[%s2479 + $0xc9] sm:$0xff]
        %v3173 = vld [vmem:[%s2479 + $0xd9] sm:$0xff]
        %v3174 = vld [vmem:[%s2479 + $0xe1] sm:$0xff]
        %v3175 = vld [vmem:[%s2479 + $0xf1] sm:$0xff]
        %v3176 = vld [vmem:[%s2479 + $0xf9] sm:$0xff]
        %v3177 = vld [vmem:[%s2479 + $0x109] sm:$0xff]
        %v3178 = vld [vmem:[%s2479 + $0x111] sm:$0xff]
        %v3179 = vld [vmem:[%s2479 + $0x121] sm:$0xff]
        %v3180 = vld [vmem:[%s2479 + $0x129] sm:$0xff]
        %v3181 = vld [vmem:[%s2479 + $0x139] sm:$0xff]
        %v3182 = vld [vmem:[%s2479 + $0x141] sm:$0xff]
        %v3183 = vld [vmem:[%s2479 + $0x151] sm:$0xff]
        %v3184 = vld [vmem:[%s2479 + $0x159] sm:$0xff]
        %v3185 = vld [vmem:[%s2479 + $0x169] sm:$0xff]
        %v3186 = vld [vmem:[%s2479 + $0x171] sm:$0xff]
        %3187 = vst.msk [vmem:[#allocation6 + $0x8] sm:$0xff] %vm406, %v3155
        %3188 = vst.msk [vmem:[#allocation6 + $0x20] sm:$0xff] %vm406, %v3156
        %3189 = vst.msk [vmem:[#allocation6 + $0x38] sm:$0xff] %vm406, %v3157
        %3190 = vst.msk [vmem:[#allocation6 + $0x50] sm:$0xff] %vm406, %v3158
        %3191 = vst.msk [vmem:[#allocation6 + $0x68] sm:$0xff] %vm406, %v3159
        %3192 = vst.msk [vmem:[#allocation6 + $0x80] sm:$0xff] %vm406, %v3160
        %3193 = vst.msk [vmem:[#allocation6 + $0x98] sm:$0xff] %vm406, %v3161
        %3194 = vst.msk [vmem:[#allocation6 + $0xb0] sm:$0xff] %vm406, %v3162
        %3195 = vst.msk [vmem:[#allocation6 + $0xc8] sm:$0xff] %vm406, %v3163
        %3196 = vst.msk [vmem:[#allocation6 + $0xe0] sm:$0xff] %vm406, %v3164
        %3197 = vst.msk [vmem:[#allocation6 + $0xf8] sm:$0xff] %vm406, %v3165
        %3198 = vst.msk [vmem:[#allocation6 + $0x110] sm:$0xff] %vm406, %v3166
        %3199 = vst.msk [vmem:[#allocation6 + $0x128] sm:$0xff] %vm406, %v3167
        %3200 = vst.msk [vmem:[#allocation6 + $0x140] sm:$0xff] %vm406, %v3168
        %3201 = vst.msk [vmem:[#allocation6 + $0x158] sm:$0xff] %vm406, %v3169
        %3202 = vst.msk [vmem:[#allocation6 + $0x170] sm:$0xff] %vm406, %v3170
        %3203 = vst.msk [vmem:[#allocation6 + $0x188] sm:$0xff] %vm406, %v3171
        %3204 = vst.msk [vmem:[#allocation6 + $0x1a0] sm:$0xff] %vm406, %v3172
        %3205 = vst.msk [vmem:[#allocation6 + $0x1b8] sm:$0xff] %vm406, %v3173
        %3206 = vst.msk [vmem:[#allocation6 + $0x1d0] sm:$0xff] %vm406, %v3174
        %3207 = vst.msk [vmem:[#allocation6 + $0x1e8] sm:$0xff] %vm406, %v3175
        %3208 = vst.msk [vmem:[#allocation6 + $0x200] sm:$0xff] %vm406, %v3176
        %3209 = vst.msk [vmem:[#allocation6 + $0x218] sm:$0xff] %vm406, %v3177
        %3210 = vst.msk [vmem:[#allocation6 + $0x230] sm:$0xff] %vm406, %v3178
        %3211 = vst.msk [vmem:[#allocation6 + $0x248] sm:$0xff] %vm406, %v3179
        %3212 = vst.msk [vmem:[#allocation6 + $0x260] sm:$0xff] %vm406, %v3180
        %3213 = vst.msk [vmem:[#allocation6 + $0x278] sm:$0xff] %vm406, %v3181
        %3214 = vst.msk [vmem:[#allocation6 + $0x290] sm:$0xff] %vm406, %v3182
        %3215 = vst.msk [vmem:[#allocation6 + $0x2a8] sm:$0xff] %vm406, %v3183
        %3216 = vst.msk [vmem:[#allocation6 + $0x2c0] sm:$0xff] %vm406, %v3184
        %3217 = vst.msk [vmem:[#allocation6 + $0x2d8] sm:$0xff] %vm406, %v3185
        %3218 = vst.msk [vmem:[#allocation6 + $0x2f0] sm:$0xff] %vm406, %v3186
        %v3219 = vld [vmem:[%s2479 + $0x2] sm:$0xff]
        %v3220 = vld [vmem:[%s2479 + $0xa] sm:$0xff]
        %v3221 = vld [vmem:[%s2479 + $0x1a] sm:$0xff]
        %v3222 = vld [vmem:[%s2479 + $0x22] sm:$0xff]
        %v3223 = vld [vmem:[%s2479 + $0x32] sm:$0xff]
        %v3224 = vld [vmem:[%s2479 + $0x3a] sm:$0xff]
        %v3225 = vld [vmem:[%s2479 + $0x4a] sm:$0xff]
        %v3226 = vld [vmem:[%s2479 + $0x52] sm:$0xff]
        %v3227 = vld [vmem:[%s2479 + $0x62] sm:$0xff]
        %v3228 = vld [vmem:[%s2479 + $0x6a] sm:$0xff]
        %v3229 = vld [vmem:[%s2479 + $0x7a] sm:$0xff]
        %v3230 = vld [vmem:[%s2479 + $0x82] sm:$0xff]
        %v3231 = vld [vmem:[%s2479 + $0x92] sm:$0xff]
        %v3232 = vld [vmem:[%s2479 + $0x9a] sm:$0xff]
        %v3233 = vld [vmem:[%s2479 + $0xaa] sm:$0xff]
        %v3234 = vld [vmem:[%s2479 + $0xb2] sm:$0xff]
        %v3235 = vld [vmem:[%s2479 + $0xc2] sm:$0xff]
        %v3236 = vld [vmem:[%s2479 + $0xca] sm:$0xff]
        %v3237 = vld [vmem:[%s2479 + $0xda] sm:$0xff]
        %v3238 = vld [vmem:[%s2479 + $0xe2] sm:$0xff]
        %v3239 = vld [vmem:[%s2479 + $0xf2] sm:$0xff]
        %v3240 = vld [vmem:[%s2479 + $0xfa] sm:$0xff]
        %v3241 = vld [vmem:[%s2479 + $0x10a] sm:$0xff]
        %v3242 = vld [vmem:[%s2479 + $0x112] sm:$0xff]
        %v3243 = vld [vmem:[%s2479 + $0x122] sm:$0xff]
        %v3244 = vld [vmem:[%s2479 + $0x12a] sm:$0xff]
        %v3245 = vld [vmem:[%s2479 + $0x13a] sm:$0xff]
        %v3246 = vld [vmem:[%s2479 + $0x142] sm:$0xff]
        %v3247 = vld [vmem:[%s2479 + $0x152] sm:$0xff]
        %v3248 = vld [vmem:[%s2479 + $0x15a] sm:$0xff]
        %v3249 = vld [vmem:[%s2479 + $0x16a] sm:$0xff]
        %v3250 = vld [vmem:[%s2479 + $0x172] sm:$0xff]
        %3283 = vrot.lane.b32.xlu0 %v3219, 32
        %v3284 = vpop.permute.xlu0 %3283
        %3285 = vrot.lane.b32.xlu0 %v3220, 32
        %v3286 = vpop.permute.xlu0 %3285
        %3287 = vrot.lane.b32.xlu0 %v3221, 32
        %v3288 = vpop.permute.xlu0 %3287
        %3289 = vrot.lane.b32.xlu0 %v3222, 32
        %v3290 = vpop.permute.xlu0 %3289
        %3291 = vrot.lane.b32.xlu0 %v3223, 32
        %v3292 = vpop.permute.xlu0 %3291
        %3293 = vrot.lane.b32.xlu0 %v3224, 32
        %v3294 = vpop.permute.xlu0 %3293
        %3295 = vrot.lane.b32.xlu0 %v3225, 32
        %v3296 = vpop.permute.xlu0 %3295
        %3297 = vrot.lane.b32.xlu0 %v3226, 32
        %v3298 = vpop.permute.xlu0 %3297
        %3299 = vrot.lane.b32.xlu0 %v3227, 32
        %v3300 = vpop.permute.xlu0 %3299
        %3301 = vrot.lane.b32.xlu0 %v3228, 32
        %v3302 = vpop.permute.xlu0 %3301
        %3303 = vrot.lane.b32.xlu0 %v3229, 32
        %v3304 = vpop.permute.xlu0 %3303
        %3305 = vrot.lane.b32.xlu0 %v3230, 32
        %v3306 = vpop.permute.xlu0 %3305
        %3307 = vrot.lane.b32.xlu0 %v3231, 32
        %v3308 = vpop.permute.xlu0 %3307
        %3309 = vrot.lane.b32.xlu0 %v3232, 32
        %v3310 = vpop.permute.xlu0 %3309
        %3311 = vrot.lane.b32.xlu0 %v3233, 32
        %v3312 = vpop.permute.xlu0 %3311
        %3313 = vrot.lane.b32.xlu0 %v3234, 32
        %v3314 = vpop.permute.xlu0 %3313
        %3315 = vrot.lane.b32.xlu0 %v3235, 32
        %v3316 = vpop.permute.xlu0 %3315
        %3317 = vrot.lane.b32.xlu0 %v3236, 32
        %v3318 = vpop.permute.xlu0 %3317
        %3319 = vrot.lane.b32.xlu0 %v3237, 32
        %v3320 = vpop.permute.xlu0 %3319
        %3321 = vrot.lane.b32.xlu0 %v3238, 32
        %v3322 = vpop.permute.xlu0 %3321
        %3323 = vrot.lane.b32.xlu0 %v3239, 32
        %v3324 = vpop.permute.xlu0 %3323
        %3325 = vrot.lane.b32.xlu0 %v3240, 32
        %v3326 = vpop.permute.xlu0 %3325
        %3327 = vrot.lane.b32.xlu0 %v3241, 32
        %v3328 = vpop.permute.xlu0 %3327
        %3329 = vrot.lane.b32.xlu0 %v3242, 32
        %v3330 = vpop.permute.xlu0 %3329
        %3331 = vrot.lane.b32.xlu0 %v3243, 32
        %v3332 = vpop.permute.xlu0 %3331
        %3333 = vrot.lane.b32.xlu0 %v3244, 32
        %v3334 = vpop.permute.xlu0 %3333
        %3335 = vrot.lane.b32.xlu0 %v3245, 32
        %v3336 = vpop.permute.xlu0 %3335
        %3337 = vrot.lane.b32.xlu0 %v3246, 32
        %v3338 = vpop.permute.xlu0 %3337
        %3339 = vrot.lane.b32.xlu0 %v3247, 32
        %v3340 = vpop.permute.xlu0 %3339
        %3341 = vrot.lane.b32.xlu0 %v3248, 32
        %v3342 = vpop.permute.xlu0 %3341
        %3343 = vrot.lane.b32.xlu0 %v3249, 32
        %v3344 = vpop.permute.xlu0 %3343
        %3345 = vrot.lane.b32.xlu0 %v3250, 32
        %v3346 = vpop.permute.xlu0 %3345
        %3379 = vst.msk [vmem:[#allocation6 + $0x8] sm:$0xff] %vm2736, %v3284
        %3380 = vst.msk [vmem:[#allocation6 + $0x20] sm:$0xff] %vm2736, %v3286
        %3381 = vst.msk [vmem:[#allocation6 + $0x38] sm:$0xff] %vm2736, %v3288
        %3382 = vst.msk [vmem:[#allocation6 + $0x50] sm:$0xff] %vm2736, %v3290
        %3383 = vst.msk [vmem:[#allocation6 + $0x68] sm:$0xff] %vm2736, %v3292
        %3384 = vst.msk [vmem:[#allocation6 + $0x80] sm:$0xff] %vm2736, %v3294
        %3385 = vst.msk [vmem:[#allocation6 + $0x98] sm:$0xff] %vm2736, %v3296
        %3386 = vst.msk [vmem:[#allocation6 + $0xb0] sm:$0xff] %vm2736, %v3298
        %3387 = vst.msk [vmem:[#allocation6 + $0xc8] sm:$0xff] %vm2736, %v3300
        %3388 = vst.msk [vmem:[#allocation6 + $0xe0] sm:$0xff] %vm2736, %v3302
        %3389 = vst.msk [vmem:[#allocation6 + $0xf8] sm:$0xff] %vm2736, %v3304
        %3390 = vst.msk [vmem:[#allocation6 + $0x110] sm:$0xff] %vm2736, %v3306
        %3391 = vst.msk [vmem:[#allocation6 + $0x128] sm:$0xff] %vm2736, %v3308
        %3392 = vst.msk [vmem:[#allocation6 + $0x140] sm:$0xff] %vm2736, %v3310
        %3393 = vst.msk [vmem:[#allocation6 + $0x158] sm:$0xff] %vm2736, %v3312
        %3394 = vst.msk [vmem:[#allocation6 + $0x170] sm:$0xff] %vm2736, %v3314
        %3395 = vst.msk [vmem:[#allocation6 + $0x188] sm:$0xff] %vm2736, %v3316
        %3396 = vst.msk [vmem:[#allocation6 + $0x1a0] sm:$0xff] %vm2736, %v3318
        %3397 = vst.msk [vmem:[#allocation6 + $0x1b8] sm:$0xff] %vm2736, %v3320
        %3398 = vst.msk [vmem:[#allocation6 + $0x1d0] sm:$0xff] %vm2736, %v3322
        %3399 = vst.msk [vmem:[#allocation6 + $0x1e8] sm:$0xff] %vm2736, %v3324
        %3400 = vst.msk [vmem:[#allocation6 + $0x200] sm:$0xff] %vm2736, %v3326
        %3401 = vst.msk [vmem:[#allocation6 + $0x218] sm:$0xff] %vm2736, %v3328
        %3402 = vst.msk [vmem:[#allocation6 + $0x230] sm:$0xff] %vm2736, %v3330
        %3403 = vst.msk [vmem:[#allocation6 + $0x248] sm:$0xff] %vm2736, %v3332
        %3404 = vst.msk [vmem:[#allocation6 + $0x260] sm:$0xff] %vm2736, %v3334
        %3405 = vst.msk [vmem:[#allocation6 + $0x278] sm:$0xff] %vm2736, %v3336
        %3406 = vst.msk [vmem:[#allocation6 + $0x290] sm:$0xff] %vm2736, %v3338
        %3407 = vst.msk [vmem:[#allocation6 + $0x2a8] sm:$0xff] %vm2736, %v3340
        %3408 = vst.msk [vmem:[#allocation6 + $0x2c0] sm:$0xff] %vm2736, %v3342
        %3409 = vst.msk [vmem:[#allocation6 + $0x2d8] sm:$0xff] %vm2736, %v3344
        %3410 = vst.msk [vmem:[#allocation6 + $0x2f0] sm:$0xff] %vm2736, %v3346
        %s3411 = scalar_lea.vmem [#allocation3], 48
        %v3412 = vld [vmem:[%s3411] sm:$0xff]
        %v3413 = vld [vmem:[%s3411 + $0x8] sm:$0xff]
        %v3414 = vld [vmem:[%s3411 + $0x18] sm:$0xff]
        %v3415 = vld [vmem:[%s3411 + $0x20] sm:$0xff]
        %v3416 = vld [vmem:[%s3411 + $0x30] sm:$0xff]
        %v3417 = vld [vmem:[%s3411 + $0x38] sm:$0xff]
        %v3418 = vld [vmem:[%s3411 + $0x48] sm:$0xff]
        %v3419 = vld [vmem:[%s3411 + $0x50] sm:$0xff]
        %v3420 = vld [vmem:[%s3411 + $0x60] sm:$0xff]
        %v3421 = vld [vmem:[%s3411 + $0x68] sm:$0xff]
        %v3422 = vld [vmem:[%s3411 + $0x78] sm:$0xff]
        %v3423 = vld [vmem:[%s3411 + $0x80] sm:$0xff]
        %v3424 = vld [vmem:[%s3411 + $0x90] sm:$0xff]
        %v3425 = vld [vmem:[%s3411 + $0x98] sm:$0xff]
        %v3426 = vld [vmem:[%s3411 + $0xa8] sm:$0xff]
        %v3427 = vld [vmem:[%s3411 + $0xb0] sm:$0xff]
        %v3428 = vld [vmem:[%s3411 + $0xc0] sm:$0xff]
        %v3429 = vld [vmem:[%s3411 + $0xc8] sm:$0xff]
        %v3430 = vld [vmem:[%s3411 + $0xd8] sm:$0xff]
        %v3431 = vld [vmem:[%s3411 + $0xe0] sm:$0xff]
        %v3432 = vld [vmem:[%s3411 + $0xf0] sm:$0xff]
        %v3433 = vld [vmem:[%s3411 + $0xf8] sm:$0xff]
        %v3434 = vld [vmem:[%s3411 + $0x108] sm:$0xff]
        %v3435 = vld [vmem:[%s3411 + $0x110] sm:$0xff]
        %v3436 = vld [vmem:[%s3411 + $0x120] sm:$0xff]
        %v3437 = vld [vmem:[%s3411 + $0x128] sm:$0xff]
        %v3438 = vld [vmem:[%s3411 + $0x138] sm:$0xff]
        %v3439 = vld [vmem:[%s3411 + $0x140] sm:$0xff]
        %v3440 = vld [vmem:[%s3411 + $0x150] sm:$0xff]
        %v3441 = vld [vmem:[%s3411 + $0x158] sm:$0xff]
        %v3442 = vld [vmem:[%s3411 + $0x168] sm:$0xff]
        %v3443 = vld [vmem:[%s3411 + $0x170] sm:$0xff]
        %3476 = vrot.lane.b32.xlu0 %v3412, 64
        %v3477 = vpop.permute.xlu0 %3476
        %3478 = vrot.lane.b32.xlu0 %v3413, 64
        %v3479 = vpop.permute.xlu0 %3478
        %3480 = vrot.lane.b32.xlu0 %v3414, 64
        %v3481 = vpop.permute.xlu0 %3480
        %3482 = vrot.lane.b32.xlu0 %v3415, 64
        %v3483 = vpop.permute.xlu0 %3482
        %3484 = vrot.lane.b32.xlu0 %v3416, 64
        %v3485 = vpop.permute.xlu0 %3484
        %3486 = vrot.lane.b32.xlu0 %v3417, 64
        %v3487 = vpop.permute.xlu0 %3486
        %3488 = vrot.lane.b32.xlu0 %v3418, 64
        %v3489 = vpop.permute.xlu0 %3488
        %3490 = vrot.lane.b32.xlu0 %v3419, 64
        %v3491 = vpop.permute.xlu0 %3490
        %3492 = vrot.lane.b32.xlu0 %v3420, 64
        %v3493 = vpop.permute.xlu0 %3492
        %3494 = vrot.lane.b32.xlu0 %v3421, 64
        %v3495 = vpop.permute.xlu0 %3494
        %3496 = vrot.lane.b32.xlu0 %v3422, 64
        %v3497 = vpop.permute.xlu0 %3496
        %3498 = vrot.lane.b32.xlu0 %v3423, 64
        %v3499 = vpop.permute.xlu0 %3498
        %3500 = vrot.lane.b32.xlu0 %v3424, 64
        %v3501 = vpop.permute.xlu0 %3500
        %3502 = vrot.lane.b32.xlu0 %v3425, 64
        %v3503 = vpop.permute.xlu0 %3502
        %3504 = vrot.lane.b32.xlu0 %v3426, 64
        %v3505 = vpop.permute.xlu0 %3504
        %3506 = vrot.lane.b32.xlu0 %v3427, 64
        %v3507 = vpop.permute.xlu0 %3506
        %3508 = vrot.lane.b32.xlu0 %v3428, 64
        %v3509 = vpop.permute.xlu0 %3508
        %3510 = vrot.lane.b32.xlu0 %v3429, 64
        %v3511 = vpop.permute.xlu0 %3510
        %3512 = vrot.lane.b32.xlu0 %v3430, 64
        %v3513 = vpop.permute.xlu0 %3512
        %3514 = vrot.lane.b32.xlu0 %v3431, 64
        %v3515 = vpop.permute.xlu0 %3514
        %3516 = vrot.lane.b32.xlu0 %v3432, 64
        %v3517 = vpop.permute.xlu0 %3516
        %3518 = vrot.lane.b32.xlu0 %v3433, 64
        %v3519 = vpop.permute.xlu0 %3518
        %3520 = vrot.lane.b32.xlu0 %v3434, 64
        %v3521 = vpop.permute.xlu0 %3520
        %3522 = vrot.lane.b32.xlu0 %v3435, 64
        %v3523 = vpop.permute.xlu0 %3522
        %3524 = vrot.lane.b32.xlu0 %v3436, 64
        %v3525 = vpop.permute.xlu0 %3524
        %3526 = vrot.lane.b32.xlu0 %v3437, 64
        %v3527 = vpop.permute.xlu0 %3526
        %3528 = vrot.lane.b32.xlu0 %v3438, 64
        %v3529 = vpop.permute.xlu0 %3528
        %3530 = vrot.lane.b32.xlu0 %v3439, 64
        %v3531 = vpop.permute.xlu0 %3530
        %3532 = vrot.lane.b32.xlu0 %v3440, 64
        %v3533 = vpop.permute.xlu0 %3532
        %3534 = vrot.lane.b32.xlu0 %v3441, 64
        %v3535 = vpop.permute.xlu0 %3534
        %3536 = vrot.lane.b32.xlu0 %v3442, 64
        %v3537 = vpop.permute.xlu0 %3536
        %3538 = vrot.lane.b32.xlu0 %v3443, 64
        %v3539 = vpop.permute.xlu0 %3538
        %3572 = vst.msk [vmem:[#allocation6 + $0x8] sm:$0xff] %vm2929, %v3477
        %3573 = vst.msk [vmem:[#allocation6 + $0x20] sm:$0xff] %vm2929, %v3479
        %3574 = vst.msk [vmem:[#allocation6 + $0x38] sm:$0xff] %vm2929, %v3481
        %3575 = vst.msk [vmem:[#allocation6 + $0x50] sm:$0xff] %vm2929, %v3483
        %3576 = vst.msk [vmem:[#allocation6 + $0x68] sm:$0xff] %vm2929, %v3485
        %3577 = vst.msk [vmem:[#allocation6 + $0x80] sm:$0xff] %vm2929, %v3487
        %3578 = vst.msk [vmem:[#allocation6 + $0x98] sm:$0xff] %vm2929, %v3489
        %3579 = vst.msk [vmem:[#allocation6 + $0xb0] sm:$0xff] %vm2929, %v3491
        %3580 = vst.msk [vmem:[#allocation6 + $0xc8] sm:$0xff] %vm2929, %v3493
        %3581 = vst.msk [vmem:[#allocation6 + $0xe0] sm:$0xff] %vm2929, %v3495
        %3582 = vst.msk [vmem:[#allocation6 + $0xf8] sm:$0xff] %vm2929, %v3497
        %3583 = vst.msk [vmem:[#allocation6 + $0x110] sm:$0xff] %vm2929, %v3499
        %3584 = vst.msk [vmem:[#allocation6 + $0x128] sm:$0xff] %vm2929, %v3501
        %3585 = vst.msk [vmem:[#allocation6 + $0x140] sm:$0xff] %vm2929, %v3503
        %3586 = vst.msk [vmem:[#allocation6 + $0x158] sm:$0xff] %vm2929, %v3505
        %3587 = vst.msk [vmem:[#allocation6 + $0x170] sm:$0xff] %vm2929, %v3507
        %3588 = vst.msk [vmem:[#allocation6 + $0x188] sm:$0xff] %vm2929, %v3509
        %3589 = vst.msk [vmem:[#allocation6 + $0x1a0] sm:$0xff] %vm2929, %v3511
        %3590 = vst.msk [vmem:[#allocation6 + $0x1b8] sm:$0xff] %vm2929, %v3513
        %3591 = vst.msk [vmem:[#allocation6 + $0x1d0] sm:$0xff] %vm2929, %v3515
        %3592 = vst.msk [vmem:[#allocation6 + $0x1e8] sm:$0xff] %vm2929, %v3517
        %3593 = vst.msk [vmem:[#allocation6 + $0x200] sm:$0xff] %vm2929, %v3519
        %3594 = vst.msk [vmem:[#allocation6 + $0x218] sm:$0xff] %vm2929, %v3521
        %3595 = vst.msk [vmem:[#allocation6 + $0x230] sm:$0xff] %vm2929, %v3523
        %3596 = vst.msk [vmem:[#allocation6 + $0x248] sm:$0xff] %vm2929, %v3525
        %3597 = vst.msk [vmem:[#allocation6 + $0x260] sm:$0xff] %vm2929, %v3527
        %3598 = vst.msk [vmem:[#allocation6 + $0x278] sm:$0xff] %vm2929, %v3529
        %3599 = vst.msk [vmem:[#allocation6 + $0x290] sm:$0xff] %vm2929, %v3531
        %3600 = vst.msk [vmem:[#allocation6 + $0x2a8] sm:$0xff] %vm2929, %v3533
        %3601 = vst.msk [vmem:[#allocation6 + $0x2c0] sm:$0xff] %vm2929, %v3535
        %3602 = vst.msk [vmem:[#allocation6 + $0x2d8] sm:$0xff] %vm2929, %v3537
        %3603 = vst.msk [vmem:[#allocation6 + $0x2f0] sm:$0xff] %vm2929, %v3539
        %v3604 = vld [vmem:[%s3411 + $0x1] sm:$0xff]
        %v3605 = vld [vmem:[%s3411 + $0x9] sm:$0xff]
        %v3606 = vld [vmem:[%s3411 + $0x19] sm:$0xff]
        %v3607 = vld [vmem:[%s3411 + $0x21] sm:$0xff]
        %v3608 = vld [vmem:[%s3411 + $0x31] sm:$0xff]
        %v3609 = vld [vmem:[%s3411 + $0x39] sm:$0xff]
        %v3610 = vld [vmem:[%s3411 + $0x49] sm:$0xff]
        %v3611 = vld [vmem:[%s3411 + $0x51] sm:$0xff]
        %v3612 = vld [vmem:[%s3411 + $0x61] sm:$0xff]
        %v3613 = vld [vmem:[%s3411 + $0x69] sm:$0xff]
        %v3614 = vld [vmem:[%s3411 + $0x79] sm:$0xff]
        %v3615 = vld [vmem:[%s3411 + $0x81] sm:$0xff]
        %v3616 = vld [vmem:[%s3411 + $0x91] sm:$0xff]
        %v3617 = vld [vmem:[%s3411 + $0x99] sm:$0xff]
        %v3618 = vld [vmem:[%s3411 + $0xa9] sm:$0xff]
        %v3619 = vld [vmem:[%s3411 + $0xb1] sm:$0xff]
        %v3620 = vld [vmem:[%s3411 + $0xc1] sm:$0xff]
        %v3621 = vld [vmem:[%s3411 + $0xc9] sm:$0xff]
        %v3622 = vld [vmem:[%s3411 + $0xd9] sm:$0xff]
        %v3623 = vld [vmem:[%s3411 + $0xe1] sm:$0xff]
        %v3624 = vld [vmem:[%s3411 + $0xf1] sm:$0xff]
        %v3625 = vld [vmem:[%s3411 + $0xf9] sm:$0xff]
        %v3626 = vld [vmem:[%s3411 + $0x109] sm:$0xff]
        %v3627 = vld [vmem:[%s3411 + $0x111] sm:$0xff]
        %v3628 = vld [vmem:[%s3411 + $0x121] sm:$0xff]
        %v3629 = vld [vmem:[%s3411 + $0x129] sm:$0xff]
        %v3630 = vld [vmem:[%s3411 + $0x139] sm:$0xff]
        %v3631 = vld [vmem:[%s3411 + $0x141] sm:$0xff]
        %v3632 = vld [vmem:[%s3411 + $0x151] sm:$0xff]
        %v3633 = vld [vmem:[%s3411 + $0x159] sm:$0xff]
        %v3634 = vld [vmem:[%s3411 + $0x169] sm:$0xff]
        %v3635 = vld [vmem:[%s3411 + $0x171] sm:$0xff]
        %3668 = vrot.lane.b32.xlu0 %v3604, 96
        %v3669 = vpop.permute.xlu0 %3668
        %3670 = vrot.lane.b32.xlu0 %v3605, 96
        %v3671 = vpop.permute.xlu0 %3670
        %3672 = vrot.lane.b32.xlu0 %v3606, 96
        %v3673 = vpop.permute.xlu0 %3672
        %3674 = vrot.lane.b32.xlu0 %v3607, 96
        %v3675 = vpop.permute.xlu0 %3674
        %3676 = vrot.lane.b32.xlu0 %v3608, 96
        %v3677 = vpop.permute.xlu0 %3676
        %3678 = vrot.lane.b32.xlu0 %v3609, 96
        %v3679 = vpop.permute.xlu0 %3678
        %3680 = vrot.lane.b32.xlu0 %v3610, 96
        %v3681 = vpop.permute.xlu0 %3680
        %3682 = vrot.lane.b32.xlu0 %v3611, 96
        %v3683 = vpop.permute.xlu0 %3682
        %3684 = vrot.lane.b32.xlu0 %v3612, 96
        %v3685 = vpop.permute.xlu0 %3684
        %3686 = vrot.lane.b32.xlu0 %v3613, 96
        %v3687 = vpop.permute.xlu0 %3686
        %3688 = vrot.lane.b32.xlu0 %v3614, 96
        %v3689 = vpop.permute.xlu0 %3688
        %3690 = vrot.lane.b32.xlu0 %v3615, 96
        %v3691 = vpop.permute.xlu0 %3690
        %3692 = vrot.lane.b32.xlu0 %v3616, 96
        %v3693 = vpop.permute.xlu0 %3692
        %3694 = vrot.lane.b32.xlu0 %v3617, 96
        %v3695 = vpop.permute.xlu0 %3694
        %3696 = vrot.lane.b32.xlu0 %v3618, 96
        %v3697 = vpop.permute.xlu0 %3696
        %3698 = vrot.lane.b32.xlu0 %v3619, 96
        %v3699 = vpop.permute.xlu0 %3698
        %3700 = vrot.lane.b32.xlu0 %v3620, 96
        %v3701 = vpop.permute.xlu0 %3700
        %3702 = vrot.lane.b32.xlu0 %v3621, 96
        %v3703 = vpop.permute.xlu0 %3702
        %3704 = vrot.lane.b32.xlu0 %v3622, 96
        %v3705 = vpop.permute.xlu0 %3704
        %3706 = vrot.lane.b32.xlu0 %v3623, 96
        %v3707 = vpop.permute.xlu0 %3706
        %3708 = vrot.lane.b32.xlu0 %v3624, 96
        %v3709 = vpop.permute.xlu0 %3708
        %3710 = vrot.lane.b32.xlu0 %v3625, 96
        %v3711 = vpop.permute.xlu0 %3710
        %3712 = vrot.lane.b32.xlu0 %v3626, 96
        %v3713 = vpop.permute.xlu0 %3712
        %3714 = vrot.lane.b32.xlu0 %v3627, 96
        %v3715 = vpop.permute.xlu0 %3714
        %3716 = vrot.lane.b32.xlu0 %v3628, 96
        %v3717 = vpop.permute.xlu0 %3716
        %3718 = vrot.lane.b32.xlu0 %v3629, 96
        %v3719 = vpop.permute.xlu0 %3718
        %3720 = vrot.lane.b32.xlu0 %v3630, 96
        %v3721 = vpop.permute.xlu0 %3720
        %3722 = vrot.lane.b32.xlu0 %v3631, 96
        %v3723 = vpop.permute.xlu0 %3722
        %3724 = vrot.lane.b32.xlu0 %v3632, 96
        %v3725 = vpop.permute.xlu0 %3724
        %3726 = vrot.lane.b32.xlu0 %v3633, 96
        %v3727 = vpop.permute.xlu0 %3726
        %3728 = vrot.lane.b32.xlu0 %v3634, 96
        %v3729 = vpop.permute.xlu0 %3728
        %3730 = vrot.lane.b32.xlu0 %v3635, 96
        %v3731 = vpop.permute.xlu0 %3730
        %3764 = vst.msk [vmem:[#allocation6 + $0x8] sm:$0xff] %vm3122, %v3669
        %3765 = vst.msk [vmem:[#allocation6 + $0x20] sm:$0xff] %vm3122, %v3671
        %3766 = vst.msk [vmem:[#allocation6 + $0x38] sm:$0xff] %vm3122, %v3673
        %3767 = vst.msk [vmem:[#allocation6 + $0x50] sm:$0xff] %vm3122, %v3675
        %3768 = vst.msk [vmem:[#allocation6 + $0x68] sm:$0xff] %vm3122, %v3677
        %3769 = vst.msk [vmem:[#allocation6 + $0x80] sm:$0xff] %vm3122, %v3679
        %3770 = vst.msk [vmem:[#allocation6 + $0x98] sm:$0xff] %vm3122, %v3681
        %3771 = vst.msk [vmem:[#allocation6 + $0xb0] sm:$0xff] %vm3122, %v3683
        %3772 = vst.msk [vmem:[#allocation6 + $0xc8] sm:$0xff] %vm3122, %v3685
        %3773 = vst.msk [vmem:[#allocation6 + $0xe0] sm:$0xff] %vm3122, %v3687
        %3774 = vst.msk [vmem:[#allocation6 + $0xf8] sm:$0xff] %vm3122, %v3689
        %3775 = vst.msk [vmem:[#allocation6 + $0x110] sm:$0xff] %vm3122, %v3691
        %3776 = vst.msk [vmem:[#allocation6 + $0x128] sm:$0xff] %vm3122, %v3693
        %3777 = vst.msk [vmem:[#allocation6 + $0x140] sm:$0xff] %vm3122, %v3695
        %3778 = vst.msk [vmem:[#allocation6 + $0x158] sm:$0xff] %vm3122, %v3697
        %3779 = vst.msk [vmem:[#allocation6 + $0x170] sm:$0xff] %vm3122, %v3699
        %3780 = vst.msk [vmem:[#allocation6 + $0x188] sm:$0xff] %vm3122, %v3701
        %3781 = vst.msk [vmem:[#allocation6 + $0x1a0] sm:$0xff] %vm3122, %v3703
        %3782 = vst.msk [vmem:[#allocation6 + $0x1b8] sm:$0xff] %vm3122, %v3705
        %3783 = vst.msk [vmem:[#allocation6 + $0x1d0] sm:$0xff] %vm3122, %v3707
        %3784 = vst.msk [vmem:[#allocation6 + $0x1e8] sm:$0xff] %vm3122, %v3709
        %3785 = vst.msk [vmem:[#allocation6 + $0x200] sm:$0xff] %vm3122, %v3711
        %3786 = vst.msk [vmem:[#allocation6 + $0x218] sm:$0xff] %vm3122, %v3713
        %3787 = vst.msk [vmem:[#allocation6 + $0x230] sm:$0xff] %vm3122, %v3715
        %3788 = vst.msk [vmem:[#allocation6 + $0x248] sm:$0xff] %vm3122, %v3717
        %3789 = vst.msk [vmem:[#allocation6 + $0x260] sm:$0xff] %vm3122, %v3719
        %3790 = vst.msk [vmem:[#allocation6 + $0x278] sm:$0xff] %vm3122, %v3721
        %3791 = vst.msk [vmem:[#allocation6 + $0x290] sm:$0xff] %vm3122, %v3723
        %3792 = vst.msk [vmem:[#allocation6 + $0x2a8] sm:$0xff] %vm3122, %v3725
        %3793 = vst.msk [vmem:[#allocation6 + $0x2c0] sm:$0xff] %vm3122, %v3727
        %3794 = vst.msk [vmem:[#allocation6 + $0x2d8] sm:$0xff] %vm3122, %v3729
        %3795 = vst.msk [vmem:[#allocation6 + $0x2f0] sm:$0xff] %vm3122, %v3731
        %v3796 = vld [vmem:[%s3411 + $0x2] sm:$0xff]
        %v3797 = vld [vmem:[%s3411 + $0xa] sm:$0xff]
        %v3798 = vld [vmem:[%s3411 + $0x1a] sm:$0xff]
        %v3799 = vld [vmem:[%s3411 + $0x22] sm:$0xff]
        %v3800 = vld [vmem:[%s3411 + $0x32] sm:$0xff]
        %v3801 = vld [vmem:[%s3411 + $0x3a] sm:$0xff]
        %v3802 = vld [vmem:[%s3411 + $0x4a] sm:$0xff]
        %v3803 = vld [vmem:[%s3411 + $0x52] sm:$0xff]
        %v3804 = vld [vmem:[%s3411 + $0x62] sm:$0xff]
        %v3805 = vld [vmem:[%s3411 + $0x6a] sm:$0xff]
        %v3806 = vld [vmem:[%s3411 + $0x7a] sm:$0xff]
        %v3807 = vld [vmem:[%s3411 + $0x82] sm:$0xff]
        %v3808 = vld [vmem:[%s3411 + $0x92] sm:$0xff]
        %v3809 = vld [vmem:[%s3411 + $0x9a] sm:$0xff]
        %v3810 = vld [vmem:[%s3411 + $0xaa] sm:$0xff]
        %v3811 = vld [vmem:[%s3411 + $0xb2] sm:$0xff]
        %v3812 = vld [vmem:[%s3411 + $0xc2] sm:$0xff]
        %v3813 = vld [vmem:[%s3411 + $0xca] sm:$0xff]
        %v3814 = vld [vmem:[%s3411 + $0xda] sm:$0xff]
        %v3815 = vld [vmem:[%s3411 + $0xe2] sm:$0xff]
        %v3816 = vld [vmem:[%s3411 + $0xf2] sm:$0xff]
        %v3817 = vld [vmem:[%s3411 + $0xfa] sm:$0xff]
        %v3818 = vld [vmem:[%s3411 + $0x10a] sm:$0xff]
        %v3819 = vld [vmem:[%s3411 + $0x112] sm:$0xff]
        %v3820 = vld [vmem:[%s3411 + $0x122] sm:$0xff]
        %v3821 = vld [vmem:[%s3411 + $0x12a] sm:$0xff]
        %v3822 = vld [vmem:[%s3411 + $0x13a] sm:$0xff]
        %v3823 = vld [vmem:[%s3411 + $0x142] sm:$0xff]
        %v3824 = vld [vmem:[%s3411 + $0x152] sm:$0xff]
        %v3825 = vld [vmem:[%s3411 + $0x15a] sm:$0xff]
        %v3826 = vld [vmem:[%s3411 + $0x16a] sm:$0xff]
        %v3827 = vld [vmem:[%s3411 + $0x172] sm:$0xff]
        %3828 = vst.msk [vmem:[#allocation6 + $0x10] sm:$0xff] %vm406, %v3796
        %3829 = vst.msk [vmem:[#allocation6 + $0x28] sm:$0xff] %vm406, %v3797
        %3830 = vst.msk [vmem:[#allocation6 + $0x40] sm:$0xff] %vm406, %v3798
        %3831 = vst.msk [vmem:[#allocation6 + $0x58] sm:$0xff] %vm406, %v3799
        %3832 = vst.msk [vmem:[#allocation6 + $0x70] sm:$0xff] %vm406, %v3800
        %3833 = vst.msk [vmem:[#allocation6 + $0x88] sm:$0xff] %vm406, %v3801
        %3834 = vst.msk [vmem:[#allocation6 + $0xa0] sm:$0xff] %vm406, %v3802
        %3835 = vst.msk [vmem:[#allocation6 + $0xb8] sm:$0xff] %vm406, %v3803
        %3836 = vst.msk [vmem:[#allocation6 + $0xd0] sm:$0xff] %vm406, %v3804
        %3837 = vst.msk [vmem:[#allocation6 + $0xe8] sm:$0xff] %vm406, %v3805
        %3838 = vst.msk [vmem:[#allocation6 + $0x100] sm:$0xff] %vm406, %v3806
        %3839 = vst.msk [vmem:[#allocation6 + $0x118] sm:$0xff] %vm406, %v3807
        %3840 = vst.msk [vmem:[#allocation6 + $0x130] sm:$0xff] %vm406, %v3808
        %3841 = vst.msk [vmem:[#allocation6 + $0x148] sm:$0xff] %vm406, %v3809
        %3842 = vst.msk [vmem:[#allocation6 + $0x160] sm:$0xff] %vm406, %v3810
        %3843 = vst.msk [vmem:[#allocation6 + $0x178] sm:$0xff] %vm406, %v3811
        %3844 = vst.msk [vmem:[#allocation6 + $0x190] sm:$0xff] %vm406, %v3812
        %3845 = vst.msk [vmem:[#allocation6 + $0x1a8] sm:$0xff] %vm406, %v3813
        %3846 = vst.msk [vmem:[#allocation6 + $0x1c0] sm:$0xff] %vm406, %v3814
        %3847 = vst.msk [vmem:[#allocation6 + $0x1d8] sm:$0xff] %vm406, %v3815
        %3848 = vst.msk [vmem:[#allocation6 + $0x1f0] sm:$0xff] %vm406, %v3816
        %3849 = vst.msk [vmem:[#allocation6 + $0x208] sm:$0xff] %vm406, %v3817
        %3850 = vst.msk [vmem:[#allocation6 + $0x220] sm:$0xff] %vm406, %v3818
        %3851 = vst.msk [vmem:[#allocation6 + $0x238] sm:$0xff] %vm406, %v3819
        %3852 = vst.msk [vmem:[#allocation6 + $0x250] sm:$0xff] %vm406, %v3820
        %3853 = vst.msk [vmem:[#allocation6 + $0x268] sm:$0xff] %vm406, %v3821
        %3854 = vst.msk [vmem:[#allocation6 + $0x280] sm:$0xff] %vm406, %v3822
        %3855 = vst.msk [vmem:[#allocation6 + $0x298] sm:$0xff] %vm406, %v3823
        %3856 = vst.msk [vmem:[#allocation6 + $0x2b0] sm:$0xff] %vm406, %v3824
        %3857 = vst.msk [vmem:[#allocation6 + $0x2c8] sm:$0xff] %vm406, %v3825
        %3858 = vst.msk [vmem:[#allocation6 + $0x2e0] sm:$0xff] %vm406, %v3826
        %3859 = vst.msk [vmem:[#allocation6 + $0x2f8] sm:$0xff] %vm406, %v3827
        %v3860 = vld [vmem:[#allocation6] sm:$0xff]
        %v3861 = vld [vmem:[#allocation6 + $0x8] sm:$0xff]
        %v3862 = vld [vmem:[#allocation6 + $0x10] sm:$0xff]
        %v3863 = vld [vmem:[#allocation6 + $0x18] sm:$0xff]
        %v3864 = vld [vmem:[#allocation6 + $0x20] sm:$0xff]
        %v3865 = vld [vmem:[#allocation6 + $0x28] sm:$0xff]
        %v3866 = vld [vmem:[#allocation6 + $0x30] sm:$0xff]
        %v3867 = vld [vmem:[#allocation6 + $0x38] sm:$0xff]
        %v3868 = vld [vmem:[#allocation6 + $0x40] sm:$0xff]
        %v3869 = vld [vmem:[#allocation6 + $0x48] sm:$0xff]
        %v3870 = vld [vmem:[#allocation6 + $0x50] sm:$0xff]
        %v3871 = vld [vmem:[#allocation6 + $0x58] sm:$0xff]
        %v3872 = vld [vmem:[#allocation6 + $0x60] sm:$0xff]
        %v3873 = vld [vmem:[#allocation6 + $0x68] sm:$0xff]
        %v3874 = vld [vmem:[#allocation6 + $0x70] sm:$0xff]
        %v3875 = vld [vmem:[#allocation6 + $0x78] sm:$0xff]
        %v3876 = vld [vmem:[#allocation6 + $0x80] sm:$0xff]
        %v3877 = vld [vmem:[#allocation6 + $0x88] sm:$0xff]
        %v3878 = vld [vmem:[#allocation6 + $0x90] sm:$0xff]
        %v3879 = vld [vmem:[#allocation6 + $0x98] sm:$0xff]
        %v3880 = vld [vmem:[#allocation6 + $0xa0] sm:$0xff]
        %v3881 = vld [vmem:[#allocation6 + $0xa8] sm:$0xff]
        %v3882 = vld [vmem:[#allocation6 + $0xb0] sm:$0xff]
        %v3883 = vld [vmem:[#allocation6 + $0xb8] sm:$0xff]
        %v3884 = vld [vmem:[#allocation6 + $0xc0] sm:$0xff]
        %v3885 = vld [vmem:[#allocation6 + $0xc8] sm:$0xff]
        %v3886 = vld [vmem:[#allocation6 + $0xd0] sm:$0xff]
        %v3887 = vld [vmem:[#allocation6 + $0xd8] sm:$0xff]
        %v3888 = vld [vmem:[#allocation6 + $0xe0] sm:$0xff]
        %v3889 = vld [vmem:[#allocation6 + $0xe8] sm:$0xff]
        %v3890 = vld [vmem:[#allocation6 + $0xf0] sm:$0xff]
        %v3891 = vld [vmem:[#allocation6 + $0xf8] sm:$0xff]
        %v3892 = vld [vmem:[#allocation6 + $0x100] sm:$0xff]
        %v3893 = vld [vmem:[#allocation6 + $0x108] sm:$0xff]
        %v3894 = vld [vmem:[#allocation6 + $0x110] sm:$0xff]
        %v3895 = vld [vmem:[#allocation6 + $0x118] sm:$0xff]
        %v3896 = vld [vmem:[#allocation6 + $0x120] sm:$0xff]
        %v3897 = vld [vmem:[#allocation6 + $0x128] sm:$0xff]
        %v3898 = vld [vmem:[#allocation6 + $0x130] sm:$0xff]
        %v3899 = vld [vmem:[#allocation6 + $0x138] sm:$0xff]
        %v3900 = vld [vmem:[#allocation6 + $0x140] sm:$0xff]
        %v3901 = vld [vmem:[#allocation6 + $0x148] sm:$0xff]
        %v3902 = vld [vmem:[#allocation6 + $0x150] sm:$0xff]
        %v3903 = vld [vmem:[#allocation6 + $0x158] sm:$0xff]
        %v3904 = vld [vmem:[#allocation6 + $0x160] sm:$0xff]
        %v3905 = vld [vmem:[#allocation6 + $0x168] sm:$0xff]
        %v3906 = vld [vmem:[#allocation6 + $0x170] sm:$0xff]
        %v3907 = vld [vmem:[#allocation6 + $0x178] sm:$0xff]
        %v3908 = vld [vmem:[#allocation6 + $0x180] sm:$0xff]
        %v3909 = vld [vmem:[#allocation6 + $0x188] sm:$0xff]
        %v3910 = vld [vmem:[#allocation6 + $0x190] sm:$0xff]
        %v3911 = vld [vmem:[#allocation6 + $0x198] sm:$0xff]
        %v3912 = vld [vmem:[#allocation6 + $0x1a0] sm:$0xff]
        %v3913 = vld [vmem:[#allocation6 + $0x1a8] sm:$0xff]
        %v3914 = vld [vmem:[#allocation6 + $0x1b0] sm:$0xff]
        %v3915 = vld [vmem:[#allocation6 + $0x1b8] sm:$0xff]
        %v3916 = vld [vmem:[#allocation6 + $0x1c0] sm:$0xff]
        %v3917 = vld [vmem:[#allocation6 + $0x1c8] sm:$0xff]
        %v3918 = vld [vmem:[#allocation6 + $0x1d0] sm:$0xff]
        %v3919 = vld [vmem:[#allocation6 + $0x1d8] sm:$0xff]
        %v3920 = vld [vmem:[#allocation6 + $0x1e0] sm:$0xff]
        %v3921 = vld [vmem:[#allocation6 + $0x1e8] sm:$0xff]
        %v3922 = vld [vmem:[#allocation6 + $0x1f0] sm:$0xff]
        %v3923 = vld [vmem:[#allocation6 + $0x1f8] sm:$0xff]
        %v3924 = vld [vmem:[#allocation6 + $0x200] sm:$0xff]
        %v3925 = vld [vmem:[#allocation6 + $0x208] sm:$0xff]
        %v3926 = vld [vmem:[#allocation6 + $0x210] sm:$0xff]
        %v3927 = vld [vmem:[#allocation6 + $0x218] sm:$0xff]
        %v3928 = vld [vmem:[#allocation6 + $0x220] sm:$0xff]
        %v3929 = vld [vmem:[#allocation6 + $0x228] sm:$0xff]
        %v3930 = vld [vmem:[#allocation6 + $0x230] sm:$0xff]
        %v3931 = vld [vmem:[#allocation6 + $0x238] sm:$0xff]
        %v3932 = vld [vmem:[#allocation6 + $0x240] sm:$0xff]
        %v3933 = vld [vmem:[#allocation6 + $0x248] sm:$0xff]
        %v3934 = vld [vmem:[#allocation6 + $0x250] sm:$0xff]
        %v3935 = vld [vmem:[#allocation6 + $0x258] sm:$0xff]
        %v3936 = vld [vmem:[#allocation6 + $0x260] sm:$0xff]
        %v3937 = vld [vmem:[#allocation6 + $0x268] sm:$0xff]
        %v3938 = vld [vmem:[#allocation6 + $0x270] sm:$0xff]
        %v3939 = vld [vmem:[#allocation6 + $0x278] sm:$0xff]
        %v3940 = vld [vmem:[#allocation6 + $0x280] sm:$0xff]
        %v3941 = vld [vmem:[#allocation6 + $0x288] sm:$0xff]
        %v3942 = vld [vmem:[#allocation6 + $0x290] sm:$0xff]
        %v3943 = vld [vmem:[#allocation6 + $0x298] sm:$0xff]
        %v3944 = vld [vmem:[#allocation6 + $0x2a0] sm:$0xff]
        %v3945 = vld [vmem:[#allocation6 + $0x2a8] sm:$0xff]
        %v3946 = vld [vmem:[#allocation6 + $0x2b0] sm:$0xff]
        %v3947 = vld [vmem:[#allocation6 + $0x2b8] sm:$0xff]
        %v3948 = vld [vmem:[#allocation6 + $0x2c0] sm:$0xff]
        %v3949 = vld [vmem:[#allocation6 + $0x2c8] sm:$0xff]
        %v3950 = vld [vmem:[#allocation6 + $0x2d0] sm:$0xff]
        %v3951 = vld [vmem:[#allocation6 + $0x2d8] sm:$0xff]
        %v3952 = vld [vmem:[#allocation6 + $0x2e0] sm:$0xff]
        %v3953 = vld [vmem:[#allocation6 + $0x2e8] sm:$0xff]
        %v3954 = vld [vmem:[#allocation6 + $0x2f0] sm:$0xff]
        %v3955 = vld [vmem:[#allocation6 + $0x2f8] sm:$0xff]
        %v3956 = vld [vmem:[#allocation10] sm:$0xff]
        %v3957 = vld [vmem:[#allocation10 + $0x8] sm:$0xff]
        %v3958 = vld [vmem:[#allocation10 + $0x10] sm:$0xff]
        %v3959 = vld [vmem:[#allocation10 + $0x18] sm:$0xff]
        %v3960 = vld [vmem:[#allocation10 + $0x20] sm:$0xff]
        %v3961 = vld [vmem:[#allocation10 + $0x28] sm:$0xff]
        %v3962 = vld [vmem:[#allocation10 + $0x30] sm:$0xff]
        %v3963 = vld [vmem:[#allocation10 + $0x38] sm:$0xff]
        %v3964 = vld [vmem:[#allocation10 + $0x40] sm:$0xff]
        %v3965 = vld [vmem:[#allocation10 + $0x48] sm:$0xff]
        %v3966 = vld [vmem:[#allocation10 + $0x50] sm:$0xff]
        %v3967 = vld [vmem:[#allocation10 + $0x58] sm:$0xff]
        %v3968 = vld [vmem:[#allocation10 + $0x60] sm:$0xff]
        %v3969 = vld [vmem:[#allocation10 + $0x68] sm:$0xff]
        %v3970 = vld [vmem:[#allocation10 + $0x70] sm:$0xff]
        %v3971 = vld [vmem:[#allocation10 + $0x78] sm:$0xff]
        %v3972 = vld [vmem:[#allocation10 + $0x80] sm:$0xff]
        %v3973 = vld [vmem:[#allocation10 + $0x88] sm:$0xff]
        %v3974 = vld [vmem:[#allocation10 + $0x90] sm:$0xff]
        %v3975 = vld [vmem:[#allocation10 + $0x98] sm:$0xff]
        %v3976 = vld [vmem:[#allocation10 + $0xa0] sm:$0xff]
        %v3977 = vld [vmem:[#allocation10 + $0xa8] sm:$0xff]
        %v3978 = vld [vmem:[#allocation10 + $0xb0] sm:$0xff]
        %v3979 = vld [vmem:[#allocation10 + $0xb8] sm:$0xff]
        %v3980 = vld [vmem:[#allocation10 + $0xc0] sm:$0xff]
        %v3981 = vld [vmem:[#allocation10 + $0xc8] sm:$0xff]
        %v3982 = vld [vmem:[#allocation10 + $0xd0] sm:$0xff]
        %v3983 = vld [vmem:[#allocation10 + $0xd8] sm:$0xff]
        %v3984 = vld [vmem:[#allocation10 + $0xe0] sm:$0xff]
        %v3985 = vld [vmem:[#allocation10 + $0xe8] sm:$0xff]
        %v3986 = vld [vmem:[#allocation10 + $0xf0] sm:$0xff]
        %v3987 = vld [vmem:[#allocation10 + $0xf8] sm:$0xff]
        %v3988 = vld [vmem:[#allocation10 + $0x100] sm:$0xff]
        %v3989 = vld [vmem:[#allocation10 + $0x108] sm:$0xff]
        %v3990 = vld [vmem:[#allocation10 + $0x110] sm:$0xff]
        %v3991 = vld [vmem:[#allocation10 + $0x118] sm:$0xff]
        %v3992 = vld [vmem:[%s4] sm:$0x1]
        %v3994 = vperm.slane %v3992, 0
        %v3997 = vsel %vm406, %v3862, 0
        %v4000 = vsel %vm406, %v3865, 0
        %v4003 = vsel %vm406, %v3868, 0
        %v4006 = vsel %vm406, %v3871, 0
        %v4009 = vsel %vm406, %v3874, 0
        %v4012 = vsel %vm406, %v3877, 0
        %v4015 = vsel %vm406, %v3880, 0
        %v4018 = vsel %vm406, %v3883, 0
        %v4021 = vsel %vm406, %v3886, 0
        %v4024 = vsel %vm406, %v3889, 0
        %v4027 = vsel %vm406, %v3892, 0
        %v4030 = vsel %vm406, %v3895, 0
        %v4033 = vsel %vm406, %v3898, 0
        %v4036 = vsel %vm406, %v3901, 0
        %v4039 = vsel %vm406, %v3904, 0
        %v4042 = vsel %vm406, %v3907, 0
        %v4045 = vsel %vm406, %v3910, 0
        %v4048 = vsel %vm406, %v3913, 0
        %v4051 = vsel %vm406, %v3916, 0
        %v4054 = vsel %vm406, %v3919, 0
        %v4057 = vsel %vm406, %v3922, 0
        %v4060 = vsel %vm406, %v3925, 0
        %v4063 = vsel %vm406, %v3928, 0
        %v4066 = vsel %vm406, %v3931, 0
        %v4069 = vsel %vm406, %v3934, 0
        %v4072 = vsel %vm406, %v3937, 0
        %v4075 = vsel %vm406, %v3940, 0
        %v4078 = vsel %vm406, %v3943, 0
        %v4081 = vsel %vm406, %v3946, 0
        %v4084 = vsel %vm406, %v3949, 0
        %v4087 = vsel %vm406, %v3952, 0
        %v4090 = vsel %vm406, %v3955, 0
        %4092 = vmatpush.msra.mxu0 %v3971
        %4093 = vmatpush.msra.mxu0 %v3970
        %4094 = vmatpush.msra.mxu0 %v3969
        %4095 = vmatpush.msra.mxu0 %v3968
        %4096 = vmatpush.msra.mxu0 %v3967
        %4097 = vmatpush.msra.mxu0 %v3966
        %4098 = vmatpush.msra.mxu0 %v3965
        %4099 = vmatpush.msra.mxu0 %v3964
        %4100 = vmatpush.msra.mxu0 %v3963
        %4101 = vmatpush.msra.mxu0 %v3962
        %4102 = vmatpush.msra.mxu0 %v3961
        %4103 = vmatpush.msra.mxu0 %v3960
        %4104 = vmatpush.msra.mxu0 %v3959
        %4105 = vmatpush.msra.mxu0 %v3958
        %4106 = vmatpush.msra.mxu0 %v3957
        %4107 = vmatpush.msra.mxu0 %v3956
        %4108 = vmatmul.f32.gmra.mxu0 %v3860
        %v4109 = vpop.f32.mrf.mxu0
        %v4110 = vadd.f32 %v3994, %v4109
        %4111 = vmatmul.f32.gmra.mxu0 %v3863
        %v4112 = vpop.f32.mrf.mxu0
        %v4113 = vadd.f32 %v3994, %v4112
        %4114 = vmatmul.f32.gmra.mxu0 %v3866
        %v4115 = vpop.f32.mrf.mxu0
        %v4116 = vadd.f32 %v3994, %v4115
        %4117 = vmatmul.f32.gmra.mxu0 %v3869
        %v4118 = vpop.f32.mrf.mxu0
        %v4119 = vadd.f32 %v3994, %v4118
        %4120 = vmatmul.f32.gmra.mxu0 %v3872
        %v4121 = vpop.f32.mrf.mxu0
        %v4122 = vadd.f32 %v3994, %v4121
        %4123 = vmatmul.f32.gmra.mxu0 %v3875
        %v4124 = vpop.f32.mrf.mxu0
        %v4125 = vadd.f32 %v3994, %v4124
        %4126 = vmatmul.f32.gmra.mxu0 %v3878
        %v4127 = vpop.f32.mrf.mxu0
        %v4128 = vadd.f32 %v3994, %v4127
        %4129 = vmatmul.f32.gmra.mxu0 %v3881
        %v4130 = vpop.f32.mrf.mxu0
        %v4131 = vadd.f32 %v3994, %v4130
        %4132 = vmatmul.f32.gmra.mxu0 %v3884
        %v4133 = vpop.f32.mrf.mxu0
        %v4134 = vadd.f32 %v3994, %v4133
        %4135 = vmatmul.f32.gmra.mxu0 %v3887
        %v4136 = vpop.f32.mrf.mxu0
        %v4137 = vadd.f32 %v3994, %v4136
        %4138 = vmatmul.f32.gmra.mxu0 %v3890
        %v4139 = vpop.f32.mrf.mxu0
        %v4140 = vadd.f32 %v3994, %v4139
        %4141 = vmatmul.f32.gmra.mxu0 %v3893
        %v4142 = vpop.f32.mrf.mxu0
        %v4143 = vadd.f32 %v3994, %v4142
        %4144 = vmatmul.f32.gmra.mxu0 %v3896
        %v4145 = vpop.f32.mrf.mxu0
        %v4146 = vadd.f32 %v3994, %v4145
        %4147 = vmatmul.f32.gmra.mxu0 %v3899
        %v4148 = vpop.f32.mrf.mxu0
        %v4149 = vadd.f32 %v3994, %v4148
        %4150 = vmatmul.f32.gmra.mxu0 %v3902
        %v4151 = vpop.f32.mrf.mxu0
        %v4152 = vadd.f32 %v3994, %v4151
        %4153 = vmatmul.f32.gmra.mxu0 %v3905
        %v4154 = vpop.f32.mrf.mxu0
        %v4155 = vadd.f32 %v3994, %v4154
        %4156 = vmatmul.f32.gmra.mxu0 %v3908
        %v4157 = vpop.f32.mrf.mxu0
        %v4158 = vadd.f32 %v3994, %v4157
        %4159 = vmatmul.f32.gmra.mxu0 %v3911
        %v4160 = vpop.f32.mrf.mxu0
        %v4161 = vadd.f32 %v3994, %v4160
        %4162 = vmatmul.f32.gmra.mxu0 %v3914
        %v4163 = vpop.f32.mrf.mxu0
        %v4164 = vadd.f32 %v3994, %v4163
        %4165 = vmatmul.f32.gmra.mxu0 %v3917
        %v4166 = vpop.f32.mrf.mxu0
        %v4167 = vadd.f32 %v3994, %v4166
        %4168 = vmatmul.f32.gmra.mxu0 %v3920
        %v4169 = vpop.f32.mrf.mxu0
        %v4170 = vadd.f32 %v3994, %v4169
        %4171 = vmatmul.f32.gmra.mxu0 %v3923
        %v4172 = vpop.f32.mrf.mxu0
        %v4173 = vadd.f32 %v3994, %v4172
        %4174 = vmatmul.f32.gmra.mxu0 %v3926
        %v4175 = vpop.f32.mrf.mxu0
        %v4176 = vadd.f32 %v3994, %v4175
        %4177 = vmatmul.f32.gmra.mxu0 %v3929
        %v4178 = vpop.f32.mrf.mxu0
        %v4179 = vadd.f32 %v3994, %v4178
        %4180 = vmatmul.f32.gmra.mxu0 %v3932
        %v4181 = vpop.f32.mrf.mxu0
        %v4182 = vadd.f32 %v3994, %v4181
        %4183 = vmatmul.f32.gmra.mxu0 %v3935
        %v4184 = vpop.f32.mrf.mxu0
        %v4185 = vadd.f32 %v3994, %v4184
        %4186 = vmatmul.f32.gmra.mxu0 %v3938
        %v4187 = vpop.f32.mrf.mxu0
        %v4188 = vadd.f32 %v3994, %v4187
        %4189 = vmatmul.f32.gmra.mxu0 %v3941
        %v4190 = vpop.f32.mrf.mxu0
        %v4191 = vadd.f32 %v3994, %v4190
        %4192 = vmatmul.f32.gmra.mxu0 %v3944
        %v4193 = vpop.f32.mrf.mxu0
        %v4194 = vadd.f32 %v3994, %v4193
        %4195 = vmatmul.f32.gmra.mxu0 %v3947
        %v4196 = vpop.f32.mrf.mxu0
        %v4197 = vadd.f32 %v3994, %v4196
        %4198 = vmatmul.f32.gmra.mxu0 %v3950
        %v4199 = vpop.f32.mrf.mxu0
        %v4200 = vadd.f32 %v3994, %v4199
        %4201 = vmatmul.f32.gmra.mxu0 %v3953
        %v4202 = vpop.f32.mrf.mxu0
        %v4203 = vadd.f32 %v3994, %v4202
        %4204 = vdwg.mxu0
        %4205 = vmatpush.msra.mxu0 %v3987
        %4206 = vmatpush.msra.mxu0 %v3986
        %4207 = vmatpush.msra.mxu0 %v3985
        %4208 = vmatpush.msra.mxu0 %v3984
        %4209 = vmatpush.msra.mxu0 %v3983
        %4210 = vmatpush.msra.mxu0 %v3982
        %4211 = vmatpush.msra.mxu0 %v3981
        %4212 = vmatpush.msra.mxu0 %v3980
        %4213 = vmatpush.msra.mxu0 %v3979
        %4214 = vmatpush.msra.mxu0 %v3978
        %4215 = vmatpush.msra.mxu0 %v3977
        %4216 = vmatpush.msra.mxu0 %v3976
        %4217 = vmatpush.msra.mxu0 %v3975
        %4218 = vmatpush.msra.mxu0 %v3974
        %4219 = vmatpush.msra.mxu0 %v3973
        %4220 = vmatpush.msra.mxu0 %v3972
        %4221 = vmatmul.f32.gmra.mxu0 %v3861
        %v4222 = vpop.f32.mrf.mxu0
        %v4223 = vadd.f32 %v4110, %v4222
        %4224 = vmatmul.f32.gmra.mxu0 %v3864
        %v4225 = vpop.f32.mrf.mxu0
        %v4226 = vadd.f32 %v4113, %v4225
        %4227 = vmatmul.f32.gmra.mxu0 %v3867
        %v4228 = vpop.f32.mrf.mxu0
        %v4229 = vadd.f32 %v4116, %v4228
        %4230 = vmatmul.f32.gmra.mxu0 %v3870
        %v4231 = vpop.f32.mrf.mxu0
        %v4232 = vadd.f32 %v4119, %v4231
        %4233 = vmatmul.f32.gmra.mxu0 %v3873
        %v4234 = vpop.f32.mrf.mxu0
        %v4235 = vadd.f32 %v4122, %v4234
        %4236 = vmatmul.f32.gmra.mxu0 %v3876
        %v4237 = vpop.f32.mrf.mxu0
        %v4238 = vadd.f32 %v4125, %v4237
        %4239 = vmatmul.f32.gmra.mxu0 %v3879
        %v4240 = vpop.f32.mrf.mxu0
        %v4241 = vadd.f32 %v4128, %v4240
        %4242 = vmatmul.f32.gmra.mxu0 %v3882
        %v4243 = vpop.f32.mrf.mxu0
        %v4244 = vadd.f32 %v4131, %v4243
        %4245 = vmatmul.f32.gmra.mxu0 %v3885
        %v4246 = vpop.f32.mrf.mxu0
        %v4247 = vadd.f32 %v4134, %v4246
        %4248 = vmatmul.f32.gmra.mxu0 %v3888
        %v4249 = vpop.f32.mrf.mxu0
        %v4250 = vadd.f32 %v4137, %v4249
        %4251 = vmatmul.f32.gmra.mxu0 %v3891
        %v4252 = vpop.f32.mrf.mxu0
        %v4253 = vadd.f32 %v4140, %v4252
        %4254 = vmatmul.f32.gmra.mxu0 %v3894
        %v4255 = vpop.f32.mrf.mxu0
        %v4256 = vadd.f32 %v4143, %v4255
        %4257 = vmatmul.f32.gmra.mxu0 %v3897
        %v4258 = vpop.f32.mrf.mxu0
        %v4259 = vadd.f32 %v4146, %v4258
        %4260 = vmatmul.f32.gmra.mxu0 %v3900
        %v4261 = vpop.f32.mrf.mxu0
        %v4262 = vadd.f32 %v4149, %v4261
        %4263 = vmatmul.f32.gmra.mxu0 %v3903
        %v4264 = vpop.f32.mrf.mxu0
        %v4265 = vadd.f32 %v4152, %v4264
        %4266 = vmatmul.f32.gmra.mxu0 %v3906
        %v4267 = vpop.f32.mrf.mxu0
        %v4268 = vadd.f32 %v4155, %v4267
        %4269 = vmatmul.f32.gmra.mxu0 %v3909
        %v4270 = vpop.f32.mrf.mxu0
        %v4271 = vadd.f32 %v4158, %v4270
        %4272 = vmatmul.f32.gmra.mxu0 %v3912
        %v4273 = vpop.f32.mrf.mxu0
        %v4274 = vadd.f32 %v4161, %v4273
        %4275 = vmatmul.f32.gmra.mxu0 %v3915
        %v4276 = vpop.f32.mrf.mxu0
        %v4277 = vadd.f32 %v4164, %v4276
        %4278 = vmatmul.f32.gmra.mxu0 %v3918
        %v4279 = vpop.f32.mrf.mxu0
        %v4280 = vadd.f32 %v4167, %v4279
        %4281 = vmatmul.f32.gmra.mxu0 %v3921
        %v4282 = vpop.f32.mrf.mxu0
        %v4283 = vadd.f32 %v4170, %v4282
        %4284 = vmatmul.f32.gmra.mxu0 %v3924
        %v4285 = vpop.f32.mrf.mxu0
        %v4286 = vadd.f32 %v4173, %v4285
        %4287 = vmatmul.f32.gmra.mxu0 %v3927
        %v4288 = vpop.f32.mrf.mxu0
        %v4289 = vadd.f32 %v4176, %v4288
        %4290 = vmatmul.f32.gmra.mxu0 %v3930
        %v4291 = vpop.f32.mrf.mxu0
        %v4292 = vadd.f32 %v4179, %v4291
        %4293 = vmatmul.f32.gmra.mxu0 %v3933
        %v4294 = vpop.f32.mrf.mxu0
        %v4295 = vadd.f32 %v4182, %v4294
        %4296 = vmatmul.f32.gmra.mxu0 %v3936
        %v4297 = vpop.f32.mrf.mxu0
        %v4298 = vadd.f32 %v4185, %v4297
        %4299 = vmatmul.f32.gmra.mxu0 %v3939
        %v4300 = vpop.f32.mrf.mxu0
        %v4301 = vadd.f32 %v4188, %v4300
        %4302 = vmatmul.f32.gmra.mxu0 %v3942
        %v4303 = vpop.f32.mrf.mxu0
        %v4304 = vadd.f32 %v4191, %v4303
        %4305 = vmatmul.f32.gmra.mxu0 %v3945
        %v4306 = vpop.f32.mrf.mxu0
        %v4307 = vadd.f32 %v4194, %v4306
        %4308 = vmatmul.f32.gmra.mxu0 %v3948
        %v4309 = vpop.f32.mrf.mxu0
        %v4310 = vadd.f32 %v4197, %v4309
        %4311 = vmatmul.f32.gmra.mxu0 %v3951
        %v4312 = vpop.f32.mrf.mxu0
        %v4313 = vadd.f32 %v4200, %v4312
        %4314 = vmatmul.f32.gmra.mxu0 %v3954
        %v4315 = vpop.f32.mrf.mxu0
        %v4316 = vadd.f32 %v4203, %v4315
        %4317 = vdwg.mxu0
        %4318 = vmatpush.msra.mxu0 0.0
        %4319 = vmatpush.msra.mxu0 0.0
        %4320 = vmatpush.msra.mxu0 0.0
        %4321 = vmatpush.msra.mxu0 0.0
        %4322 = vmatpush.msra.mxu0 0.0
        %4323 = vmatpush.msra.mxu0 0.0
        %4324 = vmatpush.msra.mxu0 0.0
        %4325 = vmatpush.msra.mxu0 0.0
        %4326 = vmatpush.msra.mxu0 0.0
        %4327 = vmatpush.msra.mxu0 0.0
        %4328 = vmatpush.msra.mxu0 0.0
        %4329 = vmatpush.msra.mxu0 0.0
        %4330 = vmatpush.msra.mxu0 %v3991
        %4331 = vmatpush.msra.mxu0 %v3990
        %4332 = vmatpush.msra.mxu0 %v3989
        %4333 = vmatpush.msra.mxu0 %v3988
        %4334 = vmatmul.f32.gmra.mxu0 %v3997
        %v4335 = vpop.f32.mrf.mxu0
        %v4336 = vadd.f32 %v4223, %v4335
        %4337 = vmatmul.f32.gmra.mxu0 %v4000
        %v4338 = vpop.f32.mrf.mxu0
        %v4339 = vadd.f32 %v4226, %v4338
        %4340 = vmatmul.f32.gmra.mxu0 %v4003
        %v4341 = vpop.f32.mrf.mxu0
        %v4342 = vadd.f32 %v4229, %v4341
        %4343 = vmatmul.f32.gmra.mxu0 %v4006
        %v4344 = vpop.f32.mrf.mxu0
        %v4345 = vadd.f32 %v4232, %v4344
        %4346 = vmatmul.f32.gmra.mxu0 %v4009
        %v4347 = vpop.f32.mrf.mxu0
        %v4348 = vadd.f32 %v4235, %v4347
        %4349 = vmatmul.f32.gmra.mxu0 %v4012
        %v4350 = vpop.f32.mrf.mxu0
        %v4351 = vadd.f32 %v4238, %v4350
        %4352 = vmatmul.f32.gmra.mxu0 %v4015
        %v4353 = vpop.f32.mrf.mxu0
        %v4354 = vadd.f32 %v4241, %v4353
        %4355 = vmatmul.f32.gmra.mxu0 %v4018
        %v4356 = vpop.f32.mrf.mxu0
        %v4357 = vadd.f32 %v4244, %v4356
        %4358 = vmatmul.f32.gmra.mxu0 %v4021
        %v4359 = vpop.f32.mrf.mxu0
        %v4360 = vadd.f32 %v4247, %v4359
        %4361 = vmatmul.f32.gmra.mxu0 %v4024
        %v4362 = vpop.f32.mrf.mxu0
        %v4363 = vadd.f32 %v4250, %v4362
        %4364 = vmatmul.f32.gmra.mxu0 %v4027
        %v4365 = vpop.f32.mrf.mxu0
        %v4366 = vadd.f32 %v4253, %v4365
        %4367 = vmatmul.f32.gmra.mxu0 %v4030
        %v4368 = vpop.f32.mrf.mxu0
        %v4369 = vadd.f32 %v4256, %v4368
        %4370 = vmatmul.f32.gmra.mxu0 %v4033
        %v4371 = vpop.f32.mrf.mxu0
        %v4372 = vadd.f32 %v4259, %v4371
        %4373 = vmatmul.f32.gmra.mxu0 %v4036
        %v4374 = vpop.f32.mrf.mxu0
        %v4375 = vadd.f32 %v4262, %v4374
        %4376 = vmatmul.f32.gmra.mxu0 %v4039
        %v4377 = vpop.f32.mrf.mxu0
        %v4378 = vadd.f32 %v4265, %v4377
        %4379 = vmatmul.f32.gmra.mxu0 %v4042
        %v4380 = vpop.f32.mrf.mxu0
        %v4381 = vadd.f32 %v4268, %v4380
        %4382 = vmatmul.f32.gmra.mxu0 %v4045
        %v4383 = vpop.f32.mrf.mxu0
        %v4384 = vadd.f32 %v4271, %v4383
        %4385 = vmatmul.f32.gmra.mxu0 %v4048
        %v4386 = vpop.f32.mrf.mxu0
        %v4387 = vadd.f32 %v4274, %v4386
        %4388 = vmatmul.f32.gmra.mxu0 %v4051
        %v4389 = vpop.f32.mrf.mxu0
        %v4390 = vadd.f32 %v4277, %v4389
        %4391 = vmatmul.f32.gmra.mxu0 %v4054
        %v4392 = vpop.f32.mrf.mxu0
        %v4393 = vadd.f32 %v4280, %v4392
        %4394 = vmatmul.f32.gmra.mxu0 %v4057
        %v4395 = vpop.f32.mrf.mxu0
        %v4396 = vadd.f32 %v4283, %v4395
        %4397 = vmatmul.f32.gmra.mxu0 %v4060
        %v4398 = vpop.f32.mrf.mxu0
        %v4399 = vadd.f32 %v4286, %v4398
        %4400 = vmatmul.f32.gmra.mxu0 %v4063
        %v4401 = vpop.f32.mrf.mxu0
        %v4402 = vadd.f32 %v4289, %v4401
        %4403 = vmatmul.f32.gmra.mxu0 %v4066
        %v4404 = vpop.f32.mrf.mxu0
        %v4405 = vadd.f32 %v4292, %v4404
        %4406 = vmatmul.f32.gmra.mxu0 %v4069
        %v4407 = vpop.f32.mrf.mxu0
        %v4408 = vadd.f32 %v4295, %v4407
        %4409 = vmatmul.f32.gmra.mxu0 %v4072
        %v4410 = vpop.f32.mrf.mxu0
        %v4411 = vadd.f32 %v4298, %v4410
        %4412 = vmatmul.f32.gmra.mxu0 %v4075
        %v4413 = vpop.f32.mrf.mxu0
        %v4414 = vadd.f32 %v4301, %v4413
        %4415 = vmatmul.f32.gmra.mxu0 %v4078
        %v4416 = vpop.f32.mrf.mxu0
        %v4417 = vadd.f32 %v4304, %v4416
        %4418 = vmatmul.f32.gmra.mxu0 %v4081
        %v4419 = vpop.f32.mrf.mxu0
        %v4420 = vadd.f32 %v4307, %v4419
        %4421 = vmatmul.f32.gmra.mxu0 %v4084
        %v4422 = vpop.f32.mrf.mxu0
        %v4423 = vadd.f32 %v4310, %v4422
        %4424 = vmatmul.f32.gmra.mxu0 %v4087
        %v4425 = vpop.f32.mrf.mxu0
        %v4426 = vadd.f32 %v4313, %v4425
        %4427 = vmatmul.f32.gmra.mxu0 %v4090
        %v4428 = vpop.f32.mrf.mxu0
        %v4429 = vadd.f32 %v4316, %v4428
        %4430 = vdwg.mxu0
        %v4431 = vmax.f32 %v4336, 0.0
        %v4432 = vmax.f32 %v4339, 0.0
        %v4433 = vmax.f32 %v4342, 0.0
        %v4434 = vmax.f32 %v4345, 0.0
        %v4435 = vmax.f32 %v4348, 0.0
        %v4436 = vmax.f32 %v4351, 0.0
        %v4437 = vmax.f32 %v4354, 0.0
        %v4438 = vmax.f32 %v4357, 0.0
        %v4439 = vmax.f32 %v4360, 0.0
        %v4440 = vmax.f32 %v4363, 0.0
        %v4441 = vmax.f32 %v4366, 0.0
        %v4442 = vmax.f32 %v4369, 0.0
        %v4443 = vmax.f32 %v4372, 0.0
        %v4444 = vmax.f32 %v4375, 0.0
        %v4445 = vmax.f32 %v4378, 0.0
        %v4446 = vmax.f32 %v4381, 0.0
        %v4447 = vmax.f32 %v4384, 0.0
        %v4448 = vmax.f32 %v4387, 0.0
        %v4449 = vmax.f32 %v4390, 0.0
        %v4450 = vmax.f32 %v4393, 0.0
        %v4451 = vmax.f32 %v4396, 0.0
        %v4452 = vmax.f32 %v4399, 0.0
        %v4453 = vmax.f32 %v4402, 0.0
        %v4454 = vmax.f32 %v4405, 0.0
        %v4455 = vmax.f32 %v4408, 0.0
        %v4456 = vmax.f32 %v4411, 0.0
        %v4457 = vmax.f32 %v4414, 0.0
        %v4458 = vmax.f32 %v4417, 0.0
        %v4459 = vmax.f32 %v4420, 0.0
        %v4460 = vmax.f32 %v4423, 0.0
        %v4461 = vmax.f32 %v4426, 0.0
        %v4462 = vmax.f32 %v4429, 0.0
        %s4463 = scalar_lea.vmem [#allocation4], 24
        %4464 = vst.msk [vmem:[%s4463 + $0x1] sm:$0xff] %vm462, %v4431
        %4465 = vst.msk [vmem:[%s4463 + $0x9] sm:$0xff] %vm462, %v4432
        %4466 = vst.msk [vmem:[%s4463 + $0x19] sm:$0xff] %vm462, %v4433
        %4467 = vst.msk [vmem:[%s4463 + $0x21] sm:$0xff] %vm462, %v4434
        %4468 = vst.msk [vmem:[%s4463 + $0x31] sm:$0xff] %vm462, %v4435
        %4469 = vst.msk [vmem:[%s4463 + $0x39] sm:$0xff] %vm462, %v4436
        %4470 = vst.msk [vmem:[%s4463 + $0x49] sm:$0xff] %vm462, %v4437
        %4471 = vst.msk [vmem:[%s4463 + $0x51] sm:$0xff] %vm462, %v4438
        %4472 = vst.msk [vmem:[%s4463 + $0x61] sm:$0xff] %vm462, %v4439
        %4473 = vst.msk [vmem:[%s4463 + $0x69] sm:$0xff] %vm462, %v4440
        %4474 = vst.msk [vmem:[%s4463 + $0x79] sm:$0xff] %vm462, %v4441
        %4475 = vst.msk [vmem:[%s4463 + $0x81] sm:$0xff] %vm462, %v4442
        %4476 = vst.msk [vmem:[%s4463 + $0x91] sm:$0xff] %vm462, %v4443
        %4477 = vst.msk [vmem:[%s4463 + $0x99] sm:$0xff] %vm462, %v4444
        %4478 = vst.msk [vmem:[%s4463 + $0xa9] sm:$0xff] %vm462, %v4445
        %4479 = vst.msk [vmem:[%s4463 + $0xb1] sm:$0xff] %vm462, %v4446
        %4480 = vst.msk [vmem:[%s4463 + $0xc1] sm:$0xff] %vm462, %v4447
        %4481 = vst.msk [vmem:[%s4463 + $0xc9] sm:$0xff] %vm462, %v4448
        %4482 = vst.msk [vmem:[%s4463 + $0xd9] sm:$0xff] %vm462, %v4449
        %4483 = vst.msk [vmem:[%s4463 + $0xe1] sm:$0xff] %vm462, %v4450
        %4484 = vst.msk [vmem:[%s4463 + $0xf1] sm:$0xff] %vm462, %v4451
        %4485 = vst.msk [vmem:[%s4463 + $0xf9] sm:$0xff] %vm462, %v4452
        %4486 = vst.msk [vmem:[%s4463 + $0x109] sm:$0xff] %vm462, %v4453
        %4487 = vst.msk [vmem:[%s4463 + $0x111] sm:$0xff] %vm462, %v4454
        %4488 = vst.msk [vmem:[%s4463 + $0x121] sm:$0xff] %vm462, %v4455
        %4489 = vst.msk [vmem:[%s4463 + $0x129] sm:$0xff] %vm462, %v4456
        %4490 = vst.msk [vmem:[%s4463 + $0x139] sm:$0xff] %vm462, %v4457
        %4491 = vst.msk [vmem:[%s4463 + $0x141] sm:$0xff] %vm462, %v4458
        %4492 = vst.msk [vmem:[%s4463 + $0x151] sm:$0xff] %vm462, %v4459
        %4493 = vst.msk [vmem:[%s4463 + $0x159] sm:$0xff] %vm462, %v4460
        %4494 = vst.msk [vmem:[%s4463 + $0x169] sm:$0xff] %vm462, %v4461
        %4495 = vst.msk [vmem:[%s4463 + $0x171] sm:$0xff] %vm462, %v4462
        %v4496 = vld [vmem:[#allocation4] sm:$0xff]
        %v4497 = vld [vmem:[#allocation4 + $0x8] sm:$0xff]
        %v4498 = vld [vmem:[#allocation4 + $0x18] sm:$0xff]
        %v4499 = vld [vmem:[#allocation4 + $0x20] sm:$0xff]
        %v4500 = vld [vmem:[#allocation4 + $0x30] sm:$0xff]
        %v4501 = vld [vmem:[#allocation4 + $0x38] sm:$0xff]
        %v4502 = vld [vmem:[#allocation4 + $0x48] sm:$0xff]
        %v4503 = vld [vmem:[#allocation4 + $0x50] sm:$0xff]
        %v4504 = vld [vmem:[#allocation4 + $0x60] sm:$0xff]
        %v4505 = vld [vmem:[#allocation4 + $0x68] sm:$0xff]
        %v4506 = vld [vmem:[#allocation4 + $0x78] sm:$0xff]
        %v4507 = vld [vmem:[#allocation4 + $0x80] sm:$0xff]
        %v4508 = vld [vmem:[#allocation4 + $0x90] sm:$0xff]
        %v4509 = vld [vmem:[#allocation4 + $0x98] sm:$0xff]
        %v4510 = vld [vmem:[#allocation4 + $0xa8] sm:$0xff]
        %v4511 = vld [vmem:[#allocation4 + $0xb0] sm:$0xff]
        %v4512 = vld [vmem:[#allocation4 + $0xc0] sm:$0xff]
        %v4513 = vld [vmem:[#allocation4 + $0xc8] sm:$0xff]
        %v4514 = vld [vmem:[#allocation4 + $0xd8] sm:$0xff]
        %v4515 = vld [vmem:[#allocation4 + $0xe0] sm:$0xff]
        %v4516 = vld [vmem:[#allocation4 + $0xf0] sm:$0xff]
        %v4517 = vld [vmem:[#allocation4 + $0xf8] sm:$0xff]
        %v4518 = vld [vmem:[#allocation4 + $0x108] sm:$0xff]
        %v4519 = vld [vmem:[#allocation4 + $0x110] sm:$0xff]
        %v4520 = vld [vmem:[#allocation4 + $0x120] sm:$0xff]
        %v4521 = vld [vmem:[#allocation4 + $0x128] sm:$0xff]
        %v4522 = vld [vmem:[#allocation4 + $0x138] sm:$0xff]
        %v4523 = vld [vmem:[#allocation4 + $0x140] sm:$0xff]
        %v4524 = vld [vmem:[#allocation4 + $0x150] sm:$0xff]
        %v4525 = vld [vmem:[#allocation4 + $0x158] sm:$0xff]
        %v4526 = vld [vmem:[#allocation4 + $0x168] sm:$0xff]
        %v4527 = vld [vmem:[#allocation4 + $0x170] sm:$0xff]
        %4528 = vst.msk [vmem:[#allocation7] sm:$0xff] %vm462, %v4496
        %4529 = vst.msk [vmem:[#allocation7 + $0x28] sm:$0xff] %vm462, %v4497
        %4530 = vst.msk [vmem:[#allocation7 + $0x50] sm:$0xff] %vm462, %v4498
        %4531 = vst.msk [vmem:[#allocation7 + $0x78] sm:$0xff] %vm462, %v4499
        %4532 = vst.msk [vmem:[#allocation7 + $0xa0] sm:$0xff] %vm462, %v4500
        %4533 = vst.msk [vmem:[#allocation7 + $0xc8] sm:$0xff] %vm462, %v4501
        %4534 = vst.msk [vmem:[#allocation7 + $0xf0] sm:$0xff] %vm462, %v4502
        %4535 = vst.msk [vmem:[#allocation7 + $0x118] sm:$0xff] %vm462, %v4503
        %4536 = vst.msk [vmem:[#allocation7 + $0x140] sm:$0xff] %vm462, %v4504
        %4537 = vst.msk [vmem:[#allocation7 + $0x168] sm:$0xff] %vm462, %v4505
        %4538 = vst.msk [vmem:[#allocation7 + $0x190] sm:$0xff] %vm462, %v4506
        %4539 = vst.msk [vmem:[#allocation7 + $0x1b8] sm:$0xff] %vm462, %v4507
        %4540 = vst.msk [vmem:[#allocation7 + $0x1e0] sm:$0xff] %vm462, %v4508
        %4541 = vst.msk [vmem:[#allocation7 + $0x208] sm:$0xff] %vm462, %v4509
        %4542 = vst.msk [vmem:[#allocation7 + $0x230] sm:$0xff] %vm462, %v4510
        %4543 = vst.msk [vmem:[#allocation7 + $0x258] sm:$0xff] %vm462, %v4511
        %4544 = vst.msk [vmem:[#allocation7 + $0x280] sm:$0xff] %vm462, %v4512
        %4545 = vst.msk [vmem:[#allocation7 + $0x2a8] sm:$0xff] %vm462, %v4513
        %4546 = vst.msk [vmem:[#allocation7 + $0x2d0] sm:$0xff] %vm462, %v4514
        %4547 = vst.msk [vmem:[#allocation7 + $0x2f8] sm:$0xff] %vm462, %v4515
        %4548 = vst.msk [vmem:[#allocation7 + $0x320] sm:$0xff] %vm462, %v4516
        %4549 = vst.msk [vmem:[#allocation7 + $0x348] sm:$0xff] %vm462, %v4517
        %4550 = vst.msk [vmem:[#allocation7 + $0x370] sm:$0xff] %vm462, %v4518
        %4551 = vst.msk [vmem:[#allocation7 + $0x398] sm:$0xff] %vm462, %v4519
        %4552 = vst.msk [vmem:[#allocation7 + $0x3c0] sm:$0xff] %vm462, %v4520
        %4553 = vst.msk [vmem:[#allocation7 + $0x3e8] sm:$0xff] %vm462, %v4521
        %4554 = vst.msk [vmem:[#allocation7 + $0x410] sm:$0xff] %vm462, %v4522
        %4555 = vst.msk [vmem:[#allocation7 + $0x438] sm:$0xff] %vm462, %v4523
        %4556 = vst.msk [vmem:[#allocation7 + $0x460] sm:$0xff] %vm462, %v4524
        %4557 = vst.msk [vmem:[#allocation7 + $0x488] sm:$0xff] %vm462, %v4525
        %4558 = vst.msk [vmem:[#allocation7 + $0x4b0] sm:$0xff] %vm462, %v4526
        %4559 = vst.msk [vmem:[#allocation7 + $0x4d8] sm:$0xff] %vm462, %v4527
        %v4560 = vld [vmem:[#allocation4 + $0x1] sm:$0xff]
        %v4561 = vld [vmem:[#allocation4 + $0x9] sm:$0xff]
        %v4562 = vld [vmem:[#allocation4 + $0x19] sm:$0xff]
        %v4563 = vld [vmem:[#allocation4 + $0x21] sm:$0xff]
        %v4564 = vld [vmem:[#allocation4 + $0x31] sm:$0xff]
        %v4565 = vld [vmem:[#allocation4 + $0x39] sm:$0xff]
        %v4566 = vld [vmem:[#allocation4 + $0x49] sm:$0xff]
        %v4567 = vld [vmem:[#allocation4 + $0x51] sm:$0xff]
        %v4568 = vld [vmem:[#allocation4 + $0x61] sm:$0xff]
        %v4569 = vld [vmem:[#allocation4 + $0x69] sm:$0xff]
        %v4570 = vld [vmem:[#allocation4 + $0x79] sm:$0xff]
        %v4571 = vld [vmem:[#allocation4 + $0x81] sm:$0xff]
        %v4572 = vld [vmem:[#allocation4 + $0x91] sm:$0xff]
        %v4573 = vld [vmem:[#allocation4 + $0x99] sm:$0xff]
        %v4574 = vld [vmem:[#allocation4 + $0xa9] sm:$0xff]
        %v4575 = vld [vmem:[#allocation4 + $0xb1] sm:$0xff]
        %v4576 = vld [vmem:[#allocation4 + $0xc1] sm:$0xff]
        %v4577 = vld [vmem:[#allocation4 + $0xc9] sm:$0xff]
        %v4578 = vld [vmem:[#allocation4 + $0xd9] sm:$0xff]
        %v4579 = vld [vmem:[#allocation4 + $0xe1] sm:$0xff]
        %v4580 = vld [vmem:[#allocation4 + $0xf1] sm:$0xff]
        %v4581 = vld [vmem:[#allocation4 + $0xf9] sm:$0xff]
        %v4582 = vld [vmem:[#allocation4 + $0x109] sm:$0xff]
        %v4583 = vld [vmem:[#allocation4 + $0x111] sm:$0xff]
        %v4584 = vld [vmem:[#allocation4 + $0x121] sm:$0xff]
        %v4585 = vld [vmem:[#allocation4 + $0x129] sm:$0xff]
        %v4586 = vld [vmem:[#allocation4 + $0x139] sm:$0xff]
        %v4587 = vld [vmem:[#allocation4 + $0x141] sm:$0xff]
        %v4588 = vld [vmem:[#allocation4 + $0x151] sm:$0xff]
        %v4589 = vld [vmem:[#allocation4 + $0x159] sm:$0xff]
        %v4590 = vld [vmem:[#allocation4 + $0x169] sm:$0xff]
        %v4591 = vld [vmem:[#allocation4 + $0x171] sm:$0xff]
        %4624 = vrot.lane.b32.xlu0 %v4560, 64
        %v4625 = vpop.permute.xlu0 %4624
        %4626 = vrot.lane.b32.xlu0 %v4561, 64
        %v4627 = vpop.permute.xlu0 %4626
        %4628 = vrot.lane.b32.xlu0 %v4562, 64
        %v4629 = vpop.permute.xlu0 %4628
        %4630 = vrot.lane.b32.xlu0 %v4563, 64
        %v4631 = vpop.permute.xlu0 %4630
        %4632 = vrot.lane.b32.xlu0 %v4564, 64
        %v4633 = vpop.permute.xlu0 %4632
        %4634 = vrot.lane.b32.xlu0 %v4565, 64
        %v4635 = vpop.permute.xlu0 %4634
        %4636 = vrot.lane.b32.xlu0 %v4566, 64
        %v4637 = vpop.permute.xlu0 %4636
        %4638 = vrot.lane.b32.xlu0 %v4567, 64
        %v4639 = vpop.permute.xlu0 %4638
        %4640 = vrot.lane.b32.xlu0 %v4568, 64
        %v4641 = vpop.permute.xlu0 %4640
        %4642 = vrot.lane.b32.xlu0 %v4569, 64
        %v4643 = vpop.permute.xlu0 %4642
        %4644 = vrot.lane.b32.xlu0 %v4570, 64
        %v4645 = vpop.permute.xlu0 %4644
        %4646 = vrot.lane.b32.xlu0 %v4571, 64
        %v4647 = vpop.permute.xlu0 %4646
        %4648 = vrot.lane.b32.xlu0 %v4572, 64
        %v4649 = vpop.permute.xlu0 %4648
        %4650 = vrot.lane.b32.xlu0 %v4573, 64
        %v4651 = vpop.permute.xlu0 %4650
        %4652 = vrot.lane.b32.xlu0 %v4574, 64
        %v4653 = vpop.permute.xlu0 %4652
        %4654 = vrot.lane.b32.xlu0 %v4575, 64
        %v4655 = vpop.permute.xlu0 %4654
        %4656 = vrot.lane.b32.xlu0 %v4576, 64
        %v4657 = vpop.permute.xlu0 %4656
        %4658 = vrot.lane.b32.xlu0 %v4577, 64
        %v4659 = vpop.permute.xlu0 %4658
        %4660 = vrot.lane.b32.xlu0 %v4578, 64
        %v4661 = vpop.permute.xlu0 %4660
        %4662 = vrot.lane.b32.xlu0 %v4579, 64
        %v4663 = vpop.permute.xlu0 %4662
        %4664 = vrot.lane.b32.xlu0 %v4580, 64
        %v4665 = vpop.permute.xlu0 %4664
        %4666 = vrot.lane.b32.xlu0 %v4581, 64
        %v4667 = vpop.permute.xlu0 %4666
        %4668 = vrot.lane.b32.xlu0 %v4582, 64
        %v4669 = vpop.permute.xlu0 %4668
        %4670 = vrot.lane.b32.xlu0 %v4583, 64
        %v4671 = vpop.permute.xlu0 %4670
        %4672 = vrot.lane.b32.xlu0 %v4584, 64
        %v4673 = vpop.permute.xlu0 %4672
        %4674 = vrot.lane.b32.xlu0 %v4585, 64
        %v4675 = vpop.permute.xlu0 %4674
        %4676 = vrot.lane.b32.xlu0 %v4586, 64
        %v4677 = vpop.permute.xlu0 %4676
        %4678 = vrot.lane.b32.xlu0 %v4587, 64
        %v4679 = vpop.permute.xlu0 %4678
        %4680 = vrot.lane.b32.xlu0 %v4588, 64
        %v4681 = vpop.permute.xlu0 %4680
        %4682 = vrot.lane.b32.xlu0 %v4589, 64
        %v4683 = vpop.permute.xlu0 %4682
        %4684 = vrot.lane.b32.xlu0 %v4590, 64
        %v4685 = vpop.permute.xlu0 %4684
        %4686 = vrot.lane.b32.xlu0 %v4591, 64
        %v4687 = vpop.permute.xlu0 %4686
        %vm4720 = vcmask 1048064
        %4721 = vst.msk [vmem:[#allocation7] sm:$0xff] %vm4720, %v4625
        %4722 = vst.msk [vmem:[#allocation7 + $0x28] sm:$0xff] %vm4720, %v4627
        %4723 = vst.msk [vmem:[#allocation7 + $0x50] sm:$0xff] %vm4720, %v4629
        %4724 = vst.msk [vmem:[#allocation7 + $0x78] sm:$0xff] %vm4720, %v4631
        %4725 = vst.msk [vmem:[#allocation7 + $0xa0] sm:$0xff] %vm4720, %v4633
        %4726 = vst.msk [vmem:[#allocation7 + $0xc8] sm:$0xff] %vm4720, %v4635
        %4727 = vst.msk [vmem:[#allocation7 + $0xf0] sm:$0xff] %vm4720, %v4637
        %4728 = vst.msk [vmem:[#allocation7 + $0x118] sm:$0xff] %vm4720, %v4639
        %4729 = vst.msk [vmem:[#allocation7 + $0x140] sm:$0xff] %vm4720, %v4641
        %4730 = vst.msk [vmem:[#allocation7 + $0x168] sm:$0xff] %vm4720, %v4643
        %4731 = vst.msk [vmem:[#allocation7 + $0x190] sm:$0xff] %vm4720, %v4645
        %4732 = vst.msk [vmem:[#allocation7 + $0x1b8] sm:$0xff] %vm4720, %v4647
        %4733 = vst.msk [vmem:[#allocation7 + $0x1e0] sm:$0xff] %vm4720, %v4649
        %4734 = vst.msk [vmem:[#allocation7 + $0x208] sm:$0xff] %vm4720, %v4651
        %4735 = vst.msk [vmem:[#allocation7 + $0x230] sm:$0xff] %vm4720, %v4653
        %4736 = vst.msk [vmem:[#allocation7 + $0x258] sm:$0xff] %vm4720, %v4655
        %4737 = vst.msk [vmem:[#allocation7 + $0x280] sm:$0xff] %vm4720, %v4657
        %4738 = vst.msk [vmem:[#allocation7 + $0x2a8] sm:$0xff] %vm4720, %v4659
        %4739 = vst.msk [vmem:[#allocation7 + $0x2d0] sm:$0xff] %vm4720, %v4661
        %4740 = vst.msk [vmem:[#allocation7 + $0x2f8] sm:$0xff] %vm4720, %v4663
        %4741 = vst.msk [vmem:[#allocation7 + $0x320] sm:$0xff] %vm4720, %v4665
        %4742 = vst.msk [vmem:[#allocation7 + $0x348] sm:$0xff] %vm4720, %v4667
        %4743 = vst.msk [vmem:[#allocation7 + $0x370] sm:$0xff] %vm4720, %v4669
        %4744 = vst.msk [vmem:[#allocation7 + $0x398] sm:$0xff] %vm4720, %v4671
        %4745 = vst.msk [vmem:[#allocation7 + $0x3c0] sm:$0xff] %vm4720, %v4673
        %4746 = vst.msk [vmem:[#allocation7 + $0x3e8] sm:$0xff] %vm4720, %v4675
        %4747 = vst.msk [vmem:[#allocation7 + $0x410] sm:$0xff] %vm4720, %v4677
        %4748 = vst.msk [vmem:[#allocation7 + $0x438] sm:$0xff] %vm4720, %v4679
        %4749 = vst.msk [vmem:[#allocation7 + $0x460] sm:$0xff] %vm4720, %v4681
        %4750 = vst.msk [vmem:[#allocation7 + $0x488] sm:$0xff] %vm4720, %v4683
        %4751 = vst.msk [vmem:[#allocation7 + $0x4b0] sm:$0xff] %vm4720, %v4685
        %4752 = vst.msk [vmem:[#allocation7 + $0x4d8] sm:$0xff] %vm4720, %v4687
        %v4753 = vld [vmem:[#allocation4 + $0x2] sm:$0xff]
        %v4754 = vld [vmem:[#allocation4 + $0xa] sm:$0xff]
        %v4755 = vld [vmem:[#allocation4 + $0x1a] sm:$0xff]
        %v4756 = vld [vmem:[#allocation4 + $0x22] sm:$0xff]
        %v4757 = vld [vmem:[#allocation4 + $0x32] sm:$0xff]
        %v4758 = vld [vmem:[#allocation4 + $0x3a] sm:$0xff]
        %v4759 = vld [vmem:[#allocation4 + $0x4a] sm:$0xff]
        %v4760 = vld [vmem:[#allocation4 + $0x52] sm:$0xff]
        %v4761 = vld [vmem:[#allocation4 + $0x62] sm:$0xff]
        %v4762 = vld [vmem:[#allocation4 + $0x6a] sm:$0xff]
        %v4763 = vld [vmem:[#allocation4 + $0x7a] sm:$0xff]
        %v4764 = vld [vmem:[#allocation4 + $0x82] sm:$0xff]
        %v4765 = vld [vmem:[#allocation4 + $0x92] sm:$0xff]
        %v4766 = vld [vmem:[#allocation4 + $0x9a] sm:$0xff]
        %v4767 = vld [vmem:[#allocation4 + $0xaa] sm:$0xff]
        %v4768 = vld [vmem:[#allocation4 + $0xb2] sm:$0xff]
        %v4769 = vld [vmem:[#allocation4 + $0xc2] sm:$0xff]
        %v4770 = vld [vmem:[#allocation4 + $0xca] sm:$0xff]
        %v4771 = vld [vmem:[#allocation4 + $0xda] sm:$0xff]
        %v4772 = vld [vmem:[#allocation4 + $0xe2] sm:$0xff]
        %v4773 = vld [vmem:[#allocation4 + $0xf2] sm:$0xff]
        %v4774 = vld [vmem:[#allocation4 + $0xfa] sm:$0xff]
        %v4775 = vld [vmem:[#allocation4 + $0x10a] sm:$0xff]
        %v4776 = vld [vmem:[#allocation4 + $0x112] sm:$0xff]
        %v4777 = vld [vmem:[#allocation4 + $0x122] sm:$0xff]
        %v4778 = vld [vmem:[#allocation4 + $0x12a] sm:$0xff]
        %v4779 = vld [vmem:[#allocation4 + $0x13a] sm:$0xff]
        %v4780 = vld [vmem:[#allocation4 + $0x142] sm:$0xff]
        %v4781 = vld [vmem:[#allocation4 + $0x152] sm:$0xff]
        %v4782 = vld [vmem:[#allocation4 + $0x15a] sm:$0xff]
        %v4783 = vld [vmem:[#allocation4 + $0x16a] sm:$0xff]
        %v4784 = vld [vmem:[#allocation4 + $0x172] sm:$0xff]
        %4785 = vst.msk [vmem:[#allocation7 + $0x8] sm:$0xff] %vm462, %v4753
        %4786 = vst.msk [vmem:[#allocation7 + $0x30] sm:$0xff] %vm462, %v4754
        %4787 = vst.msk [vmem:[#allocation7 + $0x58] sm:$0xff] %vm462, %v4755
        %4788 = vst.msk [vmem:[#allocation7 + $0x80] sm:$0xff] %vm462, %v4756
        %4789 = vst.msk [vmem:[#allocation7 + $0xa8] sm:$0xff] %vm462, %v4757
        %4790 = vst.msk [vmem:[#allocation7 + $0xd0] sm:$0xff] %vm462, %v4758
        %4791 = vst.msk [vmem:[#allocation7 + $0xf8] sm:$0xff] %vm462, %v4759
        %4792 = vst.msk [vmem:[#allocation7 + $0x120] sm:$0xff] %vm462, %v4760
        %4793 = vst.msk [vmem:[#allocation7 + $0x148] sm:$0xff] %vm462, %v4761
        %4794 = vst.msk [vmem:[#allocation7 + $0x170] sm:$0xff] %vm462, %v4762
        %4795 = vst.msk [vmem:[#allocation7 + $0x198] sm:$0xff] %vm462, %v4763
        %4796 = vst.msk [vmem:[#allocation7 + $0x1c0] sm:$0xff] %vm462, %v4764
        %4797 = vst.msk [vmem:[#allocation7 + $0x1e8] sm:$0xff] %vm462, %v4765
        %4798 = vst.msk [vmem:[#allocation7 + $0x210] sm:$0xff] %vm462, %v4766
        %4799 = vst.msk [vmem:[#allocation7 + $0x238] sm:$0xff] %vm462, %v4767
        %4800 = vst.msk [vmem:[#allocation7 + $0x260] sm:$0xff] %vm462, %v4768
        %4801 = vst.msk [vmem:[#allocation7 + $0x288] sm:$0xff] %vm462, %v4769
        %4802 = vst.msk [vmem:[#allocation7 + $0x2b0] sm:$0xff] %vm462, %v4770
        %4803 = vst.msk [vmem:[#allocation7 + $0x2d8] sm:$0xff] %vm462, %v4771
        %4804 = vst.msk [vmem:[#allocation7 + $0x300] sm:$0xff] %vm462, %v4772
        %4805 = vst.msk [vmem:[#allocation7 + $0x328] sm:$0xff] %vm462, %v4773
        %4806 = vst.msk [vmem:[#allocation7 + $0x350] sm:$0xff] %vm462, %v4774
        %4807 = vst.msk [vmem:[#allocation7 + $0x378] sm:$0xff] %vm462, %v4775
        %4808 = vst.msk [vmem:[#allocation7 + $0x3a0] sm:$0xff] %vm462, %v4776
        %4809 = vst.msk [vmem:[#allocation7 + $0x3c8] sm:$0xff] %vm462, %v4777
        %4810 = vst.msk [vmem:[#allocation7 + $0x3f0] sm:$0xff] %vm462, %v4778
        %4811 = vst.msk [vmem:[#allocation7 + $0x418] sm:$0xff] %vm462, %v4779
        %4812 = vst.msk [vmem:[#allocation7 + $0x440] sm:$0xff] %vm462, %v4780
        %4813 = vst.msk [vmem:[#allocation7 + $0x468] sm:$0xff] %vm462, %v4781
        %4814 = vst.msk [vmem:[#allocation7 + $0x490] sm:$0xff] %vm462, %v4782
        %4815 = vst.msk [vmem:[#allocation7 + $0x4b8] sm:$0xff] %vm462, %v4783
        %4816 = vst.msk [vmem:[#allocation7 + $0x4e0] sm:$0xff] %vm462, %v4784
        %v4817 = vld [vmem:[%s4463] sm:$0xff]
        %v4818 = vld [vmem:[%s4463 + $0x8] sm:$0xff]
        %v4819 = vld [vmem:[%s4463 + $0x18] sm:$0xff]
        %v4820 = vld [vmem:[%s4463 + $0x20] sm:$0xff]
        %v4821 = vld [vmem:[%s4463 + $0x30] sm:$0xff]
        %v4822 = vld [vmem:[%s4463 + $0x38] sm:$0xff]
        %v4823 = vld [vmem:[%s4463 + $0x48] sm:$0xff]
        %v4824 = vld [vmem:[%s4463 + $0x50] sm:$0xff]
        %v4825 = vld [vmem:[%s4463 + $0x60] sm:$0xff]
        %v4826 = vld [vmem:[%s4463 + $0x68] sm:$0xff]
        %v4827 = vld [vmem:[%s4463 + $0x78] sm:$0xff]
        %v4828 = vld [vmem:[%s4463 + $0x80] sm:$0xff]
        %v4829 = vld [vmem:[%s4463 + $0x90] sm:$0xff]
        %v4830 = vld [vmem:[%s4463 + $0x98] sm:$0xff]
        %v4831 = vld [vmem:[%s4463 + $0xa8] sm:$0xff]
        %v4832 = vld [vmem:[%s4463 + $0xb0] sm:$0xff]
        %v4833 = vld [vmem:[%s4463 + $0xc0] sm:$0xff]
        %v4834 = vld [vmem:[%s4463 + $0xc8] sm:$0xff]
        %v4835 = vld [vmem:[%s4463 + $0xd8] sm:$0xff]
        %v4836 = vld [vmem:[%s4463 + $0xe0] sm:$0xff]
        %v4837 = vld [vmem:[%s4463 + $0xf0] sm:$0xff]
        %v4838 = vld [vmem:[%s4463 + $0xf8] sm:$0xff]
        %v4839 = vld [vmem:[%s4463 + $0x108] sm:$0xff]
        %v4840 = vld [vmem:[%s4463 + $0x110] sm:$0xff]
        %v4841 = vld [vmem:[%s4463 + $0x120] sm:$0xff]
        %v4842 = vld [vmem:[%s4463 + $0x128] sm:$0xff]
        %v4843 = vld [vmem:[%s4463 + $0x138] sm:$0xff]
        %v4844 = vld [vmem:[%s4463 + $0x140] sm:$0xff]
        %v4845 = vld [vmem:[%s4463 + $0x150] sm:$0xff]
        %v4846 = vld [vmem:[%s4463 + $0x158] sm:$0xff]
        %v4847 = vld [vmem:[%s4463 + $0x168] sm:$0xff]
        %v4848 = vld [vmem:[%s4463 + $0x170] sm:$0xff]
        %4881 = vrot.lane.b32.xlu0 %v4817, 64
        %v4882 = vpop.permute.xlu0 %4881
        %4883 = vrot.lane.b32.xlu0 %v4818, 64
        %v4884 = vpop.permute.xlu0 %4883
        %4885 = vrot.lane.b32.xlu0 %v4819, 64
        %v4886 = vpop.permute.xlu0 %4885
        %4887 = vrot.lane.b32.xlu0 %v4820, 64
        %v4888 = vpop.permute.xlu0 %4887
        %4889 = vrot.lane.b32.xlu0 %v4821, 64
        %v4890 = vpop.permute.xlu0 %4889
        %4891 = vrot.lane.b32.xlu0 %v4822, 64
        %v4892 = vpop.permute.xlu0 %4891
        %4893 = vrot.lane.b32.xlu0 %v4823, 64
        %v4894 = vpop.permute.xlu0 %4893
        %4895 = vrot.lane.b32.xlu0 %v4824, 64
        %v4896 = vpop.permute.xlu0 %4895
        %4897 = vrot.lane.b32.xlu0 %v4825, 64
        %v4898 = vpop.permute.xlu0 %4897
        %4899 = vrot.lane.b32.xlu0 %v4826, 64
        %v4900 = vpop.permute.xlu0 %4899
        %4901 = vrot.lane.b32.xlu0 %v4827, 64
        %v4902 = vpop.permute.xlu0 %4901
        %4903 = vrot.lane.b32.xlu0 %v4828, 64
        %v4904 = vpop.permute.xlu0 %4903
        %4905 = vrot.lane.b32.xlu0 %v4829, 64
        %v4906 = vpop.permute.xlu0 %4905
        %4907 = vrot.lane.b32.xlu0 %v4830, 64
        %v4908 = vpop.permute.xlu0 %4907
        %4909 = vrot.lane.b32.xlu0 %v4831, 64
        %v4910 = vpop.permute.xlu0 %4909
        %4911 = vrot.lane.b32.xlu0 %v4832, 64
        %v4912 = vpop.permute.xlu0 %4911
        %4913 = vrot.lane.b32.xlu0 %v4833, 64
        %v4914 = vpop.permute.xlu0 %4913
        %4915 = vrot.lane.b32.xlu0 %v4834, 64
        %v4916 = vpop.permute.xlu0 %4915
        %4917 = vrot.lane.b32.xlu0 %v4835, 64
        %v4918 = vpop.permute.xlu0 %4917
        %4919 = vrot.lane.b32.xlu0 %v4836, 64
        %v4920 = vpop.permute.xlu0 %4919
        %4921 = vrot.lane.b32.xlu0 %v4837, 64
        %v4922 = vpop.permute.xlu0 %4921
        %4923 = vrot.lane.b32.xlu0 %v4838, 64
        %v4924 = vpop.permute.xlu0 %4923
        %4925 = vrot.lane.b32.xlu0 %v4839, 64
        %v4926 = vpop.permute.xlu0 %4925
        %4927 = vrot.lane.b32.xlu0 %v4840, 64
        %v4928 = vpop.permute.xlu0 %4927
        %4929 = vrot.lane.b32.xlu0 %v4841, 64
        %v4930 = vpop.permute.xlu0 %4929
        %4931 = vrot.lane.b32.xlu0 %v4842, 64
        %v4932 = vpop.permute.xlu0 %4931
        %4933 = vrot.lane.b32.xlu0 %v4843, 64
        %v4934 = vpop.permute.xlu0 %4933
        %4935 = vrot.lane.b32.xlu0 %v4844, 64
        %v4936 = vpop.permute.xlu0 %4935
        %4937 = vrot.lane.b32.xlu0 %v4845, 64
        %v4938 = vpop.permute.xlu0 %4937
        %4939 = vrot.lane.b32.xlu0 %v4846, 64
        %v4940 = vpop.permute.xlu0 %4939
        %4941 = vrot.lane.b32.xlu0 %v4847, 64
        %v4942 = vpop.permute.xlu0 %4941
        %4943 = vrot.lane.b32.xlu0 %v4848, 64
        %v4944 = vpop.permute.xlu0 %4943
        %4977 = vst.msk [vmem:[#allocation7 + $0x8] sm:$0xff] %vm4720, %v4882
        %4978 = vst.msk [vmem:[#allocation7 + $0x30] sm:$0xff] %vm4720, %v4884
        %4979 = vst.msk [vmem:[#allocation7 + $0x58] sm:$0xff] %vm4720, %v4886
        %4980 = vst.msk [vmem:[#allocation7 + $0x80] sm:$0xff] %vm4720, %v4888
        %4981 = vst.msk [vmem:[#allocation7 + $0xa8] sm:$0xff] %vm4720, %v4890
        %4982 = vst.msk [vmem:[#allocation7 + $0xd0] sm:$0xff] %vm4720, %v4892
        %4983 = vst.msk [vmem:[#allocation7 + $0xf8] sm:$0xff] %vm4720, %v4894
        %4984 = vst.msk [vmem:[#allocation7 + $0x120] sm:$0xff] %vm4720, %v4896
        %4985 = vst.msk [vmem:[#allocation7 + $0x148] sm:$0xff] %vm4720, %v4898
        %4986 = vst.msk [vmem:[#allocation7 + $0x170] sm:$0xff] %vm4720, %v4900
        %4987 = vst.msk [vmem:[#allocation7 + $0x198] sm:$0xff] %vm4720, %v4902
        %4988 = vst.msk [vmem:[#allocation7 + $0x1c0] sm:$0xff] %vm4720, %v4904
        %4989 = vst.msk [vmem:[#allocation7 + $0x1e8] sm:$0xff] %vm4720, %v4906
        %4990 = vst.msk [vmem:[#allocation7 + $0x210] sm:$0xff] %vm4720, %v4908
        %4991 = vst.msk [vmem:[#allocation7 + $0x238] sm:$0xff] %vm4720, %v4910
        %4992 = vst.msk [vmem:[#allocation7 + $0x260] sm:$0xff] %vm4720, %v4912
        %4993 = vst.msk [vmem:[#allocation7 + $0x288] sm:$0xff] %vm4720, %v4914
        %4994 = vst.msk [vmem:[#allocation7 + $0x2b0] sm:$0xff] %vm4720, %v4916
        %4995 = vst.msk [vmem:[#allocation7 + $0x2d8] sm:$0xff] %vm4720, %v4918
        %4996 = vst.msk [vmem:[#allocation7 + $0x300] sm:$0xff] %vm4720, %v4920
        %4997 = vst.msk [vmem:[#allocation7 + $0x328] sm:$0xff] %vm4720, %v4922
        %4998 = vst.msk [vmem:[#allocation7 + $0x350] sm:$0xff] %vm4720, %v4924
        %4999 = vst.msk [vmem:[#allocation7 + $0x378] sm:$0xff] %vm4720, %v4926
        %5000 = vst.msk [vmem:[#allocation7 + $0x3a0] sm:$0xff] %vm4720, %v4928
        %5001 = vst.msk [vmem:[#allocation7 + $0x3c8] sm:$0xff] %vm4720, %v4930
        %5002 = vst.msk [vmem:[#allocation7 + $0x3f0] sm:$0xff] %vm4720, %v4932
        %5003 = vst.msk [vmem:[#allocation7 + $0x418] sm:$0xff] %vm4720, %v4934
        %5004 = vst.msk [vmem:[#allocation7 + $0x440] sm:$0xff] %vm4720, %v4936
        %5005 = vst.msk [vmem:[#allocation7 + $0x468] sm:$0xff] %vm4720, %v4938
        %5006 = vst.msk [vmem:[#allocation7 + $0x490] sm:$0xff] %vm4720, %v4940
        %5007 = vst.msk [vmem:[#allocation7 + $0x4b8] sm:$0xff] %vm4720, %v4942
        %5008 = vst.msk [vmem:[#allocation7 + $0x4e0] sm:$0xff] %vm4720, %v4944
        %v5009 = vld [vmem:[%s4463 + $0x1] sm:$0xff]
        %v5010 = vld [vmem:[%s4463 + $0x9] sm:$0xff]
        %v5011 = vld [vmem:[%s4463 + $0x19] sm:$0xff]
        %v5012 = vld [vmem:[%s4463 + $0x21] sm:$0xff]
        %v5013 = vld [vmem:[%s4463 + $0x31] sm:$0xff]
        %v5014 = vld [vmem:[%s4463 + $0x39] sm:$0xff]
        %v5015 = vld [vmem:[%s4463 + $0x49] sm:$0xff]
        %v5016 = vld [vmem:[%s4463 + $0x51] sm:$0xff]
        %v5017 = vld [vmem:[%s4463 + $0x61] sm:$0xff]
        %v5018 = vld [vmem:[%s4463 + $0x69] sm:$0xff]
        %v5019 = vld [vmem:[%s4463 + $0x79] sm:$0xff]
        %v5020 = vld [vmem:[%s4463 + $0x81] sm:$0xff]
        %v5021 = vld [vmem:[%s4463 + $0x91] sm:$0xff]
        %v5022 = vld [vmem:[%s4463 + $0x99] sm:$0xff]
        %v5023 = vld [vmem:[%s4463 + $0xa9] sm:$0xff]
        %v5024 = vld [vmem:[%s4463 + $0xb1] sm:$0xff]
        %v5025 = vld [vmem:[%s4463 + $0xc1] sm:$0xff]
        %v5026 = vld [vmem:[%s4463 + $0xc9] sm:$0xff]
        %v5027 = vld [vmem:[%s4463 + $0xd9] sm:$0xff]
        %v5028 = vld [vmem:[%s4463 + $0xe1] sm:$0xff]
        %v5029 = vld [vmem:[%s4463 + $0xf1] sm:$0xff]
        %v5030 = vld [vmem:[%s4463 + $0xf9] sm:$0xff]
        %v5031 = vld [vmem:[%s4463 + $0x109] sm:$0xff]
        %v5032 = vld [vmem:[%s4463 + $0x111] sm:$0xff]
        %v5033 = vld [vmem:[%s4463 + $0x121] sm:$0xff]
        %v5034 = vld [vmem:[%s4463 + $0x129] sm:$0xff]
        %v5035 = vld [vmem:[%s4463 + $0x139] sm:$0xff]
        %v5036 = vld [vmem:[%s4463 + $0x141] sm:$0xff]
        %v5037 = vld [vmem:[%s4463 + $0x151] sm:$0xff]
        %v5038 = vld [vmem:[%s4463 + $0x159] sm:$0xff]
        %v5039 = vld [vmem:[%s4463 + $0x169] sm:$0xff]
        %v5040 = vld [vmem:[%s4463 + $0x171] sm:$0xff]
        %5041 = vst.msk [vmem:[#allocation7 + $0x10] sm:$0xff] %vm462, %v5009
        %5042 = vst.msk [vmem:[#allocation7 + $0x38] sm:$0xff] %vm462, %v5010
        %5043 = vst.msk [vmem:[#allocation7 + $0x60] sm:$0xff] %vm462, %v5011
        %5044 = vst.msk [vmem:[#allocation7 + $0x88] sm:$0xff] %vm462, %v5012
        %5045 = vst.msk [vmem:[#allocation7 + $0xb0] sm:$0xff] %vm462, %v5013
        %5046 = vst.msk [vmem:[#allocation7 + $0xd8] sm:$0xff] %vm462, %v5014
        %5047 = vst.msk [vmem:[#allocation7 + $0x100] sm:$0xff] %vm462, %v5015
        %5048 = vst.msk [vmem:[#allocation7 + $0x128] sm:$0xff] %vm462, %v5016
        %5049 = vst.msk [vmem:[#allocation7 + $0x150] sm:$0xff] %vm462, %v5017
        %5050 = vst.msk [vmem:[#allocation7 + $0x178] sm:$0xff] %vm462, %v5018
        %5051 = vst.msk [vmem:[#allocation7 + $0x1a0] sm:$0xff] %vm462, %v5019
        %5052 = vst.msk [vmem:[#allocation7 + $0x1c8] sm:$0xff] %vm462, %v5020
        %5053 = vst.msk [vmem:[#allocation7 + $0x1f0] sm:$0xff] %vm462, %v5021
        %5054 = vst.msk [vmem:[#allocation7 + $0x218] sm:$0xff] %vm462, %v5022
        %5055 = vst.msk [vmem:[#allocation7 + $0x240] sm:$0xff] %vm462, %v5023
        %5056 = vst.msk [vmem:[#allocation7 + $0x268] sm:$0xff] %vm462, %v5024
        %5057 = vst.msk [vmem:[#allocation7 + $0x290] sm:$0xff] %vm462, %v5025
        %5058 = vst.msk [vmem:[#allocation7 + $0x2b8] sm:$0xff] %vm462, %v5026
        %5059 = vst.msk [vmem:[#allocation7 + $0x2e0] sm:$0xff] %vm462, %v5027
        %5060 = vst.msk [vmem:[#allocation7 + $0x308] sm:$0xff] %vm462, %v5028
        %5061 = vst.msk [vmem:[#allocation7 + $0x330] sm:$0xff] %vm462, %v5029
        %5062 = vst.msk [vmem:[#allocation7 + $0x358] sm:$0xff] %vm462, %v5030
        %5063 = vst.msk [vmem:[#allocation7 + $0x380] sm:$0xff] %vm462, %v5031
        %5064 = vst.msk [vmem:[#allocation7 + $0x3a8] sm:$0xff] %vm462, %v5032
        %5065 = vst.msk [vmem:[#allocation7 + $0x3d0] sm:$0xff] %vm462, %v5033
        %5066 = vst.msk [vmem:[#allocation7 + $0x3f8] sm:$0xff] %vm462, %v5034
        %5067 = vst.msk [vmem:[#allocation7 + $0x420] sm:$0xff] %vm462, %v5035
        %5068 = vst.msk [vmem:[#allocation7 + $0x448] sm:$0xff] %vm462, %v5036
        %5069 = vst.msk [vmem:[#allocation7 + $0x470] sm:$0xff] %vm462, %v5037
        %5070 = vst.msk [vmem:[#allocation7 + $0x498] sm:$0xff] %vm462, %v5038
        %5071 = vst.msk [vmem:[#allocation7 + $0x4c0] sm:$0xff] %vm462, %v5039
        %5072 = vst.msk [vmem:[#allocation7 + $0x4e8] sm:$0xff] %vm462, %v5040
        %v5073 = vld [vmem:[%s4463 + $0x2] sm:$0xff]
        %v5074 = vld [vmem:[%s4463 + $0xa] sm:$0xff]
        %v5075 = vld [vmem:[%s4463 + $0x1a] sm:$0xff]
        %v5076 = vld [vmem:[%s4463 + $0x22] sm:$0xff]
        %v5077 = vld [vmem:[%s4463 + $0x32] sm:$0xff]
        %v5078 = vld [vmem:[%s4463 + $0x3a] sm:$0xff]
        %v5079 = vld [vmem:[%s4463 + $0x4a] sm:$0xff]
        %v5080 = vld [vmem:[%s4463 + $0x52] sm:$0xff]
        %v5081 = vld [vmem:[%s4463 + $0x62] sm:$0xff]
        %v5082 = vld [vmem:[%s4463 + $0x6a] sm:$0xff]
        %v5083 = vld [vmem:[%s4463 + $0x7a] sm:$0xff]
        %v5084 = vld [vmem:[%s4463 + $0x82] sm:$0xff]
        %v5085 = vld [vmem:[%s4463 + $0x92] sm:$0xff]
        %v5086 = vld [vmem:[%s4463 + $0x9a] sm:$0xff]
        %v5087 = vld [vmem:[%s4463 + $0xaa] sm:$0xff]
        %v5088 = vld [vmem:[%s4463 + $0xb2] sm:$0xff]
        %v5089 = vld [vmem:[%s4463 + $0xc2] sm:$0xff]
        %v5090 = vld [vmem:[%s4463 + $0xca] sm:$0xff]
        %v5091 = vld [vmem:[%s4463 + $0xda] sm:$0xff]
        %v5092 = vld [vmem:[%s4463 + $0xe2] sm:$0xff]
        %v5093 = vld [vmem:[%s4463 + $0xf2] sm:$0xff]
        %v5094 = vld [vmem:[%s4463 + $0xfa] sm:$0xff]
        %v5095 = vld [vmem:[%s4463 + $0x10a] sm:$0xff]
        %v5096 = vld [vmem:[%s4463 + $0x112] sm:$0xff]
        %v5097 = vld [vmem:[%s4463 + $0x122] sm:$0xff]
        %v5098 = vld [vmem:[%s4463 + $0x12a] sm:$0xff]
        %v5099 = vld [vmem:[%s4463 + $0x13a] sm:$0xff]
        %v5100 = vld [vmem:[%s4463 + $0x142] sm:$0xff]
        %v5101 = vld [vmem:[%s4463 + $0x152] sm:$0xff]
        %v5102 = vld [vmem:[%s4463 + $0x15a] sm:$0xff]
        %v5103 = vld [vmem:[%s4463 + $0x16a] sm:$0xff]
        %v5104 = vld [vmem:[%s4463 + $0x172] sm:$0xff]
        %5137 = vrot.lane.b32.xlu0 %v5073, 64
        %v5138 = vpop.permute.xlu0 %5137
        %5139 = vrot.lane.b32.xlu0 %v5074, 64
        %v5140 = vpop.permute.xlu0 %5139
        %5141 = vrot.lane.b32.xlu0 %v5075, 64
        %v5142 = vpop.permute.xlu0 %5141
        %5143 = vrot.lane.b32.xlu0 %v5076, 64
        %v5144 = vpop.permute.xlu0 %5143
        %5145 = vrot.lane.b32.xlu0 %v5077, 64
        %v5146 = vpop.permute.xlu0 %5145
        %5147 = vrot.lane.b32.xlu0 %v5078, 64
        %v5148 = vpop.permute.xlu0 %5147
        %5149 = vrot.lane.b32.xlu0 %v5079, 64
        %v5150 = vpop.permute.xlu0 %5149
        %5151 = vrot.lane.b32.xlu0 %v5080, 64
        %v5152 = vpop.permute.xlu0 %5151
        %5153 = vrot.lane.b32.xlu0 %v5081, 64
        %v5154 = vpop.permute.xlu0 %5153
        %5155 = vrot.lane.b32.xlu0 %v5082, 64
        %v5156 = vpop.permute.xlu0 %5155
        %5157 = vrot.lane.b32.xlu0 %v5083, 64
        %v5158 = vpop.permute.xlu0 %5157
        %5159 = vrot.lane.b32.xlu0 %v5084, 64
        %v5160 = vpop.permute.xlu0 %5159
        %5161 = vrot.lane.b32.xlu0 %v5085, 64
        %v5162 = vpop.permute.xlu0 %5161
        %5163 = vrot.lane.b32.xlu0 %v5086, 64
        %v5164 = vpop.permute.xlu0 %5163
        %5165 = vrot.lane.b32.xlu0 %v5087, 64
        %v5166 = vpop.permute.xlu0 %5165
        %5167 = vrot.lane.b32.xlu0 %v5088, 64
        %v5168 = vpop.permute.xlu0 %5167
        %5169 = vrot.lane.b32.xlu0 %v5089, 64
        %v5170 = vpop.permute.xlu0 %5169
        %5171 = vrot.lane.b32.xlu0 %v5090, 64
        %v5172 = vpop.permute.xlu0 %5171
        %5173 = vrot.lane.b32.xlu0 %v5091, 64
        %v5174 = vpop.permute.xlu0 %5173
        %5175 = vrot.lane.b32.xlu0 %v5092, 64
        %v5176 = vpop.permute.xlu0 %5175
        %5177 = vrot.lane.b32.xlu0 %v5093, 64
        %v5178 = vpop.permute.xlu0 %5177
        %5179 = vrot.lane.b32.xlu0 %v5094, 64
        %v5180 = vpop.permute.xlu0 %5179
        %5181 = vrot.lane.b32.xlu0 %v5095, 64
        %v5182 = vpop.permute.xlu0 %5181
        %5183 = vrot.lane.b32.xlu0 %v5096, 64
        %v5184 = vpop.permute.xlu0 %5183
        %5185 = vrot.lane.b32.xlu0 %v5097, 64
        %v5186 = vpop.permute.xlu0 %5185
        %5187 = vrot.lane.b32.xlu0 %v5098, 64
        %v5188 = vpop.permute.xlu0 %5187
        %5189 = vrot.lane.b32.xlu0 %v5099, 64
        %v5190 = vpop.permute.xlu0 %5189
        %5191 = vrot.lane.b32.xlu0 %v5100, 64
        %v5192 = vpop.permute.xlu0 %5191
        %5193 = vrot.lane.b32.xlu0 %v5101, 64
        %v5194 = vpop.permute.xlu0 %5193
        %5195 = vrot.lane.b32.xlu0 %v5102, 64
        %v5196 = vpop.permute.xlu0 %5195
        %5197 = vrot.lane.b32.xlu0 %v5103, 64
        %v5198 = vpop.permute.xlu0 %5197
        %5199 = vrot.lane.b32.xlu0 %v5104, 64
        %v5200 = vpop.permute.xlu0 %5199
        %5233 = vst.msk [vmem:[#allocation7 + $0x10] sm:$0xff] %vm4720, %v5138
        %5234 = vst.msk [vmem:[#allocation7 + $0x38] sm:$0xff] %vm4720, %v5140
        %5235 = vst.msk [vmem:[#allocation7 + $0x60] sm:$0xff] %vm4720, %v5142
        %5236 = vst.msk [vmem:[#allocation7 + $0x88] sm:$0xff] %vm4720, %v5144
        %5237 = vst.msk [vmem:[#allocation7 + $0xb0] sm:$0xff] %vm4720, %v5146
        %5238 = vst.msk [vmem:[#allocation7 + $0xd8] sm:$0xff] %vm4720, %v5148
        %5239 = vst.msk [vmem:[#allocation7 + $0x100] sm:$0xff] %vm4720, %v5150
        %5240 = vst.msk [vmem:[#allocation7 + $0x128] sm:$0xff] %vm4720, %v5152
        %5241 = vst.msk [vmem:[#allocation7 + $0x150] sm:$0xff] %vm4720, %v5154
        %5242 = vst.msk [vmem:[#allocation7 + $0x178] sm:$0xff] %vm4720, %v5156
        %5243 = vst.msk [vmem:[#allocation7 + $0x1a0] sm:$0xff] %vm4720, %v5158
        %5244 = vst.msk [vmem:[#allocation7 + $0x1c8] sm:$0xff] %vm4720, %v5160
        %5245 = vst.msk [vmem:[#allocation7 + $0x1f0] sm:$0xff] %vm4720, %v5162
        %5246 = vst.msk [vmem:[#allocation7 + $0x218] sm:$0xff] %vm4720, %v5164
        %5247 = vst.msk [vmem:[#allocation7 + $0x240] sm:$0xff] %vm4720, %v5166
        %5248 = vst.msk [vmem:[#allocation7 + $0x268] sm:$0xff] %vm4720, %v5168
        %5249 = vst.msk [vmem:[#allocation7 + $0x290] sm:$0xff] %vm4720, %v5170
        %5250 = vst.msk [vmem:[#allocation7 + $0x2b8] sm:$0xff] %vm4720, %v5172
        %5251 = vst.msk [vmem:[#allocation7 + $0x2e0] sm:$0xff] %vm4720, %v5174
        %5252 = vst.msk [vmem:[#allocation7 + $0x308] sm:$0xff] %vm4720, %v5176
        %5253 = vst.msk [vmem:[#allocation7 + $0x330] sm:$0xff] %vm4720, %v5178
        %5254 = vst.msk [vmem:[#allocation7 + $0x358] sm:$0xff] %vm4720, %v5180
        %5255 = vst.msk [vmem:[#allocation7 + $0x380] sm:$0xff] %vm4720, %v5182
        %5256 = vst.msk [vmem:[#allocation7 + $0x3a8] sm:$0xff] %vm4720, %v5184
        %5257 = vst.msk [vmem:[#allocation7 + $0x3d0] sm:$0xff] %vm4720, %v5186
        %5258 = vst.msk [vmem:[#allocation7 + $0x3f8] sm:$0xff] %vm4720, %v5188
        %5259 = vst.msk [vmem:[#allocation7 + $0x420] sm:$0xff] %vm4720, %v5190
        %5260 = vst.msk [vmem:[#allocation7 + $0x448] sm:$0xff] %vm4720, %v5192
        %5261 = vst.msk [vmem:[#allocation7 + $0x470] sm:$0xff] %vm4720, %v5194
        %5262 = vst.msk [vmem:[#allocation7 + $0x498] sm:$0xff] %vm4720, %v5196
        %5263 = vst.msk [vmem:[#allocation7 + $0x4c0] sm:$0xff] %vm4720, %v5198
        %5264 = vst.msk [vmem:[#allocation7 + $0x4e8] sm:$0xff] %vm4720, %v5200
        %s5265 = scalar_lea.vmem [#allocation4], 48
        %v5266 = vld [vmem:[%s5265] sm:$0xff]
        %v5267 = vld [vmem:[%s5265 + $0x8] sm:$0xff]
        %v5268 = vld [vmem:[%s5265 + $0x18] sm:$0xff]
        %v5269 = vld [vmem:[%s5265 + $0x20] sm:$0xff]
        %v5270 = vld [vmem:[%s5265 + $0x30] sm:$0xff]
        %v5271 = vld [vmem:[%s5265 + $0x38] sm:$0xff]
        %v5272 = vld [vmem:[%s5265 + $0x48] sm:$0xff]
        %v5273 = vld [vmem:[%s5265 + $0x50] sm:$0xff]
        %v5274 = vld [vmem:[%s5265 + $0x60] sm:$0xff]
        %v5275 = vld [vmem:[%s5265 + $0x68] sm:$0xff]
        %v5276 = vld [vmem:[%s5265 + $0x78] sm:$0xff]
        %v5277 = vld [vmem:[%s5265 + $0x80] sm:$0xff]
        %v5278 = vld [vmem:[%s5265 + $0x90] sm:$0xff]
        %v5279 = vld [vmem:[%s5265 + $0x98] sm:$0xff]
        %v5280 = vld [vmem:[%s5265 + $0xa8] sm:$0xff]
        %v5281 = vld [vmem:[%s5265 + $0xb0] sm:$0xff]
        %v5282 = vld [vmem:[%s5265 + $0xc0] sm:$0xff]
        %v5283 = vld [vmem:[%s5265 + $0xc8] sm:$0xff]
        %v5284 = vld [vmem:[%s5265 + $0xd8] sm:$0xff]
        %v5285 = vld [vmem:[%s5265 + $0xe0] sm:$0xff]
        %v5286 = vld [vmem:[%s5265 + $0xf0] sm:$0xff]
        %v5287 = vld [vmem:[%s5265 + $0xf8] sm:$0xff]
        %v5288 = vld [vmem:[%s5265 + $0x108] sm:$0xff]
        %v5289 = vld [vmem:[%s5265 + $0x110] sm:$0xff]
        %v5290 = vld [vmem:[%s5265 + $0x120] sm:$0xff]
        %v5291 = vld [vmem:[%s5265 + $0x128] sm:$0xff]
        %v5292 = vld [vmem:[%s5265 + $0x138] sm:$0xff]
        %v5293 = vld [vmem:[%s5265 + $0x140] sm:$0xff]
        %v5294 = vld [vmem:[%s5265 + $0x150] sm:$0xff]
        %v5295 = vld [vmem:[%s5265 + $0x158] sm:$0xff]
        %v5296 = vld [vmem:[%s5265 + $0x168] sm:$0xff]
        %v5297 = vld [vmem:[%s5265 + $0x170] sm:$0xff]
        %5298 = vst.msk [vmem:[#allocation7 + $0x18] sm:$0xff] %vm462, %v5266
        %5299 = vst.msk [vmem:[#allocation7 + $0x40] sm:$0xff] %vm462, %v5267
        %5300 = vst.msk [vmem:[#allocation7 + $0x68] sm:$0xff] %vm462, %v5268
        %5301 = vst.msk [vmem:[#allocation7 + $0x90] sm:$0xff] %vm462, %v5269
        %5302 = vst.msk [vmem:[#allocation7 + $0xb8] sm:$0xff] %vm462, %v5270
        %5303 = vst.msk [vmem:[#allocation7 + $0xe0] sm:$0xff] %vm462, %v5271
        %5304 = vst.msk [vmem:[#allocation7 + $0x108] sm:$0xff] %vm462, %v5272
        %5305 = vst.msk [vmem:[#allocation7 + $0x130] sm:$0xff] %vm462, %v5273
        %5306 = vst.msk [vmem:[#allocation7 + $0x158] sm:$0xff] %vm462, %v5274
        %5307 = vst.msk [vmem:[#allocation7 + $0x180] sm:$0xff] %vm462, %v5275
        %5308 = vst.msk [vmem:[#allocation7 + $0x1a8] sm:$0xff] %vm462, %v5276
        %5309 = vst.msk [vmem:[#allocation7 + $0x1d0] sm:$0xff] %vm462, %v5277
        %5310 = vst.msk [vmem:[#allocation7 + $0x1f8] sm:$0xff] %vm462, %v5278
        %5311 = vst.msk [vmem:[#allocation7 + $0x220] sm:$0xff] %vm462, %v5279
        %5312 = vst.msk [vmem:[#allocation7 + $0x248] sm:$0xff] %vm462, %v5280
        %5313 = vst.msk [vmem:[#allocation7 + $0x270] sm:$0xff] %vm462, %v5281
        %5314 = vst.msk [vmem:[#allocation7 + $0x298] sm:$0xff] %vm462, %v5282
        %5315 = vst.msk [vmem:[#allocation7 + $0x2c0] sm:$0xff] %vm462, %v5283
        %5316 = vst.msk [vmem:[#allocation7 + $0x2e8] sm:$0xff] %vm462, %v5284
        %5317 = vst.msk [vmem:[#allocation7 + $0x310] sm:$0xff] %vm462, %v5285
        %5318 = vst.msk [vmem:[#allocation7 + $0x338] sm:$0xff] %vm462, %v5286
        %5319 = vst.msk [vmem:[#allocation7 + $0x360] sm:$0xff] %vm462, %v5287
        %5320 = vst.msk [vmem:[#allocation7 + $0x388] sm:$0xff] %vm462, %v5288
        %5321 = vst.msk [vmem:[#allocation7 + $0x3b0] sm:$0xff] %vm462, %v5289
        %5322 = vst.msk [vmem:[#allocation7 + $0x3d8] sm:$0xff] %vm462, %v5290
        %5323 = vst.msk [vmem:[#allocation7 + $0x400] sm:$0xff] %vm462, %v5291
        %5324 = vst.msk [vmem:[#allocation7 + $0x428] sm:$0xff] %vm462, %v5292
        %5325 = vst.msk [vmem:[#allocation7 + $0x450] sm:$0xff] %vm462, %v5293
        %5326 = vst.msk [vmem:[#allocation7 + $0x478] sm:$0xff] %vm462, %v5294
        %5327 = vst.msk [vmem:[#allocation7 + $0x4a0] sm:$0xff] %vm462, %v5295
        %5328 = vst.msk [vmem:[#allocation7 + $0x4c8] sm:$0xff] %vm462, %v5296
        %5329 = vst.msk [vmem:[#allocation7 + $0x4f0] sm:$0xff] %vm462, %v5297
        %v5330 = vld [vmem:[%s5265 + $0x1] sm:$0xff]
        %v5331 = vld [vmem:[%s5265 + $0x9] sm:$0xff]
        %v5332 = vld [vmem:[%s5265 + $0x19] sm:$0xff]
        %v5333 = vld [vmem:[%s5265 + $0x21] sm:$0xff]
        %v5334 = vld [vmem:[%s5265 + $0x31] sm:$0xff]
        %v5335 = vld [vmem:[%s5265 + $0x39] sm:$0xff]
        %v5336 = vld [vmem:[%s5265 + $0x49] sm:$0xff]
        %v5337 = vld [vmem:[%s5265 + $0x51] sm:$0xff]
        %v5338 = vld [vmem:[%s5265 + $0x61] sm:$0xff]
        %v5339 = vld [vmem:[%s5265 + $0x69] sm:$0xff]
        %v5340 = vld [vmem:[%s5265 + $0x79] sm:$0xff]
        %v5341 = vld [vmem:[%s5265 + $0x81] sm:$0xff]
        %v5342 = vld [vmem:[%s5265 + $0x91] sm:$0xff]
        %v5343 = vld [vmem:[%s5265 + $0x99] sm:$0xff]
        %v5344 = vld [vmem:[%s5265 + $0xa9] sm:$0xff]
        %v5345 = vld [vmem:[%s5265 + $0xb1] sm:$0xff]
        %v5346 = vld [vmem:[%s5265 + $0xc1] sm:$0xff]
        %v5347 = vld [vmem:[%s5265 + $0xc9] sm:$0xff]
        %v5348 = vld [vmem:[%s5265 + $0xd9] sm:$0xff]
        %v5349 = vld [vmem:[%s5265 + $0xe1] sm:$0xff]
        %v5350 = vld [vmem:[%s5265 + $0xf1] sm:$0xff]
        %v5351 = vld [vmem:[%s5265 + $0xf9] sm:$0xff]
        %v5352 = vld [vmem:[%s5265 + $0x109] sm:$0xff]
        %v5353 = vld [vmem:[%s5265 + $0x111] sm:$0xff]
        %v5354 = vld [vmem:[%s5265 + $0x121] sm:$0xff]
        %v5355 = vld [vmem:[%s5265 + $0x129] sm:$0xff]
        %v5356 = vld [vmem:[%s5265 + $0x139] sm:$0xff]
        %v5357 = vld [vmem:[%s5265 + $0x141] sm:$0xff]
        %v5358 = vld [vmem:[%s5265 + $0x151] sm:$0xff]
        %v5359 = vld [vmem:[%s5265 + $0x159] sm:$0xff]
        %v5360 = vld [vmem:[%s5265 + $0x169] sm:$0xff]
        %v5361 = vld [vmem:[%s5265 + $0x171] sm:$0xff]
        %5394 = vrot.lane.b32.xlu0 %v5330, 64
        %v5395 = vpop.permute.xlu0 %5394
        %5396 = vrot.lane.b32.xlu0 %v5331, 64
        %v5397 = vpop.permute.xlu0 %5396
        %5398 = vrot.lane.b32.xlu0 %v5332, 64
        %v5399 = vpop.permute.xlu0 %5398
        %5400 = vrot.lane.b32.xlu0 %v5333, 64
        %v5401 = vpop.permute.xlu0 %5400
        %5402 = vrot.lane.b32.xlu0 %v5334, 64
        %v5403 = vpop.permute.xlu0 %5402
        %5404 = vrot.lane.b32.xlu0 %v5335, 64
        %v5405 = vpop.permute.xlu0 %5404
        %5406 = vrot.lane.b32.xlu0 %v5336, 64
        %v5407 = vpop.permute.xlu0 %5406
        %5408 = vrot.lane.b32.xlu0 %v5337, 64
        %v5409 = vpop.permute.xlu0 %5408
        %5410 = vrot.lane.b32.xlu0 %v5338, 64
        %v5411 = vpop.permute.xlu0 %5410
        %5412 = vrot.lane.b32.xlu0 %v5339, 64
        %v5413 = vpop.permute.xlu0 %5412
        %5414 = vrot.lane.b32.xlu0 %v5340, 64
        %v5415 = vpop.permute.xlu0 %5414
        %5416 = vrot.lane.b32.xlu0 %v5341, 64
        %v5417 = vpop.permute.xlu0 %5416
        %5418 = vrot.lane.b32.xlu0 %v5342, 64
        %v5419 = vpop.permute.xlu0 %5418
        %5420 = vrot.lane.b32.xlu0 %v5343, 64
        %v5421 = vpop.permute.xlu0 %5420
        %5422 = vrot.lane.b32.xlu0 %v5344, 64
        %v5423 = vpop.permute.xlu0 %5422
        %5424 = vrot.lane.b32.xlu0 %v5345, 64
        %v5425 = vpop.permute.xlu0 %5424
        %5426 = vrot.lane.b32.xlu0 %v5346, 64
        %v5427 = vpop.permute.xlu0 %5426
        %5428 = vrot.lane.b32.xlu0 %v5347, 64
        %v5429 = vpop.permute.xlu0 %5428
        %5430 = vrot.lane.b32.xlu0 %v5348, 64
        %v5431 = vpop.permute.xlu0 %5430
        %5432 = vrot.lane.b32.xlu0 %v5349, 64
        %v5433 = vpop.permute.xlu0 %5432
        %5434 = vrot.lane.b32.xlu0 %v5350, 64
        %v5435 = vpop.permute.xlu0 %5434
        %5436 = vrot.lane.b32.xlu0 %v5351, 64
        %v5437 = vpop.permute.xlu0 %5436
        %5438 = vrot.lane.b32.xlu0 %v5352, 64
        %v5439 = vpop.permute.xlu0 %5438
        %5440 = vrot.lane.b32.xlu0 %v5353, 64
        %v5441 = vpop.permute.xlu0 %5440
        %5442 = vrot.lane.b32.xlu0 %v5354, 64
        %v5443 = vpop.permute.xlu0 %5442
        %5444 = vrot.lane.b32.xlu0 %v5355, 64
        %v5445 = vpop.permute.xlu0 %5444
        %5446 = vrot.lane.b32.xlu0 %v5356, 64
        %v5447 = vpop.permute.xlu0 %5446
        %5448 = vrot.lane.b32.xlu0 %v5357, 64
        %v5449 = vpop.permute.xlu0 %5448
        %5450 = vrot.lane.b32.xlu0 %v5358, 64
        %v5451 = vpop.permute.xlu0 %5450
        %5452 = vrot.lane.b32.xlu0 %v5359, 64
        %v5453 = vpop.permute.xlu0 %5452
        %5454 = vrot.lane.b32.xlu0 %v5360, 64
        %v5455 = vpop.permute.xlu0 %5454
        %5456 = vrot.lane.b32.xlu0 %v5361, 64
        %v5457 = vpop.permute.xlu0 %5456
        %5490 = vst.msk [vmem:[#allocation7 + $0x18] sm:$0xff] %vm4720, %v5395
        %5491 = vst.msk [vmem:[#allocation7 + $0x40] sm:$0xff] %vm4720, %v5397
        %5492 = vst.msk [vmem:[#allocation7 + $0x68] sm:$0xff] %vm4720, %v5399
        %5493 = vst.msk [vmem:[#allocation7 + $0x90] sm:$0xff] %vm4720, %v5401
        %5494 = vst.msk [vmem:[#allocation7 + $0xb8] sm:$0xff] %vm4720, %v5403
        %5495 = vst.msk [vmem:[#allocation7 + $0xe0] sm:$0xff] %vm4720, %v5405
        %5496 = vst.msk [vmem:[#allocation7 + $0x108] sm:$0xff] %vm4720, %v5407
        %5497 = vst.msk [vmem:[#allocation7 + $0x130] sm:$0xff] %vm4720, %v5409
        %5498 = vst.msk [vmem:[#allocation7 + $0x158] sm:$0xff] %vm4720, %v5411
        %5499 = vst.msk [vmem:[#allocation7 + $0x180] sm:$0xff] %vm4720, %v5413
        %5500 = vst.msk [vmem:[#allocation7 + $0x1a8] sm:$0xff] %vm4720, %v5415
        %5501 = vst.msk [vmem:[#allocation7 + $0x1d0] sm:$0xff] %vm4720, %v5417
        %5502 = vst.msk [vmem:[#allocation7 + $0x1f8] sm:$0xff] %vm4720, %v5419
        %5503 = vst.msk [vmem:[#allocation7 + $0x220] sm:$0xff] %vm4720, %v5421
        %5504 = vst.msk [vmem:[#allocation7 + $0x248] sm:$0xff] %vm4720, %v5423
        %5505 = vst.msk [vmem:[#allocation7 + $0x270] sm:$0xff] %vm4720, %v5425
        %5506 = vst.msk [vmem:[#allocation7 + $0x298] sm:$0xff] %vm4720, %v5427
        %5507 = vst.msk [vmem:[#allocation7 + $0x2c0] sm:$0xff] %vm4720, %v5429
        %5508 = vst.msk [vmem:[#allocation7 + $0x2e8] sm:$0xff] %vm4720, %v5431
        %5509 = vst.msk [vmem:[#allocation7 + $0x310] sm:$0xff] %vm4720, %v5433
        %5510 = vst.msk [vmem:[#allocation7 + $0x338] sm:$0xff] %vm4720, %v5435
        %5511 = vst.msk [vmem:[#allocation7 + $0x360] sm:$0xff] %vm4720, %v5437
        %5512 = vst.msk [vmem:[#allocation7 + $0x388] sm:$0xff] %vm4720, %v5439
        %5513 = vst.msk [vmem:[#allocation7 + $0x3b0] sm:$0xff] %vm4720, %v5441
        %5514 = vst.msk [vmem:[#allocation7 + $0x3d8] sm:$0xff] %vm4720, %v5443
        %5515 = vst.msk [vmem:[#allocation7 + $0x400] sm:$0xff] %vm4720, %v5445
        %5516 = vst.msk [vmem:[#allocation7 + $0x428] sm:$0xff] %vm4720, %v5447
        %5517 = vst.msk [vmem:[#allocation7 + $0x450] sm:$0xff] %vm4720, %v5449
        %5518 = vst.msk [vmem:[#allocation7 + $0x478] sm:$0xff] %vm4720, %v5451
        %5519 = vst.msk [vmem:[#allocation7 + $0x4a0] sm:$0xff] %vm4720, %v5453
        %5520 = vst.msk [vmem:[#allocation7 + $0x4c8] sm:$0xff] %vm4720, %v5455
        %5521 = vst.msk [vmem:[#allocation7 + $0x4f0] sm:$0xff] %vm4720, %v5457
        %v5522 = vld [vmem:[%s5265 + $0x2] sm:$0xff]
        %v5523 = vld [vmem:[%s5265 + $0xa] sm:$0xff]
        %v5524 = vld [vmem:[%s5265 + $0x1a] sm:$0xff]
        %v5525 = vld [vmem:[%s5265 + $0x22] sm:$0xff]
        %v5526 = vld [vmem:[%s5265 + $0x32] sm:$0xff]
        %v5527 = vld [vmem:[%s5265 + $0x3a] sm:$0xff]
        %v5528 = vld [vmem:[%s5265 + $0x4a] sm:$0xff]
        %v5529 = vld [vmem:[%s5265 + $0x52] sm:$0xff]
        %v5530 = vld [vmem:[%s5265 + $0x62] sm:$0xff]
        %v5531 = vld [vmem:[%s5265 + $0x6a] sm:$0xff]
        %v5532 = vld [vmem:[%s5265 + $0x7a] sm:$0xff]
        %v5533 = vld [vmem:[%s5265 + $0x82] sm:$0xff]
        %v5534 = vld [vmem:[%s5265 + $0x92] sm:$0xff]
        %v5535 = vld [vmem:[%s5265 + $0x9a] sm:$0xff]
        %v5536 = vld [vmem:[%s5265 + $0xaa] sm:$0xff]
        %v5537 = vld [vmem:[%s5265 + $0xb2] sm:$0xff]
        %v5538 = vld [vmem:[%s5265 + $0xc2] sm:$0xff]
        %v5539 = vld [vmem:[%s5265 + $0xca] sm:$0xff]
        %v5540 = vld [vmem:[%s5265 + $0xda] sm:$0xff]
        %v5541 = vld [vmem:[%s5265 + $0xe2] sm:$0xff]
        %v5542 = vld [vmem:[%s5265 + $0xf2] sm:$0xff]
        %v5543 = vld [vmem:[%s5265 + $0xfa] sm:$0xff]
        %v5544 = vld [vmem:[%s5265 + $0x10a] sm:$0xff]
        %v5545 = vld [vmem:[%s5265 + $0x112] sm:$0xff]
        %v5546 = vld [vmem:[%s5265 + $0x122] sm:$0xff]
        %v5547 = vld [vmem:[%s5265 + $0x12a] sm:$0xff]
        %v5548 = vld [vmem:[%s5265 + $0x13a] sm:$0xff]
        %v5549 = vld [vmem:[%s5265 + $0x142] sm:$0xff]
        %v5550 = vld [vmem:[%s5265 + $0x152] sm:$0xff]
        %v5551 = vld [vmem:[%s5265 + $0x15a] sm:$0xff]
        %v5552 = vld [vmem:[%s5265 + $0x16a] sm:$0xff]
        %v5553 = vld [vmem:[%s5265 + $0x172] sm:$0xff]
        %5554 = vst.msk [vmem:[#allocation7 + $0x20] sm:$0xff] %vm462, %v5522
        %5555 = vst.msk [vmem:[#allocation7 + $0x48] sm:$0xff] %vm462, %v5523
        %5556 = vst.msk [vmem:[#allocation7 + $0x70] sm:$0xff] %vm462, %v5524
        %5557 = vst.msk [vmem:[#allocation7 + $0x98] sm:$0xff] %vm462, %v5525
        %5558 = vst.msk [vmem:[#allocation7 + $0xc0] sm:$0xff] %vm462, %v5526
        %5559 = vst.msk [vmem:[#allocation7 + $0xe8] sm:$0xff] %vm462, %v5527
        %5560 = vst.msk [vmem:[#allocation7 + $0x110] sm:$0xff] %vm462, %v5528
        %5561 = vst.msk [vmem:[#allocation7 + $0x138] sm:$0xff] %vm462, %v5529
        %5562 = vst.msk [vmem:[#allocation7 + $0x160] sm:$0xff] %vm462, %v5530
        %5563 = vst.msk [vmem:[#allocation7 + $0x188] sm:$0xff] %vm462, %v5531
        %5564 = vst.msk [vmem:[#allocation7 + $0x1b0] sm:$0xff] %vm462, %v5532
        %5565 = vst.msk [vmem:[#allocation7 + $0x1d8] sm:$0xff] %vm462, %v5533
        %5566 = vst.msk [vmem:[#allocation7 + $0x200] sm:$0xff] %vm462, %v5534
        %5567 = vst.msk [vmem:[#allocation7 + $0x228] sm:$0xff] %vm462, %v5535
        %5568 = vst.msk [vmem:[#allocation7 + $0x250] sm:$0xff] %vm462, %v5536
        %5569 = vst.msk [vmem:[#allocation7 + $0x278] sm:$0xff] %vm462, %v5537
        %5570 = vst.msk [vmem:[#allocation7 + $0x2a0] sm:$0xff] %vm462, %v5538
        %5571 = vst.msk [vmem:[#allocation7 + $0x2c8] sm:$0xff] %vm462, %v5539
        %5572 = vst.msk [vmem:[#allocation7 + $0x2f0] sm:$0xff] %vm462, %v5540
        %5573 = vst.msk [vmem:[#allocation7 + $0x318] sm:$0xff] %vm462, %v5541
        %5574 = vst.msk [vmem:[#allocation7 + $0x340] sm:$0xff] %vm462, %v5542
        %5575 = vst.msk [vmem:[#allocation7 + $0x368] sm:$0xff] %vm462, %v5543
        %5576 = vst.msk [vmem:[#allocation7 + $0x390] sm:$0xff] %vm462, %v5544
        %5577 = vst.msk [vmem:[#allocation7 + $0x3b8] sm:$0xff] %vm462, %v5545
        %5578 = vst.msk [vmem:[#allocation7 + $0x3e0] sm:$0xff] %vm462, %v5546
        %5579 = vst.msk [vmem:[#allocation7 + $0x408] sm:$0xff] %vm462, %v5547
        %5580 = vst.msk [vmem:[#allocation7 + $0x430] sm:$0xff] %vm462, %v5548
        %5581 = vst.msk [vmem:[#allocation7 + $0x458] sm:$0xff] %vm462, %v5549
        %5582 = vst.msk [vmem:[#allocation7 + $0x480] sm:$0xff] %vm462, %v5550
        %5583 = vst.msk [vmem:[#allocation7 + $0x4a8] sm:$0xff] %vm462, %v5551
        %5584 = vst.msk [vmem:[#allocation7 + $0x4d0] sm:$0xff] %vm462, %v5552
        %5585 = vst.msk [vmem:[#allocation7 + $0x4f8] sm:$0xff] %vm462, %v5553
        %v5586 = vld [vmem:[#allocation7] sm:$0xff]
        %v5587 = vld [vmem:[#allocation7 + $0x8] sm:$0xff]
        %v5588 = vld [vmem:[#allocation7 + $0x10] sm:$0xff]
        %v5589 = vld [vmem:[#allocation7 + $0x18] sm:$0xff]
        %v5590 = vld [vmem:[#allocation7 + $0x20] sm:$0xff]
        %v5591 = vld [vmem:[#allocation7 + $0x28] sm:$0xff]
        %v5592 = vld [vmem:[#allocation7 + $0x30] sm:$0xff]
        %v5593 = vld [vmem:[#allocation7 + $0x38] sm:$0xff]
        %v5594 = vld [vmem:[#allocation7 + $0x40] sm:$0xff]
        %v5595 = vld [vmem:[#allocation7 + $0x48] sm:$0xff]
        %v5596 = vld [vmem:[#allocation7 + $0x50] sm:$0xff]
        %v5597 = vld [vmem:[#allocation7 + $0x58] sm:$0xff]
        %v5598 = vld [vmem:[#allocation7 + $0x60] sm:$0xff]
        %v5599 = vld [vmem:[#allocation7 + $0x68] sm:$0xff]
        %v5600 = vld [vmem:[#allocation7 + $0x70] sm:$0xff]
        %v5601 = vld [vmem:[#allocation7 + $0x78] sm:$0xff]
        %v5602 = vld [vmem:[#allocation7 + $0x80] sm:$0xff]
        %v5603 = vld [vmem:[#allocation7 + $0x88] sm:$0xff]
        %v5604 = vld [vmem:[#allocation7 + $0x90] sm:$0xff]
        %v5605 = vld [vmem:[#allocation7 + $0x98] sm:$0xff]
        %v5606 = vld [vmem:[#allocation7 + $0xa0] sm:$0xff]
        %v5607 = vld [vmem:[#allocation7 + $0xa8] sm:$0xff]
        %v5608 = vld [vmem:[#allocation7 + $0xb0] sm:$0xff]
        %v5609 = vld [vmem:[#allocation7 + $0xb8] sm:$0xff]
        %v5610 = vld [vmem:[#allocation7 + $0xc0] sm:$0xff]
        %v5611 = vld [vmem:[#allocation7 + $0xc8] sm:$0xff]
        %v5612 = vld [vmem:[#allocation7 + $0xd0] sm:$0xff]
        %v5613 = vld [vmem:[#allocation7 + $0xd8] sm:$0xff]
        %v5614 = vld [vmem:[#allocation7 + $0xe0] sm:$0xff]
        %v5615 = vld [vmem:[#allocation7 + $0xe8] sm:$0xff]
        %v5616 = vld [vmem:[#allocation7 + $0xf0] sm:$0xff]
        %v5617 = vld [vmem:[#allocation7 + $0xf8] sm:$0xff]
        %v5618 = vld [vmem:[#allocation7 + $0x100] sm:$0xff]
        %v5619 = vld [vmem:[#allocation7 + $0x108] sm:$0xff]
        %v5620 = vld [vmem:[#allocation7 + $0x110] sm:$0xff]
        %v5621 = vld [vmem:[#allocation7 + $0x118] sm:$0xff]
        %v5622 = vld [vmem:[#allocation7 + $0x120] sm:$0xff]
        %v5623 = vld [vmem:[#allocation7 + $0x128] sm:$0xff]
        %v5624 = vld [vmem:[#allocation7 + $0x130] sm:$0xff]
        %v5625 = vld [vmem:[#allocation7 + $0x138] sm:$0xff]
        %v5626 = vld [vmem:[#allocation7 + $0x140] sm:$0xff]
        %v5627 = vld [vmem:[#allocation7 + $0x148] sm:$0xff]
        %v5628 = vld [vmem:[#allocation7 + $0x150] sm:$0xff]
        %v5629 = vld [vmem:[#allocation7 + $0x158] sm:$0xff]
        %v5630 = vld [vmem:[#allocation7 + $0x160] sm:$0xff]
        %v5631 = vld [vmem:[#allocation7 + $0x168] sm:$0xff]
        %v5632 = vld [vmem:[#allocation7 + $0x170] sm:$0xff]
        %v5633 = vld [vmem:[#allocation7 + $0x178] sm:$0xff]
        %v5634 = vld [vmem:[#allocation7 + $0x180] sm:$0xff]
        %v5635 = vld [vmem:[#allocation7 + $0x188] sm:$0xff]
        %v5636 = vld [vmem:[#allocation7 + $0x190] sm:$0xff]
        %v5637 = vld [vmem:[#allocation7 + $0x198] sm:$0xff]
        %v5638 = vld [vmem:[#allocation7 + $0x1a0] sm:$0xff]
        %v5639 = vld [vmem:[#allocation7 + $0x1a8] sm:$0xff]
        %v5640 = vld [vmem:[#allocation7 + $0x1b0] sm:$0xff]
        %v5641 = vld [vmem:[#allocation7 + $0x1b8] sm:$0xff]
        %v5642 = vld [vmem:[#allocation7 + $0x1c0] sm:$0xff]
        %v5643 = vld [vmem:[#allocation7 + $0x1c8] sm:$0xff]
        %v5644 = vld [vmem:[#allocation7 + $0x1d0] sm:$0xff]
        %v5645 = vld [vmem:[#allocation7 + $0x1d8] sm:$0xff]
        %v5646 = vld [vmem:[#allocation7 + $0x1e0] sm:$0xff]
        %v5647 = vld [vmem:[#allocation7 + $0x1e8] sm:$0xff]
        %v5648 = vld [vmem:[#allocation7 + $0x1f0] sm:$0xff]
        %v5649 = vld [vmem:[#allocation7 + $0x1f8] sm:$0xff]
        %v5650 = vld [vmem:[#allocation7 + $0x200] sm:$0xff]
        %v5651 = vld [vmem:[#allocation7 + $0x208] sm:$0xff]
        %v5652 = vld [vmem:[#allocation7 + $0x210] sm:$0xff]
        %v5653 = vld [vmem:[#allocation7 + $0x218] sm:$0xff]
        %v5654 = vld [vmem:[#allocation7 + $0x220] sm:$0xff]
        %v5655 = vld [vmem:[#allocation7 + $0x228] sm:$0xff]
        %v5656 = vld [vmem:[#allocation7 + $0x230] sm:$0xff]
        %v5657 = vld [vmem:[#allocation7 + $0x238] sm:$0xff]
        %v5658 = vld [vmem:[#allocation7 + $0x240] sm:$0xff]
        %v5659 = vld [vmem:[#allocation7 + $0x248] sm:$0xff]
        %v5660 = vld [vmem:[#allocation7 + $0x250] sm:$0xff]
        %v5661 = vld [vmem:[#allocation7 + $0x258] sm:$0xff]
        %v5662 = vld [vmem:[#allocation7 + $0x260] sm:$0xff]
        %v5663 = vld [vmem:[#allocation7 + $0x268] sm:$0xff]
        %v5664 = vld [vmem:[#allocation7 + $0x270] sm:$0xff]
        %v5665 = vld [vmem:[#allocation7 + $0x278] sm:$0xff]
        %v5666 = vld [vmem:[#allocation7 + $0x280] sm:$0xff]
        %v5667 = vld [vmem:[#allocation7 + $0x288] sm:$0xff]
        %v5668 = vld [vmem:[#allocation7 + $0x290] sm:$0xff]
        %v5669 = vld [vmem:[#allocation7 + $0x298] sm:$0xff]
        %v5670 = vld [vmem:[#allocation7 + $0x2a0] sm:$0xff]
        %v5671 = vld [vmem:[#allocation7 + $0x2a8] sm:$0xff]
        %v5672 = vld [vmem:[#allocation7 + $0x2b0] sm:$0xff]
        %v5673 = vld [vmem:[#allocation7 + $0x2b8] sm:$0xff]
        %v5674 = vld [vmem:[#allocation7 + $0x2c0] sm:$0xff]
        %v5675 = vld [vmem:[#allocation7 + $0x2c8] sm:$0xff]
        %v5676 = vld [vmem:[#allocation7 + $0x2d0] sm:$0xff]
        %v5677 = vld [vmem:[#allocation7 + $0x2d8] sm:$0xff]
        %v5678 = vld [vmem:[#allocation7 + $0x2e0] sm:$0xff]
        %v5679 = vld [vmem:[#allocation7 + $0x2e8] sm:$0xff]
        %v5680 = vld [vmem:[#allocation7 + $0x2f0] sm:$0xff]
        %v5681 = vld [vmem:[#allocation7 + $0x2f8] sm:$0xff]
        %v5682 = vld [vmem:[#allocation7 + $0x300] sm:$0xff]
        %v5683 = vld [vmem:[#allocation7 + $0x308] sm:$0xff]
        %v5684 = vld [vmem:[#allocation7 + $0x310] sm:$0xff]
        %v5685 = vld [vmem:[#allocation7 + $0x318] sm:$0xff]
        %v5686 = vld [vmem:[#allocation7 + $0x320] sm:$0xff]
        %v5687 = vld [vmem:[#allocation7 + $0x328] sm:$0xff]
        %v5688 = vld [vmem:[#allocation7 + $0x330] sm:$0xff]
        %v5689 = vld [vmem:[#allocation7 + $0x338] sm:$0xff]
        %v5690 = vld [vmem:[#allocation7 + $0x340] sm:$0xff]
        %v5691 = vld [vmem:[#allocation7 + $0x348] sm:$0xff]
        %v5692 = vld [vmem:[#allocation7 + $0x350] sm:$0xff]
        %v5693 = vld [vmem:[#allocation7 + $0x358] sm:$0xff]
        %v5694 = vld [vmem:[#allocation7 + $0x360] sm:$0xff]
        %v5695 = vld [vmem:[#allocation7 + $0x368] sm:$0xff]
        %v5696 = vld [vmem:[#allocation7 + $0x370] sm:$0xff]
        %v5697 = vld [vmem:[#allocation7 + $0x378] sm:$0xff]
        %v5698 = vld [vmem:[#allocation7 + $0x380] sm:$0xff]
        %v5699 = vld [vmem:[#allocation7 + $0x388] sm:$0xff]
        %v5700 = vld [vmem:[#allocation7 + $0x390] sm:$0xff]
        %v5701 = vld [vmem:[#allocation7 + $0x398] sm:$0xff]
        %v5702 = vld [vmem:[#allocation7 + $0x3a0] sm:$0xff]
        %v5703 = vld [vmem:[#allocation7 + $0x3a8] sm:$0xff]
        %v5704 = vld [vmem:[#allocation7 + $0x3b0] sm:$0xff]
        %v5705 = vld [vmem:[#allocation7 + $0x3b8] sm:$0xff]
        %v5706 = vld [vmem:[#allocation7 + $0x3c0] sm:$0xff]
        %v5707 = vld [vmem:[#allocation7 + $0x3c8] sm:$0xff]
        %v5708 = vld [vmem:[#allocation7 + $0x3d0] sm:$0xff]
        %v5709 = vld [vmem:[#allocation7 + $0x3d8] sm:$0xff]
        %v5710 = vld [vmem:[#allocation7 + $0x3e0] sm:$0xff]
        %v5711 = vld [vmem:[#allocation7 + $0x3e8] sm:$0xff]
        %v5712 = vld [vmem:[#allocation7 + $0x3f0] sm:$0xff]
        %v5713 = vld [vmem:[#allocation7 + $0x3f8] sm:$0xff]
        %v5714 = vld [vmem:[#allocation7 + $0x400] sm:$0xff]
        %v5715 = vld [vmem:[#allocation7 + $0x408] sm:$0xff]
        %v5716 = vld [vmem:[#allocation7 + $0x410] sm:$0xff]
        %v5717 = vld [vmem:[#allocation7 + $0x418] sm:$0xff]
        %v5718 = vld [vmem:[#allocation7 + $0x420] sm:$0xff]
        %v5719 = vld [vmem:[#allocation7 + $0x428] sm:$0xff]
        %v5720 = vld [vmem:[#allocation7 + $0x430] sm:$0xff]
        %v5721 = vld [vmem:[#allocation7 + $0x438] sm:$0xff]
        %v5722 = vld [vmem:[#allocation7 + $0x440] sm:$0xff]
        %v5723 = vld [vmem:[#allocation7 + $0x448] sm:$0xff]
        %v5724 = vld [vmem:[#allocation7 + $0x450] sm:$0xff]
        %v5725 = vld [vmem:[#allocation7 + $0x458] sm:$0xff]
        %v5726 = vld [vmem:[#allocation7 + $0x460] sm:$0xff]
        %v5727 = vld [vmem:[#allocation7 + $0x468] sm:$0xff]
        %v5728 = vld [vmem:[#allocation7 + $0x470] sm:$0xff]
        %v5729 = vld [vmem:[#allocation7 + $0x478] sm:$0xff]
        %v5730 = vld [vmem:[#allocation7 + $0x480] sm:$0xff]
        %v5731 = vld [vmem:[#allocation7 + $0x488] sm:$0xff]
        %v5732 = vld [vmem:[#allocation7 + $0x490] sm:$0xff]
        %v5733 = vld [vmem:[#allocation7 + $0x498] sm:$0xff]
        %v5734 = vld [vmem:[#allocation7 + $0x4a0] sm:$0xff]
        %v5735 = vld [vmem:[#allocation7 + $0x4a8] sm:$0xff]
        %v5736 = vld [vmem:[#allocation7 + $0x4b0] sm:$0xff]
        %v5737 = vld [vmem:[#allocation7 + $0x4b8] sm:$0xff]
        %v5738 = vld [vmem:[#allocation7 + $0x4c0] sm:$0xff]
        %v5739 = vld [vmem:[#allocation7 + $0x4c8] sm:$0xff]
        %v5740 = vld [vmem:[#allocation7 + $0x4d0] sm:$0xff]
        %v5741 = vld [vmem:[#allocation7 + $0x4d8] sm:$0xff]
        %v5742 = vld [vmem:[#allocation7 + $0x4e0] sm:$0xff]
        %v5743 = vld [vmem:[#allocation7 + $0x4e8] sm:$0xff]
        %v5744 = vld [vmem:[#allocation7 + $0x4f0] sm:$0xff]
        %v5745 = vld [vmem:[#allocation7 + $0x4f8] sm:$0xff]
        %v5746 = vld [vmem:[%s5] sm:$0xff]
        %v5747 = vld [vmem:[%s5 + $0x8] sm:$0xff]
        %v5748 = vld [vmem:[%s5 + $0x10] sm:$0xff]
        %v5749 = vld [vmem:[%s5 + $0x18] sm:$0xff]
        %v5750 = vld [vmem:[%s5 + $0x20] sm:$0xff]
        %v5751 = vld [vmem:[%s5 + $0x28] sm:$0xff]
        %v5752 = vld [vmem:[%s5 + $0x30] sm:$0xff]
        %v5753 = vld [vmem:[%s5 + $0x38] sm:$0xff]
        %v5754 = vld [vmem:[%s5 + $0x40] sm:$0xff]
        %v5755 = vld [vmem:[%s5 + $0x48] sm:$0xff]
        %v5756 = vld [vmem:[%s5 + $0x50] sm:$0xff]
        %v5757 = vld [vmem:[%s5 + $0x58] sm:$0xff]
        %v5758 = vld [vmem:[%s5 + $0x60] sm:$0xff]
        %v5759 = vld [vmem:[%s5 + $0x68] sm:$0xff]
        %v5760 = vld [vmem:[%s5 + $0x70] sm:$0xff]
        %v5761 = vld [vmem:[%s5 + $0x78] sm:$0xff]
        %v5762 = vld [vmem:[%s5 + $0x80] sm:$0xff]
        %v5763 = vld [vmem:[%s5 + $0x88] sm:$0xff]
        %v5764 = vld [vmem:[%s5 + $0x90] sm:$0xff]
        %v5765 = vld [vmem:[%s5 + $0x98] sm:$0xff]
        %v5766 = vld [vmem:[%s5 + $0xa0] sm:$0xff]
        %v5767 = vld [vmem:[%s5 + $0xa8] sm:$0xff]
        %v5768 = vld [vmem:[%s5 + $0xb0] sm:$0xff]
        %v5769 = vld [vmem:[%s5 + $0xb8] sm:$0xff]
        %v5770 = vld [vmem:[%s5 + $0xc0] sm:$0xff]
        %v5771 = vld [vmem:[%s5 + $0xc8] sm:$0xff]
        %v5772 = vld [vmem:[%s5 + $0xd0] sm:$0xff]
        %v5773 = vld [vmem:[%s5 + $0xd8] sm:$0xff]
        %v5774 = vld [vmem:[%s5 + $0xe0] sm:$0xff]
        %v5775 = vld [vmem:[%s5 + $0xe8] sm:$0xff]
        %v5776 = vld [vmem:[%s5 + $0xf0] sm:$0xff]
        %v5777 = vld [vmem:[%s5 + $0xf8] sm:$0xff]
        %v5778 = vld [vmem:[%s5 + $0x100] sm:$0xff]
        %v5779 = vld [vmem:[%s5 + $0x108] sm:$0xff]
        %v5780 = vld [vmem:[%s5 + $0x110] sm:$0xff]
        %v5781 = vld [vmem:[%s5 + $0x118] sm:$0xff]
        %v5782 = vld [vmem:[%s5 + $0x120] sm:$0xff]
        %v5783 = vld [vmem:[%s5 + $0x128] sm:$0xff]
        %v5784 = vld [vmem:[%s5 + $0x130] sm:$0xff]
        %v5785 = vld [vmem:[%s5 + $0x138] sm:$0xff]
        %v5786 = vld [vmem:[%s5 + $0x140] sm:$0xff]
        %v5787 = vld [vmem:[%s5 + $0x148] sm:$0xff]
        %v5788 = vld [vmem:[%s5 + $0x150] sm:$0xff]
        %v5789 = vld [vmem:[%s5 + $0x158] sm:$0xff]
        %v5790 = vld [vmem:[%s5 + $0x160] sm:$0xff]
        %v5791 = vld [vmem:[%s5 + $0x168] sm:$0xff]
        %v5792 = vld [vmem:[%s5 + $0x170] sm:$0xff]
        %v5793 = vld [vmem:[%s5 + $0x178] sm:$0xff]
        %v5794 = vld [vmem:[%s5 + $0x180] sm:$0xff]
        %v5795 = vld [vmem:[%s5 + $0x188] sm:$0xff]
        %v5796 = vld [vmem:[%s5 + $0x190] sm:$0xff]
        %v5797 = vld [vmem:[%s5 + $0x198] sm:$0xff]
        %v5798 = vld [vmem:[%s5 + $0x1a0] sm:$0xff]
        %v5799 = vld [vmem:[%s5 + $0x1a8] sm:$0xff]
        %v5800 = vld [vmem:[%s5 + $0x1b0] sm:$0xff]
        %v5801 = vld [vmem:[%s5 + $0x1b8] sm:$0xff]
        %v5802 = vld [vmem:[%s5 + $0x1c0] sm:$0xff]
        %v5803 = vld [vmem:[%s5 + $0x1c8] sm:$0xff]
        %v5804 = vld [vmem:[%s5 + $0x1d0] sm:$0xff]
        %v5805 = vld [vmem:[%s5 + $0x1d8] sm:$0xff]
        %v5806 = vld [vmem:[%s5 + $0x1e0] sm:$0xff]
        %v5807 = vld [vmem:[%s5 + $0x1e8] sm:$0xff]
        %v5808 = vld [vmem:[%s5 + $0x1f0] sm:$0xff]
        %v5809 = vld [vmem:[%s5 + $0x1f8] sm:$0xff]
        %v5810 = vld [vmem:[%s5 + $0x200] sm:$0xff]
        %v5811 = vld [vmem:[%s5 + $0x208] sm:$0xff]
        %v5812 = vld [vmem:[%s5 + $0x210] sm:$0xff]
        %v5813 = vld [vmem:[%s5 + $0x218] sm:$0xff]
        %v5814 = vld [vmem:[%s5 + $0x220] sm:$0xff]
        %v5815 = vld [vmem:[%s5 + $0x228] sm:$0xff]
        %v5816 = vld [vmem:[%s5 + $0x230] sm:$0xff]
        %v5817 = vld [vmem:[%s5 + $0x238] sm:$0xff]
        %v5818 = vld [vmem:[%s6] sm:$0x1]
        %v5820 = vperm.slane %v5818, 0
        %v5823 = vsel %vm462, %v5590, 0
        %v5826 = vsel %vm462, %v5595, 0
        %v5829 = vsel %vm462, %v5600, 0
        %v5832 = vsel %vm462, %v5605, 0
        %v5835 = vsel %vm462, %v5610, 0
        %v5838 = vsel %vm462, %v5615, 0
        %v5841 = vsel %vm462, %v5620, 0
        %v5844 = vsel %vm462, %v5625, 0
        %v5847 = vsel %vm462, %v5630, 0
        %v5850 = vsel %vm462, %v5635, 0
        %v5853 = vsel %vm462, %v5640, 0
        %v5856 = vsel %vm462, %v5645, 0
        %v5859 = vsel %vm462, %v5650, 0
        %v5862 = vsel %vm462, %v5655, 0
        %v5865 = vsel %vm462, %v5660, 0
        %v5868 = vsel %vm462, %v5665, 0
        %v5871 = vsel %vm462, %v5670, 0
        %v5874 = vsel %vm462, %v5675, 0
        %v5877 = vsel %vm462, %v5680, 0
        %v5880 = vsel %vm462, %v5685, 0
        %v5883 = vsel %vm462, %v5690, 0
        %v5886 = vsel %vm462, %v5695, 0
        %v5889 = vsel %vm462, %v5700, 0
        %v5892 = vsel %vm462, %v5705, 0
        %v5895 = vsel %vm462, %v5710, 0
        %v5898 = vsel %vm462, %v5715, 0
        %v5901 = vsel %vm462, %v5720, 0
        %v5904 = vsel %vm462, %v5725, 0
        %v5907 = vsel %vm462, %v5730, 0
        %v5910 = vsel %vm462, %v5735, 0
        %v5913 = vsel %vm462, %v5740, 0
        %v5916 = vsel %vm462, %v5745, 0
        %5918 = vmatpush.msra.mxu0 %v5761
        %5919 = vmatpush.msra.mxu0 %v5760
        %5920 = vmatpush.msra.mxu0 %v5759
        %5921 = vmatpush.msra.mxu0 %v5758
        %5922 = vmatpush.msra.mxu0 %v5757
        %5923 = vmatpush.msra.mxu0 %v5756
        %5924 = vmatpush.msra.mxu0 %v5755
        %5925 = vmatpush.msra.mxu0 %v5754
        %5926 = vmatpush.msra.mxu0 %v5753
        %5927 = vmatpush.msra.mxu0 %v5752
        %5928 = vmatpush.msra.mxu0 %v5751
        %5929 = vmatpush.msra.mxu0 %v5750
        %5930 = vmatpush.msra.mxu0 %v5749
        %5931 = vmatpush.msra.mxu0 %v5748
        %5932 = vmatpush.msra.mxu0 %v5747
        %5933 = vmatpush.msra.mxu0 %v5746
        %5934 = vmatmul.f32.gmra.mxu0 %v5586
        %v5935 = vpop.f32.mrf.mxu0
        %v5936 = vadd.f32 %v5820, %v5935
        %5937 = vmatmul.f32.gmra.mxu0 %v5591
        %v5938 = vpop.f32.mrf.mxu0
        %v5939 = vadd.f32 %v5820, %v5938
        %5940 = vmatmul.f32.gmra.mxu0 %v5596
        %v5941 = vpop.f32.mrf.mxu0
        %v5942 = vadd.f32 %v5820, %v5941
        %5943 = vmatmul.f32.gmra.mxu0 %v5601
        %v5944 = vpop.f32.mrf.mxu0
        %v5945 = vadd.f32 %v5820, %v5944
        %5946 = vmatmul.f32.gmra.mxu0 %v5606
        %v5947 = vpop.f32.mrf.mxu0
        %v5948 = vadd.f32 %v5820, %v5947
        %5949 = vmatmul.f32.gmra.mxu0 %v5611
        %v5950 = vpop.f32.mrf.mxu0
        %v5951 = vadd.f32 %v5820, %v5950
        %5952 = vmatmul.f32.gmra.mxu0 %v5616
        %v5953 = vpop.f32.mrf.mxu0
        %v5954 = vadd.f32 %v5820, %v5953
        %5955 = vmatmul.f32.gmra.mxu0 %v5621
        %v5956 = vpop.f32.mrf.mxu0
        %v5957 = vadd.f32 %v5820, %v5956
        %5958 = vmatmul.f32.gmra.mxu0 %v5626
        %v5959 = vpop.f32.mrf.mxu0
        %v5960 = vadd.f32 %v5820, %v5959
        %5961 = vmatmul.f32.gmra.mxu0 %v5631
        %v5962 = vpop.f32.mrf.mxu0
        %v5963 = vadd.f32 %v5820, %v5962
        %5964 = vmatmul.f32.gmra.mxu0 %v5636
        %v5965 = vpop.f32.mrf.mxu0
        %v5966 = vadd.f32 %v5820, %v5965
        %5967 = vmatmul.f32.gmra.mxu0 %v5641
        %v5968 = vpop.f32.mrf.mxu0
        %v5969 = vadd.f32 %v5820, %v5968
        %5970 = vmatmul.f32.gmra.mxu0 %v5646
        %v5971 = vpop.f32.mrf.mxu0
        %v5972 = vadd.f32 %v5820, %v5971
        %5973 = vmatmul.f32.gmra.mxu0 %v5651
        %v5974 = vpop.f32.mrf.mxu0
        %v5975 = vadd.f32 %v5820, %v5974
        %5976 = vmatmul.f32.gmra.mxu0 %v5656
        %v5977 = vpop.f32.mrf.mxu0
        %v5978 = vadd.f32 %v5820, %v5977
        %5979 = vmatmul.f32.gmra.mxu0 %v5661
        %v5980 = vpop.f32.mrf.mxu0
        %v5981 = vadd.f32 %v5820, %v5980
        %5982 = vmatmul.f32.gmra.mxu0 %v5666
        %v5983 = vpop.f32.mrf.mxu0
        %v5984 = vadd.f32 %v5820, %v5983
        %5985 = vmatmul.f32.gmra.mxu0 %v5671
        %v5986 = vpop.f32.mrf.mxu0
        %v5987 = vadd.f32 %v5820, %v5986
        %5988 = vmatmul.f32.gmra.mxu0 %v5676
        %v5989 = vpop.f32.mrf.mxu0
        %v5990 = vadd.f32 %v5820, %v5989
        %5991 = vmatmul.f32.gmra.mxu0 %v5681
        %v5992 = vpop.f32.mrf.mxu0
        %v5993 = vadd.f32 %v5820, %v5992
        %5994 = vmatmul.f32.gmra.mxu0 %v5686
        %v5995 = vpop.f32.mrf.mxu0
        %v5996 = vadd.f32 %v5820, %v5995
        %5997 = vmatmul.f32.gmra.mxu0 %v5691
        %v5998 = vpop.f32.mrf.mxu0
        %v5999 = vadd.f32 %v5820, %v5998
        %6000 = vmatmul.f32.gmra.mxu0 %v5696
        %v6001 = vpop.f32.mrf.mxu0
        %v6002 = vadd.f32 %v5820, %v6001
        %6003 = vmatmul.f32.gmra.mxu0 %v5701
        %v6004 = vpop.f32.mrf.mxu0
        %v6005 = vadd.f32 %v5820, %v6004
        %6006 = vmatmul.f32.gmra.mxu0 %v5706
        %v6007 = vpop.f32.mrf.mxu0
        %v6008 = vadd.f32 %v5820, %v6007
        %6009 = vmatmul.f32.gmra.mxu0 %v5711
        %v6010 = vpop.f32.mrf.mxu0
        %v6011 = vadd.f32 %v5820, %v6010
        %6012 = vmatmul.f32.gmra.mxu0 %v5716
        %v6013 = vpop.f32.mrf.mxu0
        %v6014 = vadd.f32 %v5820, %v6013
        %6015 = vmatmul.f32.gmra.mxu0 %v5721
        %v6016 = vpop.f32.mrf.mxu0
        %v6017 = vadd.f32 %v5820, %v6016
        %6018 = vmatmul.f32.gmra.mxu0 %v5726
        %v6019 = vpop.f32.mrf.mxu0
        %v6020 = vadd.f32 %v5820, %v6019
        %6021 = vmatmul.f32.gmra.mxu0 %v5731
        %v6022 = vpop.f32.mrf.mxu0
        %v6023 = vadd.f32 %v5820, %v6022
        %6024 = vmatmul.f32.gmra.mxu0 %v5736
        %v6025 = vpop.f32.mrf.mxu0
        %v6026 = vadd.f32 %v5820, %v6025
        %6027 = vmatmul.f32.gmra.mxu0 %v5741
        %v6028 = vpop.f32.mrf.mxu0
        %v6029 = vadd.f32 %v5820, %v6028
        %6030 = vdwg.mxu0
        %6031 = vmatpush.msra.mxu0 %v5777
        %6032 = vmatpush.msra.mxu0 %v5776
        %6033 = vmatpush.msra.mxu0 %v5775
        %6034 = vmatpush.msra.mxu0 %v5774
        %6035 = vmatpush.msra.mxu0 %v5773
        %6036 = vmatpush.msra.mxu0 %v5772
        %6037 = vmatpush.msra.mxu0 %v5771
        %6038 = vmatpush.msra.mxu0 %v5770
        %6039 = vmatpush.msra.mxu0 %v5769
        %6040 = vmatpush.msra.mxu0 %v5768
        %6041 = vmatpush.msra.mxu0 %v5767
        %6042 = vmatpush.msra.mxu0 %v5766
        %6043 = vmatpush.msra.mxu0 %v5765
        %6044 = vmatpush.msra.mxu0 %v5764
        %6045 = vmatpush.msra.mxu0 %v5763
        %6046 = vmatpush.msra.mxu0 %v5762
        %6047 = vmatmul.f32.gmra.mxu0 %v5587
        %v6048 = vpop.f32.mrf.mxu0
        %v6049 = vadd.f32 %v5936, %v6048
        %6050 = vmatmul.f32.gmra.mxu0 %v5592
        %v6051 = vpop.f32.mrf.mxu0
        %v6052 = vadd.f32 %v5939, %v6051
        %6053 = vmatmul.f32.gmra.mxu0 %v5597
        %v6054 = vpop.f32.mrf.mxu0
        %v6055 = vadd.f32 %v5942, %v6054
        %6056 = vmatmul.f32.gmra.mxu0 %v5602
        %v6057 = vpop.f32.mrf.mxu0
        %v6058 = vadd.f32 %v5945, %v6057
        %6059 = vmatmul.f32.gmra.mxu0 %v5607
        %v6060 = vpop.f32.mrf.mxu0
        %v6061 = vadd.f32 %v5948, %v6060
        %6062 = vmatmul.f32.gmra.mxu0 %v5612
        %v6063 = vpop.f32.mrf.mxu0
        %v6064 = vadd.f32 %v5951, %v6063
        %6065 = vmatmul.f32.gmra.mxu0 %v5617
        %v6066 = vpop.f32.mrf.mxu0
        %v6067 = vadd.f32 %v5954, %v6066
        %6068 = vmatmul.f32.gmra.mxu0 %v5622
        %v6069 = vpop.f32.mrf.mxu0
        %v6070 = vadd.f32 %v5957, %v6069
        %6071 = vmatmul.f32.gmra.mxu0 %v5627
        %v6072 = vpop.f32.mrf.mxu0
        %v6073 = vadd.f32 %v5960, %v6072
        %6074 = vmatmul.f32.gmra.mxu0 %v5632
        %v6075 = vpop.f32.mrf.mxu0
        %v6076 = vadd.f32 %v5963, %v6075
        %6077 = vmatmul.f32.gmra.mxu0 %v5637
        %v6078 = vpop.f32.mrf.mxu0
        %v6079 = vadd.f32 %v5966, %v6078
        %6080 = vmatmul.f32.gmra.mxu0 %v5642
        %v6081 = vpop.f32.mrf.mxu0
        %v6082 = vadd.f32 %v5969, %v6081
        %6083 = vmatmul.f32.gmra.mxu0 %v5647
        %v6084 = vpop.f32.mrf.mxu0
        %v6085 = vadd.f32 %v5972, %v6084
        %6086 = vmatmul.f32.gmra.mxu0 %v5652
        %v6087 = vpop.f32.mrf.mxu0
        %v6088 = vadd.f32 %v5975, %v6087
        %6089 = vmatmul.f32.gmra.mxu0 %v5657
        %v6090 = vpop.f32.mrf.mxu0
        %v6091 = vadd.f32 %v5978, %v6090
        %6092 = vmatmul.f32.gmra.mxu0 %v5662
        %v6093 = vpop.f32.mrf.mxu0
        %v6094 = vadd.f32 %v5981, %v6093
        %6095 = vmatmul.f32.gmra.mxu0 %v5667
        %v6096 = vpop.f32.mrf.mxu0
        %v6097 = vadd.f32 %v5984, %v6096
        %6098 = vmatmul.f32.gmra.mxu0 %v5672
        %v6099 = vpop.f32.mrf.mxu0
        %v6100 = vadd.f32 %v5987, %v6099
        %6101 = vmatmul.f32.gmra.mxu0 %v5677
        %v6102 = vpop.f32.mrf.mxu0
        %v6103 = vadd.f32 %v5990, %v6102
        %6104 = vmatmul.f32.gmra.mxu0 %v5682
        %v6105 = vpop.f32.mrf.mxu0
        %v6106 = vadd.f32 %v5993, %v6105
        %6107 = vmatmul.f32.gmra.mxu0 %v5687
        %v6108 = vpop.f32.mrf.mxu0
        %v6109 = vadd.f32 %v5996, %v6108
        %6110 = vmatmul.f32.gmra.mxu0 %v5692
        %v6111 = vpop.f32.mrf.mxu0
        %v6112 = vadd.f32 %v5999, %v6111
        %6113 = vmatmul.f32.gmra.mxu0 %v5697
        %v6114 = vpop.f32.mrf.mxu0
        %v6115 = vadd.f32 %v6002, %v6114
        %6116 = vmatmul.f32.gmra.mxu0 %v5702
        %v6117 = vpop.f32.mrf.mxu0
        %v6118 = vadd.f32 %v6005, %v6117
        %6119 = vmatmul.f32.gmra.mxu0 %v5707
        %v6120 = vpop.f32.mrf.mxu0
        %v6121 = vadd.f32 %v6008, %v6120
        %6122 = vmatmul.f32.gmra.mxu0 %v5712
        %v6123 = vpop.f32.mrf.mxu0
        %v6124 = vadd.f32 %v6011, %v6123
        %6125 = vmatmul.f32.gmra.mxu0 %v5717
        %v6126 = vpop.f32.mrf.mxu0
        %v6127 = vadd.f32 %v6014, %v6126
        %6128 = vmatmul.f32.gmra.mxu0 %v5722
        %v6129 = vpop.f32.mrf.mxu0
        %v6130 = vadd.f32 %v6017, %v6129
        %6131 = vmatmul.f32.gmra.mxu0 %v5727
        %v6132 = vpop.f32.mrf.mxu0
        %v6133 = vadd.f32 %v6020, %v6132
        %6134 = vmatmul.f32.gmra.mxu0 %v5732
        %v6135 = vpop.f32.mrf.mxu0
        %v6136 = vadd.f32 %v6023, %v6135
        %6137 = vmatmul.f32.gmra.mxu0 %v5737
        %v6138 = vpop.f32.mrf.mxu0
        %v6139 = vadd.f32 %v6026, %v6138
        %6140 = vmatmul.f32.gmra.mxu0 %v5742
        %v6141 = vpop.f32.mrf.mxu0
        %v6142 = vadd.f32 %v6029, %v6141
        %6143 = vdwg.mxu0
        %6144 = vmatpush.msra.mxu0 %v5793
        %6145 = vmatpush.msra.mxu0 %v5792
        %6146 = vmatpush.msra.mxu0 %v5791
        %6147 = vmatpush.msra.mxu0 %v5790
        %6148 = vmatpush.msra.mxu0 %v5789
        %6149 = vmatpush.msra.mxu0 %v5788
        %6150 = vmatpush.msra.mxu0 %v5787
        %6151 = vmatpush.msra.mxu0 %v5786
        %6152 = vmatpush.msra.mxu0 %v5785
        %6153 = vmatpush.msra.mxu0 %v5784
        %6154 = vmatpush.msra.mxu0 %v5783
        %6155 = vmatpush.msra.mxu0 %v5782
        %6156 = vmatpush.msra.mxu0 %v5781
        %6157 = vmatpush.msra.mxu0 %v5780
        %6158 = vmatpush.msra.mxu0 %v5779
        %6159 = vmatpush.msra.mxu0 %v5778
        %6160 = vmatmul.f32.gmra.mxu0 %v5588
        %v6161 = vpop.f32.mrf.mxu0
        %v6162 = vadd.f32 %v6049, %v6161
        %6163 = vmatmul.f32.gmra.mxu0 %v5593
        %v6164 = vpop.f32.mrf.mxu0
        %v6165 = vadd.f32 %v6052, %v6164
        %6166 = vmatmul.f32.gmra.mxu0 %v5598
        %v6167 = vpop.f32.mrf.mxu0
        %v6168 = vadd.f32 %v6055, %v6167
        %6169 = vmatmul.f32.gmra.mxu0 %v5603
        %v6170 = vpop.f32.mrf.mxu0
        %v6171 = vadd.f32 %v6058, %v6170
        %6172 = vmatmul.f32.gmra.mxu0 %v5608
        %v6173 = vpop.f32.mrf.mxu0
        %v6174 = vadd.f32 %v6061, %v6173
        %6175 = vmatmul.f32.gmra.mxu0 %v5613
        %v6176 = vpop.f32.mrf.mxu0
        %v6177 = vadd.f32 %v6064, %v6176
        %6178 = vmatmul.f32.gmra.mxu0 %v5618
        %v6179 = vpop.f32.mrf.mxu0
        %v6180 = vadd.f32 %v6067, %v6179
        %6181 = vmatmul.f32.gmra.mxu0 %v5623
        %v6182 = vpop.f32.mrf.mxu0
        %v6183 = vadd.f32 %v6070, %v6182
        %6184 = vmatmul.f32.gmra.mxu0 %v5628
        %v6185 = vpop.f32.mrf.mxu0
        %v6186 = vadd.f32 %v6073, %v6185
        %6187 = vmatmul.f32.gmra.mxu0 %v5633
        %v6188 = vpop.f32.mrf.mxu0
        %v6189 = vadd.f32 %v6076, %v6188
        %6190 = vmatmul.f32.gmra.mxu0 %v5638
        %v6191 = vpop.f32.mrf.mxu0
        %v6192 = vadd.f32 %v6079, %v6191
        %6193 = vmatmul.f32.gmra.mxu0 %v5643
        %v6194 = vpop.f32.mrf.mxu0
        %v6195 = vadd.f32 %v6082, %v6194
        %6196 = vmatmul.f32.gmra.mxu0 %v5648
        %v6197 = vpop.f32.mrf.mxu0
        %v6198 = vadd.f32 %v6085, %v6197
        %6199 = vmatmul.f32.gmra.mxu0 %v5653
        %v6200 = vpop.f32.mrf.mxu0
        %v6201 = vadd.f32 %v6088, %v6200
        %6202 = vmatmul.f32.gmra.mxu0 %v5658
        %v6203 = vpop.f32.mrf.mxu0
        %v6204 = vadd.f32 %v6091, %v6203
        %6205 = vmatmul.f32.gmra.mxu0 %v5663
        %v6206 = vpop.f32.mrf.mxu0
        %v6207 = vadd.f32 %v6094, %v6206
        %6208 = vmatmul.f32.gmra.mxu0 %v5668
        %v6209 = vpop.f32.mrf.mxu0
        %v6210 = vadd.f32 %v6097, %v6209
        %6211 = vmatmul.f32.gmra.mxu0 %v5673
        %v6212 = vpop.f32.mrf.mxu0
        %v6213 = vadd.f32 %v6100, %v6212
        %6214 = vmatmul.f32.gmra.mxu0 %v5678
        %v6215 = vpop.f32.mrf.mxu0
        %v6216 = vadd.f32 %v6103, %v6215
        %6217 = vmatmul.f32.gmra.mxu0 %v5683
        %v6218 = vpop.f32.mrf.mxu0
        %v6219 = vadd.f32 %v6106, %v6218
        %6220 = vmatmul.f32.gmra.mxu0 %v5688
        %v6221 = vpop.f32.mrf.mxu0
        %v6222 = vadd.f32 %v6109, %v6221
        %6223 = vmatmul.f32.gmra.mxu0 %v5693
        %v6224 = vpop.f32.mrf.mxu0
        %v6225 = vadd.f32 %v6112, %v6224
        %6226 = vmatmul.f32.gmra.mxu0 %v5698
        %v6227 = vpop.f32.mrf.mxu0
        %v6228 = vadd.f32 %v6115, %v6227
        %6229 = vmatmul.f32.gmra.mxu0 %v5703
        %v6230 = vpop.f32.mrf.mxu0
        %v6231 = vadd.f32 %v6118, %v6230
        %6232 = vmatmul.f32.gmra.mxu0 %v5708
        %v6233 = vpop.f32.mrf.mxu0
        %v6234 = vadd.f32 %v6121, %v6233
        %6235 = vmatmul.f32.gmra.mxu0 %v5713
        %v6236 = vpop.f32.mrf.mxu0
        %v6237 = vadd.f32 %v6124, %v6236
        %6238 = vmatmul.f32.gmra.mxu0 %v5718
        %v6239 = vpop.f32.mrf.mxu0
        %v6240 = vadd.f32 %v6127, %v6239
        %6241 = vmatmul.f32.gmra.mxu0 %v5723
        %v6242 = vpop.f32.mrf.mxu0
        %v6243 = vadd.f32 %v6130, %v6242
        %6244 = vmatmul.f32.gmra.mxu0 %v5728
        %v6245 = vpop.f32.mrf.mxu0
        %v6246 = vadd.f32 %v6133, %v6245
        %6247 = vmatmul.f32.gmra.mxu0 %v5733
        %v6248 = vpop.f32.mrf.mxu0
        %v6249 = vadd.f32 %v6136, %v6248
        %6250 = vmatmul.f32.gmra.mxu0 %v5738
        %v6251 = vpop.f32.mrf.mxu0
        %v6252 = vadd.f32 %v6139, %v6251
        %6253 = vmatmul.f32.gmra.mxu0 %v5743
        %v6254 = vpop.f32.mrf.mxu0
        %v6255 = vadd.f32 %v6142, %v6254
        %6256 = vdwg.mxu0
        %6257 = vmatpush.msra.mxu0 %v5809
        %6258 = vmatpush.msra.mxu0 %v5808
        %6259 = vmatpush.msra.mxu0 %v5807
        %6260 = vmatpush.msra.mxu0 %v5806
        %6261 = vmatpush.msra.mxu0 %v5805
        %6262 = vmatpush.msra.mxu0 %v5804
        %6263 = vmatpush.msra.mxu0 %v5803
        %6264 = vmatpush.msra.mxu0 %v5802
        %6265 = vmatpush.msra.mxu0 %v5801
        %6266 = vmatpush.msra.mxu0 %v5800
        %6267 = vmatpush.msra.mxu0 %v5799
        %6268 = vmatpush.msra.mxu0 %v5798
        %6269 = vmatpush.msra.mxu0 %v5797
        %6270 = vmatpush.msra.mxu0 %v5796
        %6271 = vmatpush.msra.mxu0 %v5795
        %6272 = vmatpush.msra.mxu0 %v5794
        %6273 = vmatmul.f32.gmra.mxu0 %v5589
        %v6274 = vpop.f32.mrf.mxu0
        %v6275 = vadd.f32 %v6162, %v6274
        %6276 = vmatmul.f32.gmra.mxu0 %v5594
        %v6277 = vpop.f32.mrf.mxu0
        %v6278 = vadd.f32 %v6165, %v6277
        %6279 = vmatmul.f32.gmra.mxu0 %v5599
        %v6280 = vpop.f32.mrf.mxu0
        %v6281 = vadd.f32 %v6168, %v6280
        %6282 = vmatmul.f32.gmra.mxu0 %v5604
        %v6283 = vpop.f32.mrf.mxu0
        %v6284 = vadd.f32 %v6171, %v6283
        %6285 = vmatmul.f32.gmra.mxu0 %v5609
        %v6286 = vpop.f32.mrf.mxu0
        %v6287 = vadd.f32 %v6174, %v6286
        %6288 = vmatmul.f32.gmra.mxu0 %v5614
        %v6289 = vpop.f32.mrf.mxu0
        %v6290 = vadd.f32 %v6177, %v6289
        %6291 = vmatmul.f32.gmra.mxu0 %v5619
        %v6292 = vpop.f32.mrf.mxu0
        %v6293 = vadd.f32 %v6180, %v6292
        %6294 = vmatmul.f32.gmra.mxu0 %v5624
        %v6295 = vpop.f32.mrf.mxu0
        %v6296 = vadd.f32 %v6183, %v6295
        %6297 = vmatmul.f32.gmra.mxu0 %v5629
        %v6298 = vpop.f32.mrf.mxu0
        %v6299 = vadd.f32 %v6186, %v6298
        %6300 = vmatmul.f32.gmra.mxu0 %v5634
        %v6301 = vpop.f32.mrf.mxu0
        %v6302 = vadd.f32 %v6189, %v6301
        %6303 = vmatmul.f32.gmra.mxu0 %v5639
        %v6304 = vpop.f32.mrf.mxu0
        %v6305 = vadd.f32 %v6192, %v6304
        %6306 = vmatmul.f32.gmra.mxu0 %v5644
        %v6307 = vpop.f32.mrf.mxu0
        %v6308 = vadd.f32 %v6195, %v6307
        %6309 = vmatmul.f32.gmra.mxu0 %v5649
        %v6310 = vpop.f32.mrf.mxu0
        %v6311 = vadd.f32 %v6198, %v6310
        %6312 = vmatmul.f32.gmra.mxu0 %v5654
        %v6313 = vpop.f32.mrf.mxu0
        %v6314 = vadd.f32 %v6201, %v6313
        %6315 = vmatmul.f32.gmra.mxu0 %v5659
        %v6316 = vpop.f32.mrf.mxu0
        %v6317 = vadd.f32 %v6204, %v6316
        %6318 = vmatmul.f32.gmra.mxu0 %v5664
        %v6319 = vpop.f32.mrf.mxu0
        %v6320 = vadd.f32 %v6207, %v6319
        %6321 = vmatmul.f32.gmra.mxu0 %v5669
        %v6322 = vpop.f32.mrf.mxu0
        %v6323 = vadd.f32 %v6210, %v6322
        %6324 = vmatmul.f32.gmra.mxu0 %v5674
        %v6325 = vpop.f32.mrf.mxu0
        %v6326 = vadd.f32 %v6213, %v6325
        %6327 = vmatmul.f32.gmra.mxu0 %v5679
        %v6328 = vpop.f32.mrf.mxu0
        %v6329 = vadd.f32 %v6216, %v6328
        %6330 = vmatmul.f32.gmra.mxu0 %v5684
        %v6331 = vpop.f32.mrf.mxu0
        %v6332 = vadd.f32 %v6219, %v6331
        %6333 = vmatmul.f32.gmra.mxu0 %v5689
        %v6334 = vpop.f32.mrf.mxu0
        %v6335 = vadd.f32 %v6222, %v6334
        %6336 = vmatmul.f32.gmra.mxu0 %v5694
        %v6337 = vpop.f32.mrf.mxu0
        %v6338 = vadd.f32 %v6225, %v6337
        %6339 = vmatmul.f32.gmra.mxu0 %v5699
        %v6340 = vpop.f32.mrf.mxu0
        %v6341 = vadd.f32 %v6228, %v6340
        %6342 = vmatmul.f32.gmra.mxu0 %v5704
        %v6343 = vpop.f32.mrf.mxu0
        %v6344 = vadd.f32 %v6231, %v6343
        %6345 = vmatmul.f32.gmra.mxu0 %v5709
        %v6346 = vpop.f32.mrf.mxu0
        %v6347 = vadd.f32 %v6234, %v6346
        %6348 = vmatmul.f32.gmra.mxu0 %v5714
        %v6349 = vpop.f32.mrf.mxu0
        %v6350 = vadd.f32 %v6237, %v6349
        %6351 = vmatmul.f32.gmra.mxu0 %v5719
        %v6352 = vpop.f32.mrf.mxu0
        %v6353 = vadd.f32 %v6240, %v6352
        %6354 = vmatmul.f32.gmra.mxu0 %v5724
        %v6355 = vpop.f32.mrf.mxu0
        %v6356 = vadd.f32 %v6243, %v6355
        %6357 = vmatmul.f32.gmra.mxu0 %v5729
        %v6358 = vpop.f32.mrf.mxu0
        %v6359 = vadd.f32 %v6246, %v6358
        %6360 = vmatmul.f32.gmra.mxu0 %v5734
        %v6361 = vpop.f32.mrf.mxu0
        %v6362 = vadd.f32 %v6249, %v6361
        %6363 = vmatmul.f32.gmra.mxu0 %v5739
        %v6364 = vpop.f32.mrf.mxu0
        %v6365 = vadd.f32 %v6252, %v6364
        %6366 = vmatmul.f32.gmra.mxu0 %v5744
        %v6367 = vpop.f32.mrf.mxu0
        %v6368 = vadd.f32 %v6255, %v6367
        %6369 = vdwg.mxu0
        %6370 = vmatpush.msra.mxu0 0.0
        %6371 = vmatpush.msra.mxu0 0.0
        %6372 = vmatpush.msra.mxu0 0.0
        %6373 = vmatpush.msra.mxu0 0.0
        %6374 = vmatpush.msra.mxu0 0.0
        %6375 = vmatpush.msra.mxu0 0.0
        %6376 = vmatpush.msra.mxu0 0.0
        %6377 = vmatpush.msra.mxu0 0.0
        %6378 = vmatpush.msra.mxu0 %v5817
        %6379 = vmatpush.msra.mxu0 %v5816
        %6380 = vmatpush.msra.mxu0 %v5815
        %6381 = vmatpush.msra.mxu0 %v5814
        %6382 = vmatpush.msra.mxu0 %v5813
        %6383 = vmatpush.msra.mxu0 %v5812
        %6384 = vmatpush.msra.mxu0 %v5811
        %6385 = vmatpush.msra.mxu0 %v5810
        %6386 = vmatmul.f32.gmra.mxu0 %v5823
        %v6387 = vpop.f32.mrf.mxu0
        %v6388 = vadd.f32 %v6275, %v6387
        %6389 = vmatmul.f32.gmra.mxu0 %v5826
        %v6390 = vpop.f32.mrf.mxu0
        %v6391 = vadd.f32 %v6278, %v6390
        %6392 = vmatmul.f32.gmra.mxu0 %v5829
        %v6393 = vpop.f32.mrf.mxu0
        %v6394 = vadd.f32 %v6281, %v6393
        %6395 = vmatmul.f32.gmra.mxu0 %v5832
        %v6396 = vpop.f32.mrf.mxu0
        %v6397 = vadd.f32 %v6284, %v6396
        %6398 = vmatmul.f32.gmra.mxu0 %v5835
        %v6399 = vpop.f32.mrf.mxu0
        %v6400 = vadd.f32 %v6287, %v6399
        %6401 = vmatmul.f32.gmra.mxu0 %v5838
        %v6402 = vpop.f32.mrf.mxu0
        %v6403 = vadd.f32 %v6290, %v6402
        %6404 = vmatmul.f32.gmra.mxu0 %v5841
        %v6405 = vpop.f32.mrf.mxu0
        %v6406 = vadd.f32 %v6293, %v6405
        %6407 = vmatmul.f32.gmra.mxu0 %v5844
        %v6408 = vpop.f32.mrf.mxu0
        %v6409 = vadd.f32 %v6296, %v6408
        %6410 = vmatmul.f32.gmra.mxu0 %v5847
        %v6411 = vpop.f32.mrf.mxu0
        %v6412 = vadd.f32 %v6299, %v6411
        %6413 = vmatmul.f32.gmra.mxu0 %v5850
        %v6414 = vpop.f32.mrf.mxu0
        %v6415 = vadd.f32 %v6302, %v6414
        %6416 = vmatmul.f32.gmra.mxu0 %v5853
        %v6417 = vpop.f32.mrf.mxu0
        %v6418 = vadd.f32 %v6305, %v6417
        %6419 = vmatmul.f32.gmra.mxu0 %v5856
        %v6420 = vpop.f32.mrf.mxu0
        %v6421 = vadd.f32 %v6308, %v6420
        %6422 = vmatmul.f32.gmra.mxu0 %v5859
        %v6423 = vpop.f32.mrf.mxu0
        %v6424 = vadd.f32 %v6311, %v6423
        %6425 = vmatmul.f32.gmra.mxu0 %v5862
        %v6426 = vpop.f32.mrf.mxu0
        %v6427 = vadd.f32 %v6314, %v6426
        %6428 = vmatmul.f32.gmra.mxu0 %v5865
        %v6429 = vpop.f32.mrf.mxu0
        %v6430 = vadd.f32 %v6317, %v6429
        %6431 = vmatmul.f32.gmra.mxu0 %v5868
        %v6432 = vpop.f32.mrf.mxu0
        %v6433 = vadd.f32 %v6320, %v6432
        %6434 = vmatmul.f32.gmra.mxu0 %v5871
        %v6435 = vpop.f32.mrf.mxu0
        %v6436 = vadd.f32 %v6323, %v6435
        %6437 = vmatmul.f32.gmra.mxu0 %v5874
        %v6438 = vpop.f32.mrf.mxu0
        %v6439 = vadd.f32 %v6326, %v6438
        %6440 = vmatmul.f32.gmra.mxu0 %v5877
        %v6441 = vpop.f32.mrf.mxu0
        %v6442 = vadd.f32 %v6329, %v6441
        %6443 = vmatmul.f32.gmra.mxu0 %v5880
        %v6444 = vpop.f32.mrf.mxu0
        %v6445 = vadd.f32 %v6332, %v6444
        %6446 = vmatmul.f32.gmra.mxu0 %v5883
        %v6447 = vpop.f32.mrf.mxu0
        %v6448 = vadd.f32 %v6335, %v6447
        %6449 = vmatmul.f32.gmra.mxu0 %v5886
        %v6450 = vpop.f32.mrf.mxu0
        %v6451 = vadd.f32 %v6338, %v6450
        %6452 = vmatmul.f32.gmra.mxu0 %v5889
        %v6453 = vpop.f32.mrf.mxu0
        %v6454 = vadd.f32 %v6341, %v6453
        %6455 = vmatmul.f32.gmra.mxu0 %v5892
        %v6456 = vpop.f32.mrf.mxu0
        %v6457 = vadd.f32 %v6344, %v6456
        %6458 = vmatmul.f32.gmra.mxu0 %v5895
        %v6459 = vpop.f32.mrf.mxu0
        %v6460 = vadd.f32 %v6347, %v6459
        %6461 = vmatmul.f32.gmra.mxu0 %v5898
        %v6462 = vpop.f32.mrf.mxu0
        %v6463 = vadd.f32 %v6350, %v6462
        %6464 = vmatmul.f32.gmra.mxu0 %v5901
        %v6465 = vpop.f32.mrf.mxu0
        %v6466 = vadd.f32 %v6353, %v6465
        %6467 = vmatmul.f32.gmra.mxu0 %v5904
        %v6468 = vpop.f32.mrf.mxu0
        %v6469 = vadd.f32 %v6356, %v6468
        %6470 = vmatmul.f32.gmra.mxu0 %v5907
        %v6471 = vpop.f32.mrf.mxu0
        %v6472 = vadd.f32 %v6359, %v6471
        %6473 = vmatmul.f32.gmra.mxu0 %v5910
        %v6474 = vpop.f32.mrf.mxu0
        %v6475 = vadd.f32 %v6362, %v6474
        %6476 = vmatmul.f32.gmra.mxu0 %v5913
        %v6477 = vpop.f32.mrf.mxu0
        %v6478 = vadd.f32 %v6365, %v6477
        %6479 = vmatmul.f32.gmra.mxu0 %v5916
        %v6480 = vpop.f32.mrf.mxu0
        %v6481 = vadd.f32 %v6368, %v6480
        %6482 = vdwg.mxu0
        %v6483 = vmax.f32 %v6388, 0.0
        %v6484 = vmax.f32 %v6391, 0.0
        %v6485 = vmax.f32 %v6394, 0.0
        %v6486 = vmax.f32 %v6397, 0.0
        %v6487 = vmax.f32 %v6400, 0.0
        %v6488 = vmax.f32 %v6403, 0.0
        %v6489 = vmax.f32 %v6406, 0.0
        %v6490 = vmax.f32 %v6409, 0.0
        %v6491 = vmax.f32 %v6412, 0.0
        %v6492 = vmax.f32 %v6415, 0.0
        %v6493 = vmax.f32 %v6418, 0.0
        %v6494 = vmax.f32 %v6421, 0.0
        %v6495 = vmax.f32 %v6424, 0.0
        %v6496 = vmax.f32 %v6427, 0.0
        %v6497 = vmax.f32 %v6430, 0.0
        %v6498 = vmax.f32 %v6433, 0.0
        %v6499 = vmax.f32 %v6436, 0.0
        %v6500 = vmax.f32 %v6439, 0.0
        %v6501 = vmax.f32 %v6442, 0.0
        %v6502 = vmax.f32 %v6445, 0.0
        %v6503 = vmax.f32 %v6448, 0.0
        %v6504 = vmax.f32 %v6451, 0.0
        %v6505 = vmax.f32 %v6454, 0.0
        %v6506 = vmax.f32 %v6457, 0.0
        %v6507 = vmax.f32 %v6460, 0.0
        %v6508 = vmax.f32 %v6463, 0.0
        %v6509 = vmax.f32 %v6466, 0.0
        %v6510 = vmax.f32 %v6469, 0.0
        %v6511 = vmax.f32 %v6472, 0.0
        %v6512 = vmax.f32 %v6475, 0.0
        %v6513 = vmax.f32 %v6478, 0.0
        %v6514 = vmax.f32 %v6481, 0.0
        %6515 = vst [vmem:[#allocation8] sm:$0xff] %v6483
        %6516 = vst [vmem:[#allocation8 + $0x8] sm:$0xff] %v6484
        %6517 = vst [vmem:[#allocation8 + $0x10] sm:$0xff] %v6485
        %6518 = vst [vmem:[#allocation8 + $0x18] sm:$0xff] %v6486
        %6519 = vst [vmem:[#allocation8 + $0x20] sm:$0xff] %v6487
        %6520 = vst [vmem:[#allocation8 + $0x28] sm:$0xff] %v6488
        %6521 = vst [vmem:[#allocation8 + $0x30] sm:$0xff] %v6489
        %6522 = vst [vmem:[#allocation8 + $0x38] sm:$0xff] %v6490
        %6523 = vst [vmem:[#allocation8 + $0x40] sm:$0xff] %v6491
        %6524 = vst [vmem:[#allocation8 + $0x48] sm:$0xff] %v6492
        %6525 = vst [vmem:[#allocation8 + $0x50] sm:$0xff] %v6493
        %6526 = vst [vmem:[#allocation8 + $0x58] sm:$0xff] %v6494
        %6527 = vst [vmem:[#allocation8 + $0x60] sm:$0xff] %v6495
        %6528 = vst [vmem:[#allocation8 + $0x68] sm:$0xff] %v6496
        %6529 = vst [vmem:[#allocation8 + $0x70] sm:$0xff] %v6497
        %6530 = vst [vmem:[#allocation8 + $0x78] sm:$0xff] %v6498
        %6531 = vst [vmem:[#allocation8 + $0x80] sm:$0xff] %v6499
        %6532 = vst [vmem:[#allocation8 + $0x88] sm:$0xff] %v6500
        %6533 = vst [vmem:[#allocation8 + $0x90] sm:$0xff] %v6501
        %6534 = vst [vmem:[#allocation8 + $0x98] sm:$0xff] %v6502
        %6535 = vst [vmem:[#allocation8 + $0xa0] sm:$0xff] %v6503
        %6536 = vst [vmem:[#allocation8 + $0xa8] sm:$0xff] %v6504
        %6537 = vst [vmem:[#allocation8 + $0xb0] sm:$0xff] %v6505
        %6538 = vst [vmem:[#allocation8 + $0xb8] sm:$0xff] %v6506
        %6539 = vst [vmem:[#allocation8 + $0xc0] sm:$0xff] %v6507
        %6540 = vst [vmem:[#allocation8 + $0xc8] sm:$0xff] %v6508
        %6541 = vst [vmem:[#allocation8 + $0xd0] sm:$0xff] %v6509
        %6542 = vst [vmem:[#allocation8 + $0xd8] sm:$0xff] %v6510
        %6543 = vst [vmem:[#allocation8 + $0xe0] sm:$0xff] %v6511
        %6544 = vst [vmem:[#allocation8 + $0xe8] sm:$0xff] %v6512
        %6545 = vst [vmem:[#allocation8 + $0xf0] sm:$0xff] %v6513
        %6546 = vst [vmem:[#allocation8 + $0xf8] sm:$0xff] %v6514
        %v6547 = vld [vmem:[%s7] sm:$0x1]
        %v6548 = vld [vmem:[#allocation8] sm:$0xff]
        %v6549 = vld [vmem:[#allocation8 + $0x8] sm:$0xff]
        %v6550 = vld [vmem:[#allocation8 + $0x10] sm:$0xff]
        %v6551 = vld [vmem:[#allocation8 + $0x18] sm:$0xff]
        %v6552 = vld [vmem:[#allocation8 + $0x20] sm:$0xff]
        %v6553 = vld [vmem:[#allocation8 + $0x28] sm:$0xff]
        %v6554 = vld [vmem:[#allocation8 + $0x30] sm:$0xff]
        %v6555 = vld [vmem:[#allocation8 + $0x38] sm:$0xff]
        %v6556 = vld [vmem:[#allocation8 + $0x40] sm:$0xff]
        %v6557 = vld [vmem:[#allocation8 + $0x48] sm:$0xff]
        %v6558 = vld [vmem:[#allocation8 + $0x50] sm:$0xff]
        %v6559 = vld [vmem:[#allocation8 + $0x58] sm:$0xff]
        %v6560 = vld [vmem:[#allocation8 + $0x60] sm:$0xff]
        %v6561 = vld [vmem:[#allocation8 + $0x68] sm:$0xff]
        %v6562 = vld [vmem:[#allocation8 + $0x70] sm:$0xff]
        %v6563 = vld [vmem:[#allocation8 + $0x78] sm:$0xff]
        %v6564 = vld [vmem:[#allocation8 + $0x80] sm:$0xff]
        %v6565 = vld [vmem:[#allocation8 + $0x88] sm:$0xff]
        %v6566 = vld [vmem:[#allocation8 + $0x90] sm:$0xff]
        %v6567 = vld [vmem:[#allocation8 + $0x98] sm:$0xff]
        %v6568 = vld [vmem:[#allocation8 + $0xa0] sm:$0xff]
        %v6569 = vld [vmem:[#allocation8 + $0xa8] sm:$0xff]
        %v6570 = vld [vmem:[#allocation8 + $0xb0] sm:$0xff]
        %v6571 = vld [vmem:[#allocation8 + $0xb8] sm:$0xff]
        %v6572 = vld [vmem:[#allocation8 + $0xc0] sm:$0xff]
        %v6573 = vld [vmem:[#allocation8 + $0xc8] sm:$0xff]
        %v6574 = vld [vmem:[#allocation8 + $0xd0] sm:$0xff]
        %v6575 = vld [vmem:[#allocation8 + $0xd8] sm:$0xff]
        %v6576 = vld [vmem:[#allocation8 + $0xe0] sm:$0xff]
        %v6577 = vld [vmem:[#allocation8 + $0xe8] sm:$0xff]
        %v6578 = vld [vmem:[#allocation8 + $0xf0] sm:$0xff]
        %v6579 = vld [vmem:[#allocation8 + $0xf8] sm:$0xff]
        %v6580 = vld [vmem:[#allocation9] sm:$0x1]
        %6582 = vset.pattern.permute.xlu0 0
        %6583 = vperm.xlu0 %6582, %v6580
        %v6584 = vpop.permute.xlu0 %6583
        %v6586 = vperm.slane %v6584, 0
        %6587 = vmatpush.xpose.msra.mxu0 %v6563
        %6588 = vmatpush.xpose.msra.mxu0 %v6562
        %6589 = vmatpush.xpose.msra.mxu0 %v6561
        %6590 = vmatpush.xpose.msra.mxu0 %v6560
        %6591 = vmatpush.xpose.msra.mxu0 %v6559
        %6592 = vmatpush.xpose.msra.mxu0 %v6558
        %6593 = vmatpush.xpose.msra.mxu0 %v6557
        %6594 = vmatpush.xpose.msra.mxu0 %v6556
        %6595 = vmatpush.xpose.msra.mxu0 %v6555
        %6596 = vmatpush.xpose.msra.mxu0 %v6554
        %6597 = vmatpush.xpose.msra.mxu0 %v6553
        %6598 = vmatpush.xpose.msra.mxu0 %v6552
        %6599 = vmatpush.xpose.msra.mxu0 %v6551
        %6600 = vmatpush.xpose.msra.mxu0 %v6550
        %6601 = vmatpush.xpose.msra.mxu0 %v6549
        %6602 = vmatpush.xpose.msra.mxu0 %v6548
        %6603 = vmatmul.f32.gmra.mxu0 %v6547
        %v6604 = vpop.f32.mrf.mxu0
        %v6605 = vadd.f32 %v6586, %v6604
        %6606 = vdwg.mxu0
        %6607 = vmatpush.xpose.msra.mxu0 %v6579
        %6608 = vmatpush.xpose.msra.mxu0 %v6578
        %6609 = vmatpush.xpose.msra.mxu0 %v6577
        %6610 = vmatpush.xpose.msra.mxu0 %v6576
        %6611 = vmatpush.xpose.msra.mxu0 %v6575
        %6612 = vmatpush.xpose.msra.mxu0 %v6574
        %6613 = vmatpush.xpose.msra.mxu0 %v6573
        %6614 = vmatpush.xpose.msra.mxu0 %v6572
        %6615 = vmatpush.xpose.msra.mxu0 %v6571
        %6616 = vmatpush.xpose.msra.mxu0 %v6570
        %6617 = vmatpush.xpose.msra.mxu0 %v6569
        %6618 = vmatpush.xpose.msra.mxu0 %v6568
        %6619 = vmatpush.xpose.msra.mxu0 %v6567
        %6620 = vmatpush.xpose.msra.mxu0 %v6566
        %6621 = vmatpush.xpose.msra.mxu0 %v6565
        %6622 = vmatpush.xpose.msra.mxu0 %v6564
        %6623 = vmatmul.f32.gmra.mxu0 %v6547
        %v6624 = vpop.f32.mrf.mxu0
        %v6625 = vadd.f32 %v6586, %v6624
        %6626 = vdwg.mxu0
        %v6629 = vrot.slane %v6625, 7
        %vm6630 = vcmask 1040384
        %v6631 = vsel %vm6630, %v6605, %v6629
        %v6633 = vlaneseq
        %vm6634 = vcmp.ge.s32.totalorder %v6633, 0
        %vm6635 = vcmp.lt.s32.totalorder %v6633, 256
        %vm6636 = vmand %vm6634, %vm6635
        %6637 = vst.msk [vmem:[%s349] sm:$0x3] %vm6636, %v6631
        %p6638 = scmp.lt.s32.totalorder %s23, 1
        %s6639 = scalar_select %p6638, %s23, 1
        %s6640 = smul.addr %s6639, 2
        %s6641 = scalar_lea.vmem %s9, %s6640
        // Predicated region
        $region61: #{segmentation_model_forward.1} parent=55 // pred_check
          %p6642 = pneg %p235
        $region62: #{segmentation_model_forward.1} parent=55 // pred_check_branch
          %6644 = sbr.rel (%p6642) target = $region64
        $region63: #{segmentation_model_forward.1} parent=55 // pred_region
          _
        $region64: #{segmentation_model_forward.1} parent=55 // pred_fallthru
          _
      $region56: #{segmentation_model_forward.1} parent=5 // pred_fallthru
        _
      %p6645 = scmp.le.s32.totalorder 2, %s18
      // Predicated region
      $region65: #{segmentation_model_forward.1} parent=5 // pred_check
        %p6646 = pneg %p6645
      $region66: #{segmentation_model_forward.1} parent=5 // pred_check_branch
        %6648 = sbr.rel (%p6646) target = $region68
      $region67: #{segmentation_model_forward.1} parent=5 // pred_region
        %s6649 = ssub.s32 %s18, 2
        // Predicated region
        $region69: #{segmentation_model_forward.1} parent=67 // pred_check
          %p6650 = pneg %p241
        $region70: #{segmentation_model_forward.1} parent=67 // pred_check_branch
          %6652 = sbr.rel (%p6650) target = $region72
        $region71: #{segmentation_model_forward.1} parent=67 // pred_region
          %p6653 = scmp.lt.s32.totalorder %s24, 1
          %s6654 = scalar_select %p6653, %s24, 1
          %s6655 = smul.addr %s6654, 2
          %s6656 = scalar_lea.vmem %s9, %s6655
        $region72: #{segmentation_model_forward.1} parent=67 // pred_fallthru
          _
      $region68: #{segmentation_model_forward.1} parent=5 // pred_fallthru
        _
    $region6: #{segmentation_model_forward.1} parent=1 // loop_footer
      %s22 = sadd.s32 1, %s18
    $region7: #{segmentation_model_forward.1} parent=1 // loop_footer_branch
      %17 = sbr.rel target = $region3
    $region8: #{segmentation_model_forward.1} parent=1 // loop_exit
      _
    %6657 = vsyncpa [#allocation11], 1
    %s6658 = scalar_lea.sflag [#allocation11], 1
    %6659 = vsyncpa %s6658, 1

</llo_original>
